<compile_context>
chip_gen: v5e
topology: v5e:2x2
jax: 0.10.0
libtpu: 0.0.40
codegen_flags: <defaults>
</compile_context>

<pallas_src>
import functools
import numpy as np
import jax
import jax.numpy as jnp
from jax.experimental import pallas as pl
from jax.experimental.pallas import tpu as pltpu

F32 = jnp.float32
BF16 = jnp.bfloat16


# ------------------------------------------------------------------ utilities
def _row_tile(m, max_tile=512):
    """Largest power-of-two tile <= max_tile dividing m; if that leaves a single
    grid step and m is splittable, halve once so >=2 parallel steps exist
    (keeps both v7x TensorCores busy)."""
    tile = m
    for cand in (512, 256, 128, 64, 32, 16, 8):
        if cand <= max_tile and m >= cand and m % cand == 0:
            tile = cand
            break
    if tile == m and m >= 16 and m % 16 == 0 and (m // 2) % 8 == 0:
        tile = m // 2
    return tile


def _erf_approx(x):
    # Abramowitz & Stegun 7.1.26 (exp-only, Mosaic-friendly), |err| < 1.5e-7
    a1, a2, a3, a4, a5 = 0.254829592, -0.284496736, 1.421413741, -1.453152027, 1.061405429
    p = 0.3275911
    sign = jnp.where(x >= 0.0, 1.0, -1.0)
    ax = jnp.abs(x)
    t = 1.0 / (1.0 + p * ax)
    poly = ((((a5 * t + a4) * t + a3) * t + a2) * t + a1) * t
    return sign * (1.0 - poly * jnp.exp(-ax * ax))


def _gelu_exact(x):
    return 0.5 * x * (1.0 + _erf_approx(x * 0.7071067811865476))


def _apply_act(y, act):
    if act == "relu":
        return jnp.maximum(y, 0.0)
    if act == "gelu":
        return _gelu_exact(y)
    return y


# ------------------------------------------------------------- Pallas kernels
def _mm_kernel(x_ref, w_ref, b_ref, o_ref, *, act):
    y = jnp.dot(x_ref[...].astype(BF16), w_ref[...],
                preferred_element_type=jnp.float32) + b_ref[...]
    o_ref[...] = _apply_act(y, act)


def linear(x2d, w, b, act="none"):
    """(M,K)@(K,N) + b[N] (+act). x f32, w bf16, epilogue f32."""
    m, k = x2d.shape
    n = w.shape[1]
    tm = _row_tile(m)
    kern = functools.partial(_mm_kernel, act=act)
    return pl.pallas_call(
        kern,
        out_shape=jax.ShapeDtypeStruct((m, n), F32),
        grid=(m // tm,),
        in_specs=[
            pl.BlockSpec((tm, k), lambda i: (i, 0)),
            pl.BlockSpec((k, n), lambda i: (0, 0)),
            pl.BlockSpec((1, n), lambda i: (0, 0)),
        ],
        out_specs=pl.BlockSpec((tm, n), lambda i: (i, 0)),
        compiler_params=pltpu.CompilerParams(dimension_semantics=("parallel",)),
    )(x2d.astype(F32), w.astype(BF16), b.reshape(1, n).astype(F32))


def _mm_res_kernel(x_ref, w_ref, b_ref, r_ref, o_ref):
    y = jnp.dot(x_ref[...].astype(BF16), w_ref[...],
                preferred_element_type=jnp.float32)
    o_ref[...] = y + b_ref[...] + r_ref[...]


def linear_residual(x2d, w, b, res):
    """res + ((M,K)@(K,N) + b) — residual add fused into the matmul epilogue."""
    m, k = x2d.shape
    n = w.shape[1]
    tm = _row_tile(m)
    return pl.pallas_call(
        _mm_res_kernel,
        out_shape=jax.ShapeDtypeStruct((m, n), F32),
        grid=(m // tm,),
        in_specs=[
            pl.BlockSpec((tm, k), lambda i: (i, 0)),
            pl.BlockSpec((k, n), lambda i: (0, 0)),
            pl.BlockSpec((1, n), lambda i: (0, 0)),
            pl.BlockSpec((tm, n), lambda i: (i, 0)),
        ],
        out_specs=pl.BlockSpec((tm, n), lambda i: (i, 0)),
        compiler_params=pltpu.CompilerParams(dimension_semantics=("parallel",)),
    )(x2d.astype(F32), w.astype(BF16), b.reshape(1, n).astype(F32), res.astype(F32))


def _ln_mm_kernel(x_ref, g_ref, b_ref, w_ref, bias_ref, o_ref, *, act):
    x = x_ref[...]
    mu = jnp.mean(x, axis=-1, keepdims=True)
    var = jnp.mean((x - mu) ** 2, axis=-1, keepdims=True)
    xn = (x - mu) * jax.lax.rsqrt(var + 1e-5)
    xn = xn * g_ref[...] + b_ref[...]
    y = jnp.dot(xn.astype(BF16), w_ref[...],
                preferred_element_type=jnp.float32) + bias_ref[...]
    o_ref[...] = _apply_act(y, act)


def ln_linear(x2d, g, beta, w, b, act="none"):
    """LayerNorm fused with the following matmul: act(LN(x) @ w + b)."""
    m, c = x2d.shape
    n = w.shape[1]
    tm = _row_tile(m)
    kern = functools.partial(_ln_mm_kernel, act=act)
    return pl.pallas_call(
        kern,
        out_shape=jax.ShapeDtypeStruct((m, n), F32),
        grid=(m // tm,),
        in_specs=[
            pl.BlockSpec((tm, c), lambda i: (i, 0)),
            pl.BlockSpec((1, c), lambda i: (0, 0)),
            pl.BlockSpec((1, c), lambda i: (0, 0)),
            pl.BlockSpec((c, n), lambda i: (0, 0)),
            pl.BlockSpec((1, n), lambda i: (0, 0)),
        ],
        out_specs=pl.BlockSpec((tm, n), lambda i: (i, 0)),
        compiler_params=pltpu.CompilerParams(dimension_semantics=("parallel",)),
    )(x2d.astype(F32), g.reshape(1, c).astype(F32), beta.reshape(1, c).astype(F32),
      w.astype(BF16), b.reshape(1, n).astype(F32))


def _conv3x3_kernel(x_ref, w_ref, s_ref, t_ref, o_ref, *, wp, m):
    # x_ref: (1, Mp, Cin) row-flattened zero-padded image of one batch element.
    # For tap (i,j) the needed LHS is just the slab shifted by i*wp + j rows
    # ("wide" trick: outputs for the 2 pad columns are garbage and cropped in
    # the wrapper).  9 bf16 matmuls accumulate in f32, then folded-BN + ReLU.
    acc = None
    for i in range(3):
        for j in range(3):
            lhs = x_ref[0, pl.ds(i * wp + j, m), :].astype(BF16)
            y = jnp.dot(lhs, w_ref[i * 3 + j], preferred_element_type=jnp.float32)
            acc = y if acc is None else acc + y
    acc = acc * s_ref[...] + t_ref[...]
    o_ref[0] = jnp.maximum(acc, 0.0)


def conv3x3_bn_relu(x, w9, scale, shift):
    """3x3 stride-1 pad-1 conv + folded eval-mode BN + ReLU, single kernel per image."""
    b, h, w, cin = x.shape
    cout = w9.shape[-1]
    wp = w + 2
    m = h * wp
    xp = jnp.pad(x, ((0, 0), (1, 1), (1, 1), (0, 0)))
    xf = xp.reshape(b, (h + 2) * wp, cin)
    xf = jnp.pad(xf, ((0, 0), (0, 2), (0, 0)))          # 2 extra zero rows for tap overrun
    mp = (h + 2) * wp + 2
    kern = functools.partial(_conv3x3_kernel, wp=wp, m=m)
    y = pl.pallas_call(
        kern,
        out_shape=jax.ShapeDtypeStruct((b, m, cout), F32),
        grid=(b,),
        in_specs=[
            pl.BlockSpec((1, mp, cin), lambda i: (i, 0, 0)),
            pl.BlockSpec((9, cin, cout), lambda i: (0, 0, 0)),
            pl.BlockSpec((1, cout), lambda i: (0, 0)),
            pl.BlockSpec((1, cout), lambda i: (0, 0)),
        ],
        out_specs=pl.BlockSpec((1, m, cout), lambda i: (i, 0, 0)),
        compiler_params=pltpu.CompilerParams(dimension_semantics=("parallel",)),
    )(xf.astype(F32), w9, scale.reshape(1, cout).astype(F32),
      shift.reshape(1, cout).astype(F32))
    return y.reshape(b, h, wp, cout)[:, :, :w, :]


def _window_attn_kernel(qkv_ref, bias_ref, *rest, nh, dh, scale, has_mask):
    if has_mask:
        mask_ref, o_ref = rest
        mask = mask_ref[...]                           # (nW, n, n)
    else:
        (o_ref,) = rest
    c = nh * dh
    qkv = qkv_ref[...]                                 # (nW, n, 3C) f32
    outs = []
    for h in range(nh):
        q = qkv[:, :, h * dh:(h + 1) * dh] * scale
        k = qkv[:, :, c + h * dh:c + (h + 1) * dh]
        v = qkv[:, :, 2 * c + h * dh:2 * c + (h + 1) * dh]
        attn = jnp.einsum('bnd,bmd->bnm', q.astype(BF16), k.astype(BF16),
                          preferred_element_type=jnp.float32)
        attn = attn + bias_ref[h]
        if has_mask:
            attn = attn + mask
        mx = jnp.max(attn, axis=-1, keepdims=True)
        e = jnp.exp(attn - mx)
        p = e * pl.reciprocal(jnp.sum(e, axis=-1, keepdims=True), approx=True)
        o_h = jnp.einsum('bnm,bmd->bnd', p.astype(BF16), v.astype(BF16),
                         preferred_element_type=jnp.float32)
        outs.append(o_h)
    # one lane-contiguous store per grid step instead of nh strided lane slices
    o_ref[...] = jnp.concatenate(outs, axis=-1)


def window_attention(qkv, rel_bias, attn_mask, num_heads, scale, n_windows):
    """One grid step per image: all windows + all heads, q/k/v sliced in-kernel."""
    b_, n, c3 = qkv.shape
    c = c3 // 3
    dh = c // num_heads
    nb = b_ // n_windows
    has_mask = attn_mask is not None
    kern = functools.partial(_window_attn_kernel, nh=num_heads, dh=dh,
                             scale=scale, has_mask=has_mask)
    in_specs = [
        pl.BlockSpec((n_windows, n, c3), lambda i: (i, 0, 0)),
        pl.BlockSpec((num_heads, n, n), lambda i: (0, 0, 0)),
    ]
    args = [qkv.astype(F32), rel_bias.astype(F32)]
    if has_mask:
        in_specs.append(pl.BlockSpec((n_windows, n, n), lambda i: (0, 0, 0)))
        args.append(attn_mask.astype(F32))
    return pl.pallas_call(
        kern,
        out_shape=jax.ShapeDtypeStruct((b_, n, c), F32),
        grid=(nb,),
        in_specs=in_specs,
        out_specs=pl.BlockSpec((n_windows, n, c), lambda i: (i, 0, 0)),
        compiler_params=pltpu.CompilerParams(dimension_semantics=("parallel",)),
    )(*args)


def _channel_attention_kernel(x_ref, w1_ref, w2_ref, o_ref):
    x = x_ref[...]                                      # (B, L, C)
    nb = x.shape[0]
    avg = jnp.mean(x, axis=1)                           # (B, C) sublane reduce
    mx = jnp.max(x, axis=1)                             # (B, C)
    stats = jnp.concatenate([mx, avg], axis=0)          # (2B, C) -> one FC pass
    hdn = jnp.dot(stats.astype(BF16), w1_ref[...],
                  preferred_element_type=jnp.float32)
    hdn = jnp.maximum(hdn, 0.0)
    z = jnp.dot(hdn.astype(BF16), w2_ref[...],
                preferred_element_type=jnp.float32)     # (2B, C)
    logits = z[:nb] + z[nb:]                            # max_feature + avg_feature
    gate = pl.reciprocal(1.0 + jnp.exp(-logits), approx=True)   # sigmoid
    o_ref[...] = x * gate[:, None, :]


def channel_attention(x, w1, w2):
    b, l, c = x.shape
    cr = w1.shape[1]
    return pl.pallas_call(
        _channel_attention_kernel,
        out_shape=jax.ShapeDtypeStruct((b, l, c), F32),
        grid=(1,),
        in_specs=[
            pl.BlockSpec((b, l, c), lambda i: (0, 0, 0)),
            pl.BlockSpec((c, cr), lambda i: (0, 0)),
            pl.BlockSpec((cr, c), lambda i: (0, 0)),
        ],
        out_specs=pl.BlockSpec((b, l, c), lambda i: (0, 0, 0)),
        compiler_params=pltpu.CompilerParams(dimension_semantics=("parallel",)),
    )(x.astype(F32), w1, w2)


# --------------------------------------------------------------- conv helpers
def double_conv(x, p):
    x = conv3x3_bn_relu(x, p["w1"], p["s1"], p["t1"])
    x = conv3x3_bn_relu(x, p["w2"], p["s2"], p["t2"])
    return x


def conv2x2_s2(x, w4, bias):
    # non-overlapping 2x2 stride-2 conv == space-to-depth + linear (no expansion)
    b, h, w, c = x.shape
    xr = x.reshape(b, h // 2, 2, w // 2, 2, c).transpose(0, 1, 3, 2, 4, 5)
    xr = xr.reshape(b * (h // 2) * (w // 2), 4 * c)
    y = linear(xr, w4, bias)
    return y.reshape(b, h // 2, w // 2, -1)


def conv_transpose_2x2_s2(x, wt, bias4):
    b, h, w, cin = x.shape
    co = wt.shape[1] // 4
    y = linear(x.reshape(b * h * w, cin), wt, bias4)
    y = y.reshape(b, h, w, 2, 2, co).transpose(0, 1, 3, 2, 4, 5)
    return y.reshape(b, 2 * h, 2 * w, co)


def window_partition(x, ws):
    b, h, w, c = x.shape
    x = x.reshape(b, h // ws, ws, w // ws, ws, c)
    return x.transpose(0, 1, 3, 2, 4, 5).reshape(-1, ws, ws, c)


def window_reverse(windows, ws, h, w):
    b = windows.shape[0] // (h * w // ws // ws)
    x = windows.reshape(b, h // ws, w // ws, ws, ws, -1)
    return x.transpose(0, 1, 3, 2, 4, 5).reshape(b, h, w, -1)


# ------------------------------------------------------------------- modules
def swin_block(x, sp):
    b, l, c = x.shape
    h, w = sp["H"], sp["W"]
    ws, ss, nh = sp["ws"], sp["ss"], sp["nH"]
    dh = c // nh
    n = ws * ws
    nW = (h // ws) * (w // ws)

    xs = x.reshape(b, h, w, c)
    if ss > 0:
        xs = jnp.roll(xs, shift=(-ss, -ss), axis=(1, 2))
    xw = window_partition(xs, ws).reshape(b * nW * n, c)     # window/token layout of x

    # LN fused into qkv; q/k/v layout handled inside the attention kernel
    qkv = ln_linear(xw, sp["norm1_g"], sp["norm1_b"], sp["qkv_w"], sp["qkv_b"])
    attn = window_attention(qkv.reshape(b * nW, n, 3 * c),
                            sp["rel_bias"], sp["attn_mask"], nh, dh ** -0.5, nW)
    # proj + residual fused (shortcut is the same window-ordered x)
    yw = linear_residual(attn.reshape(b * nW * n, c), sp["proj_w"], sp["proj_b"], xw)

    y = window_reverse(yw.reshape(b * nW, ws, ws, c), ws, h, w)
    if ss > 0:
        y = jnp.roll(y, shift=(ss, ss), axis=(1, 2))
    x = y.reshape(b, l, c)

    x2d = x.reshape(b * l, c)
    hid = ln_linear(x2d, sp["norm2_g"], sp["norm2_b"], sp["fc1_w"], sp["fc1_b"], act="gelu")
    out = linear_residual(hid, sp["fc2_w"], sp["fc2_b"], x2d)
    return out.reshape(b, l, c)


def down_block(x_seq, p, res_in):
    b, hw, c = x_seq.shape
    x = x_seq.reshape(b, res_in, res_in, c)
    xd = conv2x2_s2(x, p["down_w"], p["down_b"])            # (B, r, r, c)
    r = res_in // 2
    xs = xd.reshape(b, r * r, c)
    chan = channel_attention(xs, p["ca_w1"], p["ca_w2"])
    msw = swin_block(xs, p["swin1"])
    smsw = swin_block(msw, p["swin2"])
    xsum = smsw + chan + xs
    return double_conv(xsum.reshape(b, r, r, c), p["dc"])    # (B, r, r, 2c)


def up_block(x1, x2, p):
    x1u = conv_transpose_2x2_s2(x1, p["wt"], p["bt"])
    dy = x2.shape[1] - x1u.shape[1]
    dx = x2.shape[2] - x1u.shape[2]
    x1u = jnp.pad(x1u, ((0, 0), (dy // 2, dy - dy // 2), (dx // 2, dx - dx // 2), (0, 0)))
    x = jnp.concatenate([x2, x1u], axis=-1)
    return double_conv(x, p["dc"])


# ------------------------------------------------------------ parameter init
class _KeyGen:
    def __init__(self, seed):
        self._key = jax.random.PRNGKey(seed)

    def __call__(self):
        self._key, sub = jax.random.split(self._key)
        return sub


def _normal(kg, shape, std=0.05):
    return std * jax.random.normal(kg(), shape, F32)


def init_double_conv(kg, cin, cout, cmid=None):
    cmid = cmid or cout

    def make(ci, co):
        w = _normal(kg, (3, 3, ci, co)).reshape(9, ci, co).astype(BF16)
        g = 1.0 + _normal(kg, (co,), 0.1)
        beta = _normal(kg, (co,), 0.1)
        mean = _normal(kg, (co,), 0.1)
        var = 1.0 + 0.1 * jnp.abs(jax.random.normal(kg(), (co,), F32))
        s = (g / jnp.sqrt(var + 1e-5)).astype(F32)          # fold eval-mode BN
        t = (beta - mean * s).astype(F32)
        return w, s, t

    w1, s1, t1 = make(cin, cmid)
    w2, s2, t2 = make(cmid, cout)
    return dict(w1=w1, s1=s1, t1=t1, w2=w2, s2=s2, t2=t2)


def _relative_position_index(ws):
    coords = np.stack(np.meshgrid(np.arange(ws), np.arange(ws), indexing="ij"))
    cf = coords.reshape(2, -1)
    rel = (cf[:, :, None] - cf[:, None, :]).transpose(1, 2, 0).astype(np.int64)
    rel[:, :, 0] += ws - 1
    rel[:, :, 1] += ws - 1
    rel[:, :, 0] *= 2 * ws - 1
    return rel.sum(-1)                                       # (ws*ws, ws*ws)


def _attn_mask(h, w, ws, ss):
    if ss == 0:
        return None
    img = np.zeros((1, h, w, 1), np.float32)
    cnt = 0
    for hs in (slice(0, -ws), slice(-ws, -ss), slice(-ss, None)):
        for wsl in (slice(0, -ws), slice(-ws, -ss), slice(-ss, None)):
            img[:, hs, wsl, :] = cnt
            cnt += 1
    mw = img.reshape(1, h // ws, ws, w // ws, ws, 1).transpose(0, 1, 3, 2, 4, 5)
    mw = mw.reshape(-1, ws * ws)
    am = mw[:, None, :] - mw[:, :, None]
    return jnp.asarray(np.where(am != 0, -100.0, 0.0).astype(np.float32))


def init_swin(kg, dim, res, window_size, shift_size, num_heads=4, mlp_ratio=4.0):
    h, w = res
    ws, ss = window_size, shift_size
    if min(h, w) <= ws:                 # same adjustment as SwinTransformerBlock
        ss = 0
        ws = min(h, w)
    assert 0 <= ss < ws
    n = ws * ws
    table = _normal(kg, ((2 * ws - 1) * (2 * ws - 1), num_heads), 0.02)
    idx = _relative_position_index(ws).reshape(-1)
    rel_bias = table[idx].reshape(n, n, num_heads).transpose(2, 0, 1)
    hidden = int(dim * mlp_ratio)
    return dict(
        H=h, W=w, ws=ws, ss=ss, nH=num_heads,
        norm1_g=1.0 + _normal(kg, (dim,), 0.05), norm1_b=_normal(kg, (dim,), 0.05),
        qkv_w=_normal(kg, (dim, 3 * dim)).astype(BF16), qkv_b=_normal(kg, (3 * dim,), 0.02),
        proj_w=_normal(kg, (dim, dim)).astype(BF16), proj_b=_normal(kg, (dim,), 0.02),
        rel_bias=rel_bias, attn_mask=_attn_mask(h, w, ws, ss),
        norm2_g=1.0 + _normal(kg, (dim,), 0.05), norm2_b=_normal(kg, (dim,), 0.05),
        fc1_w=_normal(kg, (dim, hidden)).astype(BF16), fc1_b=_normal(kg, (hidden,), 0.02),
        fc2_w=_normal(kg, (hidden, dim)).astype(BF16), fc2_b=_normal(kg, (dim,), 0.02),
    )


def init_down(kg, cin, cout, res, window_size, shift_size):
    return dict(
        down_w=_normal(kg, (2, 2, cin, cin)).reshape(4 * cin, cin).astype(BF16),
        down_b=_normal(kg, (cin,), 0.02),
        swin1=init_swin(kg, cin, res, window_size, 0),
        swin2=init_swin(kg, cin, res, window_size, shift_size),
        ca_w1=_normal(kg, (cin, cin // 4)).astype(BF16),
        ca_w2=_normal(kg, (cin // 4, cin)).astype(BF16),
        dc=init_double_conv(kg, cin, cout),
    )


def init_up(kg, cin, cout):
    co = cin // 2
    return dict(
        wt=_normal(kg, (cin, 2, 2, co)).reshape(cin, 4 * co).astype(BF16),
        bt=jnp.tile(_normal(kg, (co,), 0.02), 4),
        dc=init_double_conv(kg, cin, cout),
    )


def init_model(seed, in_channels, num_classes, base_c, img_size, window_size, shift_size):
    kg = _KeyGen(seed)
    h = img_size
    return dict(
        in_conv=init_double_conv(kg, in_channels, base_c),
        patch_w=_normal(kg, (in_channels, base_c)).astype(BF16),
        patch_b=_normal(kg, (base_c,), 0.02),
        down1=init_down(kg, base_c, base_c * 2, (h // 2, h // 2), window_size, shift_size),
        down2=init_down(kg, base_c * 2, base_c * 4, (h // 4, h // 4), window_size, shift_size),
        down3=init_down(kg, base_c * 4, base_c * 8, (h // 8, h // 8), window_size, shift_size),
        down4=init_down(kg, base_c * 8, base_c * 16, (h // 16, h // 16), window_size, shift_size),
        up1=init_up(kg, base_c * 16, base_c * 8),
        up2=init_up(kg, base_c * 8, base_c * 4),
        up3=init_up(kg, base_c * 4, base_c * 2),
        up4=init_up(kg, base_c * 2, base_c),
        out_w=_normal(kg, (base_c, num_classes)).astype(BF16),
        out_b=_normal(kg, (num_classes,), 0.02),
    )


# ------------------------------------------------------------------- forward
def swcatranunet_forward(params, x_nchw, base_c, num_classes):
    b, cin, h, w = x_nchw.shape
    x = jnp.transpose(x_nchw, (0, 2, 3, 1)).astype(F32)        # NHWC internal

    x1 = double_conv(x, params["in_conv"])                     # (B, H, W, bc)
    xe = linear(x.reshape(b * h * w, cin), params["patch_w"], params["patch_b"])
    xe = xe.reshape(b, h * w, base_c)                          # PatchEmbed (1x1 conv)

    x2 = down_block(xe, params["down1"], h)                    # (B, H/2,  W/2,  2bc)
    x3 = down_block(x2.reshape(b, (h // 2) ** 2, 2 * base_c), params["down2"], h // 2)
    x4 = down_block(x3.reshape(b, (h // 4) ** 2, 4 * base_c), params["down3"], h // 4)
    x5 = down_block(x4.reshape(b, (h // 8) ** 2, 8 * base_c), params["down4"], h // 8)

    u = up_block(x5, x4, params["up1"])
    u = up_block(u, x3, params["up2"])
    u = up_block(u, x2, params["up3"])
    u = up_block(u, x1, params["up4"])

    bb, hh, ww, cc = u.shape
    logits = linear(u.reshape(bb * hh * ww, cc), params["out_w"], params["out_b"])
    logits = logits.reshape(bb, hh, ww, num_classes)
    return jnp.transpose(logits, (0, 3, 1, 2))                 # NCHW, like PyTorch


# ---------------------------------------------------------------------- main
if __name__ == "__main__":
    # Small, self-consistent configuration (scaled-down SWCAtranunet):
    # input 32x32, base_c=16, window_size=4, shift_size=2 (shifted blocks get a mask).
    B, CIN, H, W = 2, 3, 32, 32
    NUM_CLASSES = 2
    BASE_C = 16

    params = init_model(seed=0, in_channels=CIN, num_classes=NUM_CLASSES,
                        base_c=BASE_C, img_size=H, window_size=4, shift_size=2)

    key = jax.random.PRNGKey(0)
    x = jax.random.normal(key, (B, CIN, H, W), F32)

    logits = swcatranunet_forward(params, x, BASE_C, NUM_CLASSES)
    logits = jax.block_until_ready(logits)

    assert logits.shape == (B, NUM_CLASSES, H, W), logits.shape
    assert bool(jnp.all(jnp.isfinite(logits)))
    print("KERNEL_OK")
</pallas_src>

<mosaic_0001>
module attributes {stable_mosaic.version = 11 : i64} {
  func.func @_conv3x3_kernel(%arg0: i32, %arg1: memref<1x1158x3xf32, #tpu.memory_space<vmem>>, %arg2: memref<9x3x16xbf16, #tpu.memory_space<vmem>>, %arg3: memref<1x16xf32, #tpu.memory_space<vmem>>, %arg4: memref<1x16xf32, #tpu.memory_space<vmem>>, %arg5: memref<1x1088x16xf32, #tpu.memory_space<vmem>>) attributes {dimension_semantics = [#tpu.dimension_semantics<parallel>], iteration_bounds = array<i64: 2>, scalar_prefetch = 0 : i64, scratch_operands = 0 : i64, tpu.core_type = #tpu.core_type<tc>, window_params = [{transform_indices = @transform_0, window_bounds = array<i64: 1, 1158, 3>}, {pipeline_mode = #tpu.pipeline_mode<synchronous>, transform_indices = @transform_1, window_bounds = array<i64: 9, 3, 16>}, {pipeline_mode = #tpu.pipeline_mode<synchronous>, transform_indices = @transform_2, window_bounds = array<i64: 1, 16>}, {pipeline_mode = #tpu.pipeline_mode<synchronous>, transform_indices = @transform_3, window_bounds = array<i64: 1, 16>}, {transform_indices = @transform_4, window_bounds = array<i64: 1, 1088, 16>}]} {
    %c0 = arith.constant 0 : index
    %c0_0 = arith.constant 0 : index
    %c0_1 = arith.constant 0 : index
    %0 = vector.load %arg1[%c0, %c0_0, %c0_1] : memref<1x1158x3xf32, #tpu.memory_space<vmem>>, vector<1x1088x3xf32>
    %1 = vector.shape_cast %0 : vector<1x1088x3xf32> to vector<1088x3xf32>
    %2 = arith.truncf %1 : vector<1088x3xf32> to vector<1088x3xbf16>
    %c0_2 = arith.constant 0 : index
    %c0_3 = arith.constant 0 : index
    %c0_4 = arith.constant 0 : index
    %3 = vector.load %arg2[%c0_2, %c0_3, %c0_4] : memref<9x3x16xbf16, #tpu.memory_space<vmem>>, vector<1x3x16xbf16>
    %4 = vector.shape_cast %3 : vector<1x3x16xbf16> to vector<3x16xbf16>
    %cst = arith.constant dense<0.000000e+00> : vector<1088x16xf32>
    %5 = tpu.matmul %2, %4, %cst {dimension_numbers = #tpu.dot_dimension_numbers<[1], [0], [0], [1], [0, 0, 1, 1], [], []>} : vector<1088x3xbf16>, vector<3x16xbf16>, vector<1088x16xf32> -> vector<1088x16xf32>
    %c0_5 = arith.constant 0 : index
    %c1 = arith.constant 1 : index
    %c0_6 = arith.constant 0 : index
    %6 = vector.load %arg1[%c0_5, %c1, %c0_6] : memref<1x1158x3xf32, #tpu.memory_space<vmem>>, vector<1x1088x3xf32>
    %7 = vector.shape_cast %6 : vector<1x1088x3xf32> to vector<1088x3xf32>
    %8 = arith.truncf %7 : vector<1088x3xf32> to vector<1088x3xbf16>
    %c1_7 = arith.constant 1 : index
    %c0_8 = arith.constant 0 : index
    %c0_9 = arith.constant 0 : index
    %9 = vector.load %arg2[%c1_7, %c0_8, %c0_9] : memref<9x3x16xbf16, #tpu.memory_space<vmem>>, vector<1x3x16xbf16>
    %10 = vector.shape_cast %9 : vector<1x3x16xbf16> to vector<3x16xbf16>
    %cst_10 = arith.constant dense<0.000000e+00> : vector<1088x16xf32>
    %11 = tpu.matmul %8, %10, %cst_10 {dimension_numbers = #tpu.dot_dimension_numbers<[1], [0], [0], [1], [0, 0, 1, 1], [], []>} : vector<1088x3xbf16>, vector<3x16xbf16>, vector<1088x16xf32> -> vector<1088x16xf32>
    %12 = arith.addf %5, %11 : vector<1088x16xf32>
    %c0_11 = arith.constant 0 : index
    %c2 = arith.constant 2 : index
    %c0_12 = arith.constant 0 : index
    %13 = vector.load %arg1[%c0_11, %c2, %c0_12] : memref<1x1158x3xf32, #tpu.memory_space<vmem>>, vector<1x1088x3xf32>
    %14 = vector.shape_cast %13 : vector<1x1088x3xf32> to vector<1088x3xf32>
    %15 = arith.truncf %14 : vector<1088x3xf32> to vector<1088x3xbf16>
    %c2_13 = arith.constant 2 : index
    %c0_14 = arith.constant 0 : index
    %c0_15 = arith.constant 0 : index
    %16 = vector.load %arg2[%c2_13, %c0_14, %c0_15] : memref<9x3x16xbf16, #tpu.memory_space<vmem>>, vector<1x3x16xbf16>
    %17 = vector.shape_cast %16 : vector<1x3x16xbf16> to vector<3x16xbf16>
    %cst_16 = arith.constant dense<0.000000e+00> : vector<1088x16xf32>
    %18 = tpu.matmul %15, %17, %cst_16 {dimension_numbers = #tpu.dot_dimension_numbers<[1], [0], [0], [1], [0, 0, 1, 1], [], []>} : vector<1088x3xbf16>, vector<3x16xbf16>, vector<1088x16xf32> -> vector<1088x16xf32>
    %19 = arith.addf %12, %18 : vector<1088x16xf32>
    %c0_17 = arith.constant 0 : index
    %c34 = arith.constant 34 : index
    %c0_18 = arith.constant 0 : index
    %20 = vector.load %arg1[%c0_17, %c34, %c0_18] : memref<1x1158x3xf32, #tpu.memory_space<vmem>>, vector<1x1088x3xf32>
    %21 = vector.shape_cast %20 : vector<1x1088x3xf32> to vector<1088x3xf32>
    %22 = arith.truncf %21 : vector<1088x3xf32> to vector<1088x3xbf16>
    %c3 = arith.constant 3 : index
    %c0_19 = arith.constant 0 : index
    %c0_20 = arith.constant 0 : index
    %23 = vector.load %arg2[%c3, %c0_19, %c0_20] : memref<9x3x16xbf16, #tpu.memory_space<vmem>>, vector<1x3x16xbf16>
    %24 = vector.shape_cast %23 : vector<1x3x16xbf16> to vector<3x16xbf16>
    %cst_21 = arith.constant dense<0.000000e+00> : vector<1088x16xf32>
    %25 = tpu.matmul %22, %24, %cst_21 {dimension_numbers = #tpu.dot_dimension_numbers<[1], [0], [0], [1], [0, 0, 1, 1], [], []>} : vector<1088x3xbf16>, vector<3x16xbf16>, vector<1088x16xf32> -> vector<1088x16xf32>
    %26 = arith.addf %19, %25 : vector<1088x16xf32>
    %c0_22 = arith.constant 0 : index
    %c35 = arith.constant 35 : index
    %c0_23 = arith.constant 0 : index
    %27 = vector.load %arg1[%c0_22, %c35, %c0_23] : memref<1x1158x3xf32, #tpu.memory_space<vmem>>, vector<1x1088x3xf32>
    %28 = vector.shape_cast %27 : vector<1x1088x3xf32> to vector<1088x3xf32>
    %29 = arith.truncf %28 : vector<1088x3xf32> to vector<1088x3xbf16>
    %c4 = arith.constant 4 : index
    %c0_24 = arith.constant 0 : index
    %c0_25 = arith.constant 0 : index
    %30 = vector.load %arg2[%c4, %c0_24, %c0_25] : memref<9x3x16xbf16, #tpu.memory_space<vmem>>, vector<1x3x16xbf16>
    %31 = vector.shape_cast %30 : vector<1x3x16xbf16> to vector<3x16xbf16>
    %cst_26 = arith.constant dense<0.000000e+00> : vector<1088x16xf32>
    %32 = tpu.matmul %29, %31, %cst_26 {dimension_numbers = #tpu.dot_dimension_numbers<[1], [0], [0], [1], [0, 0, 1, 1], [], []>} : vector<1088x3xbf16>, vector<3x16xbf16>, vector<1088x16xf32> -> vector<1088x16xf32>
    %33 = arith.addf %26, %32 : vector<1088x16xf32>
    %c0_27 = arith.constant 0 : index
    %c36 = arith.constant 36 : index
    %c0_28 = arith.constant 0 : index
    %34 = vector.load %arg1[%c0_27, %c36, %c0_28] : memref<1x1158x3xf32, #tpu.memory_space<vmem>>, vector<1x1088x3xf32>
    %35 = vector.shape_cast %34 : vector<1x1088x3xf32> to vector<1088x3xf32>
    %36 = arith.truncf %35 : vector<1088x3xf32> to vector<1088x3xbf16>
    %c5 = arith.constant 5 : index
    %c0_29 = arith.constant 0 : index
    %c0_30 = arith.constant 0 : index
    %37 = vector.load %arg2[%c5, %c0_29, %c0_30] : memref<9x3x16xbf16, #tpu.memory_space<vmem>>, vector<1x3x16xbf16>
    %38 = vector.shape_cast %37 : vector<1x3x16xbf16> to vector<3x16xbf16>
    %cst_31 = arith.constant dense<0.000000e+00> : vector<1088x16xf32>
    %39 = tpu.matmul %36, %38, %cst_31 {dimension_numbers = #tpu.dot_dimension_numbers<[1], [0], [0], [1], [0, 0, 1, 1], [], []>} : vector<1088x3xbf16>, vector<3x16xbf16>, vector<1088x16xf32> -> vector<1088x16xf32>
    %40 = arith.addf %33, %39 : vector<1088x16xf32>
    %c0_32 = arith.constant 0 : index
    %c68 = arith.constant 68 : index
    %c0_33 = arith.constant 0 : index
    %41 = vector.load %arg1[%c0_32, %c68, %c0_33] : memref<1x1158x3xf32, #tpu.memory_space<vmem>>, vector<1x1088x3xf32>
    %42 = vector.shape_cast %41 : vector<1x1088x3xf32> to vector<1088x3xf32>
    %43 = arith.truncf %42 : vector<1088x3xf32> to vector<1088x3xbf16>
    %c6 = arith.constant 6 : index
    %c0_34 = arith.constant 0 : index
    %c0_35 = arith.constant 0 : index
    %44 = vector.load %arg2[%c6, %c0_34, %c0_35] : memref<9x3x16xbf16, #tpu.memory_space<vmem>>, vector<1x3x16xbf16>
    %45 = vector.shape_cast %44 : vector<1x3x16xbf16> to vector<3x16xbf16>
    %cst_36 = arith.constant dense<0.000000e+00> : vector<1088x16xf32>
    %46 = tpu.matmul %43, %45, %cst_36 {dimension_numbers = #tpu.dot_dimension_numbers<[1], [0], [0], [1], [0, 0, 1, 1], [], []>} : vector<1088x3xbf16>, vector<3x16xbf16>, vector<1088x16xf32> -> vector<1088x16xf32>
    %47 = arith.addf %40, %46 : vector<1088x16xf32>
    %c0_37 = arith.constant 0 : index
    %c69 = arith.constant 69 : index
    %c0_38 = arith.constant 0 : index
    %48 = vector.load %arg1[%c0_37, %c69, %c0_38] : memref<1x1158x3xf32, #tpu.memory_space<vmem>>, vector<1x1088x3xf32>
    %49 = vector.shape_cast %48 : vector<1x1088x3xf32> to vector<1088x3xf32>
    %50 = arith.truncf %49 : vector<1088x3xf32> to vector<1088x3xbf16>
    %c7 = arith.constant 7 : index
    %c0_39 = arith.constant 0 : index
    %c0_40 = arith.constant 0 : index
    %51 = vector.load %arg2[%c7, %c0_39, %c0_40] : memref<9x3x16xbf16, #tpu.memory_space<vmem>>, vector<1x3x16xbf16>
    %52 = vector.shape_cast %51 : vector<1x3x16xbf16> to vector<3x16xbf16>
    %cst_41 = arith.constant dense<0.000000e+00> : vector<1088x16xf32>
    %53 = tpu.matmul %50, %52, %cst_41 {dimension_numbers = #tpu.dot_dimension_numbers<[1], [0], [0], [1], [0, 0, 1, 1], [], []>} : vector<1088x3xbf16>, vector<3x16xbf16>, vector<1088x16xf32> -> vector<1088x16xf32>
    %54 = arith.addf %47, %53 : vector<1088x16xf32>
    %c0_42 = arith.constant 0 : index
    %c70 = arith.constant 70 : index
    %c0_43 = arith.constant 0 : index
    %55 = vector.load %arg1[%c0_42, %c70, %c0_43] : memref<1x1158x3xf32, #tpu.memory_space<vmem>>, vector<1x1088x3xf32>
    %56 = vector.shape_cast %55 : vector<1x1088x3xf32> to vector<1088x3xf32>
    %57 = arith.truncf %56 : vector<1088x3xf32> to vector<1088x3xbf16>
    %c8 = arith.constant 8 : index
    %c0_44 = arith.constant 0 : index
    %c0_45 = arith.constant 0 : index
    %58 = vector.load %arg2[%c8, %c0_44, %c0_45] : memref<9x3x16xbf16, #tpu.memory_space<vmem>>, vector<1x3x16xbf16>
    %59 = vector.shape_cast %58 : vector<1x3x16xbf16> to vector<3x16xbf16>
    %cst_46 = arith.constant dense<0.000000e+00> : vector<1088x16xf32>
    %60 = tpu.matmul %57, %59, %cst_46 {dimension_numbers = #tpu.dot_dimension_numbers<[1], [0], [0], [1], [0, 0, 1, 1], [], []>} : vector<1088x3xbf16>, vector<3x16xbf16>, vector<1088x16xf32> -> vector<1088x16xf32>
    %61 = arith.addf %54, %60 : vector<1088x16xf32>
    %c0_47 = arith.constant 0 : index
    %c0_48 = arith.constant 0 : index
    %62 = vector.load %arg3[%c0_47, %c0_48] : memref<1x16xf32, #tpu.memory_space<vmem>>, vector<1x16xf32>
    %63 = vector.broadcast %62 : vector<1x16xf32> to vector<1088x16xf32>
    %64 = arith.mulf %61, %63 : vector<1088x16xf32>
    %c0_49 = arith.constant 0 : index
    %c0_50 = arith.constant 0 : index
    %65 = vector.load %arg4[%c0_49, %c0_50] : memref<1x16xf32, #tpu.memory_space<vmem>>, vector<1x16xf32>
    %66 = vector.broadcast %65 : vector<1x16xf32> to vector<1088x16xf32>
    %67 = arith.addf %64, %66 : vector<1088x16xf32>
    %cst_51 = arith.constant 0.000000e+00 : f32
    %68 = vector.broadcast %cst_51 : f32 to vector<1088x16xf32>
    %69 = arith.maximumf %67, %68 : vector<1088x16xf32>
    %c0_52 = arith.constant 0 : index
    %c0_53 = arith.constant 0 : index
    %c0_54 = arith.constant 0 : index
    %70 = vector.load %arg5[%c0_52, %c0_53, %c0_54] : memref<1x1088x16xf32, #tpu.memory_space<vmem>>, vector<1x1088x16xf32>
    %71 = vector.shape_cast %70 : vector<1x1088x16xf32> to vector<1088x16xf32>
    %72 = vector.shape_cast %69 : vector<1088x16xf32> to vector<1x1088x16xf32>
    tpu.vector_store %arg5[%c0_52, %c0_53, %c0_54], %72 {strides = array<i32>} : memref<1x1088x16xf32, #tpu.memory_space<vmem>>, vector<1x1088x16xf32>,
    return
  }
  func.func @transform_0(%arg0: i32) -> (i32, i32, i32) {
    %c0_i32 = arith.constant 0 : i32
    %c0_i32_0 = arith.constant 0 : i32
    %c0_i32_1 = arith.constant 0 : i32
    return %arg0, %c0_i32, %c0_i32_0 : i32, i32, i32
  }
  func.func @transform_1(%arg0: i32) -> (i32, i32, i32) {
    %c0_i32 = arith.constant 0 : i32
    %c0_i32_0 = arith.constant 0 : i32
    %c0_i32_1 = arith.constant 0 : i32
    %c0_i32_2 = arith.constant 0 : i32
    return %c0_i32, %c0_i32_0, %c0_i32_1 : i32, i32, i32
  }
  func.func @transform_2(%arg0: i32) -> (i32, i32) {
    %c0_i32 = arith.constant 0 : i32
    %c0_i32_0 = arith.constant 0 : i32
    %c0_i32_1 = arith.constant 0 : i32
    return %c0_i32, %c0_i32_0 : i32, i32
  }
  func.func @transform_3(%arg0: i32) -> (i32, i32) {
    %c0_i32 = arith.constant 0 : i32
    %c0_i32_0 = arith.constant 0 : i32
    %c0_i32_1 = arith.constant 0 : i32
    return %c0_i32, %c0_i32_0 : i32, i32
  }
  func.func @transform_4(%arg0: i32) -> (i32, i32, i32) {
    %c0_i32 = arith.constant 0 : i32
    %c0_i32_0 = arith.constant 0 : i32
    %c0_i32_1 = arith.constant 0 : i32
    return %arg0, %c0_i32, %c0_i32_0 : i32, i32, i32
  }
}

</mosaic_0001>

<llo_original>
// kernel: tpu_custom_call.1
$region0: #{tpu_custom_call.1}
  #allocation0 [shape = 'u32[]', space=smem, size = 0x4, offset = 0x4, fixed_abs, tag = 'smem constant byte address 0x4 - core index']
  #allocation1 [shape = 'u32[72,128]{1,0:T(1,128)}', space=vmem, size = 0x9000, scoped, tag = 'internal scratch']
  %s0 = inlined_call_operand.vmem [shape: f32[2,1158,3], index: 0, kind: input, shape index: {}]
  %s1 = inlined_call_operand.vmem [shape: bf16[9,3,16], index: 1, kind: input, shape index: {}]
  %s2 = inlined_call_operand.vmem [shape: f32[1,16], index: 2, kind: input, shape index: {}]
  %s3 = inlined_call_operand.vmem [shape: f32[1,16], index: 3, kind: input, shape index: {}]
  %s4 = inlined_call_operand.vmem [shape: f32[2,1088,16], index: 4, kind: output, shape index: {}]
  %s5 = sld [smem:[#allocation0]]
  $region49: #{tpu_custom_call.1} parent=0
    _
  %s7 = ssub.s32 1, %s5
  %s8 = scalar_select 0, %s7, %s5
  loop: start=0, step=1, limit=4
  $region2: #{tpu_custom_call.1} parent=0 // loop_pre_header
    _
  $region3: #{tpu_custom_call.1} parent=0 // loop_header
    %s10 = sphi 0, %s14
    %p11 = scmp.ge.s32.totalorder %s10, 4
    %s20 = sphi 0, %s22
    %s23 = sphi 0, %s20
    %s24 = sphi 0, %s23
    %s40 = sphi 0, %s24
    %s44 = sphi 0, %s44
    %s46 = sphi 0, %s44
    %s47 = sphi 0, %s46
    %s61 = sphi 0, %s47
    %s65 = sphi 0, %s65
    %s67 = sphi 0, %s65
    %s68 = sphi 0, %s67
    %s82 = sphi 0, %s68
    %s86 = sphi 0, %s86
    %s88 = sphi 0, %s86
    %s89 = sphi 0, %s88
    %s103 = sphi 0, %s89
    %s109 = sphi 0, %s111
    %s112 = sphi 0, %s109
    %s113 = sphi 0, %s112
    %s129 = sphi 0, %s113
  $region4: #{tpu_custom_call.1} parent=0 // loop_header_branch
    %13 = sbr.rel (%p11) target = $region8
  $region5: #{tpu_custom_call.1} parent=0 // loop_body
    %s15 = ssub.s32 %s10, 1
    %s16 = ssub.s32 %s10, 2
    %s17 = sadd.s32 %s10, 1
    %s18 = ssub.s32 %s10, %s17
    %p19 = scmp.eq.s32.totalorder %s18, 0
    %s21 = sadd.s32 %s20, 1
    %s22 = scalar_select %p19, %s20, %s21
    %p25 = pneg %p19
    %p26 = scmp.eq.s32.totalorder %s10, 1
    %p27 = por %p25, %p26
    %p28 = scmp.ne.s32.totalorder %s20, %s23
    %p29 = scmp.eq.s32.totalorder %s10, 0
    %p30 = por %p28, %p29
    %p31 = scmp.ne.s32.totalorder %s20, %s23
    %p32 = scmp.eq.s32.totalorder %s15, 1
    %p33 = por %p31, %p32
    %p34 = scmp.ne.s32.totalorder %s23, %s24
    %p35 = scmp.eq.s32.totalorder %s15, 0
    %p36 = por %p34, %p35
    %p37 = scmp.ne.s32.totalorder %s23, %s24
    %p38 = scmp.eq.s32.totalorder %s16, 1
    %p39 = por %p37, %p38
    %p41 = scmp.ne.s32.totalorder %s24, %s40
    %p42 = scmp.eq.s32.totalorder %s16, 0
    %p43 = por %p41, %p42
    %s45 = sadd.s32 %s44, 1
    %p48 = scmp.eq.s32.totalorder %s10, 1
    %p49 = scmp.ne.s32.totalorder %s44, %s46
    %p50 = scmp.eq.s32.totalorder %s10, 0
    %p51 = por %p49, %p50
    %p52 = scmp.ne.s32.totalorder %s44, %s46
    %p53 = scmp.eq.s32.totalorder %s15, 1
    %p54 = por %p52, %p53
    %p55 = scmp.ne.s32.totalorder %s46, %s47
    %p56 = scmp.eq.s32.totalorder %s15, 0
    %p57 = por %p55, %p56
    %p58 = scmp.ne.s32.totalorder %s46, %s47
    %p59 = scmp.eq.s32.totalorder %s16, 1
    %p60 = por %p58, %p59
    %p62 = scmp.ne.s32.totalorder %s47, %s61
    %p63 = scmp.eq.s32.totalorder %s16, 0
    %p64 = por %p62, %p63
    %s66 = sadd.s32 %s65, 1
    %p69 = scmp.eq.s32.totalorder %s10, 1
    %p70 = scmp.ne.s32.totalorder %s65, %s67
    %p71 = scmp.eq.s32.totalorder %s10, 0
    %p72 = por %p70, %p71
    %p73 = scmp.ne.s32.totalorder %s65, %s67
    %p74 = scmp.eq.s32.totalorder %s15, 1
    %p75 = por %p73, %p74
    %p76 = scmp.ne.s32.totalorder %s67, %s68
    %p77 = scmp.eq.s32.totalorder %s15, 0
    %p78 = por %p76, %p77
    %p79 = scmp.ne.s32.totalorder %s67, %s68
    %p80 = scmp.eq.s32.totalorder %s16, 1
    %p81 = por %p79, %p80
    %p83 = scmp.ne.s32.totalorder %s68, %s82
    %p84 = scmp.eq.s32.totalorder %s16, 0
    %p85 = por %p83, %p84
    %s87 = sadd.s32 %s86, 1
    %p90 = scmp.eq.s32.totalorder %s10, 1
    %p91 = scmp.ne.s32.totalorder %s86, %s88
    %p92 = scmp.eq.s32.totalorder %s10, 0
    %p93 = por %p91, %p92
    %p94 = scmp.ne.s32.totalorder %s86, %s88
    %p95 = scmp.eq.s32.totalorder %s15, 1
    %p96 = por %p94, %p95
    %p97 = scmp.ne.s32.totalorder %s88, %s89
    %p98 = scmp.eq.s32.totalorder %s15, 0
    %p99 = por %p97, %p98
    %p100 = scmp.ne.s32.totalorder %s88, %s89
    %p101 = scmp.eq.s32.totalorder %s16, 1
    %p102 = por %p100, %p101
    %p104 = scmp.ne.s32.totalorder %s89, %s103
    %p105 = scmp.eq.s32.totalorder %s16, 0
    %p106 = por %p104, %p105
    %s107 = ssub.s32 %s10, %s17
    %p108 = scmp.eq.s32.totalorder %s107, 0
    %s110 = sadd.s32 %s109, 1
    %s111 = scalar_select %p108, %s109, %s110
    %p114 = pneg %p108
    %p115 = scmp.eq.s32.totalorder %s10, 1
    %p116 = por %p114, %p115
    %p117 = scmp.ne.s32.totalorder %s109, %s112
    %p118 = scmp.eq.s32.totalorder %s10, 0
    %p119 = por %p117, %p118
    %p120 = scmp.ne.s32.totalorder %s109, %s112
    %p121 = scmp.eq.s32.totalorder %s15, 1
    %p122 = por %p120, %p121
    %p123 = scmp.ne.s32.totalorder %s112, %s113
    %p124 = scmp.eq.s32.totalorder %s15, 0
    %p125 = por %p123, %p124
    %p126 = scmp.ne.s32.totalorder %s112, %s113
    %p127 = scmp.eq.s32.totalorder %s16, 1
    %p128 = por %p126, %p127
    %p130 = scmp.ne.s32.totalorder %s113, %s129
    %p131 = scmp.eq.s32.totalorder %s16, 0
    %p132 = por %p130, %p131
    %p133 = scmp.le.s32.totalorder 1, %s10
    %p134 = scmp.lt.s32.totalorder %s10, 3
    %p135 = pnand %p133, %p134
    %p136 = pneg %p135
    // Predicated region
    $region9: #{tpu_custom_call.1} parent=5 // pred_check
      _
    $region10: #{tpu_custom_call.1} parent=5 // pred_check_branch
      %138 = sbr.rel (%p135) target = $region12
    $region11: #{tpu_custom_call.1} parent=5 // pred_region
      %s139 = ssub.s32 %s10, 1
      // Predicated region
      $region13: #{tpu_custom_call.1} parent=11 // pred_check
        %p140 = pneg %p57
      $region14: #{tpu_custom_call.1} parent=11 // pred_check_branch
        %142 = sbr.rel (%p140) target = $region16
      $region15: #{tpu_custom_call.1} parent=11 // pred_region
        _
      $region16: #{tpu_custom_call.1} parent=11 // pred_fallthru
        _
      // Predicated region
      $region17: #{tpu_custom_call.1} parent=11 // pred_check
        %p143 = pneg %p78
      $region18: #{tpu_custom_call.1} parent=11 // pred_check_branch
        %145 = sbr.rel (%p143) target = $region20
      $region19: #{tpu_custom_call.1} parent=11 // pred_region
        _
      $region20: #{tpu_custom_call.1} parent=11 // pred_fallthru
        _
      // Predicated region
      $region21: #{tpu_custom_call.1} parent=11 // pred_check
        %p146 = pneg %p99
      $region22: #{tpu_custom_call.1} parent=11 // pred_check_branch
        %148 = sbr.rel (%p146) target = $region24
      $region23: #{tpu_custom_call.1} parent=11 // pred_region
        _
      $region24: #{tpu_custom_call.1} parent=11 // pred_fallthru
        _
    $region12: #{tpu_custom_call.1} parent=5 // pred_fallthru
      _
    %p149 = scmp.lt.s32.totalorder %s10, 2
    // Predicated region
    $region25: #{tpu_custom_call.1} parent=5 // pred_check
      %p150 = pneg %p149
    $region26: #{tpu_custom_call.1} parent=5 // pred_check_branch
      %152 = sbr.rel (%p150) target = $region28
    $region27: #{tpu_custom_call.1} parent=5 // pred_region
      // Predicated region
      $region29: #{tpu_custom_call.1} parent=27 // pred_check
        %p153 = pneg %p30
      $region30: #{tpu_custom_call.1} parent=27 // pred_check_branch
        %155 = sbr.rel (%p153) target = $region32
      $region31: #{tpu_custom_call.1} parent=27 // pred_region
        %p156 = scmp.lt.s32.totalorder %s10, 1
        %s157 = scalar_select %p156, %s10, 1
        %s158 = smul.addr %s157, 145
        %s159 = smul.addr %s158, 8
        %s160 = scalar_lea.vmem %s0, %s159
      $region32: #{tpu_custom_call.1} parent=27 // pred_fallthru
        _
    $region28: #{tpu_custom_call.1} parent=5 // pred_fallthru
      _
    %p161 = scmp.le.s32.totalorder 1, %s10
    %p162 = scmp.lt.s32.totalorder %s10, 3
    %p163 = pnand %p161, %p162
    %p164 = pneg %p163
    // Predicated region
    $region33: #{tpu_custom_call.1} parent=5 // pred_check
      _
    $region34: #{tpu_custom_call.1} parent=5 // pred_check_branch
      %166 = sbr.rel (%p163) target = $region36
    $region35: #{tpu_custom_call.1} parent=5 // pred_region
      %s167 = ssub.s32 %s10, 1
      %p168 = scmp.lt.s32.totalorder %s15, 1
      %s169 = scalar_select %p168, %s15, 1
      %s170 = smul.addr %s169, 145
      %s171 = smul.addr %s170, 8
      %s172 = scalar_lea.vmem %s0, %s171
      %p173 = pneg %p36
      %p174 = pneg %p33
      %p175 = pneg %p57
      %p176 = pneg %p54
      %p177 = pneg %p78
      %p178 = pneg %p75
      %p179 = pneg %p99
      %p180 = pneg %p96
      %p181 = pneg %p125
      %p182 = pneg %p122
      %p183 = scmp.lt.s32.totalorder %s15, 1
      %s184 = scalar_select %p183, %s15, 1
      %s185 = smul.addr %s184, 136
      %s186 = smul.addr %s185, 8
      %s187 = scalar_lea.vmem %s4, %s186
      %p188 = scmp.lt.s32.totalorder %s15, 1
      %s189 = scalar_select %p188, %s15, 1
      %s190 = smul.addr %s189, 145
      %s191 = smul.addr %s190, 8
      %s192 = scalar_lea.vmem %s0, %s191
      %p193 = scmp.lt.s32.totalorder %s15, 1
      %s194 = scalar_select %p193, %s15, 1
      %s195 = smul.addr %s194, 136
      %s196 = smul.addr %s195, 8
      %s197 = scalar_lea.vmem %s4, %s196
      %v199 = vld [vmem:[%s192] sm:$0xff]
      %v200 = vld [vmem:[%s192 + $0x8] sm:$0xff]
      %v201 = vld [vmem:[%s192 + $0x10] sm:$0xff]
      %v202 = vld [vmem:[%s192 + $0x18] sm:$0xff]
      %v203 = vld [vmem:[%s192 + $0x20] sm:$0xff]
      %v204 = vld [vmem:[%s192 + $0x28] sm:$0xff]
      %v205 = vld [vmem:[%s192 + $0x30] sm:$0xff]
      %v206 = vld [vmem:[%s192 + $0x38] sm:$0xff]
      %v207 = vld [vmem:[%s192 + $0x40] sm:$0xff]
      %v208 = vld [vmem:[%s192 + $0x48] sm:$0xff]
      %v209 = vld [vmem:[%s192 + $0x50] sm:$0xff]
      %v210 = vld [vmem:[%s192 + $0x58] sm:$0xff]
      %v211 = vld [vmem:[%s192 + $0x60] sm:$0xff]
      %v212 = vld [vmem:[%s192 + $0x68] sm:$0xff]
      %v213 = vld [vmem:[%s192 + $0x70] sm:$0xff]
      %v214 = vld [vmem:[%s192 + $0x78] sm:$0xff]
      %v215 = vld [vmem:[%s192 + $0x80] sm:$0xff]
      %v216 = vld [vmem:[%s192 + $0x88] sm:$0xff]
      %v217 = vld [vmem:[%s192 + $0x90] sm:$0xff]
      %v218 = vld [vmem:[%s192 + $0x98] sm:$0xff]
      %v219 = vld [vmem:[%s192 + $0xa0] sm:$0xff]
      %v220 = vld [vmem:[%s192 + $0xa8] sm:$0xff]
      %v221 = vld [vmem:[%s192 + $0xb0] sm:$0xff]
      %v222 = vld [vmem:[%s192 + $0xb8] sm:$0xff]
      %v223 = vld [vmem:[%s192 + $0xc0] sm:$0xff]
      %v224 = vld [vmem:[%s192 + $0xc8] sm:$0xff]
      %v225 = vld [vmem:[%s192 + $0xd0] sm:$0xff]
      %v226 = vld [vmem:[%s192 + $0xd8] sm:$0xff]
      %v227 = vld [vmem:[%s192 + $0xe0] sm:$0xff]
      %v228 = vld [vmem:[%s192 + $0xe8] sm:$0xff]
      %v229 = vld [vmem:[%s192 + $0xf0] sm:$0xff]
      %v230 = vld [vmem:[%s192 + $0xf8] sm:$0xff]
      %v231 = vld [vmem:[%s192 + $0x100] sm:$0xff]
      %v232 = vld [vmem:[%s192 + $0x108] sm:$0xff]
      %v233 = vld [vmem:[%s192 + $0x110] sm:$0xff]
      %v234 = vld [vmem:[%s192 + $0x118] sm:$0xff]
      %v235 = vld [vmem:[%s192 + $0x120] sm:$0xff]
      %v236 = vld [vmem:[%s192 + $0x128] sm:$0xff]
      %v237 = vld [vmem:[%s192 + $0x130] sm:$0xff]
      %v238 = vld [vmem:[%s192 + $0x138] sm:$0xff]
      %v239 = vld [vmem:[%s192 + $0x140] sm:$0xff]
      %v240 = vld [vmem:[%s192 + $0x148] sm:$0xff]
      %v241 = vld [vmem:[%s192 + $0x150] sm:$0xff]
      %v242 = vld [vmem:[%s192 + $0x158] sm:$0xff]
      %v243 = vld [vmem:[%s192 + $0x160] sm:$0xff]
      %v244 = vld [vmem:[%s192 + $0x168] sm:$0xff]
      %v245 = vld [vmem:[%s192 + $0x170] sm:$0xff]
      %v246 = vld [vmem:[%s192 + $0x178] sm:$0xff]
      %v247 = vld [vmem:[%s192 + $0x180] sm:$0xff]
      %v248 = vld [vmem:[%s192 + $0x188] sm:$0xff]
      %v249 = vld [vmem:[%s192 + $0x190] sm:$0xff]
      %v250 = vld [vmem:[%s192 + $0x198] sm:$0xff]
      %v251 = vld [vmem:[%s192 + $0x1a0] sm:$0xff]
      %v252 = vld [vmem:[%s192 + $0x1a8] sm:$0xff]
      %v253 = vld [vmem:[%s192 + $0x1b0] sm:$0xff]
      %v254 = vld [vmem:[%s192 + $0x1b8] sm:$0xff]
      %v255 = vld [vmem:[%s192 + $0x1c0] sm:$0xff]
      %v256 = vld [vmem:[%s192 + $0x1c8] sm:$0xff]
      %v257 = vld [vmem:[%s192 + $0x1d0] sm:$0xff]
      %v258 = vld [vmem:[%s192 + $0x1d8] sm:$0xff]
      %v259 = vld [vmem:[%s192 + $0x1e0] sm:$0xff]
      %v260 = vld [vmem:[%s192 + $0x1e8] sm:$0xff]
      %v261 = vld [vmem:[%s192 + $0x1f0] sm:$0xff]
      %v262 = vld [vmem:[%s192 + $0x1f8] sm:$0xff]
      %v263 = vld [vmem:[%s192 + $0x200] sm:$0xff]
      %v264 = vld [vmem:[%s192 + $0x208] sm:$0xff]
      %v265 = vld [vmem:[%s192 + $0x210] sm:$0xff]
      %v266 = vld [vmem:[%s192 + $0x218] sm:$0xff]
      %v267 = vld [vmem:[%s192 + $0x220] sm:$0xff]
      %v268 = vld [vmem:[%s192 + $0x228] sm:$0xff]
      %v269 = vld [vmem:[%s192 + $0x230] sm:$0xff]
      %v270 = vld [vmem:[%s192 + $0x238] sm:$0xff]
      %v271 = vld [vmem:[%s192 + $0x240] sm:$0xff]
      %v272 = vld [vmem:[%s192 + $0x248] sm:$0xff]
      %v273 = vld [vmem:[%s192 + $0x250] sm:$0xff]
      %v274 = vld [vmem:[%s192 + $0x258] sm:$0xff]
      %v275 = vld [vmem:[%s192 + $0x260] sm:$0xff]
      %v276 = vld [vmem:[%s192 + $0x268] sm:$0xff]
      %v277 = vld [vmem:[%s192 + $0x270] sm:$0xff]
      %v278 = vld [vmem:[%s192 + $0x278] sm:$0xff]
      %v279 = vld [vmem:[%s192 + $0x280] sm:$0xff]
      %v280 = vld [vmem:[%s192 + $0x288] sm:$0xff]
      %v281 = vld [vmem:[%s192 + $0x290] sm:$0xff]
      %v282 = vld [vmem:[%s192 + $0x298] sm:$0xff]
      %v283 = vld [vmem:[%s192 + $0x2a0] sm:$0xff]
      %v284 = vld [vmem:[%s192 + $0x2a8] sm:$0xff]
      %v285 = vld [vmem:[%s192 + $0x2b0] sm:$0xff]
      %v286 = vld [vmem:[%s192 + $0x2b8] sm:$0xff]
      %v287 = vld [vmem:[%s192 + $0x2c0] sm:$0xff]
      %v288 = vld [vmem:[%s192 + $0x2c8] sm:$0xff]
      %v289 = vld [vmem:[%s192 + $0x2d0] sm:$0xff]
      %v290 = vld [vmem:[%s192 + $0x2d8] sm:$0xff]
      %v291 = vld [vmem:[%s192 + $0x2e0] sm:$0xff]
      %v292 = vld [vmem:[%s192 + $0x2e8] sm:$0xff]
      %v293 = vld [vmem:[%s192 + $0x2f0] sm:$0xff]
      %v294 = vld [vmem:[%s192 + $0x2f8] sm:$0xff]
      %v295 = vld [vmem:[%s192 + $0x300] sm:$0xff]
      %v296 = vld [vmem:[%s192 + $0x308] sm:$0xff]
      %v297 = vld [vmem:[%s192 + $0x310] sm:$0xff]
      %v298 = vld [vmem:[%s192 + $0x318] sm:$0xff]
      %v299 = vld [vmem:[%s192 + $0x320] sm:$0xff]
      %v300 = vld [vmem:[%s192 + $0x328] sm:$0xff]
      %v301 = vld [vmem:[%s192 + $0x330] sm:$0xff]
      %v302 = vld [vmem:[%s192 + $0x338] sm:$0xff]
      %v303 = vld [vmem:[%s192 + $0x340] sm:$0xff]
      %v304 = vld [vmem:[%s192 + $0x348] sm:$0xff]
      %v305 = vld [vmem:[%s192 + $0x350] sm:$0xff]
      %v306 = vld [vmem:[%s192 + $0x358] sm:$0xff]
      %v307 = vld [vmem:[%s192 + $0x360] sm:$0xff]
      %v308 = vld [vmem:[%s192 + $0x368] sm:$0xff]
      %v309 = vld [vmem:[%s192 + $0x370] sm:$0xff]
      %v310 = vld [vmem:[%s192 + $0x378] sm:$0xff]
      %v311 = vld [vmem:[%s192 + $0x380] sm:$0xff]
      %v312 = vld [vmem:[%s192 + $0x388] sm:$0xff]
      %v313 = vld [vmem:[%s192 + $0x390] sm:$0xff]
      %v314 = vld [vmem:[%s192 + $0x398] sm:$0xff]
      %v315 = vld [vmem:[%s192 + $0x3a0] sm:$0xff]
      %v316 = vld [vmem:[%s192 + $0x3a8] sm:$0xff]
      %v317 = vld [vmem:[%s192 + $0x3b0] sm:$0xff]
      %v318 = vld [vmem:[%s192 + $0x3b8] sm:$0xff]
      %v319 = vld [vmem:[%s192 + $0x3c0] sm:$0xff]
      %v320 = vld [vmem:[%s192 + $0x3c8] sm:$0xff]
      %v321 = vld [vmem:[%s192 + $0x3d0] sm:$0xff]
      %v322 = vld [vmem:[%s192 + $0x3d8] sm:$0xff]
      %v323 = vld [vmem:[%s192 + $0x3e0] sm:$0xff]
      %v324 = vld [vmem:[%s192 + $0x3e8] sm:$0xff]
      %v325 = vld [vmem:[%s192 + $0x3f0] sm:$0xff]
      %v326 = vld [vmem:[%s192 + $0x3f8] sm:$0xff]
      %v327 = vld [vmem:[%s192 + $0x400] sm:$0xff]
      %v328 = vld [vmem:[%s192 + $0x408] sm:$0xff]
      %v329 = vld [vmem:[%s192 + $0x410] sm:$0xff]
      %v330 = vld [vmem:[%s192 + $0x418] sm:$0xff]
      %v331 = vld [vmem:[%s192 + $0x420] sm:$0xff]
      %v332 = vld [vmem:[%s192 + $0x428] sm:$0xff]
      %v333 = vld [vmem:[%s192 + $0x430] sm:$0xff]
      %v334 = vld [vmem:[%s192 + $0x438] sm:$0xff]
      %v335 = vpack.c.bf16 %v200, %v199
      %v336 = vpack.c.bf16 %v202, %v201
      %v337 = vpack.c.bf16 %v204, %v203
      %v338 = vpack.c.bf16 %v206, %v205
      %v339 = vpack.c.bf16 %v208, %v207
      %v340 = vpack.c.bf16 %v210, %v209
      %v341 = vpack.c.bf16 %v212, %v211
      %v342 = vpack.c.bf16 %v214, %v213
      %v343 = vpack.c.bf16 %v216, %v215
      %v344 = vpack.c.bf16 %v218, %v217
      %v345 = vpack.c.bf16 %v220, %v219
      %v346 = vpack.c.bf16 %v222, %v221
      %v347 = vpack.c.bf16 %v224, %v223
      %v348 = vpack.c.bf16 %v226, %v225
      %v349 = vpack.c.bf16 %v228, %v227
      %v350 = vpack.c.bf16 %v230, %v229
      %v351 = vpack.c.bf16 %v232, %v231
      %v352 = vpack.c.bf16 %v234, %v233
      %v353 = vpack.c.bf16 %v236, %v235
      %v354 = vpack.c.bf16 %v238, %v237
      %v355 = vpack.c.bf16 %v240, %v239
      %v356 = vpack.c.bf16 %v242, %v241
      %v357 = vpack.c.bf16 %v244, %v243
      %v358 = vpack.c.bf16 %v246, %v245
      %v359 = vpack.c.bf16 %v248, %v247
      %v360 = vpack.c.bf16 %v250, %v249
      %v361 = vpack.c.bf16 %v252, %v251
      %v362 = vpack.c.bf16 %v254, %v253
      %v363 = vpack.c.bf16 %v256, %v255
      %v364 = vpack.c.bf16 %v258, %v257
      %v365 = vpack.c.bf16 %v260, %v259
      %v366 = vpack.c.bf16 %v262, %v261
      %v367 = vpack.c.bf16 %v264, %v263
      %v368 = vpack.c.bf16 %v266, %v265
      %v369 = vpack.c.bf16 %v268, %v267
      %v370 = vpack.c.bf16 %v270, %v269
      %v371 = vpack.c.bf16 %v272, %v271
      %v372 = vpack.c.bf16 %v274, %v273
      %v373 = vpack.c.bf16 %v276, %v275
      %v374 = vpack.c.bf16 %v278, %v277
      %v375 = vpack.c.bf16 %v280, %v279
      %v376 = vpack.c.bf16 %v282, %v281
      %v377 = vpack.c.bf16 %v284, %v283
      %v378 = vpack.c.bf16 %v286, %v285
      %v379 = vpack.c.bf16 %v288, %v287
      %v380 = vpack.c.bf16 %v290, %v289
      %v381 = vpack.c.bf16 %v292, %v291
      %v382 = vpack.c.bf16 %v294, %v293
      %v383 = vpack.c.bf16 %v296, %v295
      %v384 = vpack.c.bf16 %v298, %v297
      %v385 = vpack.c.bf16 %v300, %v299
      %v386 = vpack.c.bf16 %v302, %v301
      %v387 = vpack.c.bf16 %v304, %v303
      %v388 = vpack.c.bf16 %v306, %v305
      %v389 = vpack.c.bf16 %v308, %v307
      %v390 = vpack.c.bf16 %v310, %v309
      %v391 = vpack.c.bf16 %v312, %v311
      %v392 = vpack.c.bf16 %v314, %v313
      %v393 = vpack.c.bf16 %v316, %v315
      %v394 = vpack.c.bf16 %v318, %v317
      %v395 = vpack.c.bf16 %v320, %v319
      %v396 = vpack.c.bf16 %v322, %v321
      %v397 = vpack.c.bf16 %v324, %v323
      %v398 = vpack.c.bf16 %v326, %v325
      %v399 = vpack.c.bf16 %v328, %v327
      %v400 = vpack.c.bf16 %v330, %v329
      %v401 = vpack.c.bf16 %v332, %v331
      %v402 = vpack.c.bf16 %v334, %v333
      %v403 = vld [vmem:[%s1] sm:$0x3]
      %v404 = vld [vmem:[%s192 + $0x1] sm:$0xff]
      %v405 = vld [vmem:[%s192 + $0x9] sm:$0xff]
      %v406 = vld [vmem:[%s192 + $0x11] sm:$0xff]
      %v407 = vld [vmem:[%s192 + $0x19] sm:$0xff]
      %v408 = vld [vmem:[%s192 + $0x21] sm:$0xff]
      %v409 = vld [vmem:[%s192 + $0x29] sm:$0xff]
      %v410 = vld [vmem:[%s192 + $0x31] sm:$0xff]
      %v411 = vld [vmem:[%s192 + $0x39] sm:$0xff]
      %v412 = vld [vmem:[%s192 + $0x41] sm:$0xff]
      %v413 = vld [vmem:[%s192 + $0x49] sm:$0xff]
      %v414 = vld [vmem:[%s192 + $0x51] sm:$0xff]
      %v415 = vld [vmem:[%s192 + $0x59] sm:$0xff]
      %v416 = vld [vmem:[%s192 + $0x61] sm:$0xff]
      %v417 = vld [vmem:[%s192 + $0x69] sm:$0xff]
      %v418 = vld [vmem:[%s192 + $0x71] sm:$0xff]
      %v419 = vld [vmem:[%s192 + $0x79] sm:$0xff]
      %v420 = vld [vmem:[%s192 + $0x81] sm:$0xff]
      %v421 = vld [vmem:[%s192 + $0x89] sm:$0xff]
      %v422 = vld [vmem:[%s192 + $0x91] sm:$0xff]
      %v423 = vld [vmem:[%s192 + $0x99] sm:$0xff]
      %v424 = vld [vmem:[%s192 + $0xa1] sm:$0xff]
      %v425 = vld [vmem:[%s192 + $0xa9] sm:$0xff]
      %v426 = vld [vmem:[%s192 + $0xb1] sm:$0xff]
      %v427 = vld [vmem:[%s192 + $0xb9] sm:$0xff]
      %v428 = vld [vmem:[%s192 + $0xc1] sm:$0xff]
      %v429 = vld [vmem:[%s192 + $0xc9] sm:$0xff]
      %v430 = vld [vmem:[%s192 + $0xd1] sm:$0xff]
      %v431 = vld [vmem:[%s192 + $0xd9] sm:$0xff]
      %v432 = vld [vmem:[%s192 + $0xe1] sm:$0xff]
      %v433 = vld [vmem:[%s192 + $0xe9] sm:$0xff]
      %v434 = vld [vmem:[%s192 + $0xf1] sm:$0xff]
      %v435 = vld [vmem:[%s192 + $0xf9] sm:$0xff]
      %v436 = vld [vmem:[%s192 + $0x101] sm:$0xff]
      %v437 = vld [vmem:[%s192 + $0x109] sm:$0xff]
      %v438 = vld [vmem:[%s192 + $0x111] sm:$0xff]
      %v439 = vld [vmem:[%s192 + $0x119] sm:$0xff]
      %v440 = vld [vmem:[%s192 + $0x121] sm:$0xff]
      %v441 = vld [vmem:[%s192 + $0x129] sm:$0xff]
      %v442 = vld [vmem:[%s192 + $0x131] sm:$0xff]
      %v443 = vld [vmem:[%s192 + $0x139] sm:$0xff]
      %v444 = vld [vmem:[%s192 + $0x141] sm:$0xff]
      %v445 = vld [vmem:[%s192 + $0x149] sm:$0xff]
      %v446 = vld [vmem:[%s192 + $0x151] sm:$0xff]
      %v447 = vld [vmem:[%s192 + $0x159] sm:$0xff]
      %v448 = vld [vmem:[%s192 + $0x161] sm:$0xff]
      %v449 = vld [vmem:[%s192 + $0x169] sm:$0xff]
      %v450 = vld [vmem:[%s192 + $0x171] sm:$0xff]
      %v451 = vld [vmem:[%s192 + $0x179] sm:$0xff]
      %v452 = vld [vmem:[%s192 + $0x181] sm:$0xff]
      %v453 = vld [vmem:[%s192 + $0x189] sm:$0xff]
      %v454 = vld [vmem:[%s192 + $0x191] sm:$0xff]
      %v455 = vld [vmem:[%s192 + $0x199] sm:$0xff]
      %v456 = vld [vmem:[%s192 + $0x1a1] sm:$0xff]
      %v457 = vld [vmem:[%s192 + $0x1a9] sm:$0xff]
      %v458 = vld [vmem:[%s192 + $0x1b1] sm:$0xff]
      %v459 = vld [vmem:[%s192 + $0x1b9] sm:$0xff]
      %v460 = vld [vmem:[%s192 + $0x1c1] sm:$0xff]
      %v461 = vld [vmem:[%s192 + $0x1c9] sm:$0xff]
      %v462 = vld [vmem:[%s192 + $0x1d1] sm:$0xff]
      %v463 = vld [vmem:[%s192 + $0x1d9] sm:$0xff]
      %v464 = vld [vmem:[%s192 + $0x1e1] sm:$0xff]
      %v465 = vld [vmem:[%s192 + $0x1e9] sm:$0xff]
      %v466 = vld [vmem:[%s192 + $0x1f1] sm:$0xff]
      %v467 = vld [vmem:[%s192 + $0x1f9] sm:$0xff]
      %v468 = vld [vmem:[%s192 + $0x201] sm:$0xff]
      %v469 = vld [vmem:[%s192 + $0x209] sm:$0xff]
      %v470 = vld [vmem:[%s192 + $0x211] sm:$0xff]
      %v471 = vld [vmem:[%s192 + $0x219] sm:$0xff]
      %v472 = vld [vmem:[%s192 + $0x221] sm:$0xff]
      %v473 = vld [vmem:[%s192 + $0x229] sm:$0xff]
      %v474 = vld [vmem:[%s192 + $0x231] sm:$0xff]
      %v475 = vld [vmem:[%s192 + $0x239] sm:$0xff]
      %v476 = vld [vmem:[%s192 + $0x241] sm:$0xff]
      %v477 = vld [vmem:[%s192 + $0x249] sm:$0xff]
      %v478 = vld [vmem:[%s192 + $0x251] sm:$0xff]
      %v479 = vld [vmem:[%s192 + $0x259] sm:$0xff]
      %v480 = vld [vmem:[%s192 + $0x261] sm:$0xff]
      %v481 = vld [vmem:[%s192 + $0x269] sm:$0xff]
      %v482 = vld [vmem:[%s192 + $0x271] sm:$0xff]
      %v483 = vld [vmem:[%s192 + $0x279] sm:$0xff]
      %v484 = vld [vmem:[%s192 + $0x281] sm:$0xff]
      %v485 = vld [vmem:[%s192 + $0x289] sm:$0xff]
      %v486 = vld [vmem:[%s192 + $0x291] sm:$0xff]
      %v487 = vld [vmem:[%s192 + $0x299] sm:$0xff]
      %v488 = vld [vmem:[%s192 + $0x2a1] sm:$0xff]
      %v489 = vld [vmem:[%s192 + $0x2a9] sm:$0xff]
      %v490 = vld [vmem:[%s192 + $0x2b1] sm:$0xff]
      %v491 = vld [vmem:[%s192 + $0x2b9] sm:$0xff]
      %v492 = vld [vmem:[%s192 + $0x2c1] sm:$0xff]
      %v493 = vld [vmem:[%s192 + $0x2c9] sm:$0xff]
      %v494 = vld [vmem:[%s192 + $0x2d1] sm:$0xff]
      %v495 = vld [vmem:[%s192 + $0x2d9] sm:$0xff]
      %v496 = vld [vmem:[%s192 + $0x2e1] sm:$0xff]
      %v497 = vld [vmem:[%s192 + $0x2e9] sm:$0xff]
      %v498 = vld [vmem:[%s192 + $0x2f1] sm:$0xff]
      %v499 = vld [vmem:[%s192 + $0x2f9] sm:$0xff]
      %v500 = vld [vmem:[%s192 + $0x301] sm:$0xff]
      %v501 = vld [vmem:[%s192 + $0x309] sm:$0xff]
      %v502 = vld [vmem:[%s192 + $0x311] sm:$0xff]
      %v503 = vld [vmem:[%s192 + $0x319] sm:$0xff]
      %v504 = vld [vmem:[%s192 + $0x321] sm:$0xff]
      %v505 = vld [vmem:[%s192 + $0x329] sm:$0xff]
      %v506 = vld [vmem:[%s192 + $0x331] sm:$0xff]
      %v507 = vld [vmem:[%s192 + $0x339] sm:$0xff]
      %v508 = vld [vmem:[%s192 + $0x341] sm:$0xff]
      %v509 = vld [vmem:[%s192 + $0x349] sm:$0xff]
      %v510 = vld [vmem:[%s192 + $0x351] sm:$0xff]
      %v511 = vld [vmem:[%s192 + $0x359] sm:$0xff]
      %v512 = vld [vmem:[%s192 + $0x361] sm:$0xff]
      %v513 = vld [vmem:[%s192 + $0x369] sm:$0xff]
      %v514 = vld [vmem:[%s192 + $0x371] sm:$0xff]
      %v515 = vld [vmem:[%s192 + $0x379] sm:$0xff]
      %v516 = vld [vmem:[%s192 + $0x381] sm:$0xff]
      %v517 = vld [vmem:[%s192 + $0x389] sm:$0xff]
      %v518 = vld [vmem:[%s192 + $0x391] sm:$0xff]
      %v519 = vld [vmem:[%s192 + $0x399] sm:$0xff]
      %v520 = vld [vmem:[%s192 + $0x3a1] sm:$0xff]
      %v521 = vld [vmem:[%s192 + $0x3a9] sm:$0xff]
      %v522 = vld [vmem:[%s192 + $0x3b1] sm:$0xff]
      %v523 = vld [vmem:[%s192 + $0x3b9] sm:$0xff]
      %v524 = vld [vmem:[%s192 + $0x3c1] sm:$0xff]
      %v525 = vld [vmem:[%s192 + $0x3c9] sm:$0xff]
      %v526 = vld [vmem:[%s192 + $0x3d1] sm:$0xff]
      %v527 = vld [vmem:[%s192 + $0x3d9] sm:$0xff]
      %v528 = vld [vmem:[%s192 + $0x3e1] sm:$0xff]
      %v529 = vld [vmem:[%s192 + $0x3e9] sm:$0xff]
      %v530 = vld [vmem:[%s192 + $0x3f1] sm:$0xff]
      %v531 = vld [vmem:[%s192 + $0x3f9] sm:$0xff]
      %v532 = vld [vmem:[%s192 + $0x401] sm:$0xff]
      %v533 = vld [vmem:[%s192 + $0x409] sm:$0xff]
      %v534 = vld [vmem:[%s192 + $0x411] sm:$0xff]
      %v535 = vld [vmem:[%s192 + $0x419] sm:$0xff]
      %v536 = vld [vmem:[%s192 + $0x421] sm:$0xff]
      %v537 = vld [vmem:[%s192 + $0x429] sm:$0xff]
      %v538 = vld [vmem:[%s192 + $0x431] sm:$0xff]
      %v539 = vld [vmem:[%s192 + $0x439] sm:$0xff]
      %v540 = vpack.c.bf16 %v405, %v404
      %v541 = vpack.c.bf16 %v407, %v406
      %v542 = vpack.c.bf16 %v409, %v408
      %v543 = vpack.c.bf16 %v411, %v410
      %v544 = vpack.c.bf16 %v413, %v412
      %v545 = vpack.c.bf16 %v415, %v414
      %v546 = vpack.c.bf16 %v417, %v416
      %v547 = vpack.c.bf16 %v419, %v418
      %v548 = vpack.c.bf16 %v421, %v420
      %v549 = vpack.c.bf16 %v423, %v422
      %v550 = vpack.c.bf16 %v425, %v424
      %v551 = vpack.c.bf16 %v427, %v426
      %v552 = vpack.c.bf16 %v429, %v428
      %v553 = vpack.c.bf16 %v431, %v430
      %v554 = vpack.c.bf16 %v433, %v432
      %v555 = vpack.c.bf16 %v435, %v434
      %v556 = vpack.c.bf16 %v437, %v436
      %v557 = vpack.c.bf16 %v439, %v438
      %v558 = vpack.c.bf16 %v441, %v440
      %v559 = vpack.c.bf16 %v443, %v442
      %v560 = vpack.c.bf16 %v445, %v444
      %v561 = vpack.c.bf16 %v447, %v446
      %v562 = vpack.c.bf16 %v449, %v448
      %v563 = vpack.c.bf16 %v451, %v450
      %v564 = vpack.c.bf16 %v453, %v452
      %v565 = vpack.c.bf16 %v455, %v454
      %v566 = vpack.c.bf16 %v457, %v456
      %v567 = vpack.c.bf16 %v459, %v458
      %v568 = vpack.c.bf16 %v461, %v460
      %v569 = vpack.c.bf16 %v463, %v462
      %v570 = vpack.c.bf16 %v465, %v464
      %v571 = vpack.c.bf16 %v467, %v466
      %v572 = vpack.c.bf16 %v469, %v468
      %v573 = vpack.c.bf16 %v471, %v470
      %v574 = vpack.c.bf16 %v473, %v472
      %v575 = vpack.c.bf16 %v475, %v474
      %v576 = vpack.c.bf16 %v477, %v476
      %v577 = vpack.c.bf16 %v479, %v478
      %v578 = vpack.c.bf16 %v481, %v480
      %v579 = vpack.c.bf16 %v483, %v482
      %v580 = vpack.c.bf16 %v485, %v484
      %v581 = vpack.c.bf16 %v487, %v486
      %v582 = vpack.c.bf16 %v489, %v488
      %v583 = vpack.c.bf16 %v491, %v490
      %v584 = vpack.c.bf16 %v493, %v492
      %v585 = vpack.c.bf16 %v495, %v494
      %v586 = vpack.c.bf16 %v497, %v496
      %v587 = vpack.c.bf16 %v499, %v498
      %v588 = vpack.c.bf16 %v501, %v500
      %v589 = vpack.c.bf16 %v503, %v502
      %v590 = vpack.c.bf16 %v505, %v504
      %v591 = vpack.c.bf16 %v507, %v506
      %v592 = vpack.c.bf16 %v509, %v508
      %v593 = vpack.c.bf16 %v511, %v510
      %v594 = vpack.c.bf16 %v513, %v512
      %v595 = vpack.c.bf16 %v515, %v514
      %v596 = vpack.c.bf16 %v517, %v516
      %v597 = vpack.c.bf16 %v519, %v518
      %v598 = vpack.c.bf16 %v521, %v520
      %v599 = vpack.c.bf16 %v523, %v522
      %v600 = vpack.c.bf16 %v525, %v524
      %v601 = vpack.c.bf16 %v527, %v526
      %v602 = vpack.c.bf16 %v529, %v528
      %v603 = vpack.c.bf16 %v531, %v530
      %v604 = vpack.c.bf16 %v533, %v532
      %v605 = vpack.c.bf16 %v535, %v534
      %v606 = vpack.c.bf16 %v537, %v536
      %v607 = vpack.c.bf16 %v539, %v538
      %s608 = scalar_lea.vmem %s1, 2
      %v609 = vld [vmem:[%s608] sm:$0x3]
      %vm610 = vcmask 23552
      %v612 = vsel %vm610, %v540, 0
      %v615 = vsel %vm610, %v541, 0
      %v618 = vsel %vm610, %v542, 0
      %v621 = vsel %vm610, %v543, 0
      %v624 = vsel %vm610, %v544, 0
      %v627 = vsel %vm610, %v545, 0
      %v630 = vsel %vm610, %v546, 0
      %v633 = vsel %vm610, %v547, 0
      %v636 = vsel %vm610, %v548, 0
      %v639 = vsel %vm610, %v549, 0
      %v642 = vsel %vm610, %v550, 0
      %v645 = vsel %vm610, %v551, 0
      %v648 = vsel %vm610, %v552, 0
      %v651 = vsel %vm610, %v553, 0
      %v654 = vsel %vm610, %v554, 0
      %v657 = vsel %vm610, %v555, 0
      %v660 = vsel %vm610, %v556, 0
      %v663 = vsel %vm610, %v557, 0
      %v666 = vsel %vm610, %v558, 0
      %v669 = vsel %vm610, %v559, 0
      %v672 = vsel %vm610, %v560, 0
      %v675 = vsel %vm610, %v561, 0
      %v678 = vsel %vm610, %v562, 0
      %v681 = vsel %vm610, %v563, 0
      %v684 = vsel %vm610, %v564, 0
      %v687 = vsel %vm610, %v565, 0
      %v690 = vsel %vm610, %v566, 0
      %v693 = vsel %vm610, %v567, 0
      %v696 = vsel %vm610, %v568, 0
      %v699 = vsel %vm610, %v569, 0
      %v702 = vsel %vm610, %v570, 0
      %v705 = vsel %vm610, %v571, 0
      %v708 = vsel %vm610, %v572, 0
      %v711 = vsel %vm610, %v573, 0
      %v714 = vsel %vm610, %v574, 0
      %v717 = vsel %vm610, %v575, 0
      %v720 = vsel %vm610, %v576, 0
      %v723 = vsel %vm610, %v577, 0
      %v726 = vsel %vm610, %v578, 0
      %v729 = vsel %vm610, %v579, 0
      %v732 = vsel %vm610, %v580, 0
      %v735 = vsel %vm610, %v581, 0
      %v738 = vsel %vm610, %v582, 0
      %v741 = vsel %vm610, %v583, 0
      %v744 = vsel %vm610, %v584, 0
      %v747 = vsel %vm610, %v585, 0
      %v750 = vsel %vm610, %v586, 0
      %v753 = vsel %vm610, %v587, 0
      %v756 = vsel %vm610, %v588, 0
      %v759 = vsel %vm610, %v589, 0
      %v762 = vsel %vm610, %v590, 0
      %v765 = vsel %vm610, %v591, 0
      %v768 = vsel %vm610, %v592, 0
      %v771 = vsel %vm610, %v593, 0
      %v774 = vsel %vm610, %v594, 0
      %v777 = vsel %vm610, %v595, 0
      %v780 = vsel %vm610, %v596, 0
      %v783 = vsel %vm610, %v597, 0
      %v786 = vsel %vm610, %v598, 0
      %v789 = vsel %vm610, %v599, 0
      %v792 = vsel %vm610, %v600, 0
      %v795 = vsel %vm610, %v601, 0
      %v798 = vsel %vm610, %v602, 0
      %v801 = vsel %vm610, %v603, 0
      %v804 = vsel %vm610, %v604, 0
      %v807 = vsel %vm610, %v605, 0
      %v810 = vsel %vm610, %v606, 0
      %v813 = vsel %vm610, %v607, 0
      %vm815 = vcmask 1040384
      %vm816 = vcmask 1041408
      %v817 = vsel %vm815, 4294967295, 65535
      %v818 = vsel %vm816, %v817, 0
      %v820 = vand.u32 %v609, %v818
      %822 = vmatpush.bf16.msra.mxu0 0
      %823 = vmatpush.bf16.msra.mxu0 0
      %824 = vmatpush.bf16.msra.mxu0 0
      %825 = vmatpush.bf16.msra.mxu0 0
      %826 = vmatpush.bf16.msra.mxu0 0
      %827 = vmatpush.bf16.msra.mxu0 0
      %828 = vmatpush.bf16.msra.mxu0 0
      %829 = vmatpush.bf16.msra.mxu0 %v820
      %830 = vmatmul.bf16.gmra.mxu0 %v612
      %v831 = vpop.f32.mrf.mxu0
      %v832 = vadd.f32 0.0, %v831
      %v833 = vpop.f32.mrf.mxu0
      %v834 = vadd.f32 0.0, %v833
      %835 = vmatmul.bf16.gmra.mxu0 %v615
      %v836 = vpop.f32.mrf.mxu0
      %v837 = vadd.f32 0.0, %v836
      %v838 = vpop.f32.mrf.mxu0
      %v839 = vadd.f32 0.0, %v838
      %840 = vmatmul.bf16.gmra.mxu0 %v618
      %v841 = vpop.f32.mrf.mxu0
      %v842 = vadd.f32 0.0, %v841
      %v843 = vpop.f32.mrf.mxu0
      %v844 = vadd.f32 0.0, %v843
      %845 = vmatmul.bf16.gmra.mxu0 %v621
      %v846 = vpop.f32.mrf.mxu0
      %v847 = vadd.f32 0.0, %v846
      %v848 = vpop.f32.mrf.mxu0
      %v849 = vadd.f32 0.0, %v848
      %850 = vmatmul.bf16.gmra.mxu0 %v624
      %v851 = vpop.f32.mrf.mxu0
      %v852 = vadd.f32 0.0, %v851
      %v853 = vpop.f32.mrf.mxu0
      %v854 = vadd.f32 0.0, %v853
      %855 = vmatmul.bf16.gmra.mxu0 %v627
      %v856 = vpop.f32.mrf.mxu0
      %v857 = vadd.f32 0.0, %v856
      %v858 = vpop.f32.mrf.mxu0
      %v859 = vadd.f32 0.0, %v858
      %860 = vmatmul.bf16.gmra.mxu0 %v630
      %v861 = vpop.f32.mrf.mxu0
      %v862 = vadd.f32 0.0, %v861
      %v863 = vpop.f32.mrf.mxu0
      %v864 = vadd.f32 0.0, %v863
      %865 = vmatmul.bf16.gmra.mxu0 %v633
      %v866 = vpop.f32.mrf.mxu0
      %v867 = vadd.f32 0.0, %v866
      %v868 = vpop.f32.mrf.mxu0
      %v869 = vadd.f32 0.0, %v868
      %870 = vmatmul.bf16.gmra.mxu0 %v636
      %v871 = vpop.f32.mrf.mxu0
      %v872 = vadd.f32 0.0, %v871
      %v873 = vpop.f32.mrf.mxu0
      %v874 = vadd.f32 0.0, %v873
      %875 = vmatmul.bf16.gmra.mxu0 %v639
      %v876 = vpop.f32.mrf.mxu0
      %v877 = vadd.f32 0.0, %v876
      %v878 = vpop.f32.mrf.mxu0
      %v879 = vadd.f32 0.0, %v878
      %880 = vmatmul.bf16.gmra.mxu0 %v642
      %v881 = vpop.f32.mrf.mxu0
      %v882 = vadd.f32 0.0, %v881
      %v883 = vpop.f32.mrf.mxu0
      %v884 = vadd.f32 0.0, %v883
      %885 = vmatmul.bf16.gmra.mxu0 %v645
      %v886 = vpop.f32.mrf.mxu0
      %v887 = vadd.f32 0.0, %v886
      %v888 = vpop.f32.mrf.mxu0
      %v889 = vadd.f32 0.0, %v888
      %890 = vmatmul.bf16.gmra.mxu0 %v648
      %v891 = vpop.f32.mrf.mxu0
      %v892 = vadd.f32 0.0, %v891
      %v893 = vpop.f32.mrf.mxu0
      %v894 = vadd.f32 0.0, %v893
      %895 = vmatmul.bf16.gmra.mxu0 %v651
      %v896 = vpop.f32.mrf.mxu0
      %v897 = vadd.f32 0.0, %v896
      %v898 = vpop.f32.mrf.mxu0
      %v899 = vadd.f32 0.0, %v898
      %900 = vmatmul.bf16.gmra.mxu0 %v654
      %v901 = vpop.f32.mrf.mxu0
      %v902 = vadd.f32 0.0, %v901
      %v903 = vpop.f32.mrf.mxu0
      %v904 = vadd.f32 0.0, %v903
      %905 = vmatmul.bf16.gmra.mxu0 %v657
      %v906 = vpop.f32.mrf.mxu0
      %v907 = vadd.f32 0.0, %v906
      %v908 = vpop.f32.mrf.mxu0
      %v909 = vadd.f32 0.0, %v908
      %910 = vmatmul.bf16.gmra.mxu0 %v660
      %v911 = vpop.f32.mrf.mxu0
      %v912 = vadd.f32 0.0, %v911
      %v913 = vpop.f32.mrf.mxu0
      %v914 = vadd.f32 0.0, %v913
      %915 = vmatmul.bf16.gmra.mxu0 %v663
      %v916 = vpop.f32.mrf.mxu0
      %v917 = vadd.f32 0.0, %v916
      %v918 = vpop.f32.mrf.mxu0
      %v919 = vadd.f32 0.0, %v918
      %920 = vmatmul.bf16.gmra.mxu0 %v666
      %v921 = vpop.f32.mrf.mxu0
      %v922 = vadd.f32 0.0, %v921
      %v923 = vpop.f32.mrf.mxu0
      %v924 = vadd.f32 0.0, %v923
      %925 = vmatmul.bf16.gmra.mxu0 %v669
      %v926 = vpop.f32.mrf.mxu0
      %v927 = vadd.f32 0.0, %v926
      %v928 = vpop.f32.mrf.mxu0
      %v929 = vadd.f32 0.0, %v928
      %930 = vmatmul.bf16.gmra.mxu0 %v672
      %v931 = vpop.f32.mrf.mxu0
      %v932 = vadd.f32 0.0, %v931
      %v933 = vpop.f32.mrf.mxu0
      %v934 = vadd.f32 0.0, %v933
      %935 = vmatmul.bf16.gmra.mxu0 %v675
      %v936 = vpop.f32.mrf.mxu0
      %v937 = vadd.f32 0.0, %v936
      %v938 = vpop.f32.mrf.mxu0
      %v939 = vadd.f32 0.0, %v938
      %940 = vmatmul.bf16.gmra.mxu0 %v678
      %v941 = vpop.f32.mrf.mxu0
      %v942 = vadd.f32 0.0, %v941
      %v943 = vpop.f32.mrf.mxu0
      %v944 = vadd.f32 0.0, %v943
      %945 = vmatmul.bf16.gmra.mxu0 %v681
      %v946 = vpop.f32.mrf.mxu0
      %v947 = vadd.f32 0.0, %v946
      %v948 = vpop.f32.mrf.mxu0
      %v949 = vadd.f32 0.0, %v948
      %950 = vmatmul.bf16.gmra.mxu0 %v684
      %v951 = vpop.f32.mrf.mxu0
      %v952 = vadd.f32 0.0, %v951
      %v953 = vpop.f32.mrf.mxu0
      %v954 = vadd.f32 0.0, %v953
      %955 = vmatmul.bf16.gmra.mxu0 %v687
      %v956 = vpop.f32.mrf.mxu0
      %v957 = vadd.f32 0.0, %v956
      %v958 = vpop.f32.mrf.mxu0
      %v959 = vadd.f32 0.0, %v958
      %960 = vmatmul.bf16.gmra.mxu0 %v690
      %v961 = vpop.f32.mrf.mxu0
      %v962 = vadd.f32 0.0, %v961
      %v963 = vpop.f32.mrf.mxu0
      %v964 = vadd.f32 0.0, %v963
      %965 = vmatmul.bf16.gmra.mxu0 %v693
      %v966 = vpop.f32.mrf.mxu0
      %v967 = vadd.f32 0.0, %v966
      %v968 = vpop.f32.mrf.mxu0
      %v969 = vadd.f32 0.0, %v968
      %970 = vmatmul.bf16.gmra.mxu0 %v696
      %v971 = vpop.f32.mrf.mxu0
      %v972 = vadd.f32 0.0, %v971
      %v973 = vpop.f32.mrf.mxu0
      %v974 = vadd.f32 0.0, %v973
      %975 = vmatmul.bf16.gmra.mxu0 %v699
      %v976 = vpop.f32.mrf.mxu0
      %v977 = vadd.f32 0.0, %v976
      %v978 = vpop.f32.mrf.mxu0
      %v979 = vadd.f32 0.0, %v978
      %980 = vmatmul.bf16.gmra.mxu0 %v702
      %v981 = vpop.f32.mrf.mxu0
      %v982 = vadd.f32 0.0, %v981
      %v983 = vpop.f32.mrf.mxu0
      %v984 = vadd.f32 0.0, %v983
      %985 = vmatmul.bf16.gmra.mxu0 %v705
      %v986 = vpop.f32.mrf.mxu0
      %v987 = vadd.f32 0.0, %v986
      %v988 = vpop.f32.mrf.mxu0
      %v989 = vadd.f32 0.0, %v988
      %990 = vmatmul.bf16.gmra.mxu0 %v708
      %v991 = vpop.f32.mrf.mxu0
      %v992 = vadd.f32 0.0, %v991
      %v993 = vpop.f32.mrf.mxu0
      %v994 = vadd.f32 0.0, %v993
      %995 = vmatmul.bf16.gmra.mxu0 %v711
      %v996 = vpop.f32.mrf.mxu0
      %v997 = vadd.f32 0.0, %v996
      %v998 = vpop.f32.mrf.mxu0
      %v999 = vadd.f32 0.0, %v998
      %1000 = vmatmul.bf16.gmra.mxu0 %v714
      %v1001 = vpop.f32.mrf.mxu0
      %v1002 = vadd.f32 0.0, %v1001
      %v1003 = vpop.f32.mrf.mxu0
      %v1004 = vadd.f32 0.0, %v1003
      %1005 = vmatmul.bf16.gmra.mxu0 %v717
      %v1006 = vpop.f32.mrf.mxu0
      %v1007 = vadd.f32 0.0, %v1006
      %v1008 = vpop.f32.mrf.mxu0
      %v1009 = vadd.f32 0.0, %v1008
      %1010 = vmatmul.bf16.gmra.mxu0 %v720
      %v1011 = vpop.f32.mrf.mxu0
      %v1012 = vadd.f32 0.0, %v1011
      %v1013 = vpop.f32.mrf.mxu0
      %v1014 = vadd.f32 0.0, %v1013
      %1015 = vmatmul.bf16.gmra.mxu0 %v723
      %v1016 = vpop.f32.mrf.mxu0
      %v1017 = vadd.f32 0.0, %v1016
      %v1018 = vpop.f32.mrf.mxu0
      %v1019 = vadd.f32 0.0, %v1018
      %1020 = vmatmul.bf16.gmra.mxu0 %v726
      %v1021 = vpop.f32.mrf.mxu0
      %v1022 = vadd.f32 0.0, %v1021
      %v1023 = vpop.f32.mrf.mxu0
      %v1024 = vadd.f32 0.0, %v1023
      %1025 = vmatmul.bf16.gmra.mxu0 %v729
      %v1026 = vpop.f32.mrf.mxu0
      %v1027 = vadd.f32 0.0, %v1026
      %v1028 = vpop.f32.mrf.mxu0
      %v1029 = vadd.f32 0.0, %v1028
      %1030 = vmatmul.bf16.gmra.mxu0 %v732
      %v1031 = vpop.f32.mrf.mxu0
      %v1032 = vadd.f32 0.0, %v1031
      %v1033 = vpop.f32.mrf.mxu0
      %v1034 = vadd.f32 0.0, %v1033
      %1035 = vmatmul.bf16.gmra.mxu0 %v735
      %v1036 = vpop.f32.mrf.mxu0
      %v1037 = vadd.f32 0.0, %v1036
      %v1038 = vpop.f32.mrf.mxu0
      %v1039 = vadd.f32 0.0, %v1038
      %1040 = vmatmul.bf16.gmra.mxu0 %v738
      %v1041 = vpop.f32.mrf.mxu0
      %v1042 = vadd.f32 0.0, %v1041
      %v1043 = vpop.f32.mrf.mxu0
      %v1044 = vadd.f32 0.0, %v1043
      %1045 = vmatmul.bf16.gmra.mxu0 %v741
      %v1046 = vpop.f32.mrf.mxu0
      %v1047 = vadd.f32 0.0, %v1046
      %v1048 = vpop.f32.mrf.mxu0
      %v1049 = vadd.f32 0.0, %v1048
      %1050 = vmatmul.bf16.gmra.mxu0 %v744
      %v1051 = vpop.f32.mrf.mxu0
      %v1052 = vadd.f32 0.0, %v1051
      %v1053 = vpop.f32.mrf.mxu0
      %v1054 = vadd.f32 0.0, %v1053
      %1055 = vmatmul.bf16.gmra.mxu0 %v747
      %v1056 = vpop.f32.mrf.mxu0
      %v1057 = vadd.f32 0.0, %v1056
      %v1058 = vpop.f32.mrf.mxu0
      %v1059 = vadd.f32 0.0, %v1058
      %1060 = vmatmul.bf16.gmra.mxu0 %v750
      %v1061 = vpop.f32.mrf.mxu0
      %v1062 = vadd.f32 0.0, %v1061
      %v1063 = vpop.f32.mrf.mxu0
      %v1064 = vadd.f32 0.0, %v1063
      %1065 = vmatmul.bf16.gmra.mxu0 %v753
      %v1066 = vpop.f32.mrf.mxu0
      %v1067 = vadd.f32 0.0, %v1066
      %v1068 = vpop.f32.mrf.mxu0
      %v1069 = vadd.f32 0.0, %v1068
      %1070 = vmatmul.bf16.gmra.mxu0 %v756
      %v1071 = vpop.f32.mrf.mxu0
      %v1072 = vadd.f32 0.0, %v1071
      %v1073 = vpop.f32.mrf.mxu0
      %v1074 = vadd.f32 0.0, %v1073
      %1075 = vmatmul.bf16.gmra.mxu0 %v759
      %v1076 = vpop.f32.mrf.mxu0
      %v1077 = vadd.f32 0.0, %v1076
      %v1078 = vpop.f32.mrf.mxu0
      %v1079 = vadd.f32 0.0, %v1078
      %1080 = vmatmul.bf16.gmra.mxu0 %v762
      %v1081 = vpop.f32.mrf.mxu0
      %v1082 = vadd.f32 0.0, %v1081
      %v1083 = vpop.f32.mrf.mxu0
      %v1084 = vadd.f32 0.0, %v1083
      %1085 = vmatmul.bf16.gmra.mxu0 %v765
      %v1086 = vpop.f32.mrf.mxu0
      %v1087 = vadd.f32 0.0, %v1086
      %v1088 = vpop.f32.mrf.mxu0
      %v1089 = vadd.f32 0.0, %v1088
      %1090 = vmatmul.bf16.gmra.mxu0 %v768
      %v1091 = vpop.f32.mrf.mxu0
      %v1092 = vadd.f32 0.0, %v1091
      %v1093 = vpop.f32.mrf.mxu0
      %v1094 = vadd.f32 0.0, %v1093
      %1095 = vmatmul.bf16.gmra.mxu0 %v771
      %v1096 = vpop.f32.mrf.mxu0
      %v1097 = vadd.f32 0.0, %v1096
      %v1098 = vpop.f32.mrf.mxu0
      %v1099 = vadd.f32 0.0, %v1098
      %1100 = vmatmul.bf16.gmra.mxu0 %v774
      %v1101 = vpop.f32.mrf.mxu0
      %v1102 = vadd.f32 0.0, %v1101
      %v1103 = vpop.f32.mrf.mxu0
      %v1104 = vadd.f32 0.0, %v1103
      %1105 = vmatmul.bf16.gmra.mxu0 %v777
      %v1106 = vpop.f32.mrf.mxu0
      %v1107 = vadd.f32 0.0, %v1106
      %v1108 = vpop.f32.mrf.mxu0
      %v1109 = vadd.f32 0.0, %v1108
      %1110 = vmatmul.bf16.gmra.mxu0 %v780
      %v1111 = vpop.f32.mrf.mxu0
      %v1112 = vadd.f32 0.0, %v1111
      %v1113 = vpop.f32.mrf.mxu0
      %v1114 = vadd.f32 0.0, %v1113
      %1115 = vmatmul.bf16.gmra.mxu0 %v783
      %v1116 = vpop.f32.mrf.mxu0
      %v1117 = vadd.f32 0.0, %v1116
      %v1118 = vpop.f32.mrf.mxu0
      %v1119 = vadd.f32 0.0, %v1118
      %1120 = vmatmul.bf16.gmra.mxu0 %v786
      %v1121 = vpop.f32.mrf.mxu0
      %v1122 = vadd.f32 0.0, %v1121
      %v1123 = vpop.f32.mrf.mxu0
      %v1124 = vadd.f32 0.0, %v1123
      %1125 = vmatmul.bf16.gmra.mxu0 %v789
      %v1126 = vpop.f32.mrf.mxu0
      %v1127 = vadd.f32 0.0, %v1126
      %v1128 = vpop.f32.mrf.mxu0
      %v1129 = vadd.f32 0.0, %v1128
      %1130 = vmatmul.bf16.gmra.mxu0 %v792
      %v1131 = vpop.f32.mrf.mxu0
      %v1132 = vadd.f32 0.0, %v1131
      %v1133 = vpop.f32.mrf.mxu0
      %v1134 = vadd.f32 0.0, %v1133
      %1135 = vmatmul.bf16.gmra.mxu0 %v795
      %v1136 = vpop.f32.mrf.mxu0
      %v1137 = vadd.f32 0.0, %v1136
      %v1138 = vpop.f32.mrf.mxu0
      %v1139 = vadd.f32 0.0, %v1138
      %1140 = vmatmul.bf16.gmra.mxu0 %v798
      %v1141 = vpop.f32.mrf.mxu0
      %v1142 = vadd.f32 0.0, %v1141
      %v1143 = vpop.f32.mrf.mxu0
      %v1144 = vadd.f32 0.0, %v1143
      %1145 = vmatmul.bf16.gmra.mxu0 %v801
      %v1146 = vpop.f32.mrf.mxu0
      %v1147 = vadd.f32 0.0, %v1146
      %v1148 = vpop.f32.mrf.mxu0
      %v1149 = vadd.f32 0.0, %v1148
      %1150 = vmatmul.bf16.gmra.mxu0 %v804
      %v1151 = vpop.f32.mrf.mxu0
      %v1152 = vadd.f32 0.0, %v1151
      %v1153 = vpop.f32.mrf.mxu0
      %v1154 = vadd.f32 0.0, %v1153
      %1155 = vmatmul.bf16.gmra.mxu0 %v807
      %v1156 = vpop.f32.mrf.mxu0
      %v1157 = vadd.f32 0.0, %v1156
      %v1158 = vpop.f32.mrf.mxu0
      %v1159 = vadd.f32 0.0, %v1158
      %1160 = vmatmul.bf16.gmra.mxu0 %v810
      %v1161 = vpop.f32.mrf.mxu0
      %v1162 = vadd.f32 0.0, %v1161
      %v1163 = vpop.f32.mrf.mxu0
      %v1164 = vadd.f32 0.0, %v1163
      %1165 = vmatmul.bf16.gmra.mxu0 %v813
      %v1166 = vpop.f32.mrf.mxu0
      %v1167 = vadd.f32 0.0, %v1166
      %v1168 = vpop.f32.mrf.mxu0
      %v1169 = vadd.f32 0.0, %v1168
      %1170 = vdwg.mxu0
      %v1172 = vsel %vm610, %v335, 0
      %v1175 = vsel %vm610, %v336, 0
      %v1178 = vsel %vm610, %v337, 0
      %v1181 = vsel %vm610, %v338, 0
      %v1184 = vsel %vm610, %v339, 0
      %v1187 = vsel %vm610, %v340, 0
      %v1190 = vsel %vm610, %v341, 0
      %v1193 = vsel %vm610, %v342, 0
      %v1196 = vsel %vm610, %v343, 0
      %v1199 = vsel %vm610, %v344, 0
      %v1202 = vsel %vm610, %v345, 0
      %v1205 = vsel %vm610, %v346, 0
      %v1208 = vsel %vm610, %v347, 0
      %v1211 = vsel %vm610, %v348, 0
      %v1214 = vsel %vm610, %v349, 0
      %v1217 = vsel %vm610, %v350, 0
      %v1220 = vsel %vm610, %v351, 0
      %v1223 = vsel %vm610, %v352, 0
      %v1226 = vsel %vm610, %v353, 0
      %v1229 = vsel %vm610, %v354, 0
      %v1232 = vsel %vm610, %v355, 0
      %v1235 = vsel %vm610, %v356, 0
      %v1238 = vsel %vm610, %v357, 0
      %v1241 = vsel %vm610, %v358, 0
      %v1244 = vsel %vm610, %v359, 0
      %v1247 = vsel %vm610, %v360, 0
      %v1250 = vsel %vm610, %v361, 0
      %v1253 = vsel %vm610, %v362, 0
      %v1256 = vsel %vm610, %v363, 0
      %v1259 = vsel %vm610, %v364, 0
      %v1262 = vsel %vm610, %v365, 0
      %v1265 = vsel %vm610, %v366, 0
      %v1268 = vsel %vm610, %v367, 0
      %v1271 = vsel %vm610, %v368, 0
      %v1274 = vsel %vm610, %v369, 0
      %v1277 = vsel %vm610, %v370, 0
      %v1280 = vsel %vm610, %v371, 0
      %v1283 = vsel %vm610, %v372, 0
      %v1286 = vsel %vm610, %v373, 0
      %v1289 = vsel %vm610, %v374, 0
      %v1292 = vsel %vm610, %v375, 0
      %v1295 = vsel %vm610, %v376, 0
      %v1298 = vsel %vm610, %v377, 0
      %v1301 = vsel %vm610, %v378, 0
      %v1304 = vsel %vm610, %v379, 0
      %v1307 = vsel %vm610, %v380, 0
      %v1310 = vsel %vm610, %v381, 0
      %v1313 = vsel %vm610, %v382, 0
      %v1316 = vsel %vm610, %v383, 0
      %v1319 = vsel %vm610, %v384, 0
      %v1322 = vsel %vm610, %v385, 0
      %v1325 = vsel %vm610, %v386, 0
      %v1328 = vsel %vm610, %v387, 0
      %v1331 = vsel %vm610, %v388, 0
      %v1334 = vsel %vm610, %v389, 0
      %v1337 = vsel %vm610, %v390, 0
      %v1340 = vsel %vm610, %v391, 0
      %v1343 = vsel %vm610, %v392, 0
      %v1346 = vsel %vm610, %v393, 0
      %v1349 = vsel %vm610, %v394, 0
      %v1352 = vsel %vm610, %v395, 0
      %v1355 = vsel %vm610, %v396, 0
      %v1358 = vsel %vm610, %v397, 0
      %v1361 = vsel %vm610, %v398, 0
      %v1364 = vsel %vm610, %v399, 0
      %v1367 = vsel %vm610, %v400, 0
      %v1370 = vsel %vm610, %v401, 0
      %v1373 = vsel %vm610, %v402, 0
      %v1376 = vand.u32 %v403, %v818
      %1378 = vmatpush.bf16.msra.mxu0 0
      %1379 = vmatpush.bf16.msra.mxu0 0
      %1380 = vmatpush.bf16.msra.mxu0 0
      %1381 = vmatpush.bf16.msra.mxu0 0
      %1382 = vmatpush.bf16.msra.mxu0 0
      %1383 = vmatpush.bf16.msra.mxu0 0
      %1384 = vmatpush.bf16.msra.mxu0 0
      %1385 = vmatpush.bf16.msra.mxu0 %v1376
      %1386 = vmatmul.bf16.gmra.mxu0 %v1172
      %v1387 = vpop.f32.mrf.mxu0
      %v1388 = vadd.f32 %v832, %v1387
      %v1389 = vpop.f32.mrf.mxu0
      %v1390 = vadd.f32 %v834, %v1389
      %1391 = vmatmul.bf16.gmra.mxu0 %v1175
      %v1392 = vpop.f32.mrf.mxu0
      %v1393 = vadd.f32 %v837, %v1392
      %v1394 = vpop.f32.mrf.mxu0
      %v1395 = vadd.f32 %v839, %v1394
      %1396 = vmatmul.bf16.gmra.mxu0 %v1178
      %v1397 = vpop.f32.mrf.mxu0
      %v1398 = vadd.f32 %v842, %v1397
      %v1399 = vpop.f32.mrf.mxu0
      %v1400 = vadd.f32 %v844, %v1399
      %1401 = vmatmul.bf16.gmra.mxu0 %v1181
      %v1402 = vpop.f32.mrf.mxu0
      %v1403 = vadd.f32 %v847, %v1402
      %v1404 = vpop.f32.mrf.mxu0
      %v1405 = vadd.f32 %v849, %v1404
      %1406 = vmatmul.bf16.gmra.mxu0 %v1184
      %v1407 = vpop.f32.mrf.mxu0
      %v1408 = vadd.f32 %v852, %v1407
      %v1409 = vpop.f32.mrf.mxu0
      %v1410 = vadd.f32 %v854, %v1409
      %1411 = vmatmul.bf16.gmra.mxu0 %v1187
      %v1412 = vpop.f32.mrf.mxu0
      %v1413 = vadd.f32 %v857, %v1412
      %v1414 = vpop.f32.mrf.mxu0
      %v1415 = vadd.f32 %v859, %v1414
      %1416 = vmatmul.bf16.gmra.mxu0 %v1190
      %v1417 = vpop.f32.mrf.mxu0
      %v1418 = vadd.f32 %v862, %v1417
      %v1419 = vpop.f32.mrf.mxu0
      %v1420 = vadd.f32 %v864, %v1419
      %1421 = vmatmul.bf16.gmra.mxu0 %v1193
      %v1422 = vpop.f32.mrf.mxu0
      %v1423 = vadd.f32 %v867, %v1422
      %v1424 = vpop.f32.mrf.mxu0
      %v1425 = vadd.f32 %v869, %v1424
      %1426 = vmatmul.bf16.gmra.mxu0 %v1196
      %v1427 = vpop.f32.mrf.mxu0
      %v1428 = vadd.f32 %v872, %v1427
      %v1429 = vpop.f32.mrf.mxu0
      %v1430 = vadd.f32 %v874, %v1429
      %1431 = vmatmul.bf16.gmra.mxu0 %v1199
      %v1432 = vpop.f32.mrf.mxu0
      %v1433 = vadd.f32 %v877, %v1432
      %v1434 = vpop.f32.mrf.mxu0
      %v1435 = vadd.f32 %v879, %v1434
      %1436 = vmatmul.bf16.gmra.mxu0 %v1202
      %v1437 = vpop.f32.mrf.mxu0
      %v1438 = vadd.f32 %v882, %v1437
      %v1439 = vpop.f32.mrf.mxu0
      %v1440 = vadd.f32 %v884, %v1439
      %1441 = vmatmul.bf16.gmra.mxu0 %v1205
      %v1442 = vpop.f32.mrf.mxu0
      %v1443 = vadd.f32 %v887, %v1442
      %v1444 = vpop.f32.mrf.mxu0
      %v1445 = vadd.f32 %v889, %v1444
      %1446 = vmatmul.bf16.gmra.mxu0 %v1208
      %v1447 = vpop.f32.mrf.mxu0
      %v1448 = vadd.f32 %v892, %v1447
      %v1449 = vpop.f32.mrf.mxu0
      %v1450 = vadd.f32 %v894, %v1449
      %1451 = vmatmul.bf16.gmra.mxu0 %v1211
      %v1452 = vpop.f32.mrf.mxu0
      %v1453 = vadd.f32 %v897, %v1452
      %v1454 = vpop.f32.mrf.mxu0
      %v1455 = vadd.f32 %v899, %v1454
      %1456 = vmatmul.bf16.gmra.mxu0 %v1214
      %v1457 = vpop.f32.mrf.mxu0
      %v1458 = vadd.f32 %v902, %v1457
      %v1459 = vpop.f32.mrf.mxu0
      %v1460 = vadd.f32 %v904, %v1459
      %1461 = vmatmul.bf16.gmra.mxu0 %v1217
      %v1462 = vpop.f32.mrf.mxu0
      %v1463 = vadd.f32 %v907, %v1462
      %v1464 = vpop.f32.mrf.mxu0
      %v1465 = vadd.f32 %v909, %v1464
      %1466 = vmatmul.bf16.gmra.mxu0 %v1220
      %v1467 = vpop.f32.mrf.mxu0
      %v1468 = vadd.f32 %v912, %v1467
      %v1469 = vpop.f32.mrf.mxu0
      %v1470 = vadd.f32 %v914, %v1469
      %1471 = vmatmul.bf16.gmra.mxu0 %v1223
      %v1472 = vpop.f32.mrf.mxu0
      %v1473 = vadd.f32 %v917, %v1472
      %v1474 = vpop.f32.mrf.mxu0
      %v1475 = vadd.f32 %v919, %v1474
      %1476 = vmatmul.bf16.gmra.mxu0 %v1226
      %v1477 = vpop.f32.mrf.mxu0
      %v1478 = vadd.f32 %v922, %v1477
      %v1479 = vpop.f32.mrf.mxu0
      %v1480 = vadd.f32 %v924, %v1479
      %1481 = vmatmul.bf16.gmra.mxu0 %v1229
      %v1482 = vpop.f32.mrf.mxu0
      %v1483 = vadd.f32 %v927, %v1482
      %v1484 = vpop.f32.mrf.mxu0
      %v1485 = vadd.f32 %v929, %v1484
      %1486 = vmatmul.bf16.gmra.mxu0 %v1232
      %v1487 = vpop.f32.mrf.mxu0
      %v1488 = vadd.f32 %v932, %v1487
      %v1489 = vpop.f32.mrf.mxu0
      %v1490 = vadd.f32 %v934, %v1489
      %1491 = vmatmul.bf16.gmra.mxu0 %v1235
      %v1492 = vpop.f32.mrf.mxu0
      %v1493 = vadd.f32 %v937, %v1492
      %v1494 = vpop.f32.mrf.mxu0
      %v1495 = vadd.f32 %v939, %v1494
      %1496 = vmatmul.bf16.gmra.mxu0 %v1238
      %v1497 = vpop.f32.mrf.mxu0
      %v1498 = vadd.f32 %v942, %v1497
      %v1499 = vpop.f32.mrf.mxu0
      %v1500 = vadd.f32 %v944, %v1499
      %1501 = vmatmul.bf16.gmra.mxu0 %v1241
      %v1502 = vpop.f32.mrf.mxu0
      %v1503 = vadd.f32 %v947, %v1502
      %v1504 = vpop.f32.mrf.mxu0
      %v1505 = vadd.f32 %v949, %v1504
      %1506 = vmatmul.bf16.gmra.mxu0 %v1244
      %v1507 = vpop.f32.mrf.mxu0
      %v1508 = vadd.f32 %v952, %v1507
      %v1509 = vpop.f32.mrf.mxu0
      %v1510 = vadd.f32 %v954, %v1509
      %1511 = vmatmul.bf16.gmra.mxu0 %v1247
      %v1512 = vpop.f32.mrf.mxu0
      %v1513 = vadd.f32 %v957, %v1512
      %v1514 = vpop.f32.mrf.mxu0
      %v1515 = vadd.f32 %v959, %v1514
      %1516 = vmatmul.bf16.gmra.mxu0 %v1250
      %v1517 = vpop.f32.mrf.mxu0
      %v1518 = vadd.f32 %v962, %v1517
      %v1519 = vpop.f32.mrf.mxu0
      %v1520 = vadd.f32 %v964, %v1519
      %1521 = vmatmul.bf16.gmra.mxu0 %v1253
      %v1522 = vpop.f32.mrf.mxu0
      %v1523 = vadd.f32 %v967, %v1522
      %v1524 = vpop.f32.mrf.mxu0
      %v1525 = vadd.f32 %v969, %v1524
      %1526 = vmatmul.bf16.gmra.mxu0 %v1256
      %v1527 = vpop.f32.mrf.mxu0
      %v1528 = vadd.f32 %v972, %v1527
      %v1529 = vpop.f32.mrf.mxu0
      %v1530 = vadd.f32 %v974, %v1529
      %1531 = vmatmul.bf16.gmra.mxu0 %v1259
      %v1532 = vpop.f32.mrf.mxu0
      %v1533 = vadd.f32 %v977, %v1532
      %v1534 = vpop.f32.mrf.mxu0
      %v1535 = vadd.f32 %v979, %v1534
      %1536 = vmatmul.bf16.gmra.mxu0 %v1262
      %v1537 = vpop.f32.mrf.mxu0
      %v1538 = vadd.f32 %v982, %v1537
      %v1539 = vpop.f32.mrf.mxu0
      %v1540 = vadd.f32 %v984, %v1539
      %1541 = vmatmul.bf16.gmra.mxu0 %v1265
      %v1542 = vpop.f32.mrf.mxu0
      %v1543 = vadd.f32 %v987, %v1542
      %v1544 = vpop.f32.mrf.mxu0
      %v1545 = vadd.f32 %v989, %v1544
      %1546 = vmatmul.bf16.gmra.mxu0 %v1268
      %v1547 = vpop.f32.mrf.mxu0
      %v1548 = vadd.f32 %v992, %v1547
      %v1549 = vpop.f32.mrf.mxu0
      %v1550 = vadd.f32 %v994, %v1549
      %1551 = vmatmul.bf16.gmra.mxu0 %v1271
      %v1552 = vpop.f32.mrf.mxu0
      %v1553 = vadd.f32 %v997, %v1552
      %v1554 = vpop.f32.mrf.mxu0
      %v1555 = vadd.f32 %v999, %v1554
      %1556 = vmatmul.bf16.gmra.mxu0 %v1274
      %v1557 = vpop.f32.mrf.mxu0
      %v1558 = vadd.f32 %v1002, %v1557
      %v1559 = vpop.f32.mrf.mxu0
      %v1560 = vadd.f32 %v1004, %v1559
      %1561 = vmatmul.bf16.gmra.mxu0 %v1277
      %v1562 = vpop.f32.mrf.mxu0
      %v1563 = vadd.f32 %v1007, %v1562
      %v1564 = vpop.f32.mrf.mxu0
      %v1565 = vadd.f32 %v1009, %v1564
      %1566 = vmatmul.bf16.gmra.mxu0 %v1280
      %v1567 = vpop.f32.mrf.mxu0
      %v1568 = vadd.f32 %v1012, %v1567
      %v1569 = vpop.f32.mrf.mxu0
      %v1570 = vadd.f32 %v1014, %v1569
      %1571 = vmatmul.bf16.gmra.mxu0 %v1283
      %v1572 = vpop.f32.mrf.mxu0
      %v1573 = vadd.f32 %v1017, %v1572
      %v1574 = vpop.f32.mrf.mxu0
      %v1575 = vadd.f32 %v1019, %v1574
      %1576 = vmatmul.bf16.gmra.mxu0 %v1286
      %v1577 = vpop.f32.mrf.mxu0
      %v1578 = vadd.f32 %v1022, %v1577
      %v1579 = vpop.f32.mrf.mxu0
      %v1580 = vadd.f32 %v1024, %v1579
      %1581 = vmatmul.bf16.gmra.mxu0 %v1289
      %v1582 = vpop.f32.mrf.mxu0
      %v1583 = vadd.f32 %v1027, %v1582
      %v1584 = vpop.f32.mrf.mxu0
      %v1585 = vadd.f32 %v1029, %v1584
      %1586 = vmatmul.bf16.gmra.mxu0 %v1292
      %v1587 = vpop.f32.mrf.mxu0
      %v1588 = vadd.f32 %v1032, %v1587
      %v1589 = vpop.f32.mrf.mxu0
      %v1590 = vadd.f32 %v1034, %v1589
      %1591 = vmatmul.bf16.gmra.mxu0 %v1295
      %v1592 = vpop.f32.mrf.mxu0
      %v1593 = vadd.f32 %v1037, %v1592
      %v1594 = vpop.f32.mrf.mxu0
      %v1595 = vadd.f32 %v1039, %v1594
      %1596 = vmatmul.bf16.gmra.mxu0 %v1298
      %v1597 = vpop.f32.mrf.mxu0
      %v1598 = vadd.f32 %v1042, %v1597
      %v1599 = vpop.f32.mrf.mxu0
      %v1600 = vadd.f32 %v1044, %v1599
      %1601 = vmatmul.bf16.gmra.mxu0 %v1301
      %v1602 = vpop.f32.mrf.mxu0
      %v1603 = vadd.f32 %v1047, %v1602
      %v1604 = vpop.f32.mrf.mxu0
      %v1605 = vadd.f32 %v1049, %v1604
      %1606 = vmatmul.bf16.gmra.mxu0 %v1304
      %v1607 = vpop.f32.mrf.mxu0
      %v1608 = vadd.f32 %v1052, %v1607
      %v1609 = vpop.f32.mrf.mxu0
      %v1610 = vadd.f32 %v1054, %v1609
      %1611 = vmatmul.bf16.gmra.mxu0 %v1307
      %v1612 = vpop.f32.mrf.mxu0
      %v1613 = vadd.f32 %v1057, %v1612
      %v1614 = vpop.f32.mrf.mxu0
      %v1615 = vadd.f32 %v1059, %v1614
      %1616 = vmatmul.bf16.gmra.mxu0 %v1310
      %v1617 = vpop.f32.mrf.mxu0
      %v1618 = vadd.f32 %v1062, %v1617
      %v1619 = vpop.f32.mrf.mxu0
      %v1620 = vadd.f32 %v1064, %v1619
      %1621 = vmatmul.bf16.gmra.mxu0 %v1313
      %v1622 = vpop.f32.mrf.mxu0
      %v1623 = vadd.f32 %v1067, %v1622
      %v1624 = vpop.f32.mrf.mxu0
      %v1625 = vadd.f32 %v1069, %v1624
      %1626 = vmatmul.bf16.gmra.mxu0 %v1316
      %v1627 = vpop.f32.mrf.mxu0
      %v1628 = vadd.f32 %v1072, %v1627
      %v1629 = vpop.f32.mrf.mxu0
      %v1630 = vadd.f32 %v1074, %v1629
      %1631 = vmatmul.bf16.gmra.mxu0 %v1319
      %v1632 = vpop.f32.mrf.mxu0
      %v1633 = vadd.f32 %v1077, %v1632
      %v1634 = vpop.f32.mrf.mxu0
      %v1635 = vadd.f32 %v1079, %v1634
      %1636 = vmatmul.bf16.gmra.mxu0 %v1322
      %v1637 = vpop.f32.mrf.mxu0
      %v1638 = vadd.f32 %v1082, %v1637
      %v1639 = vpop.f32.mrf.mxu0
      %v1640 = vadd.f32 %v1084, %v1639
      %1641 = vmatmul.bf16.gmra.mxu0 %v1325
      %v1642 = vpop.f32.mrf.mxu0
      %v1643 = vadd.f32 %v1087, %v1642
      %v1644 = vpop.f32.mrf.mxu0
      %v1645 = vadd.f32 %v1089, %v1644
      %1646 = vmatmul.bf16.gmra.mxu0 %v1328
      %v1647 = vpop.f32.mrf.mxu0
      %v1648 = vadd.f32 %v1092, %v1647
      %v1649 = vpop.f32.mrf.mxu0
      %v1650 = vadd.f32 %v1094, %v1649
      %1651 = vmatmul.bf16.gmra.mxu0 %v1331
      %v1652 = vpop.f32.mrf.mxu0
      %v1653 = vadd.f32 %v1097, %v1652
      %v1654 = vpop.f32.mrf.mxu0
      %v1655 = vadd.f32 %v1099, %v1654
      %1656 = vmatmul.bf16.gmra.mxu0 %v1334
      %v1657 = vpop.f32.mrf.mxu0
      %v1658 = vadd.f32 %v1102, %v1657
      %v1659 = vpop.f32.mrf.mxu0
      %v1660 = vadd.f32 %v1104, %v1659
      %1661 = vmatmul.bf16.gmra.mxu0 %v1337
      %v1662 = vpop.f32.mrf.mxu0
      %v1663 = vadd.f32 %v1107, %v1662
      %v1664 = vpop.f32.mrf.mxu0
      %v1665 = vadd.f32 %v1109, %v1664
      %1666 = vmatmul.bf16.gmra.mxu0 %v1340
      %v1667 = vpop.f32.mrf.mxu0
      %v1668 = vadd.f32 %v1112, %v1667
      %v1669 = vpop.f32.mrf.mxu0
      %v1670 = vadd.f32 %v1114, %v1669
      %1671 = vmatmul.bf16.gmra.mxu0 %v1343
      %v1672 = vpop.f32.mrf.mxu0
      %v1673 = vadd.f32 %v1117, %v1672
      %v1674 = vpop.f32.mrf.mxu0
      %v1675 = vadd.f32 %v1119, %v1674
      %1676 = vmatmul.bf16.gmra.mxu0 %v1346
      %v1677 = vpop.f32.mrf.mxu0
      %v1678 = vadd.f32 %v1122, %v1677
      %v1679 = vpop.f32.mrf.mxu0
      %v1680 = vadd.f32 %v1124, %v1679
      %1681 = vmatmul.bf16.gmra.mxu0 %v1349
      %v1682 = vpop.f32.mrf.mxu0
      %v1683 = vadd.f32 %v1127, %v1682
      %v1684 = vpop.f32.mrf.mxu0
      %v1685 = vadd.f32 %v1129, %v1684
      %1686 = vmatmul.bf16.gmra.mxu0 %v1352
      %v1687 = vpop.f32.mrf.mxu0
      %v1688 = vadd.f32 %v1132, %v1687
      %v1689 = vpop.f32.mrf.mxu0
      %v1690 = vadd.f32 %v1134, %v1689
      %1691 = vmatmul.bf16.gmra.mxu0 %v1355
      %v1692 = vpop.f32.mrf.mxu0
      %v1693 = vadd.f32 %v1137, %v1692
      %v1694 = vpop.f32.mrf.mxu0
      %v1695 = vadd.f32 %v1139, %v1694
      %1696 = vmatmul.bf16.gmra.mxu0 %v1358
      %v1697 = vpop.f32.mrf.mxu0
      %v1698 = vadd.f32 %v1142, %v1697
      %v1699 = vpop.f32.mrf.mxu0
      %v1700 = vadd.f32 %v1144, %v1699
      %1701 = vmatmul.bf16.gmra.mxu0 %v1361
      %v1702 = vpop.f32.mrf.mxu0
      %v1703 = vadd.f32 %v1147, %v1702
      %v1704 = vpop.f32.mrf.mxu0
      %v1705 = vadd.f32 %v1149, %v1704
      %1706 = vmatmul.bf16.gmra.mxu0 %v1364
      %v1707 = vpop.f32.mrf.mxu0
      %v1708 = vadd.f32 %v1152, %v1707
      %v1709 = vpop.f32.mrf.mxu0
      %v1710 = vadd.f32 %v1154, %v1709
      %1711 = vmatmul.bf16.gmra.mxu0 %v1367
      %v1712 = vpop.f32.mrf.mxu0
      %v1713 = vadd.f32 %v1157, %v1712
      %v1714 = vpop.f32.mrf.mxu0
      %v1715 = vadd.f32 %v1159, %v1714
      %1716 = vmatmul.bf16.gmra.mxu0 %v1370
      %v1717 = vpop.f32.mrf.mxu0
      %v1718 = vadd.f32 %v1162, %v1717
      %v1719 = vpop.f32.mrf.mxu0
      %v1720 = vadd.f32 %v1164, %v1719
      %1721 = vmatmul.bf16.gmra.mxu0 %v1373
      %v1722 = vpop.f32.mrf.mxu0
      %v1723 = vadd.f32 %v1167, %v1722
      %v1724 = vpop.f32.mrf.mxu0
      %v1725 = vadd.f32 %v1169, %v1724
      %1726 = vdwg.mxu0
      %v1727 = vld [vmem:[%s192 + $0x2] sm:$0xff]
      %v1728 = vld [vmem:[%s192 + $0xa] sm:$0xff]
      %v1729 = vld [vmem:[%s192 + $0x12] sm:$0xff]
      %v1730 = vld [vmem:[%s192 + $0x1a] sm:$0xff]
      %v1731 = vld [vmem:[%s192 + $0x22] sm:$0xff]
      %v1732 = vld [vmem:[%s192 + $0x2a] sm:$0xff]
      %v1733 = vld [vmem:[%s192 + $0x32] sm:$0xff]
      %v1734 = vld [vmem:[%s192 + $0x3a] sm:$0xff]
      %v1735 = vld [vmem:[%s192 + $0x42] sm:$0xff]
      %v1736 = vld [vmem:[%s192 + $0x4a] sm:$0xff]
      %v1737 = vld [vmem:[%s192 + $0x52] sm:$0xff]
      %v1738 = vld [vmem:[%s192 + $0x5a] sm:$0xff]
      %v1739 = vld [vmem:[%s192 + $0x62] sm:$0xff]
      %v1740 = vld [vmem:[%s192 + $0x6a] sm:$0xff]
      %v1741 = vld [vmem:[%s192 + $0x72] sm:$0xff]
      %v1742 = vld [vmem:[%s192 + $0x7a] sm:$0xff]
      %v1743 = vld [vmem:[%s192 + $0x82] sm:$0xff]
      %v1744 = vld [vmem:[%s192 + $0x8a] sm:$0xff]
      %v1745 = vld [vmem:[%s192 + $0x92] sm:$0xff]
      %v1746 = vld [vmem:[%s192 + $0x9a] sm:$0xff]
      %v1747 = vld [vmem:[%s192 + $0xa2] sm:$0xff]
      %v1748 = vld [vmem:[%s192 + $0xaa] sm:$0xff]
      %v1749 = vld [vmem:[%s192 + $0xb2] sm:$0xff]
      %v1750 = vld [vmem:[%s192 + $0xba] sm:$0xff]
      %v1751 = vld [vmem:[%s192 + $0xc2] sm:$0xff]
      %v1752 = vld [vmem:[%s192 + $0xca] sm:$0xff]
      %v1753 = vld [vmem:[%s192 + $0xd2] sm:$0xff]
      %v1754 = vld [vmem:[%s192 + $0xda] sm:$0xff]
      %v1755 = vld [vmem:[%s192 + $0xe2] sm:$0xff]
      %v1756 = vld [vmem:[%s192 + $0xea] sm:$0xff]
      %v1757 = vld [vmem:[%s192 + $0xf2] sm:$0xff]
      %v1758 = vld [vmem:[%s192 + $0xfa] sm:$0xff]
      %v1759 = vld [vmem:[%s192 + $0x102] sm:$0xff]
      %v1760 = vld [vmem:[%s192 + $0x10a] sm:$0xff]
      %v1761 = vld [vmem:[%s192 + $0x112] sm:$0xff]
      %v1762 = vld [vmem:[%s192 + $0x11a] sm:$0xff]
      %v1763 = vld [vmem:[%s192 + $0x122] sm:$0xff]
      %v1764 = vld [vmem:[%s192 + $0x12a] sm:$0xff]
      %v1765 = vld [vmem:[%s192 + $0x132] sm:$0xff]
      %v1766 = vld [vmem:[%s192 + $0x13a] sm:$0xff]
      %v1767 = vld [vmem:[%s192 + $0x142] sm:$0xff]
      %v1768 = vld [vmem:[%s192 + $0x14a] sm:$0xff]
      %v1769 = vld [vmem:[%s192 + $0x152] sm:$0xff]
      %v1770 = vld [vmem:[%s192 + $0x15a] sm:$0xff]
      %v1771 = vld [vmem:[%s192 + $0x162] sm:$0xff]
      %v1772 = vld [vmem:[%s192 + $0x16a] sm:$0xff]
      %v1773 = vld [vmem:[%s192 + $0x172] sm:$0xff]
      %v1774 = vld [vmem:[%s192 + $0x17a] sm:$0xff]
      %v1775 = vld [vmem:[%s192 + $0x182] sm:$0xff]
      %v1776 = vld [vmem:[%s192 + $0x18a] sm:$0xff]
      %v1777 = vld [vmem:[%s192 + $0x192] sm:$0xff]
      %v1778 = vld [vmem:[%s192 + $0x19a] sm:$0xff]
      %v1779 = vld [vmem:[%s192 + $0x1a2] sm:$0xff]
      %v1780 = vld [vmem:[%s192 + $0x1aa] sm:$0xff]
      %v1781 = vld [vmem:[%s192 + $0x1b2] sm:$0xff]
      %v1782 = vld [vmem:[%s192 + $0x1ba] sm:$0xff]
      %v1783 = vld [vmem:[%s192 + $0x1c2] sm:$0xff]
      %v1784 = vld [vmem:[%s192 + $0x1ca] sm:$0xff]
      %v1785 = vld [vmem:[%s192 + $0x1d2] sm:$0xff]
      %v1786 = vld [vmem:[%s192 + $0x1da] sm:$0xff]
      %v1787 = vld [vmem:[%s192 + $0x1e2] sm:$0xff]
      %v1788 = vld [vmem:[%s192 + $0x1ea] sm:$0xff]
      %v1789 = vld [vmem:[%s192 + $0x1f2] sm:$0xff]
      %v1790 = vld [vmem:[%s192 + $0x1fa] sm:$0xff]
      %v1791 = vld [vmem:[%s192 + $0x202] sm:$0xff]
      %v1792 = vld [vmem:[%s192 + $0x20a] sm:$0xff]
      %v1793 = vld [vmem:[%s192 + $0x212] sm:$0xff]
      %v1794 = vld [vmem:[%s192 + $0x21a] sm:$0xff]
      %v1795 = vld [vmem:[%s192 + $0x222] sm:$0xff]
      %v1796 = vld [vmem:[%s192 + $0x22a] sm:$0xff]
      %v1797 = vld [vmem:[%s192 + $0x232] sm:$0xff]
      %v1798 = vld [vmem:[%s192 + $0x23a] sm:$0xff]
      %v1799 = vld [vmem:[%s192 + $0x242] sm:$0xff]
      %v1800 = vld [vmem:[%s192 + $0x24a] sm:$0xff]
      %v1801 = vld [vmem:[%s192 + $0x252] sm:$0xff]
      %v1802 = vld [vmem:[%s192 + $0x25a] sm:$0xff]
      %v1803 = vld [vmem:[%s192 + $0x262] sm:$0xff]
      %v1804 = vld [vmem:[%s192 + $0x26a] sm:$0xff]
      %v1805 = vld [vmem:[%s192 + $0x272] sm:$0xff]
      %v1806 = vld [vmem:[%s192 + $0x27a] sm:$0xff]
      %v1807 = vld [vmem:[%s192 + $0x282] sm:$0xff]
      %v1808 = vld [vmem:[%s192 + $0x28a] sm:$0xff]
      %v1809 = vld [vmem:[%s192 + $0x292] sm:$0xff]
      %v1810 = vld [vmem:[%s192 + $0x29a] sm:$0xff]
      %v1811 = vld [vmem:[%s192 + $0x2a2] sm:$0xff]
      %v1812 = vld [vmem:[%s192 + $0x2aa] sm:$0xff]
      %v1813 = vld [vmem:[%s192 + $0x2b2] sm:$0xff]
      %v1814 = vld [vmem:[%s192 + $0x2ba] sm:$0xff]
      %v1815 = vld [vmem:[%s192 + $0x2c2] sm:$0xff]
      %v1816 = vld [vmem:[%s192 + $0x2ca] sm:$0xff]
      %v1817 = vld [vmem:[%s192 + $0x2d2] sm:$0xff]
      %v1818 = vld [vmem:[%s192 + $0x2da] sm:$0xff]
      %v1819 = vld [vmem:[%s192 + $0x2e2] sm:$0xff]
      %v1820 = vld [vmem:[%s192 + $0x2ea] sm:$0xff]
      %v1821 = vld [vmem:[%s192 + $0x2f2] sm:$0xff]
      %v1822 = vld [vmem:[%s192 + $0x2fa] sm:$0xff]
      %v1823 = vld [vmem:[%s192 + $0x302] sm:$0xff]
      %v1824 = vld [vmem:[%s192 + $0x30a] sm:$0xff]
      %v1825 = vld [vmem:[%s192 + $0x312] sm:$0xff]
      %v1826 = vld [vmem:[%s192 + $0x31a] sm:$0xff]
      %v1827 = vld [vmem:[%s192 + $0x322] sm:$0xff]
      %v1828 = vld [vmem:[%s192 + $0x32a] sm:$0xff]
      %v1829 = vld [vmem:[%s192 + $0x332] sm:$0xff]
      %v1830 = vld [vmem:[%s192 + $0x33a] sm:$0xff]
      %v1831 = vld [vmem:[%s192 + $0x342] sm:$0xff]
      %v1832 = vld [vmem:[%s192 + $0x34a] sm:$0xff]
      %v1833 = vld [vmem:[%s192 + $0x352] sm:$0xff]
      %v1834 = vld [vmem:[%s192 + $0x35a] sm:$0xff]
      %v1835 = vld [vmem:[%s192 + $0x362] sm:$0xff]
      %v1836 = vld [vmem:[%s192 + $0x36a] sm:$0xff]
      %v1837 = vld [vmem:[%s192 + $0x372] sm:$0xff]
      %v1838 = vld [vmem:[%s192 + $0x37a] sm:$0xff]
      %v1839 = vld [vmem:[%s192 + $0x382] sm:$0xff]
      %v1840 = vld [vmem:[%s192 + $0x38a] sm:$0xff]
      %v1841 = vld [vmem:[%s192 + $0x392] sm:$0xff]
      %v1842 = vld [vmem:[%s192 + $0x39a] sm:$0xff]
      %v1843 = vld [vmem:[%s192 + $0x3a2] sm:$0xff]
      %v1844 = vld [vmem:[%s192 + $0x3aa] sm:$0xff]
      %v1845 = vld [vmem:[%s192 + $0x3b2] sm:$0xff]
      %v1846 = vld [vmem:[%s192 + $0x3ba] sm:$0xff]
      %v1847 = vld [vmem:[%s192 + $0x3c2] sm:$0xff]
      %v1848 = vld [vmem:[%s192 + $0x3ca] sm:$0xff]
      %v1849 = vld [vmem:[%s192 + $0x3d2] sm:$0xff]
      %v1850 = vld [vmem:[%s192 + $0x3da] sm:$0xff]
      %v1851 = vld [vmem:[%s192 + $0x3e2] sm:$0xff]
      %v1852 = vld [vmem:[%s192 + $0x3ea] sm:$0xff]
      %v1853 = vld [vmem:[%s192 + $0x3f2] sm:$0xff]
      %v1854 = vld [vmem:[%s192 + $0x3fa] sm:$0xff]
      %v1855 = vld [vmem:[%s192 + $0x402] sm:$0xff]
      %v1856 = vld [vmem:[%s192 + $0x40a] sm:$0xff]
      %v1857 = vld [vmem:[%s192 + $0x412] sm:$0xff]
      %v1858 = vld [vmem:[%s192 + $0x41a] sm:$0xff]
      %v1859 = vld [vmem:[%s192 + $0x422] sm:$0xff]
      %v1860 = vld [vmem:[%s192 + $0x42a] sm:$0xff]
      %v1861 = vld [vmem:[%s192 + $0x432] sm:$0xff]
      %v1862 = vld [vmem:[%s192 + $0x43a] sm:$0xff]
      %v1863 = vpack.c.bf16 %v1728, %v1727
      %v1864 = vpack.c.bf16 %v1730, %v1729
      %v1865 = vpack.c.bf16 %v1732, %v1731
      %v1866 = vpack.c.bf16 %v1734, %v1733
      %v1867 = vpack.c.bf16 %v1736, %v1735
      %v1868 = vpack.c.bf16 %v1738, %v1737
      %v1869 = vpack.c.bf16 %v1740, %v1739
      %v1870 = vpack.c.bf16 %v1742, %v1741
      %v1871 = vpack.c.bf16 %v1744, %v1743
      %v1872 = vpack.c.bf16 %v1746, %v1745
      %v1873 = vpack.c.bf16 %v1748, %v1747
      %v1874 = vpack.c.bf16 %v1750, %v1749
      %v1875 = vpack.c.bf16 %v1752, %v1751
      %v1876 = vpack.c.bf16 %v1754, %v1753
      %v1877 = vpack.c.bf16 %v1756, %v1755
      %v1878 = vpack.c.bf16 %v1758, %v1757
      %v1879 = vpack.c.bf16 %v1760, %v1759
      %v1880 = vpack.c.bf16 %v1762, %v1761
      %v1881 = vpack.c.bf16 %v1764, %v1763
      %v1882 = vpack.c.bf16 %v1766, %v1765
      %v1883 = vpack.c.bf16 %v1768, %v1767
      %v1884 = vpack.c.bf16 %v1770, %v1769
      %v1885 = vpack.c.bf16 %v1772, %v1771
      %v1886 = vpack.c.bf16 %v1774, %v1773
      %v1887 = vpack.c.bf16 %v1776, %v1775
      %v1888 = vpack.c.bf16 %v1778, %v1777
      %v1889 = vpack.c.bf16 %v1780, %v1779
      %v1890 = vpack.c.bf16 %v1782, %v1781
      %v1891 = vpack.c.bf16 %v1784, %v1783
      %v1892 = vpack.c.bf16 %v1786, %v1785
      %v1893 = vpack.c.bf16 %v1788, %v1787
      %v1894 = vpack.c.bf16 %v1790, %v1789
      %v1895 = vpack.c.bf16 %v1792, %v1791
      %v1896 = vpack.c.bf16 %v1794, %v1793
      %v1897 = vpack.c.bf16 %v1796, %v1795
      %v1898 = vpack.c.bf16 %v1798, %v1797
      %v1899 = vpack.c.bf16 %v1800, %v1799
      %v1900 = vpack.c.bf16 %v1802, %v1801
      %v1901 = vpack.c.bf16 %v1804, %v1803
      %v1902 = vpack.c.bf16 %v1806, %v1805
      %v1903 = vpack.c.bf16 %v1808, %v1807
      %v1904 = vpack.c.bf16 %v1810, %v1809
      %v1905 = vpack.c.bf16 %v1812, %v1811
      %v1906 = vpack.c.bf16 %v1814, %v1813
      %v1907 = vpack.c.bf16 %v1816, %v1815
      %v1908 = vpack.c.bf16 %v1818, %v1817
      %v1909 = vpack.c.bf16 %v1820, %v1819
      %v1910 = vpack.c.bf16 %v1822, %v1821
      %v1911 = vpack.c.bf16 %v1824, %v1823
      %v1912 = vpack.c.bf16 %v1826, %v1825
      %v1913 = vpack.c.bf16 %v1828, %v1827
      %v1914 = vpack.c.bf16 %v1830, %v1829
      %v1915 = vpack.c.bf16 %v1832, %v1831
      %v1916 = vpack.c.bf16 %v1834, %v1833
      %v1917 = vpack.c.bf16 %v1836, %v1835
      %v1918 = vpack.c.bf16 %v1838, %v1837
      %v1919 = vpack.c.bf16 %v1840, %v1839
      %v1920 = vpack.c.bf16 %v1842, %v1841
      %v1921 = vpack.c.bf16 %v1844, %v1843
      %v1922 = vpack.c.bf16 %v1846, %v1845
      %v1923 = vpack.c.bf16 %v1848, %v1847
      %v1924 = vpack.c.bf16 %v1850, %v1849
      %v1925 = vpack.c.bf16 %v1852, %v1851
      %v1926 = vpack.c.bf16 %v1854, %v1853
      %v1927 = vpack.c.bf16 %v1856, %v1855
      %v1928 = vpack.c.bf16 %v1858, %v1857
      %v1929 = vpack.c.bf16 %v1860, %v1859
      %v1930 = vpack.c.bf16 %v1862, %v1861
      %s1931 = scalar_lea.vmem %s1, 4
      %v1932 = vld [vmem:[%s1931] sm:$0x3]
      %v1934 = vsel %vm610, %v1863, 0
      %v1937 = vsel %vm610, %v1864, 0
      %v1940 = vsel %vm610, %v1865, 0
      %v1943 = vsel %vm610, %v1866, 0
      %v1946 = vsel %vm610, %v1867, 0
      %v1949 = vsel %vm610, %v1868, 0
      %v1952 = vsel %vm610, %v1869, 0
      %v1955 = vsel %vm610, %v1870, 0
      %v1958 = vsel %vm610, %v1871, 0
      %v1961 = vsel %vm610, %v1872, 0
      %v1964 = vsel %vm610, %v1873, 0
      %v1967 = vsel %vm610, %v1874, 0
      %v1970 = vsel %vm610, %v1875, 0
      %v1973 = vsel %vm610, %v1876, 0
      %v1976 = vsel %vm610, %v1877, 0
      %v1979 = vsel %vm610, %v1878, 0
      %v1982 = vsel %vm610, %v1879, 0
      %v1985 = vsel %vm610, %v1880, 0
      %v1988 = vsel %vm610, %v1881, 0
      %v1991 = vsel %vm610, %v1882, 0
      %v1994 = vsel %vm610, %v1883, 0
      %v1997 = vsel %vm610, %v1884, 0
      %v2000 = vsel %vm610, %v1885, 0
      %v2003 = vsel %vm610, %v1886, 0
      %v2006 = vsel %vm610, %v1887, 0
      %v2009 = vsel %vm610, %v1888, 0
      %v2012 = vsel %vm610, %v1889, 0
      %v2015 = vsel %vm610, %v1890, 0
      %v2018 = vsel %vm610, %v1891, 0
      %v2021 = vsel %vm610, %v1892, 0
      %v2024 = vsel %vm610, %v1893, 0
      %v2027 = vsel %vm610, %v1894, 0
      %v2030 = vsel %vm610, %v1895, 0
      %v2033 = vsel %vm610, %v1896, 0
      %v2036 = vsel %vm610, %v1897, 0
      %v2039 = vsel %vm610, %v1898, 0
      %v2042 = vsel %vm610, %v1899, 0
      %v2045 = vsel %vm610, %v1900, 0
      %v2048 = vsel %vm610, %v1901, 0
      %v2051 = vsel %vm610, %v1902, 0
      %v2054 = vsel %vm610, %v1903, 0
      %v2057 = vsel %vm610, %v1904, 0
      %v2060 = vsel %vm610, %v1905, 0
      %v2063 = vsel %vm610, %v1906, 0
      %v2066 = vsel %vm610, %v1907, 0
      %v2069 = vsel %vm610, %v1908, 0
      %v2072 = vsel %vm610, %v1909, 0
      %v2075 = vsel %vm610, %v1910, 0
      %v2078 = vsel %vm610, %v1911, 0
      %v2081 = vsel %vm610, %v1912, 0
      %v2084 = vsel %vm610, %v1913, 0
      %v2087 = vsel %vm610, %v1914, 0
      %v2090 = vsel %vm610, %v1915, 0
      %v2093 = vsel %vm610, %v1916, 0
      %v2096 = vsel %vm610, %v1917, 0
      %v2099 = vsel %vm610, %v1918, 0
      %v2102 = vsel %vm610, %v1919, 0
      %v2105 = vsel %vm610, %v1920, 0
      %v2108 = vsel %vm610, %v1921, 0
      %v2111 = vsel %vm610, %v1922, 0
      %v2114 = vsel %vm610, %v1923, 0
      %v2117 = vsel %vm610, %v1924, 0
      %v2120 = vsel %vm610, %v1925, 0
      %v2123 = vsel %vm610, %v1926, 0
      %v2126 = vsel %vm610, %v1927, 0
      %v2129 = vsel %vm610, %v1928, 0
      %v2132 = vsel %vm610, %v1929, 0
      %v2135 = vsel %vm610, %v1930, 0
      %v2138 = vand.u32 %v1932, %v818
      %2140 = vmatpush.bf16.msra.mxu0 0
      %2141 = vmatpush.bf16.msra.mxu0 0
      %2142 = vmatpush.bf16.msra.mxu0 0
      %2143 = vmatpush.bf16.msra.mxu0 0
      %2144 = vmatpush.bf16.msra.mxu0 0
      %2145 = vmatpush.bf16.msra.mxu0 0
      %2146 = vmatpush.bf16.msra.mxu0 0
      %2147 = vmatpush.bf16.msra.mxu0 %v2138
      %2148 = vmatmul.bf16.gmra.mxu0 %v1934
      %v2149 = vpop.f32.mrf.mxu0
      %v2150 = vadd.f32 0.0, %v2149
      %v2151 = vpop.f32.mrf.mxu0
      %v2152 = vadd.f32 0.0, %v2151
      %2153 = vmatmul.bf16.gmra.mxu0 %v1937
      %v2154 = vpop.f32.mrf.mxu0
      %v2155 = vadd.f32 0.0, %v2154
      %v2156 = vpop.f32.mrf.mxu0
      %v2157 = vadd.f32 0.0, %v2156
      %2158 = vmatmul.bf16.gmra.mxu0 %v1940
      %v2159 = vpop.f32.mrf.mxu0
      %v2160 = vadd.f32 0.0, %v2159
      %v2161 = vpop.f32.mrf.mxu0
      %v2162 = vadd.f32 0.0, %v2161
      %2163 = vmatmul.bf16.gmra.mxu0 %v1943
      %v2164 = vpop.f32.mrf.mxu0
      %v2165 = vadd.f32 0.0, %v2164
      %v2166 = vpop.f32.mrf.mxu0
      %v2167 = vadd.f32 0.0, %v2166
      %2168 = vmatmul.bf16.gmra.mxu0 %v1946
      %v2169 = vpop.f32.mrf.mxu0
      %v2170 = vadd.f32 0.0, %v2169
      %v2171 = vpop.f32.mrf.mxu0
      %v2172 = vadd.f32 0.0, %v2171
      %2173 = vmatmul.bf16.gmra.mxu0 %v1949
      %v2174 = vpop.f32.mrf.mxu0
      %v2175 = vadd.f32 0.0, %v2174
      %v2176 = vpop.f32.mrf.mxu0
      %v2177 = vadd.f32 0.0, %v2176
      %2178 = vmatmul.bf16.gmra.mxu0 %v1952
      %v2179 = vpop.f32.mrf.mxu0
      %v2180 = vadd.f32 0.0, %v2179
      %v2181 = vpop.f32.mrf.mxu0
      %v2182 = vadd.f32 0.0, %v2181
      %2183 = vmatmul.bf16.gmra.mxu0 %v1955
      %v2184 = vpop.f32.mrf.mxu0
      %v2185 = vadd.f32 0.0, %v2184
      %v2186 = vpop.f32.mrf.mxu0
      %v2187 = vadd.f32 0.0, %v2186
      %2188 = vmatmul.bf16.gmra.mxu0 %v1958
      %v2189 = vpop.f32.mrf.mxu0
      %v2190 = vadd.f32 0.0, %v2189
      %v2191 = vpop.f32.mrf.mxu0
      %v2192 = vadd.f32 0.0, %v2191
      %2193 = vmatmul.bf16.gmra.mxu0 %v1961
      %v2194 = vpop.f32.mrf.mxu0
      %v2195 = vadd.f32 0.0, %v2194
      %v2196 = vpop.f32.mrf.mxu0
      %v2197 = vadd.f32 0.0, %v2196
      %2198 = vmatmul.bf16.gmra.mxu0 %v1964
      %v2199 = vpop.f32.mrf.mxu0
      %v2200 = vadd.f32 0.0, %v2199
      %v2201 = vpop.f32.mrf.mxu0
      %v2202 = vadd.f32 0.0, %v2201
      %2203 = vmatmul.bf16.gmra.mxu0 %v1967
      %v2204 = vpop.f32.mrf.mxu0
      %v2205 = vadd.f32 0.0, %v2204
      %v2206 = vpop.f32.mrf.mxu0
      %v2207 = vadd.f32 0.0, %v2206
      %2208 = vmatmul.bf16.gmra.mxu0 %v1970
      %v2209 = vpop.f32.mrf.mxu0
      %v2210 = vadd.f32 0.0, %v2209
      %v2211 = vpop.f32.mrf.mxu0
      %v2212 = vadd.f32 0.0, %v2211
      %2213 = vmatmul.bf16.gmra.mxu0 %v1973
      %v2214 = vpop.f32.mrf.mxu0
      %v2215 = vadd.f32 0.0, %v2214
      %v2216 = vpop.f32.mrf.mxu0
      %v2217 = vadd.f32 0.0, %v2216
      %2218 = vmatmul.bf16.gmra.mxu0 %v1976
      %v2219 = vpop.f32.mrf.mxu0
      %v2220 = vadd.f32 0.0, %v2219
      %v2221 = vpop.f32.mrf.mxu0
      %v2222 = vadd.f32 0.0, %v2221
      %2223 = vmatmul.bf16.gmra.mxu0 %v1979
      %v2224 = vpop.f32.mrf.mxu0
      %v2225 = vadd.f32 0.0, %v2224
      %v2226 = vpop.f32.mrf.mxu0
      %v2227 = vadd.f32 0.0, %v2226
      %2228 = vmatmul.bf16.gmra.mxu0 %v1982
      %v2229 = vpop.f32.mrf.mxu0
      %v2230 = vadd.f32 0.0, %v2229
      %v2231 = vpop.f32.mrf.mxu0
      %v2232 = vadd.f32 0.0, %v2231
      %2233 = vmatmul.bf16.gmra.mxu0 %v1985
      %v2234 = vpop.f32.mrf.mxu0
      %v2235 = vadd.f32 0.0, %v2234
      %v2236 = vpop.f32.mrf.mxu0
      %v2237 = vadd.f32 0.0, %v2236
      %2238 = vmatmul.bf16.gmra.mxu0 %v1988
      %v2239 = vpop.f32.mrf.mxu0
      %v2240 = vadd.f32 0.0, %v2239
      %v2241 = vpop.f32.mrf.mxu0
      %v2242 = vadd.f32 0.0, %v2241
      %2243 = vmatmul.bf16.gmra.mxu0 %v1991
      %v2244 = vpop.f32.mrf.mxu0
      %v2245 = vadd.f32 0.0, %v2244
      %v2246 = vpop.f32.mrf.mxu0
      %v2247 = vadd.f32 0.0, %v2246
      %2248 = vmatmul.bf16.gmra.mxu0 %v1994
      %v2249 = vpop.f32.mrf.mxu0
      %v2250 = vadd.f32 0.0, %v2249
      %v2251 = vpop.f32.mrf.mxu0
      %v2252 = vadd.f32 0.0, %v2251
      %2253 = vmatmul.bf16.gmra.mxu0 %v1997
      %v2254 = vpop.f32.mrf.mxu0
      %v2255 = vadd.f32 0.0, %v2254
      %v2256 = vpop.f32.mrf.mxu0
      %v2257 = vadd.f32 0.0, %v2256
      %2258 = vmatmul.bf16.gmra.mxu0 %v2000
      %v2259 = vpop.f32.mrf.mxu0
      %v2260 = vadd.f32 0.0, %v2259
      %v2261 = vpop.f32.mrf.mxu0
      %v2262 = vadd.f32 0.0, %v2261
      %2263 = vmatmul.bf16.gmra.mxu0 %v2003
      %v2264 = vpop.f32.mrf.mxu0
      %v2265 = vadd.f32 0.0, %v2264
      %v2266 = vpop.f32.mrf.mxu0
      %v2267 = vadd.f32 0.0, %v2266
      %2268 = vmatmul.bf16.gmra.mxu0 %v2006
      %v2269 = vpop.f32.mrf.mxu0
      %v2270 = vadd.f32 0.0, %v2269
      %v2271 = vpop.f32.mrf.mxu0
      %v2272 = vadd.f32 0.0, %v2271
      %2273 = vmatmul.bf16.gmra.mxu0 %v2009
      %v2274 = vpop.f32.mrf.mxu0
      %v2275 = vadd.f32 0.0, %v2274
      %v2276 = vpop.f32.mrf.mxu0
      %v2277 = vadd.f32 0.0, %v2276
      %2278 = vmatmul.bf16.gmra.mxu0 %v2012
      %v2279 = vpop.f32.mrf.mxu0
      %v2280 = vadd.f32 0.0, %v2279
      %v2281 = vpop.f32.mrf.mxu0
      %v2282 = vadd.f32 0.0, %v2281
      %2283 = vmatmul.bf16.gmra.mxu0 %v2015
      %v2284 = vpop.f32.mrf.mxu0
      %v2285 = vadd.f32 0.0, %v2284
      %v2286 = vpop.f32.mrf.mxu0
      %v2287 = vadd.f32 0.0, %v2286
      %2288 = vmatmul.bf16.gmra.mxu0 %v2018
      %v2289 = vpop.f32.mrf.mxu0
      %v2290 = vadd.f32 0.0, %v2289
      %v2291 = vpop.f32.mrf.mxu0
      %v2292 = vadd.f32 0.0, %v2291
      %2293 = vmatmul.bf16.gmra.mxu0 %v2021
      %v2294 = vpop.f32.mrf.mxu0
      %v2295 = vadd.f32 0.0, %v2294
      %v2296 = vpop.f32.mrf.mxu0
      %v2297 = vadd.f32 0.0, %v2296
      %2298 = vmatmul.bf16.gmra.mxu0 %v2024
      %v2299 = vpop.f32.mrf.mxu0
      %v2300 = vadd.f32 0.0, %v2299
      %v2301 = vpop.f32.mrf.mxu0
      %v2302 = vadd.f32 0.0, %v2301
      %2303 = vmatmul.bf16.gmra.mxu0 %v2027
      %v2304 = vpop.f32.mrf.mxu0
      %v2305 = vadd.f32 0.0, %v2304
      %v2306 = vpop.f32.mrf.mxu0
      %v2307 = vadd.f32 0.0, %v2306
      %2308 = vmatmul.bf16.gmra.mxu0 %v2030
      %v2309 = vpop.f32.mrf.mxu0
      %v2310 = vadd.f32 0.0, %v2309
      %v2311 = vpop.f32.mrf.mxu0
      %v2312 = vadd.f32 0.0, %v2311
      %2313 = vmatmul.bf16.gmra.mxu0 %v2033
      %v2314 = vpop.f32.mrf.mxu0
      %v2315 = vadd.f32 0.0, %v2314
      %v2316 = vpop.f32.mrf.mxu0
      %v2317 = vadd.f32 0.0, %v2316
      %2318 = vmatmul.bf16.gmra.mxu0 %v2036
      %v2319 = vpop.f32.mrf.mxu0
      %v2320 = vadd.f32 0.0, %v2319
      %v2321 = vpop.f32.mrf.mxu0
      %v2322 = vadd.f32 0.0, %v2321
      %2323 = vmatmul.bf16.gmra.mxu0 %v2039
      %v2324 = vpop.f32.mrf.mxu0
      %v2325 = vadd.f32 0.0, %v2324
      %v2326 = vpop.f32.mrf.mxu0
      %v2327 = vadd.f32 0.0, %v2326
      %2328 = vmatmul.bf16.gmra.mxu0 %v2042
      %v2329 = vpop.f32.mrf.mxu0
      %v2330 = vadd.f32 0.0, %v2329
      %v2331 = vpop.f32.mrf.mxu0
      %v2332 = vadd.f32 0.0, %v2331
      %2333 = vmatmul.bf16.gmra.mxu0 %v2045
      %v2334 = vpop.f32.mrf.mxu0
      %v2335 = vadd.f32 0.0, %v2334
      %v2336 = vpop.f32.mrf.mxu0
      %v2337 = vadd.f32 0.0, %v2336
      %2338 = vmatmul.bf16.gmra.mxu0 %v2048
      %v2339 = vpop.f32.mrf.mxu0
      %v2340 = vadd.f32 0.0, %v2339
      %v2341 = vpop.f32.mrf.mxu0
      %v2342 = vadd.f32 0.0, %v2341
      %2343 = vmatmul.bf16.gmra.mxu0 %v2051
      %v2344 = vpop.f32.mrf.mxu0
      %v2345 = vadd.f32 0.0, %v2344
      %v2346 = vpop.f32.mrf.mxu0
      %v2347 = vadd.f32 0.0, %v2346
      %2348 = vmatmul.bf16.gmra.mxu0 %v2054
      %v2349 = vpop.f32.mrf.mxu0
      %v2350 = vadd.f32 0.0, %v2349
      %v2351 = vpop.f32.mrf.mxu0
      %v2352 = vadd.f32 0.0, %v2351
      %2353 = vmatmul.bf16.gmra.mxu0 %v2057
      %v2354 = vpop.f32.mrf.mxu0
      %v2355 = vadd.f32 0.0, %v2354
      %v2356 = vpop.f32.mrf.mxu0
      %v2357 = vadd.f32 0.0, %v2356
      %2358 = vmatmul.bf16.gmra.mxu0 %v2060
      %v2359 = vpop.f32.mrf.mxu0
      %v2360 = vadd.f32 0.0, %v2359
      %v2361 = vpop.f32.mrf.mxu0
      %v2362 = vadd.f32 0.0, %v2361
      %2363 = vmatmul.bf16.gmra.mxu0 %v2063
      %v2364 = vpop.f32.mrf.mxu0
      %v2365 = vadd.f32 0.0, %v2364
      %v2366 = vpop.f32.mrf.mxu0
      %v2367 = vadd.f32 0.0, %v2366
      %2368 = vmatmul.bf16.gmra.mxu0 %v2066
      %v2369 = vpop.f32.mrf.mxu0
      %v2370 = vadd.f32 0.0, %v2369
      %v2371 = vpop.f32.mrf.mxu0
      %v2372 = vadd.f32 0.0, %v2371
      %2373 = vmatmul.bf16.gmra.mxu0 %v2069
      %v2374 = vpop.f32.mrf.mxu0
      %v2375 = vadd.f32 0.0, %v2374
      %v2376 = vpop.f32.mrf.mxu0
      %v2377 = vadd.f32 0.0, %v2376
      %2378 = vmatmul.bf16.gmra.mxu0 %v2072
      %v2379 = vpop.f32.mrf.mxu0
      %v2380 = vadd.f32 0.0, %v2379
      %v2381 = vpop.f32.mrf.mxu0
      %v2382 = vadd.f32 0.0, %v2381
      %2383 = vmatmul.bf16.gmra.mxu0 %v2075
      %v2384 = vpop.f32.mrf.mxu0
      %v2385 = vadd.f32 0.0, %v2384
      %v2386 = vpop.f32.mrf.mxu0
      %v2387 = vadd.f32 0.0, %v2386
      %2388 = vmatmul.bf16.gmra.mxu0 %v2078
      %v2389 = vpop.f32.mrf.mxu0
      %v2390 = vadd.f32 0.0, %v2389
      %v2391 = vpop.f32.mrf.mxu0
      %v2392 = vadd.f32 0.0, %v2391
      %2393 = vmatmul.bf16.gmra.mxu0 %v2081
      %v2394 = vpop.f32.mrf.mxu0
      %v2395 = vadd.f32 0.0, %v2394
      %v2396 = vpop.f32.mrf.mxu0
      %v2397 = vadd.f32 0.0, %v2396
      %2398 = vmatmul.bf16.gmra.mxu0 %v2084
      %v2399 = vpop.f32.mrf.mxu0
      %v2400 = vadd.f32 0.0, %v2399
      %v2401 = vpop.f32.mrf.mxu0
      %v2402 = vadd.f32 0.0, %v2401
      %2403 = vmatmul.bf16.gmra.mxu0 %v2087
      %v2404 = vpop.f32.mrf.mxu0
      %v2405 = vadd.f32 0.0, %v2404
      %v2406 = vpop.f32.mrf.mxu0
      %v2407 = vadd.f32 0.0, %v2406
      %2408 = vmatmul.bf16.gmra.mxu0 %v2090
      %v2409 = vpop.f32.mrf.mxu0
      %v2410 = vadd.f32 0.0, %v2409
      %v2411 = vpop.f32.mrf.mxu0
      %v2412 = vadd.f32 0.0, %v2411
      %2413 = vmatmul.bf16.gmra.mxu0 %v2093
      %v2414 = vpop.f32.mrf.mxu0
      %v2415 = vadd.f32 0.0, %v2414
      %v2416 = vpop.f32.mrf.mxu0
      %v2417 = vadd.f32 0.0, %v2416
      %2418 = vmatmul.bf16.gmra.mxu0 %v2096
      %v2419 = vpop.f32.mrf.mxu0
      %v2420 = vadd.f32 0.0, %v2419
      %v2421 = vpop.f32.mrf.mxu0
      %v2422 = vadd.f32 0.0, %v2421
      %2423 = vmatmul.bf16.gmra.mxu0 %v2099
      %v2424 = vpop.f32.mrf.mxu0
      %v2425 = vadd.f32 0.0, %v2424
      %v2426 = vpop.f32.mrf.mxu0
      %v2427 = vadd.f32 0.0, %v2426
      %2428 = vmatmul.bf16.gmra.mxu0 %v2102
      %v2429 = vpop.f32.mrf.mxu0
      %v2430 = vadd.f32 0.0, %v2429
      %v2431 = vpop.f32.mrf.mxu0
      %v2432 = vadd.f32 0.0, %v2431
      %2433 = vmatmul.bf16.gmra.mxu0 %v2105
      %v2434 = vpop.f32.mrf.mxu0
      %v2435 = vadd.f32 0.0, %v2434
      %v2436 = vpop.f32.mrf.mxu0
      %v2437 = vadd.f32 0.0, %v2436
      %2438 = vmatmul.bf16.gmra.mxu0 %v2108
      %v2439 = vpop.f32.mrf.mxu0
      %v2440 = vadd.f32 0.0, %v2439
      %v2441 = vpop.f32.mrf.mxu0
      %v2442 = vadd.f32 0.0, %v2441
      %2443 = vmatmul.bf16.gmra.mxu0 %v2111
      %v2444 = vpop.f32.mrf.mxu0
      %v2445 = vadd.f32 0.0, %v2444
      %v2446 = vpop.f32.mrf.mxu0
      %v2447 = vadd.f32 0.0, %v2446
      %2448 = vmatmul.bf16.gmra.mxu0 %v2114
      %v2449 = vpop.f32.mrf.mxu0
      %v2450 = vadd.f32 0.0, %v2449
      %v2451 = vpop.f32.mrf.mxu0
      %v2452 = vadd.f32 0.0, %v2451
      %2453 = vmatmul.bf16.gmra.mxu0 %v2117
      %v2454 = vpop.f32.mrf.mxu0
      %v2455 = vadd.f32 0.0, %v2454
      %v2456 = vpop.f32.mrf.mxu0
      %v2457 = vadd.f32 0.0, %v2456
      %2458 = vmatmul.bf16.gmra.mxu0 %v2120
      %v2459 = vpop.f32.mrf.mxu0
      %v2460 = vadd.f32 0.0, %v2459
      %v2461 = vpop.f32.mrf.mxu0
      %v2462 = vadd.f32 0.0, %v2461
      %2463 = vmatmul.bf16.gmra.mxu0 %v2123
      %v2464 = vpop.f32.mrf.mxu0
      %v2465 = vadd.f32 0.0, %v2464
      %v2466 = vpop.f32.mrf.mxu0
      %v2467 = vadd.f32 0.0, %v2466
      %2468 = vmatmul.bf16.gmra.mxu0 %v2126
      %v2469 = vpop.f32.mrf.mxu0
      %v2470 = vadd.f32 0.0, %v2469
      %v2471 = vpop.f32.mrf.mxu0
      %v2472 = vadd.f32 0.0, %v2471
      %2473 = vmatmul.bf16.gmra.mxu0 %v2129
      %v2474 = vpop.f32.mrf.mxu0
      %v2475 = vadd.f32 0.0, %v2474
      %v2476 = vpop.f32.mrf.mxu0
      %v2477 = vadd.f32 0.0, %v2476
      %2478 = vmatmul.bf16.gmra.mxu0 %v2132
      %v2479 = vpop.f32.mrf.mxu0
      %v2480 = vadd.f32 0.0, %v2479
      %v2481 = vpop.f32.mrf.mxu0
      %v2482 = vadd.f32 0.0, %v2481
      %2483 = vmatmul.bf16.gmra.mxu0 %v2135
      %v2484 = vpop.f32.mrf.mxu0
      %v2485 = vadd.f32 0.0, %v2484
      %v2486 = vpop.f32.mrf.mxu0
      %v2487 = vadd.f32 0.0, %v2486
      %2488 = vdwg.mxu0
      %v2489 = vadd.f32 %v1388, %v2150
      %v2490 = vadd.f32 %v1390, %v2152
      %v2491 = vadd.f32 %v1393, %v2155
      %v2492 = vadd.f32 %v1395, %v2157
      %v2493 = vadd.f32 %v1398, %v2160
      %v2494 = vadd.f32 %v1400, %v2162
      %v2495 = vadd.f32 %v1403, %v2165
      %v2496 = vadd.f32 %v1405, %v2167
      %v2497 = vadd.f32 %v1408, %v2170
      %v2498 = vadd.f32 %v1410, %v2172
      %v2499 = vadd.f32 %v1413, %v2175
      %v2500 = vadd.f32 %v1415, %v2177
      %v2501 = vadd.f32 %v1418, %v2180
      %v2502 = vadd.f32 %v1420, %v2182
      %v2503 = vadd.f32 %v1423, %v2185
      %v2504 = vadd.f32 %v1425, %v2187
      %v2505 = vadd.f32 %v1428, %v2190
      %v2506 = vadd.f32 %v1430, %v2192
      %v2507 = vadd.f32 %v1433, %v2195
      %v2508 = vadd.f32 %v1435, %v2197
      %v2509 = vadd.f32 %v1438, %v2200
      %v2510 = vadd.f32 %v1440, %v2202
      %v2511 = vadd.f32 %v1443, %v2205
      %v2512 = vadd.f32 %v1445, %v2207
      %v2513 = vadd.f32 %v1448, %v2210
      %v2514 = vadd.f32 %v1450, %v2212
      %v2515 = vadd.f32 %v1453, %v2215
      %v2516 = vadd.f32 %v1455, %v2217
      %v2517 = vadd.f32 %v1458, %v2220
      %v2518 = vadd.f32 %v1460, %v2222
      %v2519 = vadd.f32 %v1463, %v2225
      %v2520 = vadd.f32 %v1465, %v2227
      %v2521 = vadd.f32 %v1468, %v2230
      %v2522 = vadd.f32 %v1470, %v2232
      %v2523 = vadd.f32 %v1473, %v2235
      %v2524 = vadd.f32 %v1475, %v2237
      %v2525 = vadd.f32 %v1478, %v2240
      %v2526 = vadd.f32 %v1480, %v2242
      %v2527 = vadd.f32 %v1483, %v2245
      %v2528 = vadd.f32 %v1485, %v2247
      %v2529 = vadd.f32 %v1488, %v2250
      %v2530 = vadd.f32 %v1490, %v2252
      %v2531 = vadd.f32 %v1493, %v2255
      %v2532 = vadd.f32 %v1495, %v2257
      %v2533 = vadd.f32 %v1498, %v2260
      %v2534 = vadd.f32 %v1500, %v2262
      %v2535 = vadd.f32 %v1503, %v2265
      %v2536 = vadd.f32 %v1505, %v2267
      %v2537 = vadd.f32 %v1508, %v2270
      %v2538 = vadd.f32 %v1510, %v2272
      %v2539 = vadd.f32 %v1513, %v2275
      %v2540 = vadd.f32 %v1515, %v2277
      %v2541 = vadd.f32 %v1518, %v2280
      %v2542 = vadd.f32 %v1520, %v2282
      %v2543 = vadd.f32 %v1523, %v2285
      %v2544 = vadd.f32 %v1525, %v2287
      %v2545 = vadd.f32 %v1528, %v2290
      %v2546 = vadd.f32 %v1530, %v2292
      %v2547 = vadd.f32 %v1533, %v2295
      %v2548 = vadd.f32 %v1535, %v2297
      %v2549 = vadd.f32 %v1538, %v2300
      %v2550 = vadd.f32 %v1540, %v2302
      %v2551 = vadd.f32 %v1543, %v2305
      %v2552 = vadd.f32 %v1545, %v2307
      %v2553 = vadd.f32 %v1548, %v2310
      %v2554 = vadd.f32 %v1550, %v2312
      %v2555 = vadd.f32 %v1553, %v2315
      %v2556 = vadd.f32 %v1555, %v2317
      %v2557 = vadd.f32 %v1558, %v2320
      %v2558 = vadd.f32 %v1560, %v2322
      %v2559 = vadd.f32 %v1563, %v2325
      %v2560 = vadd.f32 %v1565, %v2327
      %v2561 = vadd.f32 %v1568, %v2330
      %v2562 = vadd.f32 %v1570, %v2332
      %v2563 = vadd.f32 %v1573, %v2335
      %v2564 = vadd.f32 %v1575, %v2337
      %v2565 = vadd.f32 %v1578, %v2340
      %v2566 = vadd.f32 %v1580, %v2342
      %v2567 = vadd.f32 %v1583, %v2345
      %v2568 = vadd.f32 %v1585, %v2347
      %v2569 = vadd.f32 %v1588, %v2350
      %v2570 = vadd.f32 %v1590, %v2352
      %v2571 = vadd.f32 %v1593, %v2355
      %v2572 = vadd.f32 %v1595, %v2357
      %v2573 = vadd.f32 %v1598, %v2360
      %v2574 = vadd.f32 %v1600, %v2362
      %v2575 = vadd.f32 %v1603, %v2365
      %v2576 = vadd.f32 %v1605, %v2367
      %v2577 = vadd.f32 %v1608, %v2370
      %v2578 = vadd.f32 %v1610, %v2372
      %v2579 = vadd.f32 %v1613, %v2375
      %v2580 = vadd.f32 %v1615, %v2377
      %v2581 = vadd.f32 %v1618, %v2380
      %v2582 = vadd.f32 %v1620, %v2382
      %v2583 = vadd.f32 %v1623, %v2385
      %v2584 = vadd.f32 %v1625, %v2387
      %v2585 = vadd.f32 %v1628, %v2390
      %v2586 = vadd.f32 %v1630, %v2392
      %v2587 = vadd.f32 %v1633, %v2395
      %v2588 = vadd.f32 %v1635, %v2397
      %v2589 = vadd.f32 %v1638, %v2400
      %v2590 = vadd.f32 %v1640, %v2402
      %v2591 = vadd.f32 %v1643, %v2405
      %v2592 = vadd.f32 %v1645, %v2407
      %v2593 = vadd.f32 %v1648, %v2410
      %v2594 = vadd.f32 %v1650, %v2412
      %v2595 = vadd.f32 %v1653, %v2415
      %v2596 = vadd.f32 %v1655, %v2417
      %v2597 = vadd.f32 %v1658, %v2420
      %v2598 = vadd.f32 %v1660, %v2422
      %v2599 = vadd.f32 %v1663, %v2425
      %v2600 = vadd.f32 %v1665, %v2427
      %v2601 = vadd.f32 %v1668, %v2430
      %v2602 = vadd.f32 %v1670, %v2432
      %v2603 = vadd.f32 %v1673, %v2435
      %v2604 = vadd.f32 %v1675, %v2437
      %v2605 = vadd.f32 %v1678, %v2440
      %v2606 = vadd.f32 %v1680, %v2442
      %v2607 = vadd.f32 %v1683, %v2445
      %v2608 = vadd.f32 %v1685, %v2447
      %v2609 = vadd.f32 %v1688, %v2450
      %v2610 = vadd.f32 %v1690, %v2452
      %v2611 = vadd.f32 %v1693, %v2455
      %v2612 = vadd.f32 %v1695, %v2457
      %v2613 = vadd.f32 %v1698, %v2460
      %v2614 = vadd.f32 %v1700, %v2462
      %v2615 = vadd.f32 %v1703, %v2465
      %v2616 = vadd.f32 %v1705, %v2467
      %v2617 = vadd.f32 %v1708, %v2470
      %v2618 = vadd.f32 %v1710, %v2472
      %v2619 = vadd.f32 %v1713, %v2475
      %v2620 = vadd.f32 %v1715, %v2477
      %v2621 = vadd.f32 %v1718, %v2480
      %v2622 = vadd.f32 %v1720, %v2482
      %v2623 = vadd.f32 %v1723, %v2485
      %v2624 = vadd.f32 %v1725, %v2487
      %v2625 = vld [vmem:[%s192 + $0x22] sm:$0xff]
      %v2626 = vld [vmem:[%s192 + $0x2a] sm:$0xff]
      %v2627 = vld [vmem:[%s192 + $0x32] sm:$0xff]
      %v2628 = vld [vmem:[%s192 + $0x3a] sm:$0xff]
      %v2629 = vld [vmem:[%s192 + $0x42] sm:$0xff]
      %v2630 = vld [vmem:[%s192 + $0x4a] sm:$0xff]
      %v2631 = vld [vmem:[%s192 + $0x52] sm:$0xff]
      %v2632 = vld [vmem:[%s192 + $0x5a] sm:$0xff]
      %v2633 = vld [vmem:[%s192 + $0x62] sm:$0xff]
      %v2634 = vld [vmem:[%s192 + $0x6a] sm:$0xff]
      %v2635 = vld [vmem:[%s192 + $0x72] sm:$0xff]
      %v2636 = vld [vmem:[%s192 + $0x7a] sm:$0xff]
      %v2637 = vld [vmem:[%s192 + $0x82] sm:$0xff]
      %v2638 = vld [vmem:[%s192 + $0x8a] sm:$0xff]
      %v2639 = vld [vmem:[%s192 + $0x92] sm:$0xff]
      %v2640 = vld [vmem:[%s192 + $0x9a] sm:$0xff]
      %v2641 = vld [vmem:[%s192 + $0xa2] sm:$0xff]
      %v2642 = vld [vmem:[%s192 + $0xaa] sm:$0xff]
      %v2643 = vld [vmem:[%s192 + $0xb2] sm:$0xff]
      %v2644 = vld [vmem:[%s192 + $0xba] sm:$0xff]
      %v2645 = vld [vmem:[%s192 + $0xc2] sm:$0xff]
      %v2646 = vld [vmem:[%s192 + $0xca] sm:$0xff]
      %v2647 = vld [vmem:[%s192 + $0xd2] sm:$0xff]
      %v2648 = vld [vmem:[%s192 + $0xda] sm:$0xff]
      %v2649 = vld [vmem:[%s192 + $0xe2] sm:$0xff]
      %v2650 = vld [vmem:[%s192 + $0xea] sm:$0xff]
      %v2651 = vld [vmem:[%s192 + $0xf2] sm:$0xff]
      %v2652 = vld [vmem:[%s192 + $0xfa] sm:$0xff]
      %v2653 = vld [vmem:[%s192 + $0x102] sm:$0xff]
      %v2654 = vld [vmem:[%s192 + $0x10a] sm:$0xff]
      %v2655 = vld [vmem:[%s192 + $0x112] sm:$0xff]
      %v2656 = vld [vmem:[%s192 + $0x11a] sm:$0xff]
      %v2657 = vld [vmem:[%s192 + $0x122] sm:$0xff]
      %v2658 = vld [vmem:[%s192 + $0x12a] sm:$0xff]
      %v2659 = vld [vmem:[%s192 + $0x132] sm:$0xff]
      %v2660 = vld [vmem:[%s192 + $0x13a] sm:$0xff]
      %v2661 = vld [vmem:[%s192 + $0x142] sm:$0xff]
      %v2662 = vld [vmem:[%s192 + $0x14a] sm:$0xff]
      %v2663 = vld [vmem:[%s192 + $0x152] sm:$0xff]
      %v2664 = vld [vmem:[%s192 + $0x15a] sm:$0xff]
      %v2665 = vld [vmem:[%s192 + $0x162] sm:$0xff]
      %v2666 = vld [vmem:[%s192 + $0x16a] sm:$0xff]
      %v2667 = vld [vmem:[%s192 + $0x172] sm:$0xff]
      %v2668 = vld [vmem:[%s192 + $0x17a] sm:$0xff]
      %v2669 = vld [vmem:[%s192 + $0x182] sm:$0xff]
      %v2670 = vld [vmem:[%s192 + $0x18a] sm:$0xff]
      %v2671 = vld [vmem:[%s192 + $0x192] sm:$0xff]
      %v2672 = vld [vmem:[%s192 + $0x19a] sm:$0xff]
      %v2673 = vld [vmem:[%s192 + $0x1a2] sm:$0xff]
      %v2674 = vld [vmem:[%s192 + $0x1aa] sm:$0xff]
      %v2675 = vld [vmem:[%s192 + $0x1b2] sm:$0xff]
      %v2676 = vld [vmem:[%s192 + $0x1ba] sm:$0xff]
      %v2677 = vld [vmem:[%s192 + $0x1c2] sm:$0xff]
      %v2678 = vld [vmem:[%s192 + $0x1ca] sm:$0xff]
      %v2679 = vld [vmem:[%s192 + $0x1d2] sm:$0xff]
      %v2680 = vld [vmem:[%s192 + $0x1da] sm:$0xff]
      %v2681 = vld [vmem:[%s192 + $0x1e2] sm:$0xff]
      %v2682 = vld [vmem:[%s192 + $0x1ea] sm:$0xff]
      %v2683 = vld [vmem:[%s192 + $0x1f2] sm:$0xff]
      %v2684 = vld [vmem:[%s192 + $0x1fa] sm:$0xff]
      %v2685 = vld [vmem:[%s192 + $0x202] sm:$0xff]
      %v2686 = vld [vmem:[%s192 + $0x20a] sm:$0xff]
      %v2687 = vld [vmem:[%s192 + $0x212] sm:$0xff]
      %v2688 = vld [vmem:[%s192 + $0x21a] sm:$0xff]
      %v2689 = vld [vmem:[%s192 + $0x222] sm:$0xff]
      %v2690 = vld [vmem:[%s192 + $0x22a] sm:$0xff]
      %v2691 = vld [vmem:[%s192 + $0x232] sm:$0xff]
      %v2692 = vld [vmem:[%s192 + $0x23a] sm:$0xff]
      %v2693 = vld [vmem:[%s192 + $0x242] sm:$0xff]
      %v2694 = vld [vmem:[%s192 + $0x24a] sm:$0xff]
      %v2695 = vld [vmem:[%s192 + $0x252] sm:$0xff]
      %v2696 = vld [vmem:[%s192 + $0x25a] sm:$0xff]
      %v2697 = vld [vmem:[%s192 + $0x262] sm:$0xff]
      %v2698 = vld [vmem:[%s192 + $0x26a] sm:$0xff]
      %v2699 = vld [vmem:[%s192 + $0x272] sm:$0xff]
      %v2700 = vld [vmem:[%s192 + $0x27a] sm:$0xff]
      %v2701 = vld [vmem:[%s192 + $0x282] sm:$0xff]
      %v2702 = vld [vmem:[%s192 + $0x28a] sm:$0xff]
      %v2703 = vld [vmem:[%s192 + $0x292] sm:$0xff]
      %v2704 = vld [vmem:[%s192 + $0x29a] sm:$0xff]
      %v2705 = vld [vmem:[%s192 + $0x2a2] sm:$0xff]
      %v2706 = vld [vmem:[%s192 + $0x2aa] sm:$0xff]
      %v2707 = vld [vmem:[%s192 + $0x2b2] sm:$0xff]
      %v2708 = vld [vmem:[%s192 + $0x2ba] sm:$0xff]
      %v2709 = vld [vmem:[%s192 + $0x2c2] sm:$0xff]
      %v2710 = vld [vmem:[%s192 + $0x2ca] sm:$0xff]
      %v2711 = vld [vmem:[%s192 + $0x2d2] sm:$0xff]
      %v2712 = vld [vmem:[%s192 + $0x2da] sm:$0xff]
      %v2713 = vld [vmem:[%s192 + $0x2e2] sm:$0xff]
      %v2714 = vld [vmem:[%s192 + $0x2ea] sm:$0xff]
      %v2715 = vld [vmem:[%s192 + $0x2f2] sm:$0xff]
      %v2716 = vld [vmem:[%s192 + $0x2fa] sm:$0xff]
      %v2717 = vld [vmem:[%s192 + $0x302] sm:$0xff]
      %v2718 = vld [vmem:[%s192 + $0x30a] sm:$0xff]
      %v2719 = vld [vmem:[%s192 + $0x312] sm:$0xff]
      %v2720 = vld [vmem:[%s192 + $0x31a] sm:$0xff]
      %v2721 = vld [vmem:[%s192 + $0x322] sm:$0xff]
      %v2722 = vld [vmem:[%s192 + $0x32a] sm:$0xff]
      %v2723 = vld [vmem:[%s192 + $0x332] sm:$0xff]
      %v2724 = vld [vmem:[%s192 + $0x33a] sm:$0xff]
      %v2725 = vld [vmem:[%s192 + $0x342] sm:$0xff]
      %v2726 = vld [vmem:[%s192 + $0x34a] sm:$0xff]
      %v2727 = vld [vmem:[%s192 + $0x352] sm:$0xff]
      %v2728 = vld [vmem:[%s192 + $0x35a] sm:$0xff]
      %v2729 = vld [vmem:[%s192 + $0x362] sm:$0xff]
      %v2730 = vld [vmem:[%s192 + $0x36a] sm:$0xff]
      %v2731 = vld [vmem:[%s192 + $0x372] sm:$0xff]
      %v2732 = vld [vmem:[%s192 + $0x37a] sm:$0xff]
      %v2733 = vld [vmem:[%s192 + $0x382] sm:$0xff]
      %v2734 = vld [vmem:[%s192 + $0x38a] sm:$0xff]
      %v2735 = vld [vmem:[%s192 + $0x392] sm:$0xff]
      %v2736 = vld [vmem:[%s192 + $0x39a] sm:$0xff]
      %v2737 = vld [vmem:[%s192 + $0x3a2] sm:$0xff]
      %v2738 = vld [vmem:[%s192 + $0x3aa] sm:$0xff]
      %v2739 = vld [vmem:[%s192 + $0x3b2] sm:$0xff]
      %v2740 = vld [vmem:[%s192 + $0x3ba] sm:$0xff]
      %v2741 = vld [vmem:[%s192 + $0x3c2] sm:$0xff]
      %v2742 = vld [vmem:[%s192 + $0x3ca] sm:$0xff]
      %v2743 = vld [vmem:[%s192 + $0x3d2] sm:$0xff]
      %v2744 = vld [vmem:[%s192 + $0x3da] sm:$0xff]
      %v2745 = vld [vmem:[%s192 + $0x3e2] sm:$0xff]
      %v2746 = vld [vmem:[%s192 + $0x3ea] sm:$0xff]
      %v2747 = vld [vmem:[%s192 + $0x3f2] sm:$0xff]
      %v2748 = vld [vmem:[%s192 + $0x3fa] sm:$0xff]
      %v2749 = vld [vmem:[%s192 + $0x402] sm:$0xff]
      %v2750 = vld [vmem:[%s192 + $0x40a] sm:$0xff]
      %v2751 = vld [vmem:[%s192 + $0x412] sm:$0xff]
      %v2752 = vld [vmem:[%s192 + $0x41a] sm:$0xff]
      %v2753 = vld [vmem:[%s192 + $0x422] sm:$0xff]
      %v2754 = vld [vmem:[%s192 + $0x42a] sm:$0xff]
      %v2755 = vld [vmem:[%s192 + $0x432] sm:$0xff]
      %v2756 = vld [vmem:[%s192 + $0x43a] sm:$0xff]
      %v2757 = vld [vmem:[%s192 + $0x442] sm:$0xff]
      %v2758 = vld [vmem:[%s192 + $0x44a] sm:$0xff]
      %v2759 = vld [vmem:[%s192 + $0x452] sm:$0xff]
      %v2760 = vld [vmem:[%s192 + $0x45a] sm:$0xff]
      %v2761 = vpack.c.bf16 %v2626, %v2625
      %v2762 = vpack.c.bf16 %v2628, %v2627
      %v2763 = vpack.c.bf16 %v2630, %v2629
      %v2764 = vpack.c.bf16 %v2632, %v2631
      %v2765 = vpack.c.bf16 %v2634, %v2633
      %v2766 = vpack.c.bf16 %v2636, %v2635
      %v2767 = vpack.c.bf16 %v2638, %v2637
      %v2768 = vpack.c.bf16 %v2640, %v2639
      %v2769 = vpack.c.bf16 %v2642, %v2641
      %v2770 = vpack.c.bf16 %v2644, %v2643
      %v2771 = vpack.c.bf16 %v2646, %v2645
      %v2772 = vpack.c.bf16 %v2648, %v2647
      %v2773 = vpack.c.bf16 %v2650, %v2649
      %v2774 = vpack.c.bf16 %v2652, %v2651
      %v2775 = vpack.c.bf16 %v2654, %v2653
      %v2776 = vpack.c.bf16 %v2656, %v2655
      %v2777 = vpack.c.bf16 %v2658, %v2657
      %v2778 = vpack.c.bf16 %v2660, %v2659
      %v2779 = vpack.c.bf16 %v2662, %v2661
      %v2780 = vpack.c.bf16 %v2664, %v2663
      %v2781 = vpack.c.bf16 %v2666, %v2665
      %v2782 = vpack.c.bf16 %v2668, %v2667
      %v2783 = vpack.c.bf16 %v2670, %v2669
      %v2784 = vpack.c.bf16 %v2672, %v2671
      %v2785 = vpack.c.bf16 %v2674, %v2673
      %v2786 = vpack.c.bf16 %v2676, %v2675
      %v2787 = vpack.c.bf16 %v2678, %v2677
      %v2788 = vpack.c.bf16 %v2680, %v2679
      %v2789 = vpack.c.bf16 %v2682, %v2681
      %v2790 = vpack.c.bf16 %v2684, %v2683
      %v2791 = vpack.c.bf16 %v2686, %v2685
      %v2792 = vpack.c.bf16 %v2688, %v2687
      %v2793 = vpack.c.bf16 %v2690, %v2689
      %v2794 = vpack.c.bf16 %v2692, %v2691
      %v2795 = vpack.c.bf16 %v2694, %v2693
      %v2796 = vpack.c.bf16 %v2696, %v2695
      %v2797 = vpack.c.bf16 %v2698, %v2697
      %v2798 = vpack.c.bf16 %v2700, %v2699
      %v2799 = vpack.c.bf16 %v2702, %v2701
      %v2800 = vpack.c.bf16 %v2704, %v2703
      %v2801 = vpack.c.bf16 %v2706, %v2705
      %v2802 = vpack.c.bf16 %v2708, %v2707
      %v2803 = vpack.c.bf16 %v2710, %v2709
      %v2804 = vpack.c.bf16 %v2712, %v2711
      %v2805 = vpack.c.bf16 %v2714, %v2713
      %v2806 = vpack.c.bf16 %v2716, %v2715
      %v2807 = vpack.c.bf16 %v2718, %v2717
      %v2808 = vpack.c.bf16 %v2720, %v2719
      %v2809 = vpack.c.bf16 %v2722, %v2721
      %v2810 = vpack.c.bf16 %v2724, %v2723
      %v2811 = vpack.c.bf16 %v2726, %v2725
      %v2812 = vpack.c.bf16 %v2728, %v2727
      %v2813 = vpack.c.bf16 %v2730, %v2729
      %v2814 = vpack.c.bf16 %v2732, %v2731
      %v2815 = vpack.c.bf16 %v2734, %v2733
      %v2816 = vpack.c.bf16 %v2736, %v2735
      %v2817 = vpack.c.bf16 %v2738, %v2737
      %v2818 = vpack.c.bf16 %v2740, %v2739
      %v2819 = vpack.c.bf16 %v2742, %v2741
      %v2820 = vpack.c.bf16 %v2744, %v2743
      %v2821 = vpack.c.bf16 %v2746, %v2745
      %v2822 = vpack.c.bf16 %v2748, %v2747
      %v2823 = vpack.c.bf16 %v2750, %v2749
      %v2824 = vpack.c.bf16 %v2752, %v2751
      %v2825 = vpack.c.bf16 %v2754, %v2753
      %v2826 = vpack.c.bf16 %v2756, %v2755
      %v2827 = vpack.c.bf16 %v2758, %v2757
      %v2828 = vpack.c.bf16 %v2760, %v2759
      %s2829 = scalar_lea.vmem %s1, 6
      %v2830 = vld [vmem:[%s2829] sm:$0x3]
      %v2832 = vsel %vm610, %v2761, 0
      %v2835 = vsel %vm610, %v2762, 0
      %v2838 = vsel %vm610, %v2763, 0
      %v2841 = vsel %vm610, %v2764, 0
      %v2844 = vsel %vm610, %v2765, 0
      %v2847 = vsel %vm610, %v2766, 0
      %v2850 = vsel %vm610, %v2767, 0
      %v2853 = vsel %vm610, %v2768, 0
      %v2856 = vsel %vm610, %v2769, 0
      %v2859 = vsel %vm610, %v2770, 0
      %v2862 = vsel %vm610, %v2771, 0
      %v2865 = vsel %vm610, %v2772, 0
      %v2868 = vsel %vm610, %v2773, 0
      %v2871 = vsel %vm610, %v2774, 0
      %v2874 = vsel %vm610, %v2775, 0
      %v2877 = vsel %vm610, %v2776, 0
      %v2880 = vsel %vm610, %v2777, 0
      %v2883 = vsel %vm610, %v2778, 0
      %v2886 = vsel %vm610, %v2779, 0
      %v2889 = vsel %vm610, %v2780, 0
      %v2892 = vsel %vm610, %v2781, 0
      %v2895 = vsel %vm610, %v2782, 0
      %v2898 = vsel %vm610, %v2783, 0
      %v2901 = vsel %vm610, %v2784, 0
      %v2904 = vsel %vm610, %v2785, 0
      %v2907 = vsel %vm610, %v2786, 0
      %v2910 = vsel %vm610, %v2787, 0
      %v2913 = vsel %vm610, %v2788, 0
      %v2916 = vsel %vm610, %v2789, 0
      %v2919 = vsel %vm610, %v2790, 0
      %v2922 = vsel %vm610, %v2791, 0
      %v2925 = vsel %vm610, %v2792, 0
      %v2928 = vsel %vm610, %v2793, 0
      %v2931 = vsel %vm610, %v2794, 0
      %v2934 = vsel %vm610, %v2795, 0
      %v2937 = vsel %vm610, %v2796, 0
      %v2940 = vsel %vm610, %v2797, 0
      %v2943 = vsel %vm610, %v2798, 0
      %v2946 = vsel %vm610, %v2799, 0
      %v2949 = vsel %vm610, %v2800, 0
      %v2952 = vsel %vm610, %v2801, 0
      %v2955 = vsel %vm610, %v2802, 0
      %v2958 = vsel %vm610, %v2803, 0
      %v2961 = vsel %vm610, %v2804, 0
      %v2964 = vsel %vm610, %v2805, 0
      %v2967 = vsel %vm610, %v2806, 0
      %v2970 = vsel %vm610, %v2807, 0
      %v2973 = vsel %vm610, %v2808, 0
      %v2976 = vsel %vm610, %v2809, 0
      %v2979 = vsel %vm610, %v2810, 0
      %v2982 = vsel %vm610, %v2811, 0
      %v2985 = vsel %vm610, %v2812, 0
      %v2988 = vsel %vm610, %v2813, 0
      %v2991 = vsel %vm610, %v2814, 0
      %v2994 = vsel %vm610, %v2815, 0
      %v2997 = vsel %vm610, %v2816, 0
      %v3000 = vsel %vm610, %v2817, 0
      %v3003 = vsel %vm610, %v2818, 0
      %v3006 = vsel %vm610, %v2819, 0
      %v3009 = vsel %vm610, %v2820, 0
      %v3012 = vsel %vm610, %v2821, 0
      %v3015 = vsel %vm610, %v2822, 0
      %v3018 = vsel %vm610, %v2823, 0
      %v3021 = vsel %vm610, %v2824, 0
      %v3024 = vsel %vm610, %v2825, 0
      %v3027 = vsel %vm610, %v2826, 0
      %v3030 = vsel %vm610, %v2827, 0
      %v3033 = vsel %vm610, %v2828, 0
      %v3036 = vand.u32 %v2830, %v818
      %3038 = vmatpush.bf16.msra.mxu0 0
      %3039 = vmatpush.bf16.msra.mxu0 0
      %3040 = vmatpush.bf16.msra.mxu0 0
      %3041 = vmatpush.bf16.msra.mxu0 0
      %3042 = vmatpush.bf16.msra.mxu0 0
      %3043 = vmatpush.bf16.msra.mxu0 0
      %3044 = vmatpush.bf16.msra.mxu0 0
      %3045 = vmatpush.bf16.msra.mxu0 %v3036
      %3046 = vmatmul.bf16.gmra.mxu0 %v2832
      %v3047 = vpop.f32.mrf.mxu0
      %v3048 = vadd.f32 0.0, %v3047
      %v3049 = vpop.f32.mrf.mxu0
      %v3050 = vadd.f32 0.0, %v3049
      %3051 = vmatmul.bf16.gmra.mxu0 %v2835
      %v3052 = vpop.f32.mrf.mxu0
      %v3053 = vadd.f32 0.0, %v3052
      %v3054 = vpop.f32.mrf.mxu0
      %v3055 = vadd.f32 0.0, %v3054
      %3056 = vmatmul.bf16.gmra.mxu0 %v2838
      %v3057 = vpop.f32.mrf.mxu0
      %v3058 = vadd.f32 0.0, %v3057
      %v3059 = vpop.f32.mrf.mxu0
      %v3060 = vadd.f32 0.0, %v3059
      %3061 = vmatmul.bf16.gmra.mxu0 %v2841
      %v3062 = vpop.f32.mrf.mxu0
      %v3063 = vadd.f32 0.0, %v3062
      %v3064 = vpop.f32.mrf.mxu0
      %v3065 = vadd.f32 0.0, %v3064
      %3066 = vmatmul.bf16.gmra.mxu0 %v2844
      %v3067 = vpop.f32.mrf.mxu0
      %v3068 = vadd.f32 0.0, %v3067
      %v3069 = vpop.f32.mrf.mxu0
      %v3070 = vadd.f32 0.0, %v3069
      %3071 = vmatmul.bf16.gmra.mxu0 %v2847
      %v3072 = vpop.f32.mrf.mxu0
      %v3073 = vadd.f32 0.0, %v3072
      %v3074 = vpop.f32.mrf.mxu0
      %v3075 = vadd.f32 0.0, %v3074
      %3076 = vmatmul.bf16.gmra.mxu0 %v2850
      %v3077 = vpop.f32.mrf.mxu0
      %v3078 = vadd.f32 0.0, %v3077
      %v3079 = vpop.f32.mrf.mxu0
      %v3080 = vadd.f32 0.0, %v3079
      %3081 = vmatmul.bf16.gmra.mxu0 %v2853
      %v3082 = vpop.f32.mrf.mxu0
      %v3083 = vadd.f32 0.0, %v3082
      %v3084 = vpop.f32.mrf.mxu0
      %v3085 = vadd.f32 0.0, %v3084
      %3086 = vmatmul.bf16.gmra.mxu0 %v2856
      %v3087 = vpop.f32.mrf.mxu0
      %v3088 = vadd.f32 0.0, %v3087
      %v3089 = vpop.f32.mrf.mxu0
      %v3090 = vadd.f32 0.0, %v3089
      %3091 = vmatmul.bf16.gmra.mxu0 %v2859
      %v3092 = vpop.f32.mrf.mxu0
      %v3093 = vadd.f32 0.0, %v3092
      %v3094 = vpop.f32.mrf.mxu0
      %v3095 = vadd.f32 0.0, %v3094
      %3096 = vmatmul.bf16.gmra.mxu0 %v2862
      %v3097 = vpop.f32.mrf.mxu0
      %v3098 = vadd.f32 0.0, %v3097
      %v3099 = vpop.f32.mrf.mxu0
      %v3100 = vadd.f32 0.0, %v3099
      %3101 = vmatmul.bf16.gmra.mxu0 %v2865
      %v3102 = vpop.f32.mrf.mxu0
      %v3103 = vadd.f32 0.0, %v3102
      %v3104 = vpop.f32.mrf.mxu0
      %v3105 = vadd.f32 0.0, %v3104
      %3106 = vmatmul.bf16.gmra.mxu0 %v2868
      %v3107 = vpop.f32.mrf.mxu0
      %v3108 = vadd.f32 0.0, %v3107
      %v3109 = vpop.f32.mrf.mxu0
      %v3110 = vadd.f32 0.0, %v3109
      %3111 = vmatmul.bf16.gmra.mxu0 %v2871
      %v3112 = vpop.f32.mrf.mxu0
      %v3113 = vadd.f32 0.0, %v3112
      %v3114 = vpop.f32.mrf.mxu0
      %v3115 = vadd.f32 0.0, %v3114
      %3116 = vmatmul.bf16.gmra.mxu0 %v2874
      %v3117 = vpop.f32.mrf.mxu0
      %v3118 = vadd.f32 0.0, %v3117
      %v3119 = vpop.f32.mrf.mxu0
      %v3120 = vadd.f32 0.0, %v3119
      %3121 = vmatmul.bf16.gmra.mxu0 %v2877
      %v3122 = vpop.f32.mrf.mxu0
      %v3123 = vadd.f32 0.0, %v3122
      %v3124 = vpop.f32.mrf.mxu0
      %v3125 = vadd.f32 0.0, %v3124
      %3126 = vmatmul.bf16.gmra.mxu0 %v2880
      %v3127 = vpop.f32.mrf.mxu0
      %v3128 = vadd.f32 0.0, %v3127
      %v3129 = vpop.f32.mrf.mxu0
      %v3130 = vadd.f32 0.0, %v3129
      %3131 = vmatmul.bf16.gmra.mxu0 %v2883
      %v3132 = vpop.f32.mrf.mxu0
      %v3133 = vadd.f32 0.0, %v3132
      %v3134 = vpop.f32.mrf.mxu0
      %v3135 = vadd.f32 0.0, %v3134
      %3136 = vmatmul.bf16.gmra.mxu0 %v2886
      %v3137 = vpop.f32.mrf.mxu0
      %v3138 = vadd.f32 0.0, %v3137
      %v3139 = vpop.f32.mrf.mxu0
      %v3140 = vadd.f32 0.0, %v3139
      %3141 = vmatmul.bf16.gmra.mxu0 %v2889
      %v3142 = vpop.f32.mrf.mxu0
      %v3143 = vadd.f32 0.0, %v3142
      %v3144 = vpop.f32.mrf.mxu0
      %v3145 = vadd.f32 0.0, %v3144
      %3146 = vmatmul.bf16.gmra.mxu0 %v2892
      %v3147 = vpop.f32.mrf.mxu0
      %v3148 = vadd.f32 0.0, %v3147
      %v3149 = vpop.f32.mrf.mxu0
      %v3150 = vadd.f32 0.0, %v3149
      %3151 = vmatmul.bf16.gmra.mxu0 %v2895
      %v3152 = vpop.f32.mrf.mxu0
      %v3153 = vadd.f32 0.0, %v3152
      %v3154 = vpop.f32.mrf.mxu0
      %v3155 = vadd.f32 0.0, %v3154
      %3156 = vmatmul.bf16.gmra.mxu0 %v2898
      %v3157 = vpop.f32.mrf.mxu0
      %v3158 = vadd.f32 0.0, %v3157
      %v3159 = vpop.f32.mrf.mxu0
      %v3160 = vadd.f32 0.0, %v3159
      %3161 = vmatmul.bf16.gmra.mxu0 %v2901
      %v3162 = vpop.f32.mrf.mxu0
      %v3163 = vadd.f32 0.0, %v3162
      %v3164 = vpop.f32.mrf.mxu0
      %v3165 = vadd.f32 0.0, %v3164
      %3166 = vmatmul.bf16.gmra.mxu0 %v2904
      %v3167 = vpop.f32.mrf.mxu0
      %v3168 = vadd.f32 0.0, %v3167
      %v3169 = vpop.f32.mrf.mxu0
      %v3170 = vadd.f32 0.0, %v3169
      %3171 = vmatmul.bf16.gmra.mxu0 %v2907
      %v3172 = vpop.f32.mrf.mxu0
      %v3173 = vadd.f32 0.0, %v3172
      %v3174 = vpop.f32.mrf.mxu0
      %v3175 = vadd.f32 0.0, %v3174
      %3176 = vmatmul.bf16.gmra.mxu0 %v2910
      %v3177 = vpop.f32.mrf.mxu0
      %v3178 = vadd.f32 0.0, %v3177
      %v3179 = vpop.f32.mrf.mxu0
      %v3180 = vadd.f32 0.0, %v3179
      %3181 = vmatmul.bf16.gmra.mxu0 %v2913
      %v3182 = vpop.f32.mrf.mxu0
      %v3183 = vadd.f32 0.0, %v3182
      %v3184 = vpop.f32.mrf.mxu0
      %v3185 = vadd.f32 0.0, %v3184
      %3186 = vmatmul.bf16.gmra.mxu0 %v2916
      %v3187 = vpop.f32.mrf.mxu0
      %v3188 = vadd.f32 0.0, %v3187
      %v3189 = vpop.f32.mrf.mxu0
      %v3190 = vadd.f32 0.0, %v3189
      %3191 = vmatmul.bf16.gmra.mxu0 %v2919
      %v3192 = vpop.f32.mrf.mxu0
      %v3193 = vadd.f32 0.0, %v3192
      %v3194 = vpop.f32.mrf.mxu0
      %v3195 = vadd.f32 0.0, %v3194
      %3196 = vmatmul.bf16.gmra.mxu0 %v2922
      %v3197 = vpop.f32.mrf.mxu0
      %v3198 = vadd.f32 0.0, %v3197
      %v3199 = vpop.f32.mrf.mxu0
      %v3200 = vadd.f32 0.0, %v3199
      %3201 = vmatmul.bf16.gmra.mxu0 %v2925
      %v3202 = vpop.f32.mrf.mxu0
      %v3203 = vadd.f32 0.0, %v3202
      %v3204 = vpop.f32.mrf.mxu0
      %v3205 = vadd.f32 0.0, %v3204
      %3206 = vmatmul.bf16.gmra.mxu0 %v2928
      %v3207 = vpop.f32.mrf.mxu0
      %v3208 = vadd.f32 0.0, %v3207
      %v3209 = vpop.f32.mrf.mxu0
      %v3210 = vadd.f32 0.0, %v3209
      %3211 = vmatmul.bf16.gmra.mxu0 %v2931
      %v3212 = vpop.f32.mrf.mxu0
      %v3213 = vadd.f32 0.0, %v3212
      %v3214 = vpop.f32.mrf.mxu0
      %v3215 = vadd.f32 0.0, %v3214
      %3216 = vmatmul.bf16.gmra.mxu0 %v2934
      %v3217 = vpop.f32.mrf.mxu0
      %v3218 = vadd.f32 0.0, %v3217
      %v3219 = vpop.f32.mrf.mxu0
      %v3220 = vadd.f32 0.0, %v3219
      %3221 = vmatmul.bf16.gmra.mxu0 %v2937
      %v3222 = vpop.f32.mrf.mxu0
      %v3223 = vadd.f32 0.0, %v3222
      %v3224 = vpop.f32.mrf.mxu0
      %v3225 = vadd.f32 0.0, %v3224
      %3226 = vmatmul.bf16.gmra.mxu0 %v2940
      %v3227 = vpop.f32.mrf.mxu0
      %v3228 = vadd.f32 0.0, %v3227
      %v3229 = vpop.f32.mrf.mxu0
      %v3230 = vadd.f32 0.0, %v3229
      %3231 = vmatmul.bf16.gmra.mxu0 %v2943
      %v3232 = vpop.f32.mrf.mxu0
      %v3233 = vadd.f32 0.0, %v3232
      %v3234 = vpop.f32.mrf.mxu0
      %v3235 = vadd.f32 0.0, %v3234
      %3236 = vmatmul.bf16.gmra.mxu0 %v2946
      %v3237 = vpop.f32.mrf.mxu0
      %v3238 = vadd.f32 0.0, %v3237
      %v3239 = vpop.f32.mrf.mxu0
      %v3240 = vadd.f32 0.0, %v3239
      %3241 = vmatmul.bf16.gmra.mxu0 %v2949
      %v3242 = vpop.f32.mrf.mxu0
      %v3243 = vadd.f32 0.0, %v3242
      %v3244 = vpop.f32.mrf.mxu0
      %v3245 = vadd.f32 0.0, %v3244
      %3246 = vmatmul.bf16.gmra.mxu0 %v2952
      %v3247 = vpop.f32.mrf.mxu0
      %v3248 = vadd.f32 0.0, %v3247
      %v3249 = vpop.f32.mrf.mxu0
      %v3250 = vadd.f32 0.0, %v3249
      %3251 = vmatmul.bf16.gmra.mxu0 %v2955
      %v3252 = vpop.f32.mrf.mxu0
      %v3253 = vadd.f32 0.0, %v3252
      %v3254 = vpop.f32.mrf.mxu0
      %v3255 = vadd.f32 0.0, %v3254
      %3256 = vmatmul.bf16.gmra.mxu0 %v2958
      %v3257 = vpop.f32.mrf.mxu0
      %v3258 = vadd.f32 0.0, %v3257
      %v3259 = vpop.f32.mrf.mxu0
      %v3260 = vadd.f32 0.0, %v3259
      %3261 = vmatmul.bf16.gmra.mxu0 %v2961
      %v3262 = vpop.f32.mrf.mxu0
      %v3263 = vadd.f32 0.0, %v3262
      %v3264 = vpop.f32.mrf.mxu0
      %v3265 = vadd.f32 0.0, %v3264
      %3266 = vmatmul.bf16.gmra.mxu0 %v2964
      %v3267 = vpop.f32.mrf.mxu0
      %v3268 = vadd.f32 0.0, %v3267
      %v3269 = vpop.f32.mrf.mxu0
      %v3270 = vadd.f32 0.0, %v3269
      %3271 = vmatmul.bf16.gmra.mxu0 %v2967
      %v3272 = vpop.f32.mrf.mxu0
      %v3273 = vadd.f32 0.0, %v3272
      %v3274 = vpop.f32.mrf.mxu0
      %v3275 = vadd.f32 0.0, %v3274
      %3276 = vmatmul.bf16.gmra.mxu0 %v2970
      %v3277 = vpop.f32.mrf.mxu0
      %v3278 = vadd.f32 0.0, %v3277
      %v3279 = vpop.f32.mrf.mxu0
      %v3280 = vadd.f32 0.0, %v3279
      %3281 = vmatmul.bf16.gmra.mxu0 %v2973
      %v3282 = vpop.f32.mrf.mxu0
      %v3283 = vadd.f32 0.0, %v3282
      %v3284 = vpop.f32.mrf.mxu0
      %v3285 = vadd.f32 0.0, %v3284
      %3286 = vmatmul.bf16.gmra.mxu0 %v2976
      %v3287 = vpop.f32.mrf.mxu0
      %v3288 = vadd.f32 0.0, %v3287
      %v3289 = vpop.f32.mrf.mxu0
      %v3290 = vadd.f32 0.0, %v3289
      %3291 = vmatmul.bf16.gmra.mxu0 %v2979
      %v3292 = vpop.f32.mrf.mxu0
      %v3293 = vadd.f32 0.0, %v3292
      %v3294 = vpop.f32.mrf.mxu0
      %v3295 = vadd.f32 0.0, %v3294
      %3296 = vmatmul.bf16.gmra.mxu0 %v2982
      %v3297 = vpop.f32.mrf.mxu0
      %v3298 = vadd.f32 0.0, %v3297
      %v3299 = vpop.f32.mrf.mxu0
      %v3300 = vadd.f32 0.0, %v3299
      %3301 = vmatmul.bf16.gmra.mxu0 %v2985
      %v3302 = vpop.f32.mrf.mxu0
      %v3303 = vadd.f32 0.0, %v3302
      %v3304 = vpop.f32.mrf.mxu0
      %v3305 = vadd.f32 0.0, %v3304
      %3306 = vmatmul.bf16.gmra.mxu0 %v2988
      %v3307 = vpop.f32.mrf.mxu0
      %v3308 = vadd.f32 0.0, %v3307
      %v3309 = vpop.f32.mrf.mxu0
      %v3310 = vadd.f32 0.0, %v3309
      %3311 = vmatmul.bf16.gmra.mxu0 %v2991
      %v3312 = vpop.f32.mrf.mxu0
      %v3313 = vadd.f32 0.0, %v3312
      %v3314 = vpop.f32.mrf.mxu0
      %v3315 = vadd.f32 0.0, %v3314
      %3316 = vmatmul.bf16.gmra.mxu0 %v2994
      %v3317 = vpop.f32.mrf.mxu0
      %v3318 = vadd.f32 0.0, %v3317
      %v3319 = vpop.f32.mrf.mxu0
      %v3320 = vadd.f32 0.0, %v3319
      %3321 = vmatmul.bf16.gmra.mxu0 %v2997
      %v3322 = vpop.f32.mrf.mxu0
      %v3323 = vadd.f32 0.0, %v3322
      %v3324 = vpop.f32.mrf.mxu0
      %v3325 = vadd.f32 0.0, %v3324
      %3326 = vmatmul.bf16.gmra.mxu0 %v3000
      %v3327 = vpop.f32.mrf.mxu0
      %v3328 = vadd.f32 0.0, %v3327
      %v3329 = vpop.f32.mrf.mxu0
      %v3330 = vadd.f32 0.0, %v3329
      %3331 = vmatmul.bf16.gmra.mxu0 %v3003
      %v3332 = vpop.f32.mrf.mxu0
      %v3333 = vadd.f32 0.0, %v3332
      %v3334 = vpop.f32.mrf.mxu0
      %v3335 = vadd.f32 0.0, %v3334
      %3336 = vmatmul.bf16.gmra.mxu0 %v3006
      %v3337 = vpop.f32.mrf.mxu0
      %v3338 = vadd.f32 0.0, %v3337
      %v3339 = vpop.f32.mrf.mxu0
      %v3340 = vadd.f32 0.0, %v3339
      %3341 = vmatmul.bf16.gmra.mxu0 %v3009
      %v3342 = vpop.f32.mrf.mxu0
      %v3343 = vadd.f32 0.0, %v3342
      %v3344 = vpop.f32.mrf.mxu0
      %v3345 = vadd.f32 0.0, %v3344
      %3346 = vmatmul.bf16.gmra.mxu0 %v3012
      %v3347 = vpop.f32.mrf.mxu0
      %v3348 = vadd.f32 0.0, %v3347
      %v3349 = vpop.f32.mrf.mxu0
      %v3350 = vadd.f32 0.0, %v3349
      %3351 = vmatmul.bf16.gmra.mxu0 %v3015
      %v3352 = vpop.f32.mrf.mxu0
      %v3353 = vadd.f32 0.0, %v3352
      %v3354 = vpop.f32.mrf.mxu0
      %v3355 = vadd.f32 0.0, %v3354
      %3356 = vmatmul.bf16.gmra.mxu0 %v3018
      %v3357 = vpop.f32.mrf.mxu0
      %v3358 = vadd.f32 0.0, %v3357
      %v3359 = vpop.f32.mrf.mxu0
      %v3360 = vadd.f32 0.0, %v3359
      %3361 = vmatmul.bf16.gmra.mxu0 %v3021
      %v3362 = vpop.f32.mrf.mxu0
      %v3363 = vadd.f32 0.0, %v3362
      %v3364 = vpop.f32.mrf.mxu0
      %v3365 = vadd.f32 0.0, %v3364
      %3366 = vmatmul.bf16.gmra.mxu0 %v3024
      %v3367 = vpop.f32.mrf.mxu0
      %v3368 = vadd.f32 0.0, %v3367
      %v3369 = vpop.f32.mrf.mxu0
      %v3370 = vadd.f32 0.0, %v3369
      %3371 = vmatmul.bf16.gmra.mxu0 %v3027
      %v3372 = vpop.f32.mrf.mxu0
      %v3373 = vadd.f32 0.0, %v3372
      %v3374 = vpop.f32.mrf.mxu0
      %v3375 = vadd.f32 0.0, %v3374
      %3376 = vmatmul.bf16.gmra.mxu0 %v3030
      %v3377 = vpop.f32.mrf.mxu0
      %v3378 = vadd.f32 0.0, %v3377
      %v3379 = vpop.f32.mrf.mxu0
      %v3380 = vadd.f32 0.0, %v3379
      %3381 = vmatmul.bf16.gmra.mxu0 %v3033
      %v3382 = vpop.f32.mrf.mxu0
      %v3383 = vadd.f32 0.0, %v3382
      %v3384 = vpop.f32.mrf.mxu0
      %v3385 = vadd.f32 0.0, %v3384
      %3386 = vdwg.mxu0
      %v3387 = vadd.f32 %v2489, %v3048
      %v3388 = vadd.f32 %v2490, %v3050
      %v3389 = vadd.f32 %v2491, %v3053
      %v3390 = vadd.f32 %v2492, %v3055
      %v3391 = vadd.f32 %v2493, %v3058
      %v3392 = vadd.f32 %v2494, %v3060
      %v3393 = vadd.f32 %v2495, %v3063
      %v3394 = vadd.f32 %v2496, %v3065
      %v3395 = vadd.f32 %v2497, %v3068
      %v3396 = vadd.f32 %v2498, %v3070
      %v3397 = vadd.f32 %v2499, %v3073
      %v3398 = vadd.f32 %v2500, %v3075
      %v3399 = vadd.f32 %v2501, %v3078
      %v3400 = vadd.f32 %v2502, %v3080
      %v3401 = vadd.f32 %v2503, %v3083
      %v3402 = vadd.f32 %v2504, %v3085
      %v3403 = vadd.f32 %v2505, %v3088
      %v3404 = vadd.f32 %v2506, %v3090
      %v3405 = vadd.f32 %v2507, %v3093
      %v3406 = vadd.f32 %v2508, %v3095
      %v3407 = vadd.f32 %v2509, %v3098
      %v3408 = vadd.f32 %v2510, %v3100
      %v3409 = vadd.f32 %v2511, %v3103
      %v3410 = vadd.f32 %v2512, %v3105
      %v3411 = vadd.f32 %v2513, %v3108
      %v3412 = vadd.f32 %v2514, %v3110
      %v3413 = vadd.f32 %v2515, %v3113
      %v3414 = vadd.f32 %v2516, %v3115
      %v3415 = vadd.f32 %v2517, %v3118
      %v3416 = vadd.f32 %v2518, %v3120
      %v3417 = vadd.f32 %v2519, %v3123
      %v3418 = vadd.f32 %v2520, %v3125
      %v3419 = vadd.f32 %v2521, %v3128
      %v3420 = vadd.f32 %v2522, %v3130
      %v3421 = vadd.f32 %v2523, %v3133
      %v3422 = vadd.f32 %v2524, %v3135
      %v3423 = vadd.f32 %v2525, %v3138
      %v3424 = vadd.f32 %v2526, %v3140
      %v3425 = vadd.f32 %v2527, %v3143
      %v3426 = vadd.f32 %v2528, %v3145
      %v3427 = vadd.f32 %v2529, %v3148
      %v3428 = vadd.f32 %v2530, %v3150
      %v3429 = vadd.f32 %v2531, %v3153
      %v3430 = vadd.f32 %v2532, %v3155
      %v3431 = vadd.f32 %v2533, %v3158
      %v3432 = vadd.f32 %v2534, %v3160
      %v3433 = vadd.f32 %v2535, %v3163
      %v3434 = vadd.f32 %v2536, %v3165
      %v3435 = vadd.f32 %v2537, %v3168
      %v3436 = vadd.f32 %v2538, %v3170
      %v3437 = vadd.f32 %v2539, %v3173
      %v3438 = vadd.f32 %v2540, %v3175
      %v3439 = vadd.f32 %v2541, %v3178
      %v3440 = vadd.f32 %v2542, %v3180
      %v3441 = vadd.f32 %v2543, %v3183
      %v3442 = vadd.f32 %v2544, %v3185
      %v3443 = vadd.f32 %v2545, %v3188
      %v3444 = vadd.f32 %v2546, %v3190
      %v3445 = vadd.f32 %v2547, %v3193
      %v3446 = vadd.f32 %v2548, %v3195
      %v3447 = vadd.f32 %v2549, %v3198
      %v3448 = vadd.f32 %v2550, %v3200
      %v3449 = vadd.f32 %v2551, %v3203
      %v3450 = vadd.f32 %v2552, %v3205
      %v3451 = vadd.f32 %v2553, %v3208
      %v3452 = vadd.f32 %v2554, %v3210
      %v3453 = vadd.f32 %v2555, %v3213
      %v3454 = vadd.f32 %v2556, %v3215
      %v3455 = vadd.f32 %v2557, %v3218
      %v3456 = vadd.f32 %v2558, %v3220
      %v3457 = vadd.f32 %v2559, %v3223
      %v3458 = vadd.f32 %v2560, %v3225
      %v3459 = vadd.f32 %v2561, %v3228
      %v3460 = vadd.f32 %v2562, %v3230
      %v3461 = vadd.f32 %v2563, %v3233
      %v3462 = vadd.f32 %v2564, %v3235
      %v3463 = vadd.f32 %v2565, %v3238
      %v3464 = vadd.f32 %v2566, %v3240
      %v3465 = vadd.f32 %v2567, %v3243
      %v3466 = vadd.f32 %v2568, %v3245
      %v3467 = vadd.f32 %v2569, %v3248
      %v3468 = vadd.f32 %v2570, %v3250
      %v3469 = vadd.f32 %v2571, %v3253
      %v3470 = vadd.f32 %v2572, %v3255
      %v3471 = vadd.f32 %v2573, %v3258
      %v3472 = vadd.f32 %v2574, %v3260
      %v3473 = vadd.f32 %v2575, %v3263
      %v3474 = vadd.f32 %v2576, %v3265
      %v3475 = vadd.f32 %v2577, %v3268
      %v3476 = vadd.f32 %v2578, %v3270
      %v3477 = vadd.f32 %v2579, %v3273
      %v3478 = vadd.f32 %v2580, %v3275
      %v3479 = vadd.f32 %v2581, %v3278
      %v3480 = vadd.f32 %v2582, %v3280
      %v3481 = vadd.f32 %v2583, %v3283
      %v3482 = vadd.f32 %v2584, %v3285
      %v3483 = vadd.f32 %v2585, %v3288
      %v3484 = vadd.f32 %v2586, %v3290
      %v3485 = vadd.f32 %v2587, %v3293
      %v3486 = vadd.f32 %v2588, %v3295
      %v3487 = vadd.f32 %v2589, %v3298
      %v3488 = vadd.f32 %v2590, %v3300
      %v3489 = vadd.f32 %v2591, %v3303
      %v3490 = vadd.f32 %v2592, %v3305
      %v3491 = vadd.f32 %v2593, %v3308
      %v3492 = vadd.f32 %v2594, %v3310
      %v3493 = vadd.f32 %v2595, %v3313
      %v3494 = vadd.f32 %v2596, %v3315
      %v3495 = vadd.f32 %v2597, %v3318
      %v3496 = vadd.f32 %v2598, %v3320
      %v3497 = vadd.f32 %v2599, %v3323
      %v3498 = vadd.f32 %v2600, %v3325
      %v3499 = vadd.f32 %v2601, %v3328
      %v3500 = vadd.f32 %v2602, %v3330
      %v3501 = vadd.f32 %v2603, %v3333
      %v3502 = vadd.f32 %v2604, %v3335
      %v3503 = vadd.f32 %v2605, %v3338
      %v3504 = vadd.f32 %v2606, %v3340
      %v3505 = vadd.f32 %v2607, %v3343
      %v3506 = vadd.f32 %v2608, %v3345
      %v3507 = vadd.f32 %v2609, %v3348
      %v3508 = vadd.f32 %v2610, %v3350
      %v3509 = vadd.f32 %v2611, %v3353
      %v3510 = vadd.f32 %v2612, %v3355
      %v3511 = vadd.f32 %v2613, %v3358
      %v3512 = vadd.f32 %v2614, %v3360
      %v3513 = vadd.f32 %v2615, %v3363
      %v3514 = vadd.f32 %v2616, %v3365
      %v3515 = vadd.f32 %v2617, %v3368
      %v3516 = vadd.f32 %v2618, %v3370
      %v3517 = vadd.f32 %v2619, %v3373
      %v3518 = vadd.f32 %v2620, %v3375
      %v3519 = vadd.f32 %v2621, %v3378
      %v3520 = vadd.f32 %v2622, %v3380
      %v3521 = vadd.f32 %v2623, %v3383
      %v3522 = vadd.f32 %v2624, %v3385
      %v3523 = vld [vmem:[%s192 + $0x23] sm:$0xff]
      %v3524 = vld [vmem:[%s192 + $0x2b] sm:$0xff]
      %v3525 = vld [vmem:[%s192 + $0x33] sm:$0xff]
      %v3526 = vld [vmem:[%s192 + $0x3b] sm:$0xff]
      %v3527 = vld [vmem:[%s192 + $0x43] sm:$0xff]
      %v3528 = vld [vmem:[%s192 + $0x4b] sm:$0xff]
      %v3529 = vld [vmem:[%s192 + $0x53] sm:$0xff]
      %v3530 = vld [vmem:[%s192 + $0x5b] sm:$0xff]
      %v3531 = vld [vmem:[%s192 + $0x63] sm:$0xff]
      %v3532 = vld [vmem:[%s192 + $0x6b] sm:$0xff]
      %v3533 = vld [vmem:[%s192 + $0x73] sm:$0xff]
      %v3534 = vld [vmem:[%s192 + $0x7b] sm:$0xff]
      %v3535 = vld [vmem:[%s192 + $0x83] sm:$0xff]
      %v3536 = vld [vmem:[%s192 + $0x8b] sm:$0xff]
      %v3537 = vld [vmem:[%s192 + $0x93] sm:$0xff]
      %v3538 = vld [vmem:[%s192 + $0x9b] sm:$0xff]
      %v3539 = vld [vmem:[%s192 + $0xa3] sm:$0xff]
      %v3540 = vld [vmem:[%s192 + $0xab] sm:$0xff]
      %v3541 = vld [vmem:[%s192 + $0xb3] sm:$0xff]
      %v3542 = vld [vmem:[%s192 + $0xbb] sm:$0xff]
      %v3543 = vld [vmem:[%s192 + $0xc3] sm:$0xff]
      %v3544 = vld [vmem:[%s192 + $0xcb] sm:$0xff]
      %v3545 = vld [vmem:[%s192 + $0xd3] sm:$0xff]
      %v3546 = vld [vmem:[%s192 + $0xdb] sm:$0xff]
      %v3547 = vld [vmem:[%s192 + $0xe3] sm:$0xff]
      %v3548 = vld [vmem:[%s192 + $0xeb] sm:$0xff]
      %v3549 = vld [vmem:[%s192 + $0xf3] sm:$0xff]
      %v3550 = vld [vmem:[%s192 + $0xfb] sm:$0xff]
      %v3551 = vld [vmem:[%s192 + $0x103] sm:$0xff]
      %v3552 = vld [vmem:[%s192 + $0x10b] sm:$0xff]
      %v3553 = vld [vmem:[%s192 + $0x113] sm:$0xff]
      %v3554 = vld [vmem:[%s192 + $0x11b] sm:$0xff]
      %v3555 = vld [vmem:[%s192 + $0x123] sm:$0xff]
      %v3556 = vld [vmem:[%s192 + $0x12b] sm:$0xff]
      %v3557 = vld [vmem:[%s192 + $0x133] sm:$0xff]
      %v3558 = vld [vmem:[%s192 + $0x13b] sm:$0xff]
      %v3559 = vld [vmem:[%s192 + $0x143] sm:$0xff]
      %v3560 = vld [vmem:[%s192 + $0x14b] sm:$0xff]
      %v3561 = vld [vmem:[%s192 + $0x153] sm:$0xff]
      %v3562 = vld [vmem:[%s192 + $0x15b] sm:$0xff]
      %v3563 = vld [vmem:[%s192 + $0x163] sm:$0xff]
      %v3564 = vld [vmem:[%s192 + $0x16b] sm:$0xff]
      %v3565 = vld [vmem:[%s192 + $0x173] sm:$0xff]
      %v3566 = vld [vmem:[%s192 + $0x17b] sm:$0xff]
      %v3567 = vld [vmem:[%s192 + $0x183] sm:$0xff]
      %v3568 = vld [vmem:[%s192 + $0x18b] sm:$0xff]
      %v3569 = vld [vmem:[%s192 + $0x193] sm:$0xff]
      %v3570 = vld [vmem:[%s192 + $0x19b] sm:$0xff]
      %v3571 = vld [vmem:[%s192 + $0x1a3] sm:$0xff]
      %v3572 = vld [vmem:[%s192 + $0x1ab] sm:$0xff]
      %v3573 = vld [vmem:[%s192 + $0x1b3] sm:$0xff]
      %v3574 = vld [vmem:[%s192 + $0x1bb] sm:$0xff]
      %v3575 = vld [vmem:[%s192 + $0x1c3] sm:$0xff]
      %v3576 = vld [vmem:[%s192 + $0x1cb] sm:$0xff]
      %v3577 = vld [vmem:[%s192 + $0x1d3] sm:$0xff]
      %v3578 = vld [vmem:[%s192 + $0x1db] sm:$0xff]
      %v3579 = vld [vmem:[%s192 + $0x1e3] sm:$0xff]
      %v3580 = vld [vmem:[%s192 + $0x1eb] sm:$0xff]
      %v3581 = vld [vmem:[%s192 + $0x1f3] sm:$0xff]
      %v3582 = vld [vmem:[%s192 + $0x1fb] sm:$0xff]
      %v3583 = vld [vmem:[%s192 + $0x203] sm:$0xff]
      %v3584 = vld [vmem:[%s192 + $0x20b] sm:$0xff]
      %v3585 = vld [vmem:[%s192 + $0x213] sm:$0xff]
      %v3586 = vld [vmem:[%s192 + $0x21b] sm:$0xff]
      %v3587 = vld [vmem:[%s192 + $0x223] sm:$0xff]
      %v3588 = vld [vmem:[%s192 + $0x22b] sm:$0xff]
      %v3589 = vld [vmem:[%s192 + $0x233] sm:$0xff]
      %v3590 = vld [vmem:[%s192 + $0x23b] sm:$0xff]
      %v3591 = vld [vmem:[%s192 + $0x243] sm:$0xff]
      %v3592 = vld [vmem:[%s192 + $0x24b] sm:$0xff]
      %v3593 = vld [vmem:[%s192 + $0x253] sm:$0xff]
      %v3594 = vld [vmem:[%s192 + $0x25b] sm:$0xff]
      %v3595 = vld [vmem:[%s192 + $0x263] sm:$0xff]
      %v3596 = vld [vmem:[%s192 + $0x26b] sm:$0xff]
      %v3597 = vld [vmem:[%s192 + $0x273] sm:$0xff]
      %v3598 = vld [vmem:[%s192 + $0x27b] sm:$0xff]
      %v3599 = vld [vmem:[%s192 + $0x283] sm:$0xff]
      %v3600 = vld [vmem:[%s192 + $0x28b] sm:$0xff]
      %v3601 = vld [vmem:[%s192 + $0x293] sm:$0xff]
      %v3602 = vld [vmem:[%s192 + $0x29b] sm:$0xff]
      %v3603 = vld [vmem:[%s192 + $0x2a3] sm:$0xff]
      %v3604 = vld [vmem:[%s192 + $0x2ab] sm:$0xff]
      %v3605 = vld [vmem:[%s192 + $0x2b3] sm:$0xff]
      %v3606 = vld [vmem:[%s192 + $0x2bb] sm:$0xff]
      %v3607 = vld [vmem:[%s192 + $0x2c3] sm:$0xff]
      %v3608 = vld [vmem:[%s192 + $0x2cb] sm:$0xff]
      %v3609 = vld [vmem:[%s192 + $0x2d3] sm:$0xff]
      %v3610 = vld [vmem:[%s192 + $0x2db] sm:$0xff]
      %v3611 = vld [vmem:[%s192 + $0x2e3] sm:$0xff]
      %v3612 = vld [vmem:[%s192 + $0x2eb] sm:$0xff]
      %v3613 = vld [vmem:[%s192 + $0x2f3] sm:$0xff]
      %v3614 = vld [vmem:[%s192 + $0x2fb] sm:$0xff]
      %v3615 = vld [vmem:[%s192 + $0x303] sm:$0xff]
      %v3616 = vld [vmem:[%s192 + $0x30b] sm:$0xff]
      %v3617 = vld [vmem:[%s192 + $0x313] sm:$0xff]
      %v3618 = vld [vmem:[%s192 + $0x31b] sm:$0xff]
      %v3619 = vld [vmem:[%s192 + $0x323] sm:$0xff]
      %v3620 = vld [vmem:[%s192 + $0x32b] sm:$0xff]
      %v3621 = vld [vmem:[%s192 + $0x333] sm:$0xff]
      %v3622 = vld [vmem:[%s192 + $0x33b] sm:$0xff]
      %v3623 = vld [vmem:[%s192 + $0x343] sm:$0xff]
      %v3624 = vld [vmem:[%s192 + $0x34b] sm:$0xff]
      %v3625 = vld [vmem:[%s192 + $0x353] sm:$0xff]
      %v3626 = vld [vmem:[%s192 + $0x35b] sm:$0xff]
      %v3627 = vld [vmem:[%s192 + $0x363] sm:$0xff]
      %v3628 = vld [vmem:[%s192 + $0x36b] sm:$0xff]
      %v3629 = vld [vmem:[%s192 + $0x373] sm:$0xff]
      %v3630 = vld [vmem:[%s192 + $0x37b] sm:$0xff]
      %v3631 = vld [vmem:[%s192 + $0x383] sm:$0xff]
      %v3632 = vld [vmem:[%s192 + $0x38b] sm:$0xff]
      %v3633 = vld [vmem:[%s192 + $0x393] sm:$0xff]
      %v3634 = vld [vmem:[%s192 + $0x39b] sm:$0xff]
      %v3635 = vld [vmem:[%s192 + $0x3a3] sm:$0xff]
      %v3636 = vld [vmem:[%s192 + $0x3ab] sm:$0xff]
      %v3637 = vld [vmem:[%s192 + $0x3b3] sm:$0xff]
      %v3638 = vld [vmem:[%s192 + $0x3bb] sm:$0xff]
      %v3639 = vld [vmem:[%s192 + $0x3c3] sm:$0xff]
      %v3640 = vld [vmem:[%s192 + $0x3cb] sm:$0xff]
      %v3641 = vld [vmem:[%s192 + $0x3d3] sm:$0xff]
      %v3642 = vld [vmem:[%s192 + $0x3db] sm:$0xff]
      %v3643 = vld [vmem:[%s192 + $0x3e3] sm:$0xff]
      %v3644 = vld [vmem:[%s192 + $0x3eb] sm:$0xff]
      %v3645 = vld [vmem:[%s192 + $0x3f3] sm:$0xff]
      %v3646 = vld [vmem:[%s192 + $0x3fb] sm:$0xff]
      %v3647 = vld [vmem:[%s192 + $0x403] sm:$0xff]
      %v3648 = vld [vmem:[%s192 + $0x40b] sm:$0xff]
      %v3649 = vld [vmem:[%s192 + $0x413] sm:$0xff]
      %v3650 = vld [vmem:[%s192 + $0x41b] sm:$0xff]
      %v3651 = vld [vmem:[%s192 + $0x423] sm:$0xff]
      %v3652 = vld [vmem:[%s192 + $0x42b] sm:$0xff]
      %v3653 = vld [vmem:[%s192 + $0x433] sm:$0xff]
      %v3654 = vld [vmem:[%s192 + $0x43b] sm:$0xff]
      %v3655 = vld [vmem:[%s192 + $0x443] sm:$0xff]
      %v3656 = vld [vmem:[%s192 + $0x44b] sm:$0xff]
      %v3657 = vld [vmem:[%s192 + $0x453] sm:$0xff]
      %v3658 = vld [vmem:[%s192 + $0x45b] sm:$0xff]
      %v3659 = vpack.c.bf16 %v3524, %v3523
      %v3660 = vpack.c.bf16 %v3526, %v3525
      %v3661 = vpack.c.bf16 %v3528, %v3527
      %v3662 = vpack.c.bf16 %v3530, %v3529
      %v3663 = vpack.c.bf16 %v3532, %v3531
      %v3664 = vpack.c.bf16 %v3534, %v3533
      %v3665 = vpack.c.bf16 %v3536, %v3535
      %v3666 = vpack.c.bf16 %v3538, %v3537
      %v3667 = vpack.c.bf16 %v3540, %v3539
      %v3668 = vpack.c.bf16 %v3542, %v3541
      %v3669 = vpack.c.bf16 %v3544, %v3543
      %v3670 = vpack.c.bf16 %v3546, %v3545
      %v3671 = vpack.c.bf16 %v3548, %v3547
      %v3672 = vpack.c.bf16 %v3550, %v3549
      %v3673 = vpack.c.bf16 %v3552, %v3551
      %v3674 = vpack.c.bf16 %v3554, %v3553
      %v3675 = vpack.c.bf16 %v3556, %v3555
      %v3676 = vpack.c.bf16 %v3558, %v3557
      %v3677 = vpack.c.bf16 %v3560, %v3559
      %v3678 = vpack.c.bf16 %v3562, %v3561
      %v3679 = vpack.c.bf16 %v3564, %v3563
      %v3680 = vpack.c.bf16 %v3566, %v3565
      %v3681 = vpack.c.bf16 %v3568, %v3567
      %v3682 = vpack.c.bf16 %v3570, %v3569
      %v3683 = vpack.c.bf16 %v3572, %v3571
      %v3684 = vpack.c.bf16 %v3574, %v3573
      %v3685 = vpack.c.bf16 %v3576, %v3575
      %v3686 = vpack.c.bf16 %v3578, %v3577
      %v3687 = vpack.c.bf16 %v3580, %v3579
      %v3688 = vpack.c.bf16 %v3582, %v3581
      %v3689 = vpack.c.bf16 %v3584, %v3583
      %v3690 = vpack.c.bf16 %v3586, %v3585
      %v3691 = vpack.c.bf16 %v3588, %v3587
      %v3692 = vpack.c.bf16 %v3590, %v3589
      %v3693 = vpack.c.bf16 %v3592, %v3591
      %v3694 = vpack.c.bf16 %v3594, %v3593
      %v3695 = vpack.c.bf16 %v3596, %v3595
      %v3696 = vpack.c.bf16 %v3598, %v3597
      %v3697 = vpack.c.bf16 %v3600, %v3599
      %v3698 = vpack.c.bf16 %v3602, %v3601
      %v3699 = vpack.c.bf16 %v3604, %v3603
      %v3700 = vpack.c.bf16 %v3606, %v3605
      %v3701 = vpack.c.bf16 %v3608, %v3607
      %v3702 = vpack.c.bf16 %v3610, %v3609
      %v3703 = vpack.c.bf16 %v3612, %v3611
      %v3704 = vpack.c.bf16 %v3614, %v3613
      %v3705 = vpack.c.bf16 %v3616, %v3615
      %v3706 = vpack.c.bf16 %v3618, %v3617
      %v3707 = vpack.c.bf16 %v3620, %v3619
      %v3708 = vpack.c.bf16 %v3622, %v3621
      %v3709 = vpack.c.bf16 %v3624, %v3623
      %v3710 = vpack.c.bf16 %v3626, %v3625
      %v3711 = vpack.c.bf16 %v3628, %v3627
      %v3712 = vpack.c.bf16 %v3630, %v3629
      %v3713 = vpack.c.bf16 %v3632, %v3631
      %v3714 = vpack.c.bf16 %v3634, %v3633
      %v3715 = vpack.c.bf16 %v3636, %v3635
      %v3716 = vpack.c.bf16 %v3638, %v3637
      %v3717 = vpack.c.bf16 %v3640, %v3639
      %v3718 = vpack.c.bf16 %v3642, %v3641
      %v3719 = vpack.c.bf16 %v3644, %v3643
      %v3720 = vpack.c.bf16 %v3646, %v3645
      %v3721 = vpack.c.bf16 %v3648, %v3647
      %v3722 = vpack.c.bf16 %v3650, %v3649
      %v3723 = vpack.c.bf16 %v3652, %v3651
      %v3724 = vpack.c.bf16 %v3654, %v3653
      %v3725 = vpack.c.bf16 %v3656, %v3655
      %v3726 = vpack.c.bf16 %v3658, %v3657
      %s3727 = scalar_lea.vmem %s1, 8
      %v3728 = vld [vmem:[%s3727] sm:$0x3]
      %v3730 = vsel %vm610, %v3659, 0
      %v3733 = vsel %vm610, %v3660, 0
      %v3736 = vsel %vm610, %v3661, 0
      %v3739 = vsel %vm610, %v3662, 0
      %v3742 = vsel %vm610, %v3663, 0
      %v3745 = vsel %vm610, %v3664, 0
      %v3748 = vsel %vm610, %v3665, 0
      %v3751 = vsel %vm610, %v3666, 0
      %v3754 = vsel %vm610, %v3667, 0
      %v3757 = vsel %vm610, %v3668, 0
      %v3760 = vsel %vm610, %v3669, 0
      %v3763 = vsel %vm610, %v3670, 0
      %v3766 = vsel %vm610, %v3671, 0
      %v3769 = vsel %vm610, %v3672, 0
      %v3772 = vsel %vm610, %v3673, 0
      %v3775 = vsel %vm610, %v3674, 0
      %v3778 = vsel %vm610, %v3675, 0
      %v3781 = vsel %vm610, %v3676, 0
      %v3784 = vsel %vm610, %v3677, 0
      %v3787 = vsel %vm610, %v3678, 0
      %v3790 = vsel %vm610, %v3679, 0
      %v3793 = vsel %vm610, %v3680, 0
      %v3796 = vsel %vm610, %v3681, 0
      %v3799 = vsel %vm610, %v3682, 0
      %v3802 = vsel %vm610, %v3683, 0
      %v3805 = vsel %vm610, %v3684, 0
      %v3808 = vsel %vm610, %v3685, 0
      %v3811 = vsel %vm610, %v3686, 0
      %v3814 = vsel %vm610, %v3687, 0
      %v3817 = vsel %vm610, %v3688, 0
      %v3820 = vsel %vm610, %v3689, 0
      %v3823 = vsel %vm610, %v3690, 0
      %v3826 = vsel %vm610, %v3691, 0
      %v3829 = vsel %vm610, %v3692, 0
      %v3832 = vsel %vm610, %v3693, 0
      %v3835 = vsel %vm610, %v3694, 0
      %v3838 = vsel %vm610, %v3695, 0
      %v3841 = vsel %vm610, %v3696, 0
      %v3844 = vsel %vm610, %v3697, 0
      %v3847 = vsel %vm610, %v3698, 0
      %v3850 = vsel %vm610, %v3699, 0
      %v3853 = vsel %vm610, %v3700, 0
      %v3856 = vsel %vm610, %v3701, 0
      %v3859 = vsel %vm610, %v3702, 0
      %v3862 = vsel %vm610, %v3703, 0
      %v3865 = vsel %vm610, %v3704, 0
      %v3868 = vsel %vm610, %v3705, 0
      %v3871 = vsel %vm610, %v3706, 0
      %v3874 = vsel %vm610, %v3707, 0
      %v3877 = vsel %vm610, %v3708, 0
      %v3880 = vsel %vm610, %v3709, 0
      %v3883 = vsel %vm610, %v3710, 0
      %v3886 = vsel %vm610, %v3711, 0
      %v3889 = vsel %vm610, %v3712, 0
      %v3892 = vsel %vm610, %v3713, 0
      %v3895 = vsel %vm610, %v3714, 0
      %v3898 = vsel %vm610, %v3715, 0
      %v3901 = vsel %vm610, %v3716, 0
      %v3904 = vsel %vm610, %v3717, 0
      %v3907 = vsel %vm610, %v3718, 0
      %v3910 = vsel %vm610, %v3719, 0
      %v3913 = vsel %vm610, %v3720, 0
      %v3916 = vsel %vm610, %v3721, 0
      %v3919 = vsel %vm610, %v3722, 0
      %v3922 = vsel %vm610, %v3723, 0
      %v3925 = vsel %vm610, %v3724, 0
      %v3928 = vsel %vm610, %v3725, 0
      %v3931 = vsel %vm610, %v3726, 0
      %v3934 = vand.u32 %v3728, %v818
      %3936 = vmatpush.bf16.msra.mxu0 0
      %3937 = vmatpush.bf16.msra.mxu0 0
      %3938 = vmatpush.bf16.msra.mxu0 0
      %3939 = vmatpush.bf16.msra.mxu0 0
      %3940 = vmatpush.bf16.msra.mxu0 0
      %3941 = vmatpush.bf16.msra.mxu0 0
      %3942 = vmatpush.bf16.msra.mxu0 0
      %3943 = vmatpush.bf16.msra.mxu0 %v3934
      %3944 = vmatmul.bf16.gmra.mxu0 %v3730
      %v3945 = vpop.f32.mrf.mxu0
      %v3946 = vadd.f32 0.0, %v3945
      %v3947 = vpop.f32.mrf.mxu0
      %v3948 = vadd.f32 0.0, %v3947
      %3949 = vmatmul.bf16.gmra.mxu0 %v3733
      %v3950 = vpop.f32.mrf.mxu0
      %v3951 = vadd.f32 0.0, %v3950
      %v3952 = vpop.f32.mrf.mxu0
      %v3953 = vadd.f32 0.0, %v3952
      %3954 = vmatmul.bf16.gmra.mxu0 %v3736
      %v3955 = vpop.f32.mrf.mxu0
      %v3956 = vadd.f32 0.0, %v3955
      %v3957 = vpop.f32.mrf.mxu0
      %v3958 = vadd.f32 0.0, %v3957
      %3959 = vmatmul.bf16.gmra.mxu0 %v3739
      %v3960 = vpop.f32.mrf.mxu0
      %v3961 = vadd.f32 0.0, %v3960
      %v3962 = vpop.f32.mrf.mxu0
      %v3963 = vadd.f32 0.0, %v3962
      %3964 = vmatmul.bf16.gmra.mxu0 %v3742
      %v3965 = vpop.f32.mrf.mxu0
      %v3966 = vadd.f32 0.0, %v3965
      %v3967 = vpop.f32.mrf.mxu0
      %v3968 = vadd.f32 0.0, %v3967
      %3969 = vmatmul.bf16.gmra.mxu0 %v3745
      %v3970 = vpop.f32.mrf.mxu0
      %v3971 = vadd.f32 0.0, %v3970
      %v3972 = vpop.f32.mrf.mxu0
      %v3973 = vadd.f32 0.0, %v3972
      %3974 = vmatmul.bf16.gmra.mxu0 %v3748
      %v3975 = vpop.f32.mrf.mxu0
      %v3976 = vadd.f32 0.0, %v3975
      %v3977 = vpop.f32.mrf.mxu0
      %v3978 = vadd.f32 0.0, %v3977
      %3979 = vmatmul.bf16.gmra.mxu0 %v3751
      %v3980 = vpop.f32.mrf.mxu0
      %v3981 = vadd.f32 0.0, %v3980
      %v3982 = vpop.f32.mrf.mxu0
      %v3983 = vadd.f32 0.0, %v3982
      %3984 = vmatmul.bf16.gmra.mxu0 %v3754
      %v3985 = vpop.f32.mrf.mxu0
      %v3986 = vadd.f32 0.0, %v3985
      %v3987 = vpop.f32.mrf.mxu0
      %v3988 = vadd.f32 0.0, %v3987
      %3989 = vmatmul.bf16.gmra.mxu0 %v3757
      %v3990 = vpop.f32.mrf.mxu0
      %v3991 = vadd.f32 0.0, %v3990
      %v3992 = vpop.f32.mrf.mxu0
      %v3993 = vadd.f32 0.0, %v3992
      %3994 = vmatmul.bf16.gmra.mxu0 %v3760
      %v3995 = vpop.f32.mrf.mxu0
      %v3996 = vadd.f32 0.0, %v3995
      %v3997 = vpop.f32.mrf.mxu0
      %v3998 = vadd.f32 0.0, %v3997
      %3999 = vmatmul.bf16.gmra.mxu0 %v3763
      %v4000 = vpop.f32.mrf.mxu0
      %v4001 = vadd.f32 0.0, %v4000
      %v4002 = vpop.f32.mrf.mxu0
      %v4003 = vadd.f32 0.0, %v4002
      %4004 = vmatmul.bf16.gmra.mxu0 %v3766
      %v4005 = vpop.f32.mrf.mxu0
      %v4006 = vadd.f32 0.0, %v4005
      %v4007 = vpop.f32.mrf.mxu0
      %v4008 = vadd.f32 0.0, %v4007
      %4009 = vmatmul.bf16.gmra.mxu0 %v3769
      %v4010 = vpop.f32.mrf.mxu0
      %v4011 = vadd.f32 0.0, %v4010
      %v4012 = vpop.f32.mrf.mxu0
      %v4013 = vadd.f32 0.0, %v4012
      %4014 = vmatmul.bf16.gmra.mxu0 %v3772
      %v4015 = vpop.f32.mrf.mxu0
      %v4016 = vadd.f32 0.0, %v4015
      %v4017 = vpop.f32.mrf.mxu0
      %v4018 = vadd.f32 0.0, %v4017
      %4019 = vmatmul.bf16.gmra.mxu0 %v3775
      %v4020 = vpop.f32.mrf.mxu0
      %v4021 = vadd.f32 0.0, %v4020
      %v4022 = vpop.f32.mrf.mxu0
      %v4023 = vadd.f32 0.0, %v4022
      %4024 = vmatmul.bf16.gmra.mxu0 %v3778
      %v4025 = vpop.f32.mrf.mxu0
      %v4026 = vadd.f32 0.0, %v4025
      %v4027 = vpop.f32.mrf.mxu0
      %v4028 = vadd.f32 0.0, %v4027
      %4029 = vmatmul.bf16.gmra.mxu0 %v3781
      %v4030 = vpop.f32.mrf.mxu0
      %v4031 = vadd.f32 0.0, %v4030
      %v4032 = vpop.f32.mrf.mxu0
      %v4033 = vadd.f32 0.0, %v4032
      %4034 = vmatmul.bf16.gmra.mxu0 %v3784
      %v4035 = vpop.f32.mrf.mxu0
      %v4036 = vadd.f32 0.0, %v4035
      %v4037 = vpop.f32.mrf.mxu0
      %v4038 = vadd.f32 0.0, %v4037
      %4039 = vmatmul.bf16.gmra.mxu0 %v3787
      %v4040 = vpop.f32.mrf.mxu0
      %v4041 = vadd.f32 0.0, %v4040
      %v4042 = vpop.f32.mrf.mxu0
      %v4043 = vadd.f32 0.0, %v4042
      %4044 = vmatmul.bf16.gmra.mxu0 %v3790
      %v4045 = vpop.f32.mrf.mxu0
      %v4046 = vadd.f32 0.0, %v4045
      %v4047 = vpop.f32.mrf.mxu0
      %v4048 = vadd.f32 0.0, %v4047
      %4049 = vmatmul.bf16.gmra.mxu0 %v3793
      %v4050 = vpop.f32.mrf.mxu0
      %v4051 = vadd.f32 0.0, %v4050
      %v4052 = vpop.f32.mrf.mxu0
      %v4053 = vadd.f32 0.0, %v4052
      %4054 = vmatmul.bf16.gmra.mxu0 %v3796
      %v4055 = vpop.f32.mrf.mxu0
      %v4056 = vadd.f32 0.0, %v4055
      %v4057 = vpop.f32.mrf.mxu0
      %v4058 = vadd.f32 0.0, %v4057
      %4059 = vmatmul.bf16.gmra.mxu0 %v3799
      %v4060 = vpop.f32.mrf.mxu0
      %v4061 = vadd.f32 0.0, %v4060
      %v4062 = vpop.f32.mrf.mxu0
      %v4063 = vadd.f32 0.0, %v4062
      %4064 = vmatmul.bf16.gmra.mxu0 %v3802
      %v4065 = vpop.f32.mrf.mxu0
      %v4066 = vadd.f32 0.0, %v4065
      %v4067 = vpop.f32.mrf.mxu0
      %v4068 = vadd.f32 0.0, %v4067
      %4069 = vmatmul.bf16.gmra.mxu0 %v3805
      %v4070 = vpop.f32.mrf.mxu0
      %v4071 = vadd.f32 0.0, %v4070
      %v4072 = vpop.f32.mrf.mxu0
      %v4073 = vadd.f32 0.0, %v4072
      %4074 = vmatmul.bf16.gmra.mxu0 %v3808
      %v4075 = vpop.f32.mrf.mxu0
      %v4076 = vadd.f32 0.0, %v4075
      %v4077 = vpop.f32.mrf.mxu0
      %v4078 = vadd.f32 0.0, %v4077
      %4079 = vmatmul.bf16.gmra.mxu0 %v3811
      %v4080 = vpop.f32.mrf.mxu0
      %v4081 = vadd.f32 0.0, %v4080
      %v4082 = vpop.f32.mrf.mxu0
      %v4083 = vadd.f32 0.0, %v4082
      %4084 = vmatmul.bf16.gmra.mxu0 %v3814
      %v4085 = vpop.f32.mrf.mxu0
      %v4086 = vadd.f32 0.0, %v4085
      %v4087 = vpop.f32.mrf.mxu0
      %v4088 = vadd.f32 0.0, %v4087
      %4089 = vmatmul.bf16.gmra.mxu0 %v3817
      %v4090 = vpop.f32.mrf.mxu0
      %v4091 = vadd.f32 0.0, %v4090
      %v4092 = vpop.f32.mrf.mxu0
      %v4093 = vadd.f32 0.0, %v4092
      %4094 = vmatmul.bf16.gmra.mxu0 %v3820
      %v4095 = vpop.f32.mrf.mxu0
      %v4096 = vadd.f32 0.0, %v4095
      %v4097 = vpop.f32.mrf.mxu0
      %v4098 = vadd.f32 0.0, %v4097
      %4099 = vmatmul.bf16.gmra.mxu0 %v3823
      %v4100 = vpop.f32.mrf.mxu0
      %v4101 = vadd.f32 0.0, %v4100
      %v4102 = vpop.f32.mrf.mxu0
      %v4103 = vadd.f32 0.0, %v4102
      %4104 = vmatmul.bf16.gmra.mxu0 %v3826
      %v4105 = vpop.f32.mrf.mxu0
      %v4106 = vadd.f32 0.0, %v4105
      %v4107 = vpop.f32.mrf.mxu0
      %v4108 = vadd.f32 0.0, %v4107
      %4109 = vmatmul.bf16.gmra.mxu0 %v3829
      %v4110 = vpop.f32.mrf.mxu0
      %v4111 = vadd.f32 0.0, %v4110
      %v4112 = vpop.f32.mrf.mxu0
      %v4113 = vadd.f32 0.0, %v4112
      %4114 = vmatmul.bf16.gmra.mxu0 %v3832
      %v4115 = vpop.f32.mrf.mxu0
      %v4116 = vadd.f32 0.0, %v4115
      %v4117 = vpop.f32.mrf.mxu0
      %v4118 = vadd.f32 0.0, %v4117
      %4119 = vmatmul.bf16.gmra.mxu0 %v3835
      %v4120 = vpop.f32.mrf.mxu0
      %v4121 = vadd.f32 0.0, %v4120
      %v4122 = vpop.f32.mrf.mxu0
      %v4123 = vadd.f32 0.0, %v4122
      %4124 = vmatmul.bf16.gmra.mxu0 %v3838
      %v4125 = vpop.f32.mrf.mxu0
      %v4126 = vadd.f32 0.0, %v4125
      %v4127 = vpop.f32.mrf.mxu0
      %v4128 = vadd.f32 0.0, %v4127
      %4129 = vmatmul.bf16.gmra.mxu0 %v3841
      %v4130 = vpop.f32.mrf.mxu0
      %v4131 = vadd.f32 0.0, %v4130
      %v4132 = vpop.f32.mrf.mxu0
      %v4133 = vadd.f32 0.0, %v4132
      %4134 = vmatmul.bf16.gmra.mxu0 %v3844
      %v4135 = vpop.f32.mrf.mxu0
      %v4136 = vadd.f32 0.0, %v4135
      %v4137 = vpop.f32.mrf.mxu0
      %v4138 = vadd.f32 0.0, %v4137
      %4139 = vmatmul.bf16.gmra.mxu0 %v3847
      %v4140 = vpop.f32.mrf.mxu0
      %v4141 = vadd.f32 0.0, %v4140
      %v4142 = vpop.f32.mrf.mxu0
      %v4143 = vadd.f32 0.0, %v4142
      %4144 = vmatmul.bf16.gmra.mxu0 %v3850
      %v4145 = vpop.f32.mrf.mxu0
      %v4146 = vadd.f32 0.0, %v4145
      %v4147 = vpop.f32.mrf.mxu0
      %v4148 = vadd.f32 0.0, %v4147
      %4149 = vmatmul.bf16.gmra.mxu0 %v3853
      %v4150 = vpop.f32.mrf.mxu0
      %v4151 = vadd.f32 0.0, %v4150
      %v4152 = vpop.f32.mrf.mxu0
      %v4153 = vadd.f32 0.0, %v4152
      %4154 = vmatmul.bf16.gmra.mxu0 %v3856
      %v4155 = vpop.f32.mrf.mxu0
      %v4156 = vadd.f32 0.0, %v4155
      %v4157 = vpop.f32.mrf.mxu0
      %v4158 = vadd.f32 0.0, %v4157
      %4159 = vmatmul.bf16.gmra.mxu0 %v3859
      %v4160 = vpop.f32.mrf.mxu0
      %v4161 = vadd.f32 0.0, %v4160
      %v4162 = vpop.f32.mrf.mxu0
      %v4163 = vadd.f32 0.0, %v4162
      %4164 = vmatmul.bf16.gmra.mxu0 %v3862
      %v4165 = vpop.f32.mrf.mxu0
      %v4166 = vadd.f32 0.0, %v4165
      %v4167 = vpop.f32.mrf.mxu0
      %v4168 = vadd.f32 0.0, %v4167
      %4169 = vmatmul.bf16.gmra.mxu0 %v3865
      %v4170 = vpop.f32.mrf.mxu0
      %v4171 = vadd.f32 0.0, %v4170
      %v4172 = vpop.f32.mrf.mxu0
      %v4173 = vadd.f32 0.0, %v4172
      %4174 = vmatmul.bf16.gmra.mxu0 %v3868
      %v4175 = vpop.f32.mrf.mxu0
      %v4176 = vadd.f32 0.0, %v4175
      %v4177 = vpop.f32.mrf.mxu0
      %v4178 = vadd.f32 0.0, %v4177
      %4179 = vmatmul.bf16.gmra.mxu0 %v3871
      %v4180 = vpop.f32.mrf.mxu0
      %v4181 = vadd.f32 0.0, %v4180
      %v4182 = vpop.f32.mrf.mxu0
      %v4183 = vadd.f32 0.0, %v4182
      %4184 = vmatmul.bf16.gmra.mxu0 %v3874
      %v4185 = vpop.f32.mrf.mxu0
      %v4186 = vadd.f32 0.0, %v4185
      %v4187 = vpop.f32.mrf.mxu0
      %v4188 = vadd.f32 0.0, %v4187
      %4189 = vmatmul.bf16.gmra.mxu0 %v3877
      %v4190 = vpop.f32.mrf.mxu0
      %v4191 = vadd.f32 0.0, %v4190
      %v4192 = vpop.f32.mrf.mxu0
      %v4193 = vadd.f32 0.0, %v4192
      %4194 = vmatmul.bf16.gmra.mxu0 %v3880
      %v4195 = vpop.f32.mrf.mxu0
      %v4196 = vadd.f32 0.0, %v4195
      %v4197 = vpop.f32.mrf.mxu0
      %v4198 = vadd.f32 0.0, %v4197
      %4199 = vmatmul.bf16.gmra.mxu0 %v3883
      %v4200 = vpop.f32.mrf.mxu0
      %v4201 = vadd.f32 0.0, %v4200
      %v4202 = vpop.f32.mrf.mxu0
      %v4203 = vadd.f32 0.0, %v4202
      %4204 = vmatmul.bf16.gmra.mxu0 %v3886
      %v4205 = vpop.f32.mrf.mxu0
      %v4206 = vadd.f32 0.0, %v4205
      %v4207 = vpop.f32.mrf.mxu0
      %v4208 = vadd.f32 0.0, %v4207
      %4209 = vmatmul.bf16.gmra.mxu0 %v3889
      %v4210 = vpop.f32.mrf.mxu0
      %v4211 = vadd.f32 0.0, %v4210
      %v4212 = vpop.f32.mrf.mxu0
      %v4213 = vadd.f32 0.0, %v4212
      %4214 = vmatmul.bf16.gmra.mxu0 %v3892
      %v4215 = vpop.f32.mrf.mxu0
      %v4216 = vadd.f32 0.0, %v4215
      %v4217 = vpop.f32.mrf.mxu0
      %v4218 = vadd.f32 0.0, %v4217
      %4219 = vmatmul.bf16.gmra.mxu0 %v3895
      %v4220 = vpop.f32.mrf.mxu0
      %v4221 = vadd.f32 0.0, %v4220
      %v4222 = vpop.f32.mrf.mxu0
      %v4223 = vadd.f32 0.0, %v4222
      %4224 = vmatmul.bf16.gmra.mxu0 %v3898
      %v4225 = vpop.f32.mrf.mxu0
      %v4226 = vadd.f32 0.0, %v4225
      %v4227 = vpop.f32.mrf.mxu0
      %v4228 = vadd.f32 0.0, %v4227
      %4229 = vmatmul.bf16.gmra.mxu0 %v3901
      %v4230 = vpop.f32.mrf.mxu0
      %v4231 = vadd.f32 0.0, %v4230
      %v4232 = vpop.f32.mrf.mxu0
      %v4233 = vadd.f32 0.0, %v4232
      %4234 = vmatmul.bf16.gmra.mxu0 %v3904
      %v4235 = vpop.f32.mrf.mxu0
      %v4236 = vadd.f32 0.0, %v4235
      %v4237 = vpop.f32.mrf.mxu0
      %v4238 = vadd.f32 0.0, %v4237
      %4239 = vmatmul.bf16.gmra.mxu0 %v3907
      %v4240 = vpop.f32.mrf.mxu0
      %v4241 = vadd.f32 0.0, %v4240
      %v4242 = vpop.f32.mrf.mxu0
      %v4243 = vadd.f32 0.0, %v4242
      %4244 = vmatmul.bf16.gmra.mxu0 %v3910
      %v4245 = vpop.f32.mrf.mxu0
      %v4246 = vadd.f32 0.0, %v4245
      %v4247 = vpop.f32.mrf.mxu0
      %v4248 = vadd.f32 0.0, %v4247
      %4249 = vmatmul.bf16.gmra.mxu0 %v3913
      %v4250 = vpop.f32.mrf.mxu0
      %v4251 = vadd.f32 0.0, %v4250
      %v4252 = vpop.f32.mrf.mxu0
      %v4253 = vadd.f32 0.0, %v4252
      %4254 = vmatmul.bf16.gmra.mxu0 %v3916
      %v4255 = vpop.f32.mrf.mxu0
      %v4256 = vadd.f32 0.0, %v4255
      %v4257 = vpop.f32.mrf.mxu0
      %v4258 = vadd.f32 0.0, %v4257
      %4259 = vmatmul.bf16.gmra.mxu0 %v3919
      %v4260 = vpop.f32.mrf.mxu0
      %v4261 = vadd.f32 0.0, %v4260
      %v4262 = vpop.f32.mrf.mxu0
      %v4263 = vadd.f32 0.0, %v4262
      %4264 = vmatmul.bf16.gmra.mxu0 %v3922
      %v4265 = vpop.f32.mrf.mxu0
      %v4266 = vadd.f32 0.0, %v4265
      %v4267 = vpop.f32.mrf.mxu0
      %v4268 = vadd.f32 0.0, %v4267
      %4269 = vmatmul.bf16.gmra.mxu0 %v3925
      %v4270 = vpop.f32.mrf.mxu0
      %v4271 = vadd.f32 0.0, %v4270
      %v4272 = vpop.f32.mrf.mxu0
      %v4273 = vadd.f32 0.0, %v4272
      %4274 = vmatmul.bf16.gmra.mxu0 %v3928
      %v4275 = vpop.f32.mrf.mxu0
      %v4276 = vadd.f32 0.0, %v4275
      %v4277 = vpop.f32.mrf.mxu0
      %v4278 = vadd.f32 0.0, %v4277
      %4279 = vmatmul.bf16.gmra.mxu0 %v3931
      %v4280 = vpop.f32.mrf.mxu0
      %v4281 = vadd.f32 0.0, %v4280
      %v4282 = vpop.f32.mrf.mxu0
      %v4283 = vadd.f32 0.0, %v4282
      %4284 = vdwg.mxu0
      %v4285 = vadd.f32 %v3387, %v3946
      %v4286 = vadd.f32 %v3388, %v3948
      %v4287 = vadd.f32 %v3389, %v3951
      %v4288 = vadd.f32 %v3390, %v3953
      %v4289 = vadd.f32 %v3391, %v3956
      %v4290 = vadd.f32 %v3392, %v3958
      %v4291 = vadd.f32 %v3393, %v3961
      %v4292 = vadd.f32 %v3394, %v3963
      %v4293 = vadd.f32 %v3395, %v3966
      %v4294 = vadd.f32 %v3396, %v3968
      %v4295 = vadd.f32 %v3397, %v3971
      %v4296 = vadd.f32 %v3398, %v3973
      %v4297 = vadd.f32 %v3399, %v3976
      %v4298 = vadd.f32 %v3400, %v3978
      %v4299 = vadd.f32 %v3401, %v3981
      %v4300 = vadd.f32 %v3402, %v3983
      %v4301 = vadd.f32 %v3403, %v3986
      %v4302 = vadd.f32 %v3404, %v3988
      %v4303 = vadd.f32 %v3405, %v3991
      %v4304 = vadd.f32 %v3406, %v3993
      %v4305 = vadd.f32 %v3407, %v3996
      %v4306 = vadd.f32 %v3408, %v3998
      %v4307 = vadd.f32 %v3409, %v4001
      %v4308 = vadd.f32 %v3410, %v4003
      %v4309 = vadd.f32 %v3411, %v4006
      %v4310 = vadd.f32 %v3412, %v4008
      %v4311 = vadd.f32 %v3413, %v4011
      %v4312 = vadd.f32 %v3414, %v4013
      %v4313 = vadd.f32 %v3415, %v4016
      %v4314 = vadd.f32 %v3416, %v4018
      %v4315 = vadd.f32 %v3417, %v4021
      %v4316 = vadd.f32 %v3418, %v4023
      %v4317 = vadd.f32 %v3419, %v4026
      %v4318 = vadd.f32 %v3420, %v4028
      %v4319 = vadd.f32 %v3421, %v4031
      %v4320 = vadd.f32 %v3422, %v4033
      %v4321 = vadd.f32 %v3423, %v4036
      %v4322 = vadd.f32 %v3424, %v4038
      %v4323 = vadd.f32 %v3425, %v4041
      %v4324 = vadd.f32 %v3426, %v4043
      %v4325 = vadd.f32 %v3427, %v4046
      %v4326 = vadd.f32 %v3428, %v4048
      %v4327 = vadd.f32 %v3429, %v4051
      %v4328 = vadd.f32 %v3430, %v4053
      %v4329 = vadd.f32 %v3431, %v4056
      %v4330 = vadd.f32 %v3432, %v4058
      %v4331 = vadd.f32 %v3433, %v4061
      %v4332 = vadd.f32 %v3434, %v4063
      %v4333 = vadd.f32 %v3435, %v4066
      %v4334 = vadd.f32 %v3436, %v4068
      %v4335 = vadd.f32 %v3437, %v4071
      %v4336 = vadd.f32 %v3438, %v4073
      %v4337 = vadd.f32 %v3439, %v4076
      %v4338 = vadd.f32 %v3440, %v4078
      %v4339 = vadd.f32 %v3441, %v4081
      %v4340 = vadd.f32 %v3442, %v4083
      %v4341 = vadd.f32 %v3443, %v4086
      %v4342 = vadd.f32 %v3444, %v4088
      %v4343 = vadd.f32 %v3445, %v4091
      %v4344 = vadd.f32 %v3446, %v4093
      %v4345 = vadd.f32 %v3447, %v4096
      %v4346 = vadd.f32 %v3448, %v4098
      %v4347 = vadd.f32 %v3449, %v4101
      %v4348 = vadd.f32 %v3450, %v4103
      %v4349 = vadd.f32 %v3451, %v4106
      %v4350 = vadd.f32 %v3452, %v4108
      %v4351 = vadd.f32 %v3453, %v4111
      %v4352 = vadd.f32 %v3454, %v4113
      %v4353 = vadd.f32 %v3455, %v4116
      %v4354 = vadd.f32 %v3456, %v4118
      %v4355 = vadd.f32 %v3457, %v4121
      %v4356 = vadd.f32 %v3458, %v4123
      %v4357 = vadd.f32 %v3459, %v4126
      %v4358 = vadd.f32 %v3460, %v4128
      %v4359 = vadd.f32 %v3461, %v4131
      %v4360 = vadd.f32 %v3462, %v4133
      %v4361 = vadd.f32 %v3463, %v4136
      %v4362 = vadd.f32 %v3464, %v4138
      %v4363 = vadd.f32 %v3465, %v4141
      %v4364 = vadd.f32 %v3466, %v4143
      %v4365 = vadd.f32 %v3467, %v4146
      %v4366 = vadd.f32 %v3468, %v4148
      %v4367 = vadd.f32 %v3469, %v4151
      %v4368 = vadd.f32 %v3470, %v4153
      %v4369 = vadd.f32 %v3471, %v4156
      %v4370 = vadd.f32 %v3472, %v4158
      %v4371 = vadd.f32 %v3473, %v4161
      %v4372 = vadd.f32 %v3474, %v4163
      %v4373 = vadd.f32 %v3475, %v4166
      %v4374 = vadd.f32 %v3476, %v4168
      %v4375 = vadd.f32 %v3477, %v4171
      %v4376 = vadd.f32 %v3478, %v4173
      %v4377 = vadd.f32 %v3479, %v4176
      %v4378 = vadd.f32 %v3480, %v4178
      %v4379 = vadd.f32 %v3481, %v4181
      %v4380 = vadd.f32 %v3482, %v4183
      %v4381 = vadd.f32 %v3483, %v4186
      %v4382 = vadd.f32 %v3484, %v4188
      %v4383 = vadd.f32 %v3485, %v4191
      %v4384 = vadd.f32 %v3486, %v4193
      %v4385 = vadd.f32 %v3487, %v4196
      %v4386 = vadd.f32 %v3488, %v4198
      %v4387 = vadd.f32 %v3489, %v4201
      %v4388 = vadd.f32 %v3490, %v4203
      %v4389 = vadd.f32 %v3491, %v4206
      %v4390 = vadd.f32 %v3492, %v4208
      %v4391 = vadd.f32 %v3493, %v4211
      %v4392 = vadd.f32 %v3494, %v4213
      %v4393 = vadd.f32 %v3495, %v4216
      %v4394 = vadd.f32 %v3496, %v4218
      %v4395 = vadd.f32 %v3497, %v4221
      %v4396 = vadd.f32 %v3498, %v4223
      %v4397 = vadd.f32 %v3499, %v4226
      %v4398 = vadd.f32 %v3500, %v4228
      %v4399 = vadd.f32 %v3501, %v4231
      %v4400 = vadd.f32 %v3502, %v4233
      %v4401 = vadd.f32 %v3503, %v4236
      %v4402 = vadd.f32 %v3504, %v4238
      %v4403 = vadd.f32 %v3505, %v4241
      %v4404 = vadd.f32 %v3506, %v4243
      %v4405 = vadd.f32 %v3507, %v4246
      %v4406 = vadd.f32 %v3508, %v4248
      %v4407 = vadd.f32 %v3509, %v4251
      %v4408 = vadd.f32 %v3510, %v4253
      %v4409 = vadd.f32 %v3511, %v4256
      %v4410 = vadd.f32 %v3512, %v4258
      %v4411 = vadd.f32 %v3513, %v4261
      %v4412 = vadd.f32 %v3514, %v4263
      %v4413 = vadd.f32 %v3515, %v4266
      %v4414 = vadd.f32 %v3516, %v4268
      %v4415 = vadd.f32 %v3517, %v4271
      %v4416 = vadd.f32 %v3518, %v4273
      %v4417 = vadd.f32 %v3519, %v4276
      %v4418 = vadd.f32 %v3520, %v4278
      %v4419 = vadd.f32 %v3521, %v4281
      %v4420 = vadd.f32 %v3522, %v4283
      %v4421 = vld [vmem:[%s192 + $0x24] sm:$0xff]
      %v4422 = vld [vmem:[%s192 + $0x2c] sm:$0xff]
      %v4423 = vld [vmem:[%s192 + $0x34] sm:$0xff]
      %v4424 = vld [vmem:[%s192 + $0x3c] sm:$0xff]
      %v4425 = vld [vmem:[%s192 + $0x44] sm:$0xff]
      %v4426 = vld [vmem:[%s192 + $0x4c] sm:$0xff]
      %v4427 = vld [vmem:[%s192 + $0x54] sm:$0xff]
      %v4428 = vld [vmem:[%s192 + $0x5c] sm:$0xff]
      %v4429 = vld [vmem:[%s192 + $0x64] sm:$0xff]
      %v4430 = vld [vmem:[%s192 + $0x6c] sm:$0xff]
      %v4431 = vld [vmem:[%s192 + $0x74] sm:$0xff]
      %v4432 = vld [vmem:[%s192 + $0x7c] sm:$0xff]
      %v4433 = vld [vmem:[%s192 + $0x84] sm:$0xff]
      %v4434 = vld [vmem:[%s192 + $0x8c] sm:$0xff]
      %v4435 = vld [vmem:[%s192 + $0x94] sm:$0xff]
      %v4436 = vld [vmem:[%s192 + $0x9c] sm:$0xff]
      %v4437 = vld [vmem:[%s192 + $0xa4] sm:$0xff]
      %v4438 = vld [vmem:[%s192 + $0xac] sm:$0xff]
      %v4439 = vld [vmem:[%s192 + $0xb4] sm:$0xff]
      %v4440 = vld [vmem:[%s192 + $0xbc] sm:$0xff]
      %v4441 = vld [vmem:[%s192 + $0xc4] sm:$0xff]
      %v4442 = vld [vmem:[%s192 + $0xcc] sm:$0xff]
      %v4443 = vld [vmem:[%s192 + $0xd4] sm:$0xff]
      %v4444 = vld [vmem:[%s192 + $0xdc] sm:$0xff]
      %v4445 = vld [vmem:[%s192 + $0xe4] sm:$0xff]
      %v4446 = vld [vmem:[%s192 + $0xec] sm:$0xff]
      %v4447 = vld [vmem:[%s192 + $0xf4] sm:$0xff]
      %v4448 = vld [vmem:[%s192 + $0xfc] sm:$0xff]
      %v4449 = vld [vmem:[%s192 + $0x104] sm:$0xff]
      %v4450 = vld [vmem:[%s192 + $0x10c] sm:$0xff]
      %v4451 = vld [vmem:[%s192 + $0x114] sm:$0xff]
      %v4452 = vld [vmem:[%s192 + $0x11c] sm:$0xff]
      %v4453 = vld [vmem:[%s192 + $0x124] sm:$0xff]
      %v4454 = vld [vmem:[%s192 + $0x12c] sm:$0xff]
      %v4455 = vld [vmem:[%s192 + $0x134] sm:$0xff]
      %v4456 = vld [vmem:[%s192 + $0x13c] sm:$0xff]
      %v4457 = vld [vmem:[%s192 + $0x144] sm:$0xff]
      %v4458 = vld [vmem:[%s192 + $0x14c] sm:$0xff]
      %v4459 = vld [vmem:[%s192 + $0x154] sm:$0xff]
      %v4460 = vld [vmem:[%s192 + $0x15c] sm:$0xff]
      %v4461 = vld [vmem:[%s192 + $0x164] sm:$0xff]
      %v4462 = vld [vmem:[%s192 + $0x16c] sm:$0xff]
      %v4463 = vld [vmem:[%s192 + $0x174] sm:$0xff]
      %v4464 = vld [vmem:[%s192 + $0x17c] sm:$0xff]
      %v4465 = vld [vmem:[%s192 + $0x184] sm:$0xff]
      %v4466 = vld [vmem:[%s192 + $0x18c] sm:$0xff]
      %v4467 = vld [vmem:[%s192 + $0x194] sm:$0xff]
      %v4468 = vld [vmem:[%s192 + $0x19c] sm:$0xff]
      %v4469 = vld [vmem:[%s192 + $0x1a4] sm:$0xff]
      %v4470 = vld [vmem:[%s192 + $0x1ac] sm:$0xff]
      %v4471 = vld [vmem:[%s192 + $0x1b4] sm:$0xff]
      %v4472 = vld [vmem:[%s192 + $0x1bc] sm:$0xff]
      %v4473 = vld [vmem:[%s192 + $0x1c4] sm:$0xff]
      %v4474 = vld [vmem:[%s192 + $0x1cc] sm:$0xff]
      %v4475 = vld [vmem:[%s192 + $0x1d4] sm:$0xff]
      %v4476 = vld [vmem:[%s192 + $0x1dc] sm:$0xff]
      %v4477 = vld [vmem:[%s192 + $0x1e4] sm:$0xff]
      %v4478 = vld [vmem:[%s192 + $0x1ec] sm:$0xff]
      %v4479 = vld [vmem:[%s192 + $0x1f4] sm:$0xff]
      %v4480 = vld [vmem:[%s192 + $0x1fc] sm:$0xff]
      %v4481 = vld [vmem:[%s192 + $0x204] sm:$0xff]
      %v4482 = vld [vmem:[%s192 + $0x20c] sm:$0xff]
      %v4483 = vld [vmem:[%s192 + $0x214] sm:$0xff]
      %v4484 = vld [vmem:[%s192 + $0x21c] sm:$0xff]
      %v4485 = vld [vmem:[%s192 + $0x224] sm:$0xff]
      %v4486 = vld [vmem:[%s192 + $0x22c] sm:$0xff]
      %v4487 = vld [vmem:[%s192 + $0x234] sm:$0xff]
      %v4488 = vld [vmem:[%s192 + $0x23c] sm:$0xff]
      %v4489 = vld [vmem:[%s192 + $0x244] sm:$0xff]
      %v4490 = vld [vmem:[%s192 + $0x24c] sm:$0xff]
      %v4491 = vld [vmem:[%s192 + $0x254] sm:$0xff]
      %v4492 = vld [vmem:[%s192 + $0x25c] sm:$0xff]
      %v4493 = vld [vmem:[%s192 + $0x264] sm:$0xff]
      %v4494 = vld [vmem:[%s192 + $0x26c] sm:$0xff]
      %v4495 = vld [vmem:[%s192 + $0x274] sm:$0xff]
      %v4496 = vld [vmem:[%s192 + $0x27c] sm:$0xff]
      %v4497 = vld [vmem:[%s192 + $0x284] sm:$0xff]
      %v4498 = vld [vmem:[%s192 + $0x28c] sm:$0xff]
      %v4499 = vld [vmem:[%s192 + $0x294] sm:$0xff]
      %v4500 = vld [vmem:[%s192 + $0x29c] sm:$0xff]
      %v4501 = vld [vmem:[%s192 + $0x2a4] sm:$0xff]
      %v4502 = vld [vmem:[%s192 + $0x2ac] sm:$0xff]
      %v4503 = vld [vmem:[%s192 + $0x2b4] sm:$0xff]
      %v4504 = vld [vmem:[%s192 + $0x2bc] sm:$0xff]
      %v4505 = vld [vmem:[%s192 + $0x2c4] sm:$0xff]
      %v4506 = vld [vmem:[%s192 + $0x2cc] sm:$0xff]
      %v4507 = vld [vmem:[%s192 + $0x2d4] sm:$0xff]
      %v4508 = vld [vmem:[%s192 + $0x2dc] sm:$0xff]
      %v4509 = vld [vmem:[%s192 + $0x2e4] sm:$0xff]
      %v4510 = vld [vmem:[%s192 + $0x2ec] sm:$0xff]
      %v4511 = vld [vmem:[%s192 + $0x2f4] sm:$0xff]
      %v4512 = vld [vmem:[%s192 + $0x2fc] sm:$0xff]
      %v4513 = vld [vmem:[%s192 + $0x304] sm:$0xff]
      %v4514 = vld [vmem:[%s192 + $0x30c] sm:$0xff]
      %v4515 = vld [vmem:[%s192 + $0x314] sm:$0xff]
      %v4516 = vld [vmem:[%s192 + $0x31c] sm:$0xff]
      %v4517 = vld [vmem:[%s192 + $0x324] sm:$0xff]
      %v4518 = vld [vmem:[%s192 + $0x32c] sm:$0xff]
      %v4519 = vld [vmem:[%s192 + $0x334] sm:$0xff]
      %v4520 = vld [vmem:[%s192 + $0x33c] sm:$0xff]
      %v4521 = vld [vmem:[%s192 + $0x344] sm:$0xff]
      %v4522 = vld [vmem:[%s192 + $0x34c] sm:$0xff]
      %v4523 = vld [vmem:[%s192 + $0x354] sm:$0xff]
      %v4524 = vld [vmem:[%s192 + $0x35c] sm:$0xff]
      %v4525 = vld [vmem:[%s192 + $0x364] sm:$0xff]
      %v4526 = vld [vmem:[%s192 + $0x36c] sm:$0xff]
      %v4527 = vld [vmem:[%s192 + $0x374] sm:$0xff]
      %v4528 = vld [vmem:[%s192 + $0x37c] sm:$0xff]
      %v4529 = vld [vmem:[%s192 + $0x384] sm:$0xff]
      %v4530 = vld [vmem:[%s192 + $0x38c] sm:$0xff]
      %v4531 = vld [vmem:[%s192 + $0x394] sm:$0xff]
      %v4532 = vld [vmem:[%s192 + $0x39c] sm:$0xff]
      %v4533 = vld [vmem:[%s192 + $0x3a4] sm:$0xff]
      %v4534 = vld [vmem:[%s192 + $0x3ac] sm:$0xff]
      %v4535 = vld [vmem:[%s192 + $0x3b4] sm:$0xff]
      %v4536 = vld [vmem:[%s192 + $0x3bc] sm:$0xff]
      %v4537 = vld [vmem:[%s192 + $0x3c4] sm:$0xff]
      %v4538 = vld [vmem:[%s192 + $0x3cc] sm:$0xff]
      %v4539 = vld [vmem:[%s192 + $0x3d4] sm:$0xff]
      %v4540 = vld [vmem:[%s192 + $0x3dc] sm:$0xff]
      %v4541 = vld [vmem:[%s192 + $0x3e4] sm:$0xff]
      %v4542 = vld [vmem:[%s192 + $0x3ec] sm:$0xff]
      %v4543 = vld [vmem:[%s192 + $0x3f4] sm:$0xff]
      %v4544 = vld [vmem:[%s192 + $0x3fc] sm:$0xff]
      %v4545 = vld [vmem:[%s192 + $0x404] sm:$0xff]
      %v4546 = vld [vmem:[%s192 + $0x40c] sm:$0xff]
      %v4547 = vld [vmem:[%s192 + $0x414] sm:$0xff]
      %v4548 = vld [vmem:[%s192 + $0x41c] sm:$0xff]
      %v4549 = vld [vmem:[%s192 + $0x424] sm:$0xff]
      %v4550 = vld [vmem:[%s192 + $0x42c] sm:$0xff]
      %v4551 = vld [vmem:[%s192 + $0x434] sm:$0xff]
      %v4552 = vld [vmem:[%s192 + $0x43c] sm:$0xff]
      %v4553 = vld [vmem:[%s192 + $0x444] sm:$0xff]
      %v4554 = vld [vmem:[%s192 + $0x44c] sm:$0xff]
      %v4555 = vld [vmem:[%s192 + $0x454] sm:$0xff]
      %v4556 = vld [vmem:[%s192 + $0x45c] sm:$0xff]
      %v4557 = vpack.c.bf16 %v4422, %v4421
      %v4558 = vpack.c.bf16 %v4424, %v4423
      %v4559 = vpack.c.bf16 %v4426, %v4425
      %v4560 = vpack.c.bf16 %v4428, %v4427
      %v4561 = vpack.c.bf16 %v4430, %v4429
      %v4562 = vpack.c.bf16 %v4432, %v4431
      %v4563 = vpack.c.bf16 %v4434, %v4433
      %v4564 = vpack.c.bf16 %v4436, %v4435
      %v4565 = vpack.c.bf16 %v4438, %v4437
      %v4566 = vpack.c.bf16 %v4440, %v4439
      %v4567 = vpack.c.bf16 %v4442, %v4441
      %v4568 = vpack.c.bf16 %v4444, %v4443
      %v4569 = vpack.c.bf16 %v4446, %v4445
      %v4570 = vpack.c.bf16 %v4448, %v4447
      %v4571 = vpack.c.bf16 %v4450, %v4449
      %v4572 = vpack.c.bf16 %v4452, %v4451
      %v4573 = vpack.c.bf16 %v4454, %v4453
      %v4574 = vpack.c.bf16 %v4456, %v4455
      %v4575 = vpack.c.bf16 %v4458, %v4457
      %v4576 = vpack.c.bf16 %v4460, %v4459
      %v4577 = vpack.c.bf16 %v4462, %v4461
      %v4578 = vpack.c.bf16 %v4464, %v4463
      %v4579 = vpack.c.bf16 %v4466, %v4465
      %v4580 = vpack.c.bf16 %v4468, %v4467
      %v4581 = vpack.c.bf16 %v4470, %v4469
      %v4582 = vpack.c.bf16 %v4472, %v4471
      %v4583 = vpack.c.bf16 %v4474, %v4473
      %v4584 = vpack.c.bf16 %v4476, %v4475
      %v4585 = vpack.c.bf16 %v4478, %v4477
      %v4586 = vpack.c.bf16 %v4480, %v4479
      %v4587 = vpack.c.bf16 %v4482, %v4481
      %v4588 = vpack.c.bf16 %v4484, %v4483
      %v4589 = vpack.c.bf16 %v4486, %v4485
      %v4590 = vpack.c.bf16 %v4488, %v4487
      %v4591 = vpack.c.bf16 %v4490, %v4489
      %v4592 = vpack.c.bf16 %v4492, %v4491
      %v4593 = vpack.c.bf16 %v4494, %v4493
      %v4594 = vpack.c.bf16 %v4496, %v4495
      %v4595 = vpack.c.bf16 %v4498, %v4497
      %v4596 = vpack.c.bf16 %v4500, %v4499
      %v4597 = vpack.c.bf16 %v4502, %v4501
      %v4598 = vpack.c.bf16 %v4504, %v4503
      %v4599 = vpack.c.bf16 %v4506, %v4505
      %v4600 = vpack.c.bf16 %v4508, %v4507
      %v4601 = vpack.c.bf16 %v4510, %v4509
      %v4602 = vpack.c.bf16 %v4512, %v4511
      %v4603 = vpack.c.bf16 %v4514, %v4513
      %v4604 = vpack.c.bf16 %v4516, %v4515
      %v4605 = vpack.c.bf16 %v4518, %v4517
      %v4606 = vpack.c.bf16 %v4520, %v4519
      %v4607 = vpack.c.bf16 %v4522, %v4521
      %v4608 = vpack.c.bf16 %v4524, %v4523
      %v4609 = vpack.c.bf16 %v4526, %v4525
      %v4610 = vpack.c.bf16 %v4528, %v4527
      %v4611 = vpack.c.bf16 %v4530, %v4529
      %v4612 = vpack.c.bf16 %v4532, %v4531
      %v4613 = vpack.c.bf16 %v4534, %v4533
      %v4614 = vpack.c.bf16 %v4536, %v4535
      %v4615 = vpack.c.bf16 %v4538, %v4537
      %v4616 = vpack.c.bf16 %v4540, %v4539
      %v4617 = vpack.c.bf16 %v4542, %v4541
      %v4618 = vpack.c.bf16 %v4544, %v4543
      %v4619 = vpack.c.bf16 %v4546, %v4545
      %v4620 = vpack.c.bf16 %v4548, %v4547
      %v4621 = vpack.c.bf16 %v4550, %v4549
      %v4622 = vpack.c.bf16 %v4552, %v4551
      %v4623 = vpack.c.bf16 %v4554, %v4553
      %v4624 = vpack.c.bf16 %v4556, %v4555
      %s4625 = scalar_lea.vmem %s1, 10
      %v4626 = vld [vmem:[%s4625] sm:$0x3]
      %v4628 = vsel %vm610, %v4557, 0
      %v4631 = vsel %vm610, %v4558, 0
      %v4634 = vsel %vm610, %v4559, 0
      %v4637 = vsel %vm610, %v4560, 0
      %v4640 = vsel %vm610, %v4561, 0
      %v4643 = vsel %vm610, %v4562, 0
      %v4646 = vsel %vm610, %v4563, 0
      %v4649 = vsel %vm610, %v4564, 0
      %v4652 = vsel %vm610, %v4565, 0
      %v4655 = vsel %vm610, %v4566, 0
      %v4658 = vsel %vm610, %v4567, 0
      %v4661 = vsel %vm610, %v4568, 0
      %v4664 = vsel %vm610, %v4569, 0
      %v4667 = vsel %vm610, %v4570, 0
      %v4670 = vsel %vm610, %v4571, 0
      %v4673 = vsel %vm610, %v4572, 0
      %v4676 = vsel %vm610, %v4573, 0
      %v4679 = vsel %vm610, %v4574, 0
      %v4682 = vsel %vm610, %v4575, 0
      %v4685 = vsel %vm610, %v4576, 0
      %v4688 = vsel %vm610, %v4577, 0
      %v4691 = vsel %vm610, %v4578, 0
      %v4694 = vsel %vm610, %v4579, 0
      %v4697 = vsel %vm610, %v4580, 0
      %v4700 = vsel %vm610, %v4581, 0
      %v4703 = vsel %vm610, %v4582, 0
      %v4706 = vsel %vm610, %v4583, 0
      %v4709 = vsel %vm610, %v4584, 0
      %v4712 = vsel %vm610, %v4585, 0
      %v4715 = vsel %vm610, %v4586, 0
      %v4718 = vsel %vm610, %v4587, 0
      %v4721 = vsel %vm610, %v4588, 0
      %v4724 = vsel %vm610, %v4589, 0
      %v4727 = vsel %vm610, %v4590, 0
      %v4730 = vsel %vm610, %v4591, 0
      %v4733 = vsel %vm610, %v4592, 0
      %v4736 = vsel %vm610, %v4593, 0
      %v4739 = vsel %vm610, %v4594, 0
      %v4742 = vsel %vm610, %v4595, 0
      %v4745 = vsel %vm610, %v4596, 0
      %v4748 = vsel %vm610, %v4597, 0
      %v4751 = vsel %vm610, %v4598, 0
      %v4754 = vsel %vm610, %v4599, 0
      %v4757 = vsel %vm610, %v4600, 0
      %v4760 = vsel %vm610, %v4601, 0
      %v4763 = vsel %vm610, %v4602, 0
      %v4766 = vsel %vm610, %v4603, 0
      %v4769 = vsel %vm610, %v4604, 0
      %v4772 = vsel %vm610, %v4605, 0
      %v4775 = vsel %vm610, %v4606, 0
      %v4778 = vsel %vm610, %v4607, 0
      %v4781 = vsel %vm610, %v4608, 0
      %v4784 = vsel %vm610, %v4609, 0
      %v4787 = vsel %vm610, %v4610, 0
      %v4790 = vsel %vm610, %v4611, 0
      %v4793 = vsel %vm610, %v4612, 0
      %v4796 = vsel %vm610, %v4613, 0
      %v4799 = vsel %vm610, %v4614, 0
      %v4802 = vsel %vm610, %v4615, 0
      %v4805 = vsel %vm610, %v4616, 0
      %v4808 = vsel %vm610, %v4617, 0
      %v4811 = vsel %vm610, %v4618, 0
      %v4814 = vsel %vm610, %v4619, 0
      %v4817 = vsel %vm610, %v4620, 0
      %v4820 = vsel %vm610, %v4621, 0
      %v4823 = vsel %vm610, %v4622, 0
      %v4826 = vsel %vm610, %v4623, 0
      %v4829 = vsel %vm610, %v4624, 0
      %v4832 = vand.u32 %v4626, %v818
      %4834 = vmatpush.bf16.msra.mxu0 0
      %4835 = vmatpush.bf16.msra.mxu0 0
      %4836 = vmatpush.bf16.msra.mxu0 0
      %4837 = vmatpush.bf16.msra.mxu0 0
      %4838 = vmatpush.bf16.msra.mxu0 0
      %4839 = vmatpush.bf16.msra.mxu0 0
      %4840 = vmatpush.bf16.msra.mxu0 0
      %4841 = vmatpush.bf16.msra.mxu0 %v4832
      %4842 = vmatmul.bf16.gmra.mxu0 %v4628
      %v4843 = vpop.f32.mrf.mxu0
      %v4844 = vadd.f32 0.0, %v4843
      %v4845 = vpop.f32.mrf.mxu0
      %v4846 = vadd.f32 0.0, %v4845
      %4847 = vmatmul.bf16.gmra.mxu0 %v4631
      %v4848 = vpop.f32.mrf.mxu0
      %v4849 = vadd.f32 0.0, %v4848
      %v4850 = vpop.f32.mrf.mxu0
      %v4851 = vadd.f32 0.0, %v4850
      %4852 = vmatmul.bf16.gmra.mxu0 %v4634
      %v4853 = vpop.f32.mrf.mxu0
      %v4854 = vadd.f32 0.0, %v4853
      %v4855 = vpop.f32.mrf.mxu0
      %v4856 = vadd.f32 0.0, %v4855
      %4857 = vmatmul.bf16.gmra.mxu0 %v4637
      %v4858 = vpop.f32.mrf.mxu0
      %v4859 = vadd.f32 0.0, %v4858
      %v4860 = vpop.f32.mrf.mxu0
      %v4861 = vadd.f32 0.0, %v4860
      %4862 = vmatmul.bf16.gmra.mxu0 %v4640
      %v4863 = vpop.f32.mrf.mxu0
      %v4864 = vadd.f32 0.0, %v4863
      %v4865 = vpop.f32.mrf.mxu0
      %v4866 = vadd.f32 0.0, %v4865
      %4867 = vmatmul.bf16.gmra.mxu0 %v4643
      %v4868 = vpop.f32.mrf.mxu0
      %v4869 = vadd.f32 0.0, %v4868
      %v4870 = vpop.f32.mrf.mxu0
      %v4871 = vadd.f32 0.0, %v4870
      %4872 = vmatmul.bf16.gmra.mxu0 %v4646
      %v4873 = vpop.f32.mrf.mxu0
      %v4874 = vadd.f32 0.0, %v4873
      %v4875 = vpop.f32.mrf.mxu0
      %v4876 = vadd.f32 0.0, %v4875
      %4877 = vmatmul.bf16.gmra.mxu0 %v4649
      %v4878 = vpop.f32.mrf.mxu0
      %v4879 = vadd.f32 0.0, %v4878
      %v4880 = vpop.f32.mrf.mxu0
      %v4881 = vadd.f32 0.0, %v4880
      %4882 = vmatmul.bf16.gmra.mxu0 %v4652
      %v4883 = vpop.f32.mrf.mxu0
      %v4884 = vadd.f32 0.0, %v4883
      %v4885 = vpop.f32.mrf.mxu0
      %v4886 = vadd.f32 0.0, %v4885
      %4887 = vmatmul.bf16.gmra.mxu0 %v4655
      %v4888 = vpop.f32.mrf.mxu0
      %v4889 = vadd.f32 0.0, %v4888
      %v4890 = vpop.f32.mrf.mxu0
      %v4891 = vadd.f32 0.0, %v4890
      %4892 = vmatmul.bf16.gmra.mxu0 %v4658
      %v4893 = vpop.f32.mrf.mxu0
      %v4894 = vadd.f32 0.0, %v4893
      %v4895 = vpop.f32.mrf.mxu0
      %v4896 = vadd.f32 0.0, %v4895
      %4897 = vmatmul.bf16.gmra.mxu0 %v4661
      %v4898 = vpop.f32.mrf.mxu0
      %v4899 = vadd.f32 0.0, %v4898
      %v4900 = vpop.f32.mrf.mxu0
      %v4901 = vadd.f32 0.0, %v4900
      %4902 = vmatmul.bf16.gmra.mxu0 %v4664
      %v4903 = vpop.f32.mrf.mxu0
      %v4904 = vadd.f32 0.0, %v4903
      %v4905 = vpop.f32.mrf.mxu0
      %v4906 = vadd.f32 0.0, %v4905
      %4907 = vmatmul.bf16.gmra.mxu0 %v4667
      %v4908 = vpop.f32.mrf.mxu0
      %v4909 = vadd.f32 0.0, %v4908
      %v4910 = vpop.f32.mrf.mxu0
      %v4911 = vadd.f32 0.0, %v4910
      %4912 = vmatmul.bf16.gmra.mxu0 %v4670
      %v4913 = vpop.f32.mrf.mxu0
      %v4914 = vadd.f32 0.0, %v4913
      %v4915 = vpop.f32.mrf.mxu0
      %v4916 = vadd.f32 0.0, %v4915
      %4917 = vmatmul.bf16.gmra.mxu0 %v4673
      %v4918 = vpop.f32.mrf.mxu0
      %v4919 = vadd.f32 0.0, %v4918
      %v4920 = vpop.f32.mrf.mxu0
      %v4921 = vadd.f32 0.0, %v4920
      %4922 = vmatmul.bf16.gmra.mxu0 %v4676
      %v4923 = vpop.f32.mrf.mxu0
      %v4924 = vadd.f32 0.0, %v4923
      %v4925 = vpop.f32.mrf.mxu0
      %v4926 = vadd.f32 0.0, %v4925
      %4927 = vmatmul.bf16.gmra.mxu0 %v4679
      %v4928 = vpop.f32.mrf.mxu0
      %v4929 = vadd.f32 0.0, %v4928
      %v4930 = vpop.f32.mrf.mxu0
      %v4931 = vadd.f32 0.0, %v4930
      %4932 = vmatmul.bf16.gmra.mxu0 %v4682
      %v4933 = vpop.f32.mrf.mxu0
      %v4934 = vadd.f32 0.0, %v4933
      %v4935 = vpop.f32.mrf.mxu0
      %v4936 = vadd.f32 0.0, %v4935
      %4937 = vmatmul.bf16.gmra.mxu0 %v4685
      %v4938 = vpop.f32.mrf.mxu0
      %v4939 = vadd.f32 0.0, %v4938
      %v4940 = vpop.f32.mrf.mxu0
      %v4941 = vadd.f32 0.0, %v4940
      %4942 = vmatmul.bf16.gmra.mxu0 %v4688
      %v4943 = vpop.f32.mrf.mxu0
      %v4944 = vadd.f32 0.0, %v4943
      %v4945 = vpop.f32.mrf.mxu0
      %v4946 = vadd.f32 0.0, %v4945
      %4947 = vmatmul.bf16.gmra.mxu0 %v4691
      %v4948 = vpop.f32.mrf.mxu0
      %v4949 = vadd.f32 0.0, %v4948
      %v4950 = vpop.f32.mrf.mxu0
      %v4951 = vadd.f32 0.0, %v4950
      %4952 = vmatmul.bf16.gmra.mxu0 %v4694
      %v4953 = vpop.f32.mrf.mxu0
      %v4954 = vadd.f32 0.0, %v4953
      %v4955 = vpop.f32.mrf.mxu0
      %v4956 = vadd.f32 0.0, %v4955
      %4957 = vmatmul.bf16.gmra.mxu0 %v4697
      %v4958 = vpop.f32.mrf.mxu0
      %v4959 = vadd.f32 0.0, %v4958
      %v4960 = vpop.f32.mrf.mxu0
      %v4961 = vadd.f32 0.0, %v4960
      %4962 = vmatmul.bf16.gmra.mxu0 %v4700
      %v4963 = vpop.f32.mrf.mxu0
      %v4964 = vadd.f32 0.0, %v4963
      %v4965 = vpop.f32.mrf.mxu0
      %v4966 = vadd.f32 0.0, %v4965
      %4967 = vmatmul.bf16.gmra.mxu0 %v4703
      %v4968 = vpop.f32.mrf.mxu0
      %v4969 = vadd.f32 0.0, %v4968
      %v4970 = vpop.f32.mrf.mxu0
      %v4971 = vadd.f32 0.0, %v4970
      %4972 = vmatmul.bf16.gmra.mxu0 %v4706
      %v4973 = vpop.f32.mrf.mxu0
      %v4974 = vadd.f32 0.0, %v4973
      %v4975 = vpop.f32.mrf.mxu0
      %v4976 = vadd.f32 0.0, %v4975
      %4977 = vmatmul.bf16.gmra.mxu0 %v4709
      %v4978 = vpop.f32.mrf.mxu0
      %v4979 = vadd.f32 0.0, %v4978
      %v4980 = vpop.f32.mrf.mxu0
      %v4981 = vadd.f32 0.0, %v4980
      %4982 = vmatmul.bf16.gmra.mxu0 %v4712
      %v4983 = vpop.f32.mrf.mxu0
      %v4984 = vadd.f32 0.0, %v4983
      %v4985 = vpop.f32.mrf.mxu0
      %v4986 = vadd.f32 0.0, %v4985
      %4987 = vmatmul.bf16.gmra.mxu0 %v4715
      %v4988 = vpop.f32.mrf.mxu0
      %v4989 = vadd.f32 0.0, %v4988
      %v4990 = vpop.f32.mrf.mxu0
      %v4991 = vadd.f32 0.0, %v4990
      %4992 = vmatmul.bf16.gmra.mxu0 %v4718
      %v4993 = vpop.f32.mrf.mxu0
      %v4994 = vadd.f32 0.0, %v4993
      %v4995 = vpop.f32.mrf.mxu0
      %v4996 = vadd.f32 0.0, %v4995
      %4997 = vmatmul.bf16.gmra.mxu0 %v4721
      %v4998 = vpop.f32.mrf.mxu0
      %v4999 = vadd.f32 0.0, %v4998
      %v5000 = vpop.f32.mrf.mxu0
      %v5001 = vadd.f32 0.0, %v5000
      %5002 = vmatmul.bf16.gmra.mxu0 %v4724
      %v5003 = vpop.f32.mrf.mxu0
      %v5004 = vadd.f32 0.0, %v5003
      %v5005 = vpop.f32.mrf.mxu0
      %v5006 = vadd.f32 0.0, %v5005
      %5007 = vmatmul.bf16.gmra.mxu0 %v4727
      %v5008 = vpop.f32.mrf.mxu0
      %v5009 = vadd.f32 0.0, %v5008
      %v5010 = vpop.f32.mrf.mxu0
      %v5011 = vadd.f32 0.0, %v5010
      %5012 = vmatmul.bf16.gmra.mxu0 %v4730
      %v5013 = vpop.f32.mrf.mxu0
      %v5014 = vadd.f32 0.0, %v5013
      %v5015 = vpop.f32.mrf.mxu0
      %v5016 = vadd.f32 0.0, %v5015
      %5017 = vmatmul.bf16.gmra.mxu0 %v4733
      %v5018 = vpop.f32.mrf.mxu0
      %v5019 = vadd.f32 0.0, %v5018
      %v5020 = vpop.f32.mrf.mxu0
      %v5021 = vadd.f32 0.0, %v5020
      %5022 = vmatmul.bf16.gmra.mxu0 %v4736
      %v5023 = vpop.f32.mrf.mxu0
      %v5024 = vadd.f32 0.0, %v5023
      %v5025 = vpop.f32.mrf.mxu0
      %v5026 = vadd.f32 0.0, %v5025
      %5027 = vmatmul.bf16.gmra.mxu0 %v4739
      %v5028 = vpop.f32.mrf.mxu0
      %v5029 = vadd.f32 0.0, %v5028
      %v5030 = vpop.f32.mrf.mxu0
      %v5031 = vadd.f32 0.0, %v5030
      %5032 = vmatmul.bf16.gmra.mxu0 %v4742
      %v5033 = vpop.f32.mrf.mxu0
      %v5034 = vadd.f32 0.0, %v5033
      %v5035 = vpop.f32.mrf.mxu0
      %v5036 = vadd.f32 0.0, %v5035
      %5037 = vmatmul.bf16.gmra.mxu0 %v4745
      %v5038 = vpop.f32.mrf.mxu0
      %v5039 = vadd.f32 0.0, %v5038
      %v5040 = vpop.f32.mrf.mxu0
      %v5041 = vadd.f32 0.0, %v5040
      %5042 = vmatmul.bf16.gmra.mxu0 %v4748
      %v5043 = vpop.f32.mrf.mxu0
      %v5044 = vadd.f32 0.0, %v5043
      %v5045 = vpop.f32.mrf.mxu0
      %v5046 = vadd.f32 0.0, %v5045
      %5047 = vmatmul.bf16.gmra.mxu0 %v4751
      %v5048 = vpop.f32.mrf.mxu0
      %v5049 = vadd.f32 0.0, %v5048
      %v5050 = vpop.f32.mrf.mxu0
      %v5051 = vadd.f32 0.0, %v5050
      %5052 = vmatmul.bf16.gmra.mxu0 %v4754
      %v5053 = vpop.f32.mrf.mxu0
      %v5054 = vadd.f32 0.0, %v5053
      %v5055 = vpop.f32.mrf.mxu0
      %v5056 = vadd.f32 0.0, %v5055
      %5057 = vmatmul.bf16.gmra.mxu0 %v4757
      %v5058 = vpop.f32.mrf.mxu0
      %v5059 = vadd.f32 0.0, %v5058
      %v5060 = vpop.f32.mrf.mxu0
      %v5061 = vadd.f32 0.0, %v5060
      %5062 = vmatmul.bf16.gmra.mxu0 %v4760
      %v5063 = vpop.f32.mrf.mxu0
      %v5064 = vadd.f32 0.0, %v5063
      %v5065 = vpop.f32.mrf.mxu0
      %v5066 = vadd.f32 0.0, %v5065
      %5067 = vmatmul.bf16.gmra.mxu0 %v4763
      %v5068 = vpop.f32.mrf.mxu0
      %v5069 = vadd.f32 0.0, %v5068
      %v5070 = vpop.f32.mrf.mxu0
      %v5071 = vadd.f32 0.0, %v5070
      %5072 = vmatmul.bf16.gmra.mxu0 %v4766
      %v5073 = vpop.f32.mrf.mxu0
      %v5074 = vadd.f32 0.0, %v5073
      %v5075 = vpop.f32.mrf.mxu0
      %v5076 = vadd.f32 0.0, %v5075
      %5077 = vmatmul.bf16.gmra.mxu0 %v4769
      %v5078 = vpop.f32.mrf.mxu0
      %v5079 = vadd.f32 0.0, %v5078
      %v5080 = vpop.f32.mrf.mxu0
      %v5081 = vadd.f32 0.0, %v5080
      %5082 = vmatmul.bf16.gmra.mxu0 %v4772
      %v5083 = vpop.f32.mrf.mxu0
      %v5084 = vadd.f32 0.0, %v5083
      %v5085 = vpop.f32.mrf.mxu0
      %v5086 = vadd.f32 0.0, %v5085
      %5087 = vmatmul.bf16.gmra.mxu0 %v4775
      %v5088 = vpop.f32.mrf.mxu0
      %v5089 = vadd.f32 0.0, %v5088
      %v5090 = vpop.f32.mrf.mxu0
      %v5091 = vadd.f32 0.0, %v5090
      %5092 = vmatmul.bf16.gmra.mxu0 %v4778
      %v5093 = vpop.f32.mrf.mxu0
      %v5094 = vadd.f32 0.0, %v5093
      %v5095 = vpop.f32.mrf.mxu0
      %v5096 = vadd.f32 0.0, %v5095
      %5097 = vmatmul.bf16.gmra.mxu0 %v4781
      %v5098 = vpop.f32.mrf.mxu0
      %v5099 = vadd.f32 0.0, %v5098
      %v5100 = vpop.f32.mrf.mxu0
      %v5101 = vadd.f32 0.0, %v5100
      %5102 = vmatmul.bf16.gmra.mxu0 %v4784
      %v5103 = vpop.f32.mrf.mxu0
      %v5104 = vadd.f32 0.0, %v5103
      %v5105 = vpop.f32.mrf.mxu0
      %v5106 = vadd.f32 0.0, %v5105
      %5107 = vmatmul.bf16.gmra.mxu0 %v4787
      %v5108 = vpop.f32.mrf.mxu0
      %v5109 = vadd.f32 0.0, %v5108
      %v5110 = vpop.f32.mrf.mxu0
      %v5111 = vadd.f32 0.0, %v5110
      %5112 = vmatmul.bf16.gmra.mxu0 %v4790
      %v5113 = vpop.f32.mrf.mxu0
      %v5114 = vadd.f32 0.0, %v5113
      %v5115 = vpop.f32.mrf.mxu0
      %v5116 = vadd.f32 0.0, %v5115
      %5117 = vmatmul.bf16.gmra.mxu0 %v4793
      %v5118 = vpop.f32.mrf.mxu0
      %v5119 = vadd.f32 0.0, %v5118
      %v5120 = vpop.f32.mrf.mxu0
      %v5121 = vadd.f32 0.0, %v5120
      %5122 = vmatmul.bf16.gmra.mxu0 %v4796
      %v5123 = vpop.f32.mrf.mxu0
      %v5124 = vadd.f32 0.0, %v5123
      %v5125 = vpop.f32.mrf.mxu0
      %v5126 = vadd.f32 0.0, %v5125
      %5127 = vmatmul.bf16.gmra.mxu0 %v4799
      %v5128 = vpop.f32.mrf.mxu0
      %v5129 = vadd.f32 0.0, %v5128
      %v5130 = vpop.f32.mrf.mxu0
      %v5131 = vadd.f32 0.0, %v5130
      %5132 = vmatmul.bf16.gmra.mxu0 %v4802
      %v5133 = vpop.f32.mrf.mxu0
      %v5134 = vadd.f32 0.0, %v5133
      %v5135 = vpop.f32.mrf.mxu0
      %v5136 = vadd.f32 0.0, %v5135
      %5137 = vmatmul.bf16.gmra.mxu0 %v4805
      %v5138 = vpop.f32.mrf.mxu0
      %v5139 = vadd.f32 0.0, %v5138
      %v5140 = vpop.f32.mrf.mxu0
      %v5141 = vadd.f32 0.0, %v5140
      %5142 = vmatmul.bf16.gmra.mxu0 %v4808
      %v5143 = vpop.f32.mrf.mxu0
      %v5144 = vadd.f32 0.0, %v5143
      %v5145 = vpop.f32.mrf.mxu0
      %v5146 = vadd.f32 0.0, %v5145
      %5147 = vmatmul.bf16.gmra.mxu0 %v4811
      %v5148 = vpop.f32.mrf.mxu0
      %v5149 = vadd.f32 0.0, %v5148
      %v5150 = vpop.f32.mrf.mxu0
      %v5151 = vadd.f32 0.0, %v5150
      %5152 = vmatmul.bf16.gmra.mxu0 %v4814
      %v5153 = vpop.f32.mrf.mxu0
      %v5154 = vadd.f32 0.0, %v5153
      %v5155 = vpop.f32.mrf.mxu0
      %v5156 = vadd.f32 0.0, %v5155
      %5157 = vmatmul.bf16.gmra.mxu0 %v4817
      %v5158 = vpop.f32.mrf.mxu0
      %v5159 = vadd.f32 0.0, %v5158
      %v5160 = vpop.f32.mrf.mxu0
      %v5161 = vadd.f32 0.0, %v5160
      %5162 = vmatmul.bf16.gmra.mxu0 %v4820
      %v5163 = vpop.f32.mrf.mxu0
      %v5164 = vadd.f32 0.0, %v5163
      %v5165 = vpop.f32.mrf.mxu0
      %v5166 = vadd.f32 0.0, %v5165
      %5167 = vmatmul.bf16.gmra.mxu0 %v4823
      %v5168 = vpop.f32.mrf.mxu0
      %v5169 = vadd.f32 0.0, %v5168
      %v5170 = vpop.f32.mrf.mxu0
      %v5171 = vadd.f32 0.0, %v5170
      %5172 = vmatmul.bf16.gmra.mxu0 %v4826
      %v5173 = vpop.f32.mrf.mxu0
      %v5174 = vadd.f32 0.0, %v5173
      %v5175 = vpop.f32.mrf.mxu0
      %v5176 = vadd.f32 0.0, %v5175
      %5177 = vmatmul.bf16.gmra.mxu0 %v4829
      %v5178 = vpop.f32.mrf.mxu0
      %v5179 = vadd.f32 0.0, %v5178
      %v5180 = vpop.f32.mrf.mxu0
      %v5181 = vadd.f32 0.0, %v5180
      %5182 = vdwg.mxu0
      %v5183 = vadd.f32 %v4285, %v4844
      %v5184 = vadd.f32 %v4286, %v4846
      %v5185 = vadd.f32 %v4287, %v4849
      %v5186 = vadd.f32 %v4288, %v4851
      %v5187 = vadd.f32 %v4289, %v4854
      %v5188 = vadd.f32 %v4290, %v4856
      %v5189 = vadd.f32 %v4291, %v4859
      %v5190 = vadd.f32 %v4292, %v4861
      %v5191 = vadd.f32 %v4293, %v4864
      %v5192 = vadd.f32 %v4294, %v4866
      %v5193 = vadd.f32 %v4295, %v4869
      %v5194 = vadd.f32 %v4296, %v4871
      %v5195 = vadd.f32 %v4297, %v4874
      %v5196 = vadd.f32 %v4298, %v4876
      %v5197 = vadd.f32 %v4299, %v4879
      %v5198 = vadd.f32 %v4300, %v4881
      %v5199 = vadd.f32 %v4301, %v4884
      %v5200 = vadd.f32 %v4302, %v4886
      %v5201 = vadd.f32 %v4303, %v4889
      %v5202 = vadd.f32 %v4304, %v4891
      %v5203 = vadd.f32 %v4305, %v4894
      %v5204 = vadd.f32 %v4306, %v4896
      %v5205 = vadd.f32 %v4307, %v4899
      %v5206 = vadd.f32 %v4308, %v4901
      %v5207 = vadd.f32 %v4309, %v4904
      %v5208 = vadd.f32 %v4310, %v4906
      %v5209 = vadd.f32 %v4311, %v4909
      %v5210 = vadd.f32 %v4312, %v4911
      %v5211 = vadd.f32 %v4313, %v4914
      %v5212 = vadd.f32 %v4314, %v4916
      %v5213 = vadd.f32 %v4315, %v4919
      %v5214 = vadd.f32 %v4316, %v4921
      %v5215 = vadd.f32 %v4317, %v4924
      %v5216 = vadd.f32 %v4318, %v4926
      %v5217 = vadd.f32 %v4319, %v4929
      %v5218 = vadd.f32 %v4320, %v4931
      %v5219 = vadd.f32 %v4321, %v4934
      %v5220 = vadd.f32 %v4322, %v4936
      %v5221 = vadd.f32 %v4323, %v4939
      %v5222 = vadd.f32 %v4324, %v4941
      %v5223 = vadd.f32 %v4325, %v4944
      %v5224 = vadd.f32 %v4326, %v4946
      %v5225 = vadd.f32 %v4327, %v4949
      %v5226 = vadd.f32 %v4328, %v4951
      %v5227 = vadd.f32 %v4329, %v4954
      %v5228 = vadd.f32 %v4330, %v4956
      %v5229 = vadd.f32 %v4331, %v4959
      %v5230 = vadd.f32 %v4332, %v4961
      %v5231 = vadd.f32 %v4333, %v4964
      %v5232 = vadd.f32 %v4334, %v4966
      %v5233 = vadd.f32 %v4335, %v4969
      %v5234 = vadd.f32 %v4336, %v4971
      %v5235 = vadd.f32 %v4337, %v4974
      %v5236 = vadd.f32 %v4338, %v4976
      %v5237 = vadd.f32 %v4339, %v4979
      %v5238 = vadd.f32 %v4340, %v4981
      %v5239 = vadd.f32 %v4341, %v4984
      %v5240 = vadd.f32 %v4342, %v4986
      %v5241 = vadd.f32 %v4343, %v4989
      %v5242 = vadd.f32 %v4344, %v4991
      %v5243 = vadd.f32 %v4345, %v4994
      %v5244 = vadd.f32 %v4346, %v4996
      %v5245 = vadd.f32 %v4347, %v4999
      %v5246 = vadd.f32 %v4348, %v5001
      %v5247 = vadd.f32 %v4349, %v5004
      %v5248 = vadd.f32 %v4350, %v5006
      %v5249 = vadd.f32 %v4351, %v5009
      %v5250 = vadd.f32 %v4352, %v5011
      %v5251 = vadd.f32 %v4353, %v5014
      %v5252 = vadd.f32 %v4354, %v5016
      %v5253 = vadd.f32 %v4355, %v5019
      %v5254 = vadd.f32 %v4356, %v5021
      %v5255 = vadd.f32 %v4357, %v5024
      %v5256 = vadd.f32 %v4358, %v5026
      %v5257 = vadd.f32 %v4359, %v5029
      %v5258 = vadd.f32 %v4360, %v5031
      %v5259 = vadd.f32 %v4361, %v5034
      %v5260 = vadd.f32 %v4362, %v5036
      %v5261 = vadd.f32 %v4363, %v5039
      %v5262 = vadd.f32 %v4364, %v5041
      %v5263 = vadd.f32 %v4365, %v5044
      %v5264 = vadd.f32 %v4366, %v5046
      %v5265 = vadd.f32 %v4367, %v5049
      %v5266 = vadd.f32 %v4368, %v5051
      %v5267 = vadd.f32 %v4369, %v5054
      %v5268 = vadd.f32 %v4370, %v5056
      %v5269 = vadd.f32 %v4371, %v5059
      %v5270 = vadd.f32 %v4372, %v5061
      %v5271 = vadd.f32 %v4373, %v5064
      %v5272 = vadd.f32 %v4374, %v5066
      %v5273 = vadd.f32 %v4375, %v5069
      %v5274 = vadd.f32 %v4376, %v5071
      %v5275 = vadd.f32 %v4377, %v5074
      %v5276 = vadd.f32 %v4378, %v5076
      %v5277 = vadd.f32 %v4379, %v5079
      %v5278 = vadd.f32 %v4380, %v5081
      %v5279 = vadd.f32 %v4381, %v5084
      %v5280 = vadd.f32 %v4382, %v5086
      %v5281 = vadd.f32 %v4383, %v5089
      %v5282 = vadd.f32 %v4384, %v5091
      %v5283 = vadd.f32 %v4385, %v5094
      %v5284 = vadd.f32 %v4386, %v5096
      %v5285 = vadd.f32 %v4387, %v5099
      %v5286 = vadd.f32 %v4388, %v5101
      %v5287 = vadd.f32 %v4389, %v5104
      %v5288 = vadd.f32 %v4390, %v5106
      %v5289 = vadd.f32 %v4391, %v5109
      %v5290 = vadd.f32 %v4392, %v5111
      %v5291 = vadd.f32 %v4393, %v5114
      %v5292 = vadd.f32 %v4394, %v5116
      %v5293 = vadd.f32 %v4395, %v5119
      %v5294 = vadd.f32 %v4396, %v5121
      %v5295 = vadd.f32 %v4397, %v5124
      %v5296 = vadd.f32 %v4398, %v5126
      %v5297 = vadd.f32 %v4399, %v5129
      %v5298 = vadd.f32 %v4400, %v5131
      %v5299 = vadd.f32 %v4401, %v5134
      %v5300 = vadd.f32 %v4402, %v5136
      %v5301 = vadd.f32 %v4403, %v5139
      %v5302 = vadd.f32 %v4404, %v5141
      %v5303 = vadd.f32 %v4405, %v5144
      %v5304 = vadd.f32 %v4406, %v5146
      %v5305 = vadd.f32 %v4407, %v5149
      %v5306 = vadd.f32 %v4408, %v5151
      %v5307 = vadd.f32 %v4409, %v5154
      %v5308 = vadd.f32 %v4410, %v5156
      %v5309 = vadd.f32 %v4411, %v5159
      %v5310 = vadd.f32 %v4412, %v5161
      %v5311 = vadd.f32 %v4413, %v5164
      %v5312 = vadd.f32 %v4414, %v5166
      %v5313 = vadd.f32 %v4415, %v5169
      %v5314 = vadd.f32 %v4416, %v5171
      %v5315 = vadd.f32 %v4417, %v5174
      %v5316 = vadd.f32 %v4418, %v5176
      %v5317 = vadd.f32 %v4419, %v5179
      %v5318 = vadd.f32 %v4420, %v5181
      %v5319 = vld [vmem:[%s192 + $0x44] sm:$0xff]
      %v5320 = vld [vmem:[%s192 + $0x4c] sm:$0xff]
      %v5321 = vld [vmem:[%s192 + $0x54] sm:$0xff]
      %v5322 = vld [vmem:[%s192 + $0x5c] sm:$0xff]
      %v5323 = vld [vmem:[%s192 + $0x64] sm:$0xff]
      %v5324 = vld [vmem:[%s192 + $0x6c] sm:$0xff]
      %v5325 = vld [vmem:[%s192 + $0x74] sm:$0xff]
      %v5326 = vld [vmem:[%s192 + $0x7c] sm:$0xff]
      %v5327 = vld [vmem:[%s192 + $0x84] sm:$0xff]
      %v5328 = vld [vmem:[%s192 + $0x8c] sm:$0xff]
      %v5329 = vld [vmem:[%s192 + $0x94] sm:$0xff]
      %v5330 = vld [vmem:[%s192 + $0x9c] sm:$0xff]
      %v5331 = vld [vmem:[%s192 + $0xa4] sm:$0xff]
      %v5332 = vld [vmem:[%s192 + $0xac] sm:$0xff]
      %v5333 = vld [vmem:[%s192 + $0xb4] sm:$0xff]
      %v5334 = vld [vmem:[%s192 + $0xbc] sm:$0xff]
      %v5335 = vld [vmem:[%s192 + $0xc4] sm:$0xff]
      %v5336 = vld [vmem:[%s192 + $0xcc] sm:$0xff]
      %v5337 = vld [vmem:[%s192 + $0xd4] sm:$0xff]
      %v5338 = vld [vmem:[%s192 + $0xdc] sm:$0xff]
      %v5339 = vld [vmem:[%s192 + $0xe4] sm:$0xff]
      %v5340 = vld [vmem:[%s192 + $0xec] sm:$0xff]
      %v5341 = vld [vmem:[%s192 + $0xf4] sm:$0xff]
      %v5342 = vld [vmem:[%s192 + $0xfc] sm:$0xff]
      %v5343 = vld [vmem:[%s192 + $0x104] sm:$0xff]
      %v5344 = vld [vmem:[%s192 + $0x10c] sm:$0xff]
      %v5345 = vld [vmem:[%s192 + $0x114] sm:$0xff]
      %v5346 = vld [vmem:[%s192 + $0x11c] sm:$0xff]
      %v5347 = vld [vmem:[%s192 + $0x124] sm:$0xff]
      %v5348 = vld [vmem:[%s192 + $0x12c] sm:$0xff]
      %v5349 = vld [vmem:[%s192 + $0x134] sm:$0xff]
      %v5350 = vld [vmem:[%s192 + $0x13c] sm:$0xff]
      %v5351 = vld [vmem:[%s192 + $0x144] sm:$0xff]
      %v5352 = vld [vmem:[%s192 + $0x14c] sm:$0xff]
      %v5353 = vld [vmem:[%s192 + $0x154] sm:$0xff]
      %v5354 = vld [vmem:[%s192 + $0x15c] sm:$0xff]
      %v5355 = vld [vmem:[%s192 + $0x164] sm:$0xff]
      %v5356 = vld [vmem:[%s192 + $0x16c] sm:$0xff]
      %v5357 = vld [vmem:[%s192 + $0x174] sm:$0xff]
      %v5358 = vld [vmem:[%s192 + $0x17c] sm:$0xff]
      %v5359 = vld [vmem:[%s192 + $0x184] sm:$0xff]
      %v5360 = vld [vmem:[%s192 + $0x18c] sm:$0xff]
      %v5361 = vld [vmem:[%s192 + $0x194] sm:$0xff]
      %v5362 = vld [vmem:[%s192 + $0x19c] sm:$0xff]
      %v5363 = vld [vmem:[%s192 + $0x1a4] sm:$0xff]
      %v5364 = vld [vmem:[%s192 + $0x1ac] sm:$0xff]
      %v5365 = vld [vmem:[%s192 + $0x1b4] sm:$0xff]
      %v5366 = vld [vmem:[%s192 + $0x1bc] sm:$0xff]
      %v5367 = vld [vmem:[%s192 + $0x1c4] sm:$0xff]
      %v5368 = vld [vmem:[%s192 + $0x1cc] sm:$0xff]
      %v5369 = vld [vmem:[%s192 + $0x1d4] sm:$0xff]
      %v5370 = vld [vmem:[%s192 + $0x1dc] sm:$0xff]
      %v5371 = vld [vmem:[%s192 + $0x1e4] sm:$0xff]
      %v5372 = vld [vmem:[%s192 + $0x1ec] sm:$0xff]
      %v5373 = vld [vmem:[%s192 + $0x1f4] sm:$0xff]
      %v5374 = vld [vmem:[%s192 + $0x1fc] sm:$0xff]
      %v5375 = vld [vmem:[%s192 + $0x204] sm:$0xff]
      %v5376 = vld [vmem:[%s192 + $0x20c] sm:$0xff]
      %v5377 = vld [vmem:[%s192 + $0x214] sm:$0xff]
      %v5378 = vld [vmem:[%s192 + $0x21c] sm:$0xff]
      %v5379 = vld [vmem:[%s192 + $0x224] sm:$0xff]
      %v5380 = vld [vmem:[%s192 + $0x22c] sm:$0xff]
      %v5381 = vld [vmem:[%s192 + $0x234] sm:$0xff]
      %v5382 = vld [vmem:[%s192 + $0x23c] sm:$0xff]
      %v5383 = vld [vmem:[%s192 + $0x244] sm:$0xff]
      %v5384 = vld [vmem:[%s192 + $0x24c] sm:$0xff]
      %v5385 = vld [vmem:[%s192 + $0x254] sm:$0xff]
      %v5386 = vld [vmem:[%s192 + $0x25c] sm:$0xff]
      %v5387 = vld [vmem:[%s192 + $0x264] sm:$0xff]
      %v5388 = vld [vmem:[%s192 + $0x26c] sm:$0xff]
      %v5389 = vld [vmem:[%s192 + $0x274] sm:$0xff]
      %v5390 = vld [vmem:[%s192 + $0x27c] sm:$0xff]
      %v5391 = vld [vmem:[%s192 + $0x284] sm:$0xff]
      %v5392 = vld [vmem:[%s192 + $0x28c] sm:$0xff]
      %v5393 = vld [vmem:[%s192 + $0x294] sm:$0xff]
      %v5394 = vld [vmem:[%s192 + $0x29c] sm:$0xff]
      %v5395 = vld [vmem:[%s192 + $0x2a4] sm:$0xff]
      %v5396 = vld [vmem:[%s192 + $0x2ac] sm:$0xff]
      %v5397 = vld [vmem:[%s192 + $0x2b4] sm:$0xff]
      %v5398 = vld [vmem:[%s192 + $0x2bc] sm:$0xff]
      %v5399 = vld [vmem:[%s192 + $0x2c4] sm:$0xff]
      %v5400 = vld [vmem:[%s192 + $0x2cc] sm:$0xff]
      %v5401 = vld [vmem:[%s192 + $0x2d4] sm:$0xff]
      %v5402 = vld [vmem:[%s192 + $0x2dc] sm:$0xff]
      %v5403 = vld [vmem:[%s192 + $0x2e4] sm:$0xff]
      %v5404 = vld [vmem:[%s192 + $0x2ec] sm:$0xff]
      %v5405 = vld [vmem:[%s192 + $0x2f4] sm:$0xff]
      %v5406 = vld [vmem:[%s192 + $0x2fc] sm:$0xff]
      %v5407 = vld [vmem:[%s192 + $0x304] sm:$0xff]
      %v5408 = vld [vmem:[%s192 + $0x30c] sm:$0xff]
      %v5409 = vld [vmem:[%s192 + $0x314] sm:$0xff]
      %v5410 = vld [vmem:[%s192 + $0x31c] sm:$0xff]
      %v5411 = vld [vmem:[%s192 + $0x324] sm:$0xff]
      %v5412 = vld [vmem:[%s192 + $0x32c] sm:$0xff]
      %v5413 = vld [vmem:[%s192 + $0x334] sm:$0xff]
      %v5414 = vld [vmem:[%s192 + $0x33c] sm:$0xff]
      %v5415 = vld [vmem:[%s192 + $0x344] sm:$0xff]
      %v5416 = vld [vmem:[%s192 + $0x34c] sm:$0xff]
      %v5417 = vld [vmem:[%s192 + $0x354] sm:$0xff]
      %v5418 = vld [vmem:[%s192 + $0x35c] sm:$0xff]
      %v5419 = vld [vmem:[%s192 + $0x364] sm:$0xff]
      %v5420 = vld [vmem:[%s192 + $0x36c] sm:$0xff]
      %v5421 = vld [vmem:[%s192 + $0x374] sm:$0xff]
      %v5422 = vld [vmem:[%s192 + $0x37c] sm:$0xff]
      %v5423 = vld [vmem:[%s192 + $0x384] sm:$0xff]
      %v5424 = vld [vmem:[%s192 + $0x38c] sm:$0xff]
      %v5425 = vld [vmem:[%s192 + $0x394] sm:$0xff]
      %v5426 = vld [vmem:[%s192 + $0x39c] sm:$0xff]
      %v5427 = vld [vmem:[%s192 + $0x3a4] sm:$0xff]
      %v5428 = vld [vmem:[%s192 + $0x3ac] sm:$0xff]
      %v5429 = vld [vmem:[%s192 + $0x3b4] sm:$0xff]
      %v5430 = vld [vmem:[%s192 + $0x3bc] sm:$0xff]
      %v5431 = vld [vmem:[%s192 + $0x3c4] sm:$0xff]
      %v5432 = vld [vmem:[%s192 + $0x3cc] sm:$0xff]
      %v5433 = vld [vmem:[%s192 + $0x3d4] sm:$0xff]
      %v5434 = vld [vmem:[%s192 + $0x3dc] sm:$0xff]
      %v5435 = vld [vmem:[%s192 + $0x3e4] sm:$0xff]
      %v5436 = vld [vmem:[%s192 + $0x3ec] sm:$0xff]
      %v5437 = vld [vmem:[%s192 + $0x3f4] sm:$0xff]
      %v5438 = vld [vmem:[%s192 + $0x3fc] sm:$0xff]
      %v5439 = vld [vmem:[%s192 + $0x404] sm:$0xff]
      %v5440 = vld [vmem:[%s192 + $0x40c] sm:$0xff]
      %v5441 = vld [vmem:[%s192 + $0x414] sm:$0xff]
      %v5442 = vld [vmem:[%s192 + $0x41c] sm:$0xff]
      %v5443 = vld [vmem:[%s192 + $0x424] sm:$0xff]
      %v5444 = vld [vmem:[%s192 + $0x42c] sm:$0xff]
      %v5445 = vld [vmem:[%s192 + $0x434] sm:$0xff]
      %v5446 = vld [vmem:[%s192 + $0x43c] sm:$0xff]
      %v5447 = vld [vmem:[%s192 + $0x444] sm:$0xff]
      %v5448 = vld [vmem:[%s192 + $0x44c] sm:$0xff]
      %v5449 = vld [vmem:[%s192 + $0x454] sm:$0xff]
      %v5450 = vld [vmem:[%s192 + $0x45c] sm:$0xff]
      %v5451 = vld [vmem:[%s192 + $0x464] sm:$0xff]
      %v5452 = vld [vmem:[%s192 + $0x46c] sm:$0xff]
      %v5453 = vld [vmem:[%s192 + $0x474] sm:$0xff]
      %v5454 = vld [vmem:[%s192 + $0x47c] sm:$0xff]
      %v5455 = vpack.c.bf16 %v5320, %v5319
      %v5456 = vpack.c.bf16 %v5322, %v5321
      %v5457 = vpack.c.bf16 %v5324, %v5323
      %v5458 = vpack.c.bf16 %v5326, %v5325
      %v5459 = vpack.c.bf16 %v5328, %v5327
      %v5460 = vpack.c.bf16 %v5330, %v5329
      %v5461 = vpack.c.bf16 %v5332, %v5331
      %v5462 = vpack.c.bf16 %v5334, %v5333
      %v5463 = vpack.c.bf16 %v5336, %v5335
      %v5464 = vpack.c.bf16 %v5338, %v5337
      %v5465 = vpack.c.bf16 %v5340, %v5339
      %v5466 = vpack.c.bf16 %v5342, %v5341
      %v5467 = vpack.c.bf16 %v5344, %v5343
      %v5468 = vpack.c.bf16 %v5346, %v5345
      %v5469 = vpack.c.bf16 %v5348, %v5347
      %v5470 = vpack.c.bf16 %v5350, %v5349
      %v5471 = vpack.c.bf16 %v5352, %v5351
      %v5472 = vpack.c.bf16 %v5354, %v5353
      %v5473 = vpack.c.bf16 %v5356, %v5355
      %v5474 = vpack.c.bf16 %v5358, %v5357
      %v5475 = vpack.c.bf16 %v5360, %v5359
      %v5476 = vpack.c.bf16 %v5362, %v5361
      %v5477 = vpack.c.bf16 %v5364, %v5363
      %v5478 = vpack.c.bf16 %v5366, %v5365
      %v5479 = vpack.c.bf16 %v5368, %v5367
      %v5480 = vpack.c.bf16 %v5370, %v5369
      %v5481 = vpack.c.bf16 %v5372, %v5371
      %v5482 = vpack.c.bf16 %v5374, %v5373
      %v5483 = vpack.c.bf16 %v5376, %v5375
      %v5484 = vpack.c.bf16 %v5378, %v5377
      %v5485 = vpack.c.bf16 %v5380, %v5379
      %v5486 = vpack.c.bf16 %v5382, %v5381
      %v5487 = vpack.c.bf16 %v5384, %v5383
      %v5488 = vpack.c.bf16 %v5386, %v5385
      %v5489 = vpack.c.bf16 %v5388, %v5387
      %v5490 = vpack.c.bf16 %v5390, %v5389
      %v5491 = vpack.c.bf16 %v5392, %v5391
      %v5492 = vpack.c.bf16 %v5394, %v5393
      %v5493 = vpack.c.bf16 %v5396, %v5395
      %v5494 = vpack.c.bf16 %v5398, %v5397
      %v5495 = vpack.c.bf16 %v5400, %v5399
      %v5496 = vpack.c.bf16 %v5402, %v5401
      %v5497 = vpack.c.bf16 %v5404, %v5403
      %v5498 = vpack.c.bf16 %v5406, %v5405
      %v5499 = vpack.c.bf16 %v5408, %v5407
      %v5500 = vpack.c.bf16 %v5410, %v5409
      %v5501 = vpack.c.bf16 %v5412, %v5411
      %v5502 = vpack.c.bf16 %v5414, %v5413
      %v5503 = vpack.c.bf16 %v5416, %v5415
      %v5504 = vpack.c.bf16 %v5418, %v5417
      %v5505 = vpack.c.bf16 %v5420, %v5419
      %v5506 = vpack.c.bf16 %v5422, %v5421
      %v5507 = vpack.c.bf16 %v5424, %v5423
      %v5508 = vpack.c.bf16 %v5426, %v5425
      %v5509 = vpack.c.bf16 %v5428, %v5427
      %v5510 = vpack.c.bf16 %v5430, %v5429
      %v5511 = vpack.c.bf16 %v5432, %v5431
      %v5512 = vpack.c.bf16 %v5434, %v5433
      %v5513 = vpack.c.bf16 %v5436, %v5435
      %v5514 = vpack.c.bf16 %v5438, %v5437
      %v5515 = vpack.c.bf16 %v5440, %v5439
      %v5516 = vpack.c.bf16 %v5442, %v5441
      %v5517 = vpack.c.bf16 %v5444, %v5443
      %v5518 = vpack.c.bf16 %v5446, %v5445
      %v5519 = vpack.c.bf16 %v5448, %v5447
      %v5520 = vpack.c.bf16 %v5450, %v5449
      %v5521 = vpack.c.bf16 %v5452, %v5451
      %v5522 = vpack.c.bf16 %v5454, %v5453
      %s5523 = scalar_lea.vmem %s1, 12
      %v5524 = vld [vmem:[%s5523] sm:$0x3]
      %v5526 = vsel %vm610, %v5455, 0
      %v5529 = vsel %vm610, %v5456, 0
      %v5532 = vsel %vm610, %v5457, 0
      %v5535 = vsel %vm610, %v5458, 0
      %v5538 = vsel %vm610, %v5459, 0
      %v5541 = vsel %vm610, %v5460, 0
      %v5544 = vsel %vm610, %v5461, 0
      %v5547 = vsel %vm610, %v5462, 0
      %v5550 = vsel %vm610, %v5463, 0
      %v5553 = vsel %vm610, %v5464, 0
      %v5556 = vsel %vm610, %v5465, 0
      %v5559 = vsel %vm610, %v5466, 0
      %v5562 = vsel %vm610, %v5467, 0
      %v5565 = vsel %vm610, %v5468, 0
      %v5568 = vsel %vm610, %v5469, 0
      %v5571 = vsel %vm610, %v5470, 0
      %v5574 = vsel %vm610, %v5471, 0
      %v5577 = vsel %vm610, %v5472, 0
      %v5580 = vsel %vm610, %v5473, 0
      %v5583 = vsel %vm610, %v5474, 0
      %v5586 = vsel %vm610, %v5475, 0
      %v5589 = vsel %vm610, %v5476, 0
      %v5592 = vsel %vm610, %v5477, 0
      %v5595 = vsel %vm610, %v5478, 0
      %v5598 = vsel %vm610, %v5479, 0
      %v5601 = vsel %vm610, %v5480, 0
      %v5604 = vsel %vm610, %v5481, 0
      %v5607 = vsel %vm610, %v5482, 0
      %v5610 = vsel %vm610, %v5483, 0
      %v5613 = vsel %vm610, %v5484, 0
      %v5616 = vsel %vm610, %v5485, 0
      %v5619 = vsel %vm610, %v5486, 0
      %v5622 = vsel %vm610, %v5487, 0
      %v5625 = vsel %vm610, %v5488, 0
      %v5628 = vsel %vm610, %v5489, 0
      %v5631 = vsel %vm610, %v5490, 0
      %v5634 = vsel %vm610, %v5491, 0
      %v5637 = vsel %vm610, %v5492, 0
      %v5640 = vsel %vm610, %v5493, 0
      %v5643 = vsel %vm610, %v5494, 0
      %v5646 = vsel %vm610, %v5495, 0
      %v5649 = vsel %vm610, %v5496, 0
      %v5652 = vsel %vm610, %v5497, 0
      %v5655 = vsel %vm610, %v5498, 0
      %v5658 = vsel %vm610, %v5499, 0
      %v5661 = vsel %vm610, %v5500, 0
      %v5664 = vsel %vm610, %v5501, 0
      %v5667 = vsel %vm610, %v5502, 0
      %v5670 = vsel %vm610, %v5503, 0
      %v5673 = vsel %vm610, %v5504, 0
      %v5676 = vsel %vm610, %v5505, 0
      %v5679 = vsel %vm610, %v5506, 0
      %v5682 = vsel %vm610, %v5507, 0
      %v5685 = vsel %vm610, %v5508, 0
      %v5688 = vsel %vm610, %v5509, 0
      %v5691 = vsel %vm610, %v5510, 0
      %v5694 = vsel %vm610, %v5511, 0
      %v5697 = vsel %vm610, %v5512, 0
      %v5700 = vsel %vm610, %v5513, 0
      %v5703 = vsel %vm610, %v5514, 0
      %v5706 = vsel %vm610, %v5515, 0
      %v5709 = vsel %vm610, %v5516, 0
      %v5712 = vsel %vm610, %v5517, 0
      %v5715 = vsel %vm610, %v5518, 0
      %v5718 = vsel %vm610, %v5519, 0
      %v5721 = vsel %vm610, %v5520, 0
      %v5724 = vsel %vm610, %v5521, 0
      %v5727 = vsel %vm610, %v5522, 0
      %v5730 = vand.u32 %v5524, %v818
      %5732 = vmatpush.bf16.msra.mxu0 0
      %5733 = vmatpush.bf16.msra.mxu0 0
      %5734 = vmatpush.bf16.msra.mxu0 0
      %5735 = vmatpush.bf16.msra.mxu0 0
      %5736 = vmatpush.bf16.msra.mxu0 0
      %5737 = vmatpush.bf16.msra.mxu0 0
      %5738 = vmatpush.bf16.msra.mxu0 0
      %5739 = vmatpush.bf16.msra.mxu0 %v5730
      %5740 = vmatmul.bf16.gmra.mxu0 %v5526
      %v5741 = vpop.f32.mrf.mxu0
      %v5742 = vadd.f32 0.0, %v5741
      %v5743 = vpop.f32.mrf.mxu0
      %v5744 = vadd.f32 0.0, %v5743
      %5745 = vmatmul.bf16.gmra.mxu0 %v5529
      %v5746 = vpop.f32.mrf.mxu0
      %v5747 = vadd.f32 0.0, %v5746
      %v5748 = vpop.f32.mrf.mxu0
      %v5749 = vadd.f32 0.0, %v5748
      %5750 = vmatmul.bf16.gmra.mxu0 %v5532
      %v5751 = vpop.f32.mrf.mxu0
      %v5752 = vadd.f32 0.0, %v5751
      %v5753 = vpop.f32.mrf.mxu0
      %v5754 = vadd.f32 0.0, %v5753
      %5755 = vmatmul.bf16.gmra.mxu0 %v5535
      %v5756 = vpop.f32.mrf.mxu0
      %v5757 = vadd.f32 0.0, %v5756
      %v5758 = vpop.f32.mrf.mxu0
      %v5759 = vadd.f32 0.0, %v5758
      %5760 = vmatmul.bf16.gmra.mxu0 %v5538
      %v5761 = vpop.f32.mrf.mxu0
      %v5762 = vadd.f32 0.0, %v5761
      %v5763 = vpop.f32.mrf.mxu0
      %v5764 = vadd.f32 0.0, %v5763
      %5765 = vmatmul.bf16.gmra.mxu0 %v5541
      %v5766 = vpop.f32.mrf.mxu0
      %v5767 = vadd.f32 0.0, %v5766
      %v5768 = vpop.f32.mrf.mxu0
      %v5769 = vadd.f32 0.0, %v5768
      %5770 = vmatmul.bf16.gmra.mxu0 %v5544
      %v5771 = vpop.f32.mrf.mxu0
      %v5772 = vadd.f32 0.0, %v5771
      %v5773 = vpop.f32.mrf.mxu0
      %v5774 = vadd.f32 0.0, %v5773
      %5775 = vmatmul.bf16.gmra.mxu0 %v5547
      %v5776 = vpop.f32.mrf.mxu0
      %v5777 = vadd.f32 0.0, %v5776
      %v5778 = vpop.f32.mrf.mxu0
      %v5779 = vadd.f32 0.0, %v5778
      %5780 = vmatmul.bf16.gmra.mxu0 %v5550
      %v5781 = vpop.f32.mrf.mxu0
      %v5782 = vadd.f32 0.0, %v5781
      %v5783 = vpop.f32.mrf.mxu0
      %v5784 = vadd.f32 0.0, %v5783
      %5785 = vmatmul.bf16.gmra.mxu0 %v5553
      %v5786 = vpop.f32.mrf.mxu0
      %v5787 = vadd.f32 0.0, %v5786
      %v5788 = vpop.f32.mrf.mxu0
      %v5789 = vadd.f32 0.0, %v5788
      %5790 = vmatmul.bf16.gmra.mxu0 %v5556
      %v5791 = vpop.f32.mrf.mxu0
      %v5792 = vadd.f32 0.0, %v5791
      %v5793 = vpop.f32.mrf.mxu0
      %v5794 = vadd.f32 0.0, %v5793
      %5795 = vmatmul.bf16.gmra.mxu0 %v5559
      %v5796 = vpop.f32.mrf.mxu0
      %v5797 = vadd.f32 0.0, %v5796
      %v5798 = vpop.f32.mrf.mxu0
      %v5799 = vadd.f32 0.0, %v5798
      %5800 = vmatmul.bf16.gmra.mxu0 %v5562
      %v5801 = vpop.f32.mrf.mxu0
      %v5802 = vadd.f32 0.0, %v5801
      %v5803 = vpop.f32.mrf.mxu0
      %v5804 = vadd.f32 0.0, %v5803
      %5805 = vmatmul.bf16.gmra.mxu0 %v5565
      %v5806 = vpop.f32.mrf.mxu0
      %v5807 = vadd.f32 0.0, %v5806
      %v5808 = vpop.f32.mrf.mxu0
      %v5809 = vadd.f32 0.0, %v5808
      %5810 = vmatmul.bf16.gmra.mxu0 %v5568
      %v5811 = vpop.f32.mrf.mxu0
      %v5812 = vadd.f32 0.0, %v5811
      %v5813 = vpop.f32.mrf.mxu0
      %v5814 = vadd.f32 0.0, %v5813
      %5815 = vmatmul.bf16.gmra.mxu0 %v5571
      %v5816 = vpop.f32.mrf.mxu0
      %v5817 = vadd.f32 0.0, %v5816
      %v5818 = vpop.f32.mrf.mxu0
      %v5819 = vadd.f32 0.0, %v5818
      %5820 = vmatmul.bf16.gmra.mxu0 %v5574
      %v5821 = vpop.f32.mrf.mxu0
      %v5822 = vadd.f32 0.0, %v5821
      %v5823 = vpop.f32.mrf.mxu0
      %v5824 = vadd.f32 0.0, %v5823
      %5825 = vmatmul.bf16.gmra.mxu0 %v5577
      %v5826 = vpop.f32.mrf.mxu0
      %v5827 = vadd.f32 0.0, %v5826
      %v5828 = vpop.f32.mrf.mxu0
      %v5829 = vadd.f32 0.0, %v5828
      %5830 = vmatmul.bf16.gmra.mxu0 %v5580
      %v5831 = vpop.f32.mrf.mxu0
      %v5832 = vadd.f32 0.0, %v5831
      %v5833 = vpop.f32.mrf.mxu0
      %v5834 = vadd.f32 0.0, %v5833
      %5835 = vmatmul.bf16.gmra.mxu0 %v5583
      %v5836 = vpop.f32.mrf.mxu0
      %v5837 = vadd.f32 0.0, %v5836
      %v5838 = vpop.f32.mrf.mxu0
      %v5839 = vadd.f32 0.0, %v5838
      %5840 = vmatmul.bf16.gmra.mxu0 %v5586
      %v5841 = vpop.f32.mrf.mxu0
      %v5842 = vadd.f32 0.0, %v5841
      %v5843 = vpop.f32.mrf.mxu0
      %v5844 = vadd.f32 0.0, %v5843
      %5845 = vmatmul.bf16.gmra.mxu0 %v5589
      %v5846 = vpop.f32.mrf.mxu0
      %v5847 = vadd.f32 0.0, %v5846
      %v5848 = vpop.f32.mrf.mxu0
      %v5849 = vadd.f32 0.0, %v5848
      %5850 = vmatmul.bf16.gmra.mxu0 %v5592
      %v5851 = vpop.f32.mrf.mxu0
      %v5852 = vadd.f32 0.0, %v5851
      %v5853 = vpop.f32.mrf.mxu0
      %v5854 = vadd.f32 0.0, %v5853
      %5855 = vmatmul.bf16.gmra.mxu0 %v5595
      %v5856 = vpop.f32.mrf.mxu0
      %v5857 = vadd.f32 0.0, %v5856
      %v5858 = vpop.f32.mrf.mxu0
      %v5859 = vadd.f32 0.0, %v5858
      %5860 = vmatmul.bf16.gmra.mxu0 %v5598
      %v5861 = vpop.f32.mrf.mxu0
      %v5862 = vadd.f32 0.0, %v5861
      %v5863 = vpop.f32.mrf.mxu0
      %v5864 = vadd.f32 0.0, %v5863
      %5865 = vmatmul.bf16.gmra.mxu0 %v5601
      %v5866 = vpop.f32.mrf.mxu0
      %v5867 = vadd.f32 0.0, %v5866
      %v5868 = vpop.f32.mrf.mxu0
      %v5869 = vadd.f32 0.0, %v5868
      %5870 = vmatmul.bf16.gmra.mxu0 %v5604
      %v5871 = vpop.f32.mrf.mxu0
      %v5872 = vadd.f32 0.0, %v5871
      %v5873 = vpop.f32.mrf.mxu0
      %v5874 = vadd.f32 0.0, %v5873
      %5875 = vmatmul.bf16.gmra.mxu0 %v5607
      %v5876 = vpop.f32.mrf.mxu0
      %v5877 = vadd.f32 0.0, %v5876
      %v5878 = vpop.f32.mrf.mxu0
      %v5879 = vadd.f32 0.0, %v5878
      %5880 = vmatmul.bf16.gmra.mxu0 %v5610
      %v5881 = vpop.f32.mrf.mxu0
      %v5882 = vadd.f32 0.0, %v5881
      %v5883 = vpop.f32.mrf.mxu0
      %v5884 = vadd.f32 0.0, %v5883
      %5885 = vmatmul.bf16.gmra.mxu0 %v5613
      %v5886 = vpop.f32.mrf.mxu0
      %v5887 = vadd.f32 0.0, %v5886
      %v5888 = vpop.f32.mrf.mxu0
      %v5889 = vadd.f32 0.0, %v5888
      %5890 = vmatmul.bf16.gmra.mxu0 %v5616
      %v5891 = vpop.f32.mrf.mxu0
      %v5892 = vadd.f32 0.0, %v5891
      %v5893 = vpop.f32.mrf.mxu0
      %v5894 = vadd.f32 0.0, %v5893
      %5895 = vmatmul.bf16.gmra.mxu0 %v5619
      %v5896 = vpop.f32.mrf.mxu0
      %v5897 = vadd.f32 0.0, %v5896
      %v5898 = vpop.f32.mrf.mxu0
      %v5899 = vadd.f32 0.0, %v5898
      %5900 = vmatmul.bf16.gmra.mxu0 %v5622
      %v5901 = vpop.f32.mrf.mxu0
      %v5902 = vadd.f32 0.0, %v5901
      %v5903 = vpop.f32.mrf.mxu0
      %v5904 = vadd.f32 0.0, %v5903
      %5905 = vmatmul.bf16.gmra.mxu0 %v5625
      %v5906 = vpop.f32.mrf.mxu0
      %v5907 = vadd.f32 0.0, %v5906
      %v5908 = vpop.f32.mrf.mxu0
      %v5909 = vadd.f32 0.0, %v5908
      %5910 = vmatmul.bf16.gmra.mxu0 %v5628
      %v5911 = vpop.f32.mrf.mxu0
      %v5912 = vadd.f32 0.0, %v5911
      %v5913 = vpop.f32.mrf.mxu0
      %v5914 = vadd.f32 0.0, %v5913
      %5915 = vmatmul.bf16.gmra.mxu0 %v5631
      %v5916 = vpop.f32.mrf.mxu0
      %v5917 = vadd.f32 0.0, %v5916
      %v5918 = vpop.f32.mrf.mxu0
      %v5919 = vadd.f32 0.0, %v5918
      %5920 = vmatmul.bf16.gmra.mxu0 %v5634
      %v5921 = vpop.f32.mrf.mxu0
      %v5922 = vadd.f32 0.0, %v5921
      %v5923 = vpop.f32.mrf.mxu0
      %v5924 = vadd.f32 0.0, %v5923
      %5925 = vmatmul.bf16.gmra.mxu0 %v5637
      %v5926 = vpop.f32.mrf.mxu0
      %v5927 = vadd.f32 0.0, %v5926
      %v5928 = vpop.f32.mrf.mxu0
      %v5929 = vadd.f32 0.0, %v5928
      %5930 = vmatmul.bf16.gmra.mxu0 %v5640
      %v5931 = vpop.f32.mrf.mxu0
      %v5932 = vadd.f32 0.0, %v5931
      %v5933 = vpop.f32.mrf.mxu0
      %v5934 = vadd.f32 0.0, %v5933
      %5935 = vmatmul.bf16.gmra.mxu0 %v5643
      %v5936 = vpop.f32.mrf.mxu0
      %v5937 = vadd.f32 0.0, %v5936
      %v5938 = vpop.f32.mrf.mxu0
      %v5939 = vadd.f32 0.0, %v5938
      %5940 = vmatmul.bf16.gmra.mxu0 %v5646
      %v5941 = vpop.f32.mrf.mxu0
      %v5942 = vadd.f32 0.0, %v5941
      %v5943 = vpop.f32.mrf.mxu0
      %v5944 = vadd.f32 0.0, %v5943
      %5945 = vmatmul.bf16.gmra.mxu0 %v5649
      %v5946 = vpop.f32.mrf.mxu0
      %v5947 = vadd.f32 0.0, %v5946
      %v5948 = vpop.f32.mrf.mxu0
      %v5949 = vadd.f32 0.0, %v5948
      %5950 = vmatmul.bf16.gmra.mxu0 %v5652
      %v5951 = vpop.f32.mrf.mxu0
      %v5952 = vadd.f32 0.0, %v5951
      %v5953 = vpop.f32.mrf.mxu0
      %v5954 = vadd.f32 0.0, %v5953
      %5955 = vmatmul.bf16.gmra.mxu0 %v5655
      %v5956 = vpop.f32.mrf.mxu0
      %v5957 = vadd.f32 0.0, %v5956
      %v5958 = vpop.f32.mrf.mxu0
      %v5959 = vadd.f32 0.0, %v5958
      %5960 = vmatmul.bf16.gmra.mxu0 %v5658
      %v5961 = vpop.f32.mrf.mxu0
      %v5962 = vadd.f32 0.0, %v5961
      %v5963 = vpop.f32.mrf.mxu0
      %v5964 = vadd.f32 0.0, %v5963
      %5965 = vmatmul.bf16.gmra.mxu0 %v5661
      %v5966 = vpop.f32.mrf.mxu0
      %v5967 = vadd.f32 0.0, %v5966
      %v5968 = vpop.f32.mrf.mxu0
      %v5969 = vadd.f32 0.0, %v5968
      %5970 = vmatmul.bf16.gmra.mxu0 %v5664
      %v5971 = vpop.f32.mrf.mxu0
      %v5972 = vadd.f32 0.0, %v5971
      %v5973 = vpop.f32.mrf.mxu0
      %v5974 = vadd.f32 0.0, %v5973
      %5975 = vmatmul.bf16.gmra.mxu0 %v5667
      %v5976 = vpop.f32.mrf.mxu0
      %v5977 = vadd.f32 0.0, %v5976
      %v5978 = vpop.f32.mrf.mxu0
      %v5979 = vadd.f32 0.0, %v5978
      %5980 = vmatmul.bf16.gmra.mxu0 %v5670
      %v5981 = vpop.f32.mrf.mxu0
      %v5982 = vadd.f32 0.0, %v5981
      %v5983 = vpop.f32.mrf.mxu0
      %v5984 = vadd.f32 0.0, %v5983
      %5985 = vmatmul.bf16.gmra.mxu0 %v5673
      %v5986 = vpop.f32.mrf.mxu0
      %v5987 = vadd.f32 0.0, %v5986
      %v5988 = vpop.f32.mrf.mxu0
      %v5989 = vadd.f32 0.0, %v5988
      %5990 = vmatmul.bf16.gmra.mxu0 %v5676
      %v5991 = vpop.f32.mrf.mxu0
      %v5992 = vadd.f32 0.0, %v5991
      %v5993 = vpop.f32.mrf.mxu0
      %v5994 = vadd.f32 0.0, %v5993
      %5995 = vmatmul.bf16.gmra.mxu0 %v5679
      %v5996 = vpop.f32.mrf.mxu0
      %v5997 = vadd.f32 0.0, %v5996
      %v5998 = vpop.f32.mrf.mxu0
      %v5999 = vadd.f32 0.0, %v5998
      %6000 = vmatmul.bf16.gmra.mxu0 %v5682
      %v6001 = vpop.f32.mrf.mxu0
      %v6002 = vadd.f32 0.0, %v6001
      %v6003 = vpop.f32.mrf.mxu0
      %v6004 = vadd.f32 0.0, %v6003
      %6005 = vmatmul.bf16.gmra.mxu0 %v5685
      %v6006 = vpop.f32.mrf.mxu0
      %v6007 = vadd.f32 0.0, %v6006
      %v6008 = vpop.f32.mrf.mxu0
      %v6009 = vadd.f32 0.0, %v6008
      %6010 = vmatmul.bf16.gmra.mxu0 %v5688
      %v6011 = vpop.f32.mrf.mxu0
      %v6012 = vadd.f32 0.0, %v6011
      %v6013 = vpop.f32.mrf.mxu0
      %v6014 = vadd.f32 0.0, %v6013
      %6015 = vmatmul.bf16.gmra.mxu0 %v5691
      %v6016 = vpop.f32.mrf.mxu0
      %v6017 = vadd.f32 0.0, %v6016
      %v6018 = vpop.f32.mrf.mxu0
      %v6019 = vadd.f32 0.0, %v6018
      %6020 = vmatmul.bf16.gmra.mxu0 %v5694
      %v6021 = vpop.f32.mrf.mxu0
      %v6022 = vadd.f32 0.0, %v6021
      %v6023 = vpop.f32.mrf.mxu0
      %v6024 = vadd.f32 0.0, %v6023
      %6025 = vmatmul.bf16.gmra.mxu0 %v5697
      %v6026 = vpop.f32.mrf.mxu0
      %v6027 = vadd.f32 0.0, %v6026
      %v6028 = vpop.f32.mrf.mxu0
      %v6029 = vadd.f32 0.0, %v6028
      %6030 = vmatmul.bf16.gmra.mxu0 %v5700
      %v6031 = vpop.f32.mrf.mxu0
      %v6032 = vadd.f32 0.0, %v6031
      %v6033 = vpop.f32.mrf.mxu0
      %v6034 = vadd.f32 0.0, %v6033
      %6035 = vmatmul.bf16.gmra.mxu0 %v5703
      %v6036 = vpop.f32.mrf.mxu0
      %v6037 = vadd.f32 0.0, %v6036
      %v6038 = vpop.f32.mrf.mxu0
      %v6039 = vadd.f32 0.0, %v6038
      %6040 = vmatmul.bf16.gmra.mxu0 %v5706
      %v6041 = vpop.f32.mrf.mxu0
      %v6042 = vadd.f32 0.0, %v6041
      %v6043 = vpop.f32.mrf.mxu0
      %v6044 = vadd.f32 0.0, %v6043
      %6045 = vmatmul.bf16.gmra.mxu0 %v5709
      %v6046 = vpop.f32.mrf.mxu0
      %v6047 = vadd.f32 0.0, %v6046
      %v6048 = vpop.f32.mrf.mxu0
      %v6049 = vadd.f32 0.0, %v6048
      %6050 = vmatmul.bf16.gmra.mxu0 %v5712
      %v6051 = vpop.f32.mrf.mxu0
      %v6052 = vadd.f32 0.0, %v6051
      %v6053 = vpop.f32.mrf.mxu0
      %v6054 = vadd.f32 0.0, %v6053
      %6055 = vmatmul.bf16.gmra.mxu0 %v5715
      %v6056 = vpop.f32.mrf.mxu0
      %v6057 = vadd.f32 0.0, %v6056
      %v6058 = vpop.f32.mrf.mxu0
      %v6059 = vadd.f32 0.0, %v6058
      %6060 = vmatmul.bf16.gmra.mxu0 %v5718
      %v6061 = vpop.f32.mrf.mxu0
      %v6062 = vadd.f32 0.0, %v6061
      %v6063 = vpop.f32.mrf.mxu0
      %v6064 = vadd.f32 0.0, %v6063
      %6065 = vmatmul.bf16.gmra.mxu0 %v5721
      %v6066 = vpop.f32.mrf.mxu0
      %v6067 = vadd.f32 0.0, %v6066
      %v6068 = vpop.f32.mrf.mxu0
      %v6069 = vadd.f32 0.0, %v6068
      %6070 = vmatmul.bf16.gmra.mxu0 %v5724
      %v6071 = vpop.f32.mrf.mxu0
      %v6072 = vadd.f32 0.0, %v6071
      %v6073 = vpop.f32.mrf.mxu0
      %v6074 = vadd.f32 0.0, %v6073
      %6075 = vmatmul.bf16.gmra.mxu0 %v5727
      %v6076 = vpop.f32.mrf.mxu0
      %v6077 = vadd.f32 0.0, %v6076
      %v6078 = vpop.f32.mrf.mxu0
      %v6079 = vadd.f32 0.0, %v6078
      %6080 = vdwg.mxu0
      %v6081 = vadd.f32 %v5183, %v5742
      %v6082 = vadd.f32 %v5184, %v5744
      %v6083 = vadd.f32 %v5185, %v5747
      %v6084 = vadd.f32 %v5186, %v5749
      %v6085 = vadd.f32 %v5187, %v5752
      %v6086 = vadd.f32 %v5188, %v5754
      %v6087 = vadd.f32 %v5189, %v5757
      %v6088 = vadd.f32 %v5190, %v5759
      %v6089 = vadd.f32 %v5191, %v5762
      %v6090 = vadd.f32 %v5192, %v5764
      %v6091 = vadd.f32 %v5193, %v5767
      %v6092 = vadd.f32 %v5194, %v5769
      %v6093 = vadd.f32 %v5195, %v5772
      %v6094 = vadd.f32 %v5196, %v5774
      %v6095 = vadd.f32 %v5197, %v5777
      %v6096 = vadd.f32 %v5198, %v5779
      %v6097 = vadd.f32 %v5199, %v5782
      %v6098 = vadd.f32 %v5200, %v5784
      %v6099 = vadd.f32 %v5201, %v5787
      %v6100 = vadd.f32 %v5202, %v5789
      %v6101 = vadd.f32 %v5203, %v5792
      %v6102 = vadd.f32 %v5204, %v5794
      %v6103 = vadd.f32 %v5205, %v5797
      %v6104 = vadd.f32 %v5206, %v5799
      %v6105 = vadd.f32 %v5207, %v5802
      %v6106 = vadd.f32 %v5208, %v5804
      %v6107 = vadd.f32 %v5209, %v5807
      %v6108 = vadd.f32 %v5210, %v5809
      %v6109 = vadd.f32 %v5211, %v5812
      %v6110 = vadd.f32 %v5212, %v5814
      %v6111 = vadd.f32 %v5213, %v5817
      %v6112 = vadd.f32 %v5214, %v5819
      %v6113 = vadd.f32 %v5215, %v5822
      %v6114 = vadd.f32 %v5216, %v5824
      %v6115 = vadd.f32 %v5217, %v5827
      %v6116 = vadd.f32 %v5218, %v5829
      %v6117 = vadd.f32 %v5219, %v5832
      %v6118 = vadd.f32 %v5220, %v5834
      %v6119 = vadd.f32 %v5221, %v5837
      %v6120 = vadd.f32 %v5222, %v5839
      %v6121 = vadd.f32 %v5223, %v5842
      %v6122 = vadd.f32 %v5224, %v5844
      %v6123 = vadd.f32 %v5225, %v5847
      %v6124 = vadd.f32 %v5226, %v5849
      %v6125 = vadd.f32 %v5227, %v5852
      %v6126 = vadd.f32 %v5228, %v5854
      %v6127 = vadd.f32 %v5229, %v5857
      %v6128 = vadd.f32 %v5230, %v5859
      %v6129 = vadd.f32 %v5231, %v5862
      %v6130 = vadd.f32 %v5232, %v5864
      %v6131 = vadd.f32 %v5233, %v5867
      %v6132 = vadd.f32 %v5234, %v5869
      %v6133 = vadd.f32 %v5235, %v5872
      %v6134 = vadd.f32 %v5236, %v5874
      %v6135 = vadd.f32 %v5237, %v5877
      %v6136 = vadd.f32 %v5238, %v5879
      %v6137 = vadd.f32 %v5239, %v5882
      %v6138 = vadd.f32 %v5240, %v5884
      %v6139 = vadd.f32 %v5241, %v5887
      %v6140 = vadd.f32 %v5242, %v5889
      %v6141 = vadd.f32 %v5243, %v5892
      %v6142 = vadd.f32 %v5244, %v5894
      %v6143 = vadd.f32 %v5245, %v5897
      %v6144 = vadd.f32 %v5246, %v5899
      %v6145 = vadd.f32 %v5247, %v5902
      %v6146 = vadd.f32 %v5248, %v5904
      %v6147 = vadd.f32 %v5249, %v5907
      %v6148 = vadd.f32 %v5250, %v5909
      %v6149 = vadd.f32 %v5251, %v5912
      %v6150 = vadd.f32 %v5252, %v5914
      %v6151 = vadd.f32 %v5253, %v5917
      %v6152 = vadd.f32 %v5254, %v5919
      %v6153 = vadd.f32 %v5255, %v5922
      %v6154 = vadd.f32 %v5256, %v5924
      %v6155 = vadd.f32 %v5257, %v5927
      %v6156 = vadd.f32 %v5258, %v5929
      %v6157 = vadd.f32 %v5259, %v5932
      %v6158 = vadd.f32 %v5260, %v5934
      %v6159 = vadd.f32 %v5261, %v5937
      %v6160 = vadd.f32 %v5262, %v5939
      %v6161 = vadd.f32 %v5263, %v5942
      %v6162 = vadd.f32 %v5264, %v5944
      %v6163 = vadd.f32 %v5265, %v5947
      %v6164 = vadd.f32 %v5266, %v5949
      %v6165 = vadd.f32 %v5267, %v5952
      %v6166 = vadd.f32 %v5268, %v5954
      %v6167 = vadd.f32 %v5269, %v5957
      %v6168 = vadd.f32 %v5270, %v5959
      %v6169 = vadd.f32 %v5271, %v5962
      %v6170 = vadd.f32 %v5272, %v5964
      %v6171 = vadd.f32 %v5273, %v5967
      %v6172 = vadd.f32 %v5274, %v5969
      %v6173 = vadd.f32 %v5275, %v5972
      %v6174 = vadd.f32 %v5276, %v5974
      %v6175 = vadd.f32 %v5277, %v5977
      %v6176 = vadd.f32 %v5278, %v5979
      %v6177 = vadd.f32 %v5279, %v5982
      %v6178 = vadd.f32 %v5280, %v5984
      %v6179 = vadd.f32 %v5281, %v5987
      %v6180 = vadd.f32 %v5282, %v5989
      %v6181 = vadd.f32 %v5283, %v5992
      %v6182 = vadd.f32 %v5284, %v5994
      %v6183 = vadd.f32 %v5285, %v5997
      %v6184 = vadd.f32 %v5286, %v5999
      %v6185 = vadd.f32 %v5287, %v6002
      %v6186 = vadd.f32 %v5288, %v6004
      %v6187 = vadd.f32 %v5289, %v6007
      %v6188 = vadd.f32 %v5290, %v6009
      %v6189 = vadd.f32 %v5291, %v6012
      %v6190 = vadd.f32 %v5292, %v6014
      %v6191 = vadd.f32 %v5293, %v6017
      %v6192 = vadd.f32 %v5294, %v6019
      %v6193 = vadd.f32 %v5295, %v6022
      %v6194 = vadd.f32 %v5296, %v6024
      %v6195 = vadd.f32 %v5297, %v6027
      %v6196 = vadd.f32 %v5298, %v6029
      %v6197 = vadd.f32 %v5299, %v6032
      %v6198 = vadd.f32 %v5300, %v6034
      %v6199 = vadd.f32 %v5301, %v6037
      %v6200 = vadd.f32 %v5302, %v6039
      %v6201 = vadd.f32 %v5303, %v6042
      %v6202 = vadd.f32 %v5304, %v6044
      %v6203 = vadd.f32 %v5305, %v6047
      %v6204 = vadd.f32 %v5306, %v6049
      %v6205 = vadd.f32 %v5307, %v6052
      %v6206 = vadd.f32 %v5308, %v6054
      %v6207 = vadd.f32 %v5309, %v6057
      %v6208 = vadd.f32 %v5310, %v6059
      %v6209 = vadd.f32 %v5311, %v6062
      %v6210 = vadd.f32 %v5312, %v6064
      %v6211 = vadd.f32 %v5313, %v6067
      %v6212 = vadd.f32 %v5314, %v6069
      %v6213 = vadd.f32 %v5315, %v6072
      %v6214 = vadd.f32 %v5316, %v6074
      %v6215 = vadd.f32 %v5317, %v6077
      %v6216 = vadd.f32 %v5318, %v6079
      %v6217 = vld [vmem:[%s192 + $0x45] sm:$0xff]
      %v6218 = vld [vmem:[%s192 + $0x4d] sm:$0xff]
      %v6219 = vld [vmem:[%s192 + $0x55] sm:$0xff]
      %v6220 = vld [vmem:[%s192 + $0x5d] sm:$0xff]
      %v6221 = vld [vmem:[%s192 + $0x65] sm:$0xff]
      %v6222 = vld [vmem:[%s192 + $0x6d] sm:$0xff]
      %v6223 = vld [vmem:[%s192 + $0x75] sm:$0xff]
      %v6224 = vld [vmem:[%s192 + $0x7d] sm:$0xff]
      %v6225 = vld [vmem:[%s192 + $0x85] sm:$0xff]
      %v6226 = vld [vmem:[%s192 + $0x8d] sm:$0xff]
      %v6227 = vld [vmem:[%s192 + $0x95] sm:$0xff]
      %v6228 = vld [vmem:[%s192 + $0x9d] sm:$0xff]
      %v6229 = vld [vmem:[%s192 + $0xa5] sm:$0xff]
      %v6230 = vld [vmem:[%s192 + $0xad] sm:$0xff]
      %v6231 = vld [vmem:[%s192 + $0xb5] sm:$0xff]
      %v6232 = vld [vmem:[%s192 + $0xbd] sm:$0xff]
      %v6233 = vld [vmem:[%s192 + $0xc5] sm:$0xff]
      %v6234 = vld [vmem:[%s192 + $0xcd] sm:$0xff]
      %v6235 = vld [vmem:[%s192 + $0xd5] sm:$0xff]
      %v6236 = vld [vmem:[%s192 + $0xdd] sm:$0xff]
      %v6237 = vld [vmem:[%s192 + $0xe5] sm:$0xff]
      %v6238 = vld [vmem:[%s192 + $0xed] sm:$0xff]
      %v6239 = vld [vmem:[%s192 + $0xf5] sm:$0xff]
      %v6240 = vld [vmem:[%s192 + $0xfd] sm:$0xff]
      %v6241 = vld [vmem:[%s192 + $0x105] sm:$0xff]
      %v6242 = vld [vmem:[%s192 + $0x10d] sm:$0xff]
      %v6243 = vld [vmem:[%s192 + $0x115] sm:$0xff]
      %v6244 = vld [vmem:[%s192 + $0x11d] sm:$0xff]
      %v6245 = vld [vmem:[%s192 + $0x125] sm:$0xff]
      %v6246 = vld [vmem:[%s192 + $0x12d] sm:$0xff]
      %v6247 = vld [vmem:[%s192 + $0x135] sm:$0xff]
      %v6248 = vld [vmem:[%s192 + $0x13d] sm:$0xff]
      %v6249 = vld [vmem:[%s192 + $0x145] sm:$0xff]
      %v6250 = vld [vmem:[%s192 + $0x14d] sm:$0xff]
      %v6251 = vld [vmem:[%s192 + $0x155] sm:$0xff]
      %v6252 = vld [vmem:[%s192 + $0x15d] sm:$0xff]
      %v6253 = vld [vmem:[%s192 + $0x165] sm:$0xff]
      %v6254 = vld [vmem:[%s192 + $0x16d] sm:$0xff]
      %v6255 = vld [vmem:[%s192 + $0x175] sm:$0xff]
      %v6256 = vld [vmem:[%s192 + $0x17d] sm:$0xff]
      %v6257 = vld [vmem:[%s192 + $0x185] sm:$0xff]
      %v6258 = vld [vmem:[%s192 + $0x18d] sm:$0xff]
      %v6259 = vld [vmem:[%s192 + $0x195] sm:$0xff]
      %v6260 = vld [vmem:[%s192 + $0x19d] sm:$0xff]
      %v6261 = vld [vmem:[%s192 + $0x1a5] sm:$0xff]
      %v6262 = vld [vmem:[%s192 + $0x1ad] sm:$0xff]
      %v6263 = vld [vmem:[%s192 + $0x1b5] sm:$0xff]
      %v6264 = vld [vmem:[%s192 + $0x1bd] sm:$0xff]
      %v6265 = vld [vmem:[%s192 + $0x1c5] sm:$0xff]
      %v6266 = vld [vmem:[%s192 + $0x1cd] sm:$0xff]
      %v6267 = vld [vmem:[%s192 + $0x1d5] sm:$0xff]
      %v6268 = vld [vmem:[%s192 + $0x1dd] sm:$0xff]
      %v6269 = vld [vmem:[%s192 + $0x1e5] sm:$0xff]
      %v6270 = vld [vmem:[%s192 + $0x1ed] sm:$0xff]
      %v6271 = vld [vmem:[%s192 + $0x1f5] sm:$0xff]
      %v6272 = vld [vmem:[%s192 + $0x1fd] sm:$0xff]
      %v6273 = vld [vmem:[%s192 + $0x205] sm:$0xff]
      %v6274 = vld [vmem:[%s192 + $0x20d] sm:$0xff]
      %v6275 = vld [vmem:[%s192 + $0x215] sm:$0xff]
      %v6276 = vld [vmem:[%s192 + $0x21d] sm:$0xff]
      %v6277 = vld [vmem:[%s192 + $0x225] sm:$0xff]
      %v6278 = vld [vmem:[%s192 + $0x22d] sm:$0xff]
      %v6279 = vld [vmem:[%s192 + $0x235] sm:$0xff]
      %v6280 = vld [vmem:[%s192 + $0x23d] sm:$0xff]
      %v6281 = vld [vmem:[%s192 + $0x245] sm:$0xff]
      %v6282 = vld [vmem:[%s192 + $0x24d] sm:$0xff]
      %v6283 = vld [vmem:[%s192 + $0x255] sm:$0xff]
      %v6284 = vld [vmem:[%s192 + $0x25d] sm:$0xff]
      %v6285 = vld [vmem:[%s192 + $0x265] sm:$0xff]
      %v6286 = vld [vmem:[%s192 + $0x26d] sm:$0xff]
      %v6287 = vld [vmem:[%s192 + $0x275] sm:$0xff]
      %v6288 = vld [vmem:[%s192 + $0x27d] sm:$0xff]
      %v6289 = vld [vmem:[%s192 + $0x285] sm:$0xff]
      %v6290 = vld [vmem:[%s192 + $0x28d] sm:$0xff]
      %v6291 = vld [vmem:[%s192 + $0x295] sm:$0xff]
      %v6292 = vld [vmem:[%s192 + $0x29d] sm:$0xff]
      %v6293 = vld [vmem:[%s192 + $0x2a5] sm:$0xff]
      %v6294 = vld [vmem:[%s192 + $0x2ad] sm:$0xff]
      %v6295 = vld [vmem:[%s192 + $0x2b5] sm:$0xff]
      %v6296 = vld [vmem:[%s192 + $0x2bd] sm:$0xff]
      %v6297 = vld [vmem:[%s192 + $0x2c5] sm:$0xff]
      %v6298 = vld [vmem:[%s192 + $0x2cd] sm:$0xff]
      %v6299 = vld [vmem:[%s192 + $0x2d5] sm:$0xff]
      %v6300 = vld [vmem:[%s192 + $0x2dd] sm:$0xff]
      %v6301 = vld [vmem:[%s192 + $0x2e5] sm:$0xff]
      %v6302 = vld [vmem:[%s192 + $0x2ed] sm:$0xff]
      %v6303 = vld [vmem:[%s192 + $0x2f5] sm:$0xff]
      %v6304 = vld [vmem:[%s192 + $0x2fd] sm:$0xff]
      %v6305 = vld [vmem:[%s192 + $0x305] sm:$0xff]
      %v6306 = vld [vmem:[%s192 + $0x30d] sm:$0xff]
      %v6307 = vld [vmem:[%s192 + $0x315] sm:$0xff]
      %v6308 = vld [vmem:[%s192 + $0x31d] sm:$0xff]
      %v6309 = vld [vmem:[%s192 + $0x325] sm:$0xff]
      %v6310 = vld [vmem:[%s192 + $0x32d] sm:$0xff]
      %v6311 = vld [vmem:[%s192 + $0x335] sm:$0xff]
      %v6312 = vld [vmem:[%s192 + $0x33d] sm:$0xff]
      %v6313 = vld [vmem:[%s192 + $0x345] sm:$0xff]
      %v6314 = vld [vmem:[%s192 + $0x34d] sm:$0xff]
      %v6315 = vld [vmem:[%s192 + $0x355] sm:$0xff]
      %v6316 = vld [vmem:[%s192 + $0x35d] sm:$0xff]
      %v6317 = vld [vmem:[%s192 + $0x365] sm:$0xff]
      %v6318 = vld [vmem:[%s192 + $0x36d] sm:$0xff]
      %v6319 = vld [vmem:[%s192 + $0x375] sm:$0xff]
      %v6320 = vld [vmem:[%s192 + $0x37d] sm:$0xff]
      %v6321 = vld [vmem:[%s192 + $0x385] sm:$0xff]
      %v6322 = vld [vmem:[%s192 + $0x38d] sm:$0xff]
      %v6323 = vld [vmem:[%s192 + $0x395] sm:$0xff]
      %v6324 = vld [vmem:[%s192 + $0x39d] sm:$0xff]
      %v6325 = vld [vmem:[%s192 + $0x3a5] sm:$0xff]
      %v6326 = vld [vmem:[%s192 + $0x3ad] sm:$0xff]
      %v6327 = vld [vmem:[%s192 + $0x3b5] sm:$0xff]
      %v6328 = vld [vmem:[%s192 + $0x3bd] sm:$0xff]
      %v6329 = vld [vmem:[%s192 + $0x3c5] sm:$0xff]
      %v6330 = vld [vmem:[%s192 + $0x3cd] sm:$0xff]
      %v6331 = vld [vmem:[%s192 + $0x3d5] sm:$0xff]
      %v6332 = vld [vmem:[%s192 + $0x3dd] sm:$0xff]
      %v6333 = vld [vmem:[%s192 + $0x3e5] sm:$0xff]
      %v6334 = vld [vmem:[%s192 + $0x3ed] sm:$0xff]
      %v6335 = vld [vmem:[%s192 + $0x3f5] sm:$0xff]
      %v6336 = vld [vmem:[%s192 + $0x3fd] sm:$0xff]
      %v6337 = vld [vmem:[%s192 + $0x405] sm:$0xff]
      %v6338 = vld [vmem:[%s192 + $0x40d] sm:$0xff]
      %v6339 = vld [vmem:[%s192 + $0x415] sm:$0xff]
      %v6340 = vld [vmem:[%s192 + $0x41d] sm:$0xff]
      %v6341 = vld [vmem:[%s192 + $0x425] sm:$0xff]
      %v6342 = vld [vmem:[%s192 + $0x42d] sm:$0xff]
      %v6343 = vld [vmem:[%s192 + $0x435] sm:$0xff]
      %v6344 = vld [vmem:[%s192 + $0x43d] sm:$0xff]
      %v6345 = vld [vmem:[%s192 + $0x445] sm:$0xff]
      %v6346 = vld [vmem:[%s192 + $0x44d] sm:$0xff]
      %v6347 = vld [vmem:[%s192 + $0x455] sm:$0xff]
      %v6348 = vld [vmem:[%s192 + $0x45d] sm:$0xff]
      %v6349 = vld [vmem:[%s192 + $0x465] sm:$0xff]
      %v6350 = vld [vmem:[%s192 + $0x46d] sm:$0xff]
      %v6351 = vld [vmem:[%s192 + $0x475] sm:$0xff]
      %v6352 = vld [vmem:[%s192 + $0x47d] sm:$0xff]
      %v6353 = vpack.c.bf16 %v6218, %v6217
      %v6354 = vpack.c.bf16 %v6220, %v6219
      %v6355 = vpack.c.bf16 %v6222, %v6221
      %v6356 = vpack.c.bf16 %v6224, %v6223
      %v6357 = vpack.c.bf16 %v6226, %v6225
      %v6358 = vpack.c.bf16 %v6228, %v6227
      %v6359 = vpack.c.bf16 %v6230, %v6229
      %v6360 = vpack.c.bf16 %v6232, %v6231
      %v6361 = vpack.c.bf16 %v6234, %v6233
      %v6362 = vpack.c.bf16 %v6236, %v6235
      %v6363 = vpack.c.bf16 %v6238, %v6237
      %v6364 = vpack.c.bf16 %v6240, %v6239
      %v6365 = vpack.c.bf16 %v6242, %v6241
      %v6366 = vpack.c.bf16 %v6244, %v6243
      %v6367 = vpack.c.bf16 %v6246, %v6245
      %v6368 = vpack.c.bf16 %v6248, %v6247
      %v6369 = vpack.c.bf16 %v6250, %v6249
      %v6370 = vpack.c.bf16 %v6252, %v6251
      %v6371 = vpack.c.bf16 %v6254, %v6253
      %v6372 = vpack.c.bf16 %v6256, %v6255
      %v6373 = vpack.c.bf16 %v6258, %v6257
      %v6374 = vpack.c.bf16 %v6260, %v6259
      %v6375 = vpack.c.bf16 %v6262, %v6261
      %v6376 = vpack.c.bf16 %v6264, %v6263
      %v6377 = vpack.c.bf16 %v6266, %v6265
      %v6378 = vpack.c.bf16 %v6268, %v6267
      %v6379 = vpack.c.bf16 %v6270, %v6269
      %v6380 = vpack.c.bf16 %v6272, %v6271
      %v6381 = vpack.c.bf16 %v6274, %v6273
      %v6382 = vpack.c.bf16 %v6276, %v6275
      %v6383 = vpack.c.bf16 %v6278, %v6277
      %v6384 = vpack.c.bf16 %v6280, %v6279
      %v6385 = vpack.c.bf16 %v6282, %v6281
      %v6386 = vpack.c.bf16 %v6284, %v6283
      %v6387 = vpack.c.bf16 %v6286, %v6285
      %v6388 = vpack.c.bf16 %v6288, %v6287
      %v6389 = vpack.c.bf16 %v6290, %v6289
      %v6390 = vpack.c.bf16 %v6292, %v6291
      %v6391 = vpack.c.bf16 %v6294, %v6293
      %v6392 = vpack.c.bf16 %v6296, %v6295
      %v6393 = vpack.c.bf16 %v6298, %v6297
      %v6394 = vpack.c.bf16 %v6300, %v6299
      %v6395 = vpack.c.bf16 %v6302, %v6301
      %v6396 = vpack.c.bf16 %v6304, %v6303
      %v6397 = vpack.c.bf16 %v6306, %v6305
      %v6398 = vpack.c.bf16 %v6308, %v6307
      %v6399 = vpack.c.bf16 %v6310, %v6309
      %v6400 = vpack.c.bf16 %v6312, %v6311
      %v6401 = vpack.c.bf16 %v6314, %v6313
      %v6402 = vpack.c.bf16 %v6316, %v6315
      %v6403 = vpack.c.bf16 %v6318, %v6317
      %v6404 = vpack.c.bf16 %v6320, %v6319
      %v6405 = vpack.c.bf16 %v6322, %v6321
      %v6406 = vpack.c.bf16 %v6324, %v6323
      %v6407 = vpack.c.bf16 %v6326, %v6325
      %v6408 = vpack.c.bf16 %v6328, %v6327
      %v6409 = vpack.c.bf16 %v6330, %v6329
      %v6410 = vpack.c.bf16 %v6332, %v6331
      %v6411 = vpack.c.bf16 %v6334, %v6333
      %v6412 = vpack.c.bf16 %v6336, %v6335
      %v6413 = vpack.c.bf16 %v6338, %v6337
      %v6414 = vpack.c.bf16 %v6340, %v6339
      %v6415 = vpack.c.bf16 %v6342, %v6341
      %v6416 = vpack.c.bf16 %v6344, %v6343
      %v6417 = vpack.c.bf16 %v6346, %v6345
      %v6418 = vpack.c.bf16 %v6348, %v6347
      %v6419 = vpack.c.bf16 %v6350, %v6349
      %v6420 = vpack.c.bf16 %v6352, %v6351
      %s6421 = scalar_lea.vmem %s1, 14
      %v6422 = vld [vmem:[%s6421] sm:$0x3]
      %v6424 = vsel %vm610, %v6353, 0
      %v6427 = vsel %vm610, %v6354, 0
      %v6430 = vsel %vm610, %v6355, 0
      %v6433 = vsel %vm610, %v6356, 0
      %v6436 = vsel %vm610, %v6357, 0
      %v6439 = vsel %vm610, %v6358, 0
      %v6442 = vsel %vm610, %v6359, 0
      %v6445 = vsel %vm610, %v6360, 0
      %v6448 = vsel %vm610, %v6361, 0
      %v6451 = vsel %vm610, %v6362, 0
      %v6454 = vsel %vm610, %v6363, 0
      %v6457 = vsel %vm610, %v6364, 0
      %v6460 = vsel %vm610, %v6365, 0
      %v6463 = vsel %vm610, %v6366, 0
      %v6466 = vsel %vm610, %v6367, 0
      %v6469 = vsel %vm610, %v6368, 0
      %v6472 = vsel %vm610, %v6369, 0
      %v6475 = vsel %vm610, %v6370, 0
      %v6478 = vsel %vm610, %v6371, 0
      %v6481 = vsel %vm610, %v6372, 0
      %v6484 = vsel %vm610, %v6373, 0
      %v6487 = vsel %vm610, %v6374, 0
      %v6490 = vsel %vm610, %v6375, 0
      %v6493 = vsel %vm610, %v6376, 0
      %v6496 = vsel %vm610, %v6377, 0
      %v6499 = vsel %vm610, %v6378, 0
      %v6502 = vsel %vm610, %v6379, 0
      %v6505 = vsel %vm610, %v6380, 0
      %v6508 = vsel %vm610, %v6381, 0
      %v6511 = vsel %vm610, %v6382, 0
      %v6514 = vsel %vm610, %v6383, 0
      %v6517 = vsel %vm610, %v6384, 0
      %v6520 = vsel %vm610, %v6385, 0
      %v6523 = vsel %vm610, %v6386, 0
      %v6526 = vsel %vm610, %v6387, 0
      %v6529 = vsel %vm610, %v6388, 0
      %v6532 = vsel %vm610, %v6389, 0
      %v6535 = vsel %vm610, %v6390, 0
      %v6538 = vsel %vm610, %v6391, 0
      %v6541 = vsel %vm610, %v6392, 0
      %v6544 = vsel %vm610, %v6393, 0
      %v6547 = vsel %vm610, %v6394, 0
      %v6550 = vsel %vm610, %v6395, 0
      %v6553 = vsel %vm610, %v6396, 0
      %v6556 = vsel %vm610, %v6397, 0
      %v6559 = vsel %vm610, %v6398, 0
      %v6562 = vsel %vm610, %v6399, 0
      %v6565 = vsel %vm610, %v6400, 0
      %v6568 = vsel %vm610, %v6401, 0
      %v6571 = vsel %vm610, %v6402, 0
      %v6574 = vsel %vm610, %v6403, 0
      %v6577 = vsel %vm610, %v6404, 0
      %v6580 = vsel %vm610, %v6405, 0
      %v6583 = vsel %vm610, %v6406, 0
      %v6586 = vsel %vm610, %v6407, 0
      %v6589 = vsel %vm610, %v6408, 0
      %v6592 = vsel %vm610, %v6409, 0
      %v6595 = vsel %vm610, %v6410, 0
      %v6598 = vsel %vm610, %v6411, 0
      %v6601 = vsel %vm610, %v6412, 0
      %v6604 = vsel %vm610, %v6413, 0
      %v6607 = vsel %vm610, %v6414, 0
      %v6610 = vsel %vm610, %v6415, 0
      %v6613 = vsel %vm610, %v6416, 0
      %v6616 = vsel %vm610, %v6417, 0
      %v6619 = vsel %vm610, %v6418, 0
      %v6622 = vsel %vm610, %v6419, 0
      %v6625 = vsel %vm610, %v6420, 0
      %v6628 = vand.u32 %v6422, %v818
      %6630 = vmatpush.bf16.msra.mxu0 0
      %6631 = vmatpush.bf16.msra.mxu0 0
      %6632 = vmatpush.bf16.msra.mxu0 0
      %6633 = vmatpush.bf16.msra.mxu0 0
      %6634 = vmatpush.bf16.msra.mxu0 0
      %6635 = vmatpush.bf16.msra.mxu0 0
      %6636 = vmatpush.bf16.msra.mxu0 0
      %6637 = vmatpush.bf16.msra.mxu0 %v6628
      %6638 = vmatmul.bf16.gmra.mxu0 %v6424
      %v6639 = vpop.f32.mrf.mxu0
      %v6640 = vadd.f32 0.0, %v6639
      %v6641 = vpop.f32.mrf.mxu0
      %v6642 = vadd.f32 0.0, %v6641
      %6643 = vmatmul.bf16.gmra.mxu0 %v6427
      %v6644 = vpop.f32.mrf.mxu0
      %v6645 = vadd.f32 0.0, %v6644
      %v6646 = vpop.f32.mrf.mxu0
      %v6647 = vadd.f32 0.0, %v6646
      %6648 = vmatmul.bf16.gmra.mxu0 %v6430
      %v6649 = vpop.f32.mrf.mxu0
      %v6650 = vadd.f32 0.0, %v6649
      %v6651 = vpop.f32.mrf.mxu0
      %v6652 = vadd.f32 0.0, %v6651
      %6653 = vmatmul.bf16.gmra.mxu0 %v6433
      %v6654 = vpop.f32.mrf.mxu0
      %v6655 = vadd.f32 0.0, %v6654
      %v6656 = vpop.f32.mrf.mxu0
      %v6657 = vadd.f32 0.0, %v6656
      %6658 = vmatmul.bf16.gmra.mxu0 %v6436
      %v6659 = vpop.f32.mrf.mxu0
      %v6660 = vadd.f32 0.0, %v6659
      %v6661 = vpop.f32.mrf.mxu0
      %v6662 = vadd.f32 0.0, %v6661
      %6663 = vmatmul.bf16.gmra.mxu0 %v6439
      %v6664 = vpop.f32.mrf.mxu0
      %v6665 = vadd.f32 0.0, %v6664
      %v6666 = vpop.f32.mrf.mxu0
      %v6667 = vadd.f32 0.0, %v6666
      %6668 = vmatmul.bf16.gmra.mxu0 %v6442
      %v6669 = vpop.f32.mrf.mxu0
      %v6670 = vadd.f32 0.0, %v6669
      %v6671 = vpop.f32.mrf.mxu0
      %v6672 = vadd.f32 0.0, %v6671
      %6673 = vmatmul.bf16.gmra.mxu0 %v6445
      %v6674 = vpop.f32.mrf.mxu0
      %v6675 = vadd.f32 0.0, %v6674
      %v6676 = vpop.f32.mrf.mxu0
      %v6677 = vadd.f32 0.0, %v6676
      %6678 = vmatmul.bf16.gmra.mxu0 %v6448
      %v6679 = vpop.f32.mrf.mxu0
      %v6680 = vadd.f32 0.0, %v6679
      %v6681 = vpop.f32.mrf.mxu0
      %v6682 = vadd.f32 0.0, %v6681
      %6683 = vmatmul.bf16.gmra.mxu0 %v6451
      %v6684 = vpop.f32.mrf.mxu0
      %v6685 = vadd.f32 0.0, %v6684
      %v6686 = vpop.f32.mrf.mxu0
      %v6687 = vadd.f32 0.0, %v6686
      %6688 = vmatmul.bf16.gmra.mxu0 %v6454
      %v6689 = vpop.f32.mrf.mxu0
      %v6690 = vadd.f32 0.0, %v6689
      %v6691 = vpop.f32.mrf.mxu0
      %v6692 = vadd.f32 0.0, %v6691
      %6693 = vmatmul.bf16.gmra.mxu0 %v6457
      %v6694 = vpop.f32.mrf.mxu0
      %v6695 = vadd.f32 0.0, %v6694
      %v6696 = vpop.f32.mrf.mxu0
      %v6697 = vadd.f32 0.0, %v6696
      %6698 = vmatmul.bf16.gmra.mxu0 %v6460
      %v6699 = vpop.f32.mrf.mxu0
      %v6700 = vadd.f32 0.0, %v6699
      %v6701 = vpop.f32.mrf.mxu0
      %v6702 = vadd.f32 0.0, %v6701
      %6703 = vmatmul.bf16.gmra.mxu0 %v6463
      %v6704 = vpop.f32.mrf.mxu0
      %v6705 = vadd.f32 0.0, %v6704
      %v6706 = vpop.f32.mrf.mxu0
      %v6707 = vadd.f32 0.0, %v6706
      %6708 = vmatmul.bf16.gmra.mxu0 %v6466
      %v6709 = vpop.f32.mrf.mxu0
      %v6710 = vadd.f32 0.0, %v6709
      %v6711 = vpop.f32.mrf.mxu0
      %v6712 = vadd.f32 0.0, %v6711
      %6713 = vmatmul.bf16.gmra.mxu0 %v6469
      %v6714 = vpop.f32.mrf.mxu0
      %v6715 = vadd.f32 0.0, %v6714
      %v6716 = vpop.f32.mrf.mxu0
      %v6717 = vadd.f32 0.0, %v6716
      %6718 = vmatmul.bf16.gmra.mxu0 %v6472
      %v6719 = vpop.f32.mrf.mxu0
      %v6720 = vadd.f32 0.0, %v6719
      %v6721 = vpop.f32.mrf.mxu0
      %v6722 = vadd.f32 0.0, %v6721
      %6723 = vmatmul.bf16.gmra.mxu0 %v6475
      %v6724 = vpop.f32.mrf.mxu0
      %v6725 = vadd.f32 0.0, %v6724
      %v6726 = vpop.f32.mrf.mxu0
      %v6727 = vadd.f32 0.0, %v6726
      %6728 = vmatmul.bf16.gmra.mxu0 %v6478
      %v6729 = vpop.f32.mrf.mxu0
      %v6730 = vadd.f32 0.0, %v6729
      %v6731 = vpop.f32.mrf.mxu0
      %v6732 = vadd.f32 0.0, %v6731
      %6733 = vmatmul.bf16.gmra.mxu0 %v6481
      %v6734 = vpop.f32.mrf.mxu0
      %v6735 = vadd.f32 0.0, %v6734
      %v6736 = vpop.f32.mrf.mxu0
      %v6737 = vadd.f32 0.0, %v6736
      %6738 = vmatmul.bf16.gmra.mxu0 %v6484
      %v6739 = vpop.f32.mrf.mxu0
      %v6740 = vadd.f32 0.0, %v6739
      %v6741 = vpop.f32.mrf.mxu0
      %v6742 = vadd.f32 0.0, %v6741
      %6743 = vmatmul.bf16.gmra.mxu0 %v6487
      %v6744 = vpop.f32.mrf.mxu0
      %v6745 = vadd.f32 0.0, %v6744
      %v6746 = vpop.f32.mrf.mxu0
      %v6747 = vadd.f32 0.0, %v6746
      %6748 = vmatmul.bf16.gmra.mxu0 %v6490
      %v6749 = vpop.f32.mrf.mxu0
      %v6750 = vadd.f32 0.0, %v6749
      %v6751 = vpop.f32.mrf.mxu0
      %v6752 = vadd.f32 0.0, %v6751
      %6753 = vmatmul.bf16.gmra.mxu0 %v6493
      %v6754 = vpop.f32.mrf.mxu0
      %v6755 = vadd.f32 0.0, %v6754
      %v6756 = vpop.f32.mrf.mxu0
      %v6757 = vadd.f32 0.0, %v6756
      %6758 = vmatmul.bf16.gmra.mxu0 %v6496
      %v6759 = vpop.f32.mrf.mxu0
      %v6760 = vadd.f32 0.0, %v6759
      %v6761 = vpop.f32.mrf.mxu0
      %v6762 = vadd.f32 0.0, %v6761
      %6763 = vmatmul.bf16.gmra.mxu0 %v6499
      %v6764 = vpop.f32.mrf.mxu0
      %v6765 = vadd.f32 0.0, %v6764
      %v6766 = vpop.f32.mrf.mxu0
      %v6767 = vadd.f32 0.0, %v6766
      %6768 = vmatmul.bf16.gmra.mxu0 %v6502
      %v6769 = vpop.f32.mrf.mxu0
      %v6770 = vadd.f32 0.0, %v6769
      %v6771 = vpop.f32.mrf.mxu0
      %v6772 = vadd.f32 0.0, %v6771
      %6773 = vmatmul.bf16.gmra.mxu0 %v6505
      %v6774 = vpop.f32.mrf.mxu0
      %v6775 = vadd.f32 0.0, %v6774
      %v6776 = vpop.f32.mrf.mxu0
      %v6777 = vadd.f32 0.0, %v6776
      %6778 = vmatmul.bf16.gmra.mxu0 %v6508
      %v6779 = vpop.f32.mrf.mxu0
      %v6780 = vadd.f32 0.0, %v6779
      %v6781 = vpop.f32.mrf.mxu0
      %v6782 = vadd.f32 0.0, %v6781
      %6783 = vmatmul.bf16.gmra.mxu0 %v6511
      %v6784 = vpop.f32.mrf.mxu0
      %v6785 = vadd.f32 0.0, %v6784
      %v6786 = vpop.f32.mrf.mxu0
      %v6787 = vadd.f32 0.0, %v6786
      %6788 = vmatmul.bf16.gmra.mxu0 %v6514
      %v6789 = vpop.f32.mrf.mxu0
      %v6790 = vadd.f32 0.0, %v6789
      %v6791 = vpop.f32.mrf.mxu0
      %v6792 = vadd.f32 0.0, %v6791
      %6793 = vmatmul.bf16.gmra.mxu0 %v6517
      %v6794 = vpop.f32.mrf.mxu0
      %v6795 = vadd.f32 0.0, %v6794
      %v6796 = vpop.f32.mrf.mxu0
      %v6797 = vadd.f32 0.0, %v6796
      %6798 = vmatmul.bf16.gmra.mxu0 %v6520
      %v6799 = vpop.f32.mrf.mxu0
      %v6800 = vadd.f32 0.0, %v6799
      %v6801 = vpop.f32.mrf.mxu0
      %v6802 = vadd.f32 0.0, %v6801
      %6803 = vmatmul.bf16.gmra.mxu0 %v6523
      %v6804 = vpop.f32.mrf.mxu0
      %v6805 = vadd.f32 0.0, %v6804
      %v6806 = vpop.f32.mrf.mxu0
      %v6807 = vadd.f32 0.0, %v6806
      %6808 = vmatmul.bf16.gmra.mxu0 %v6526
      %v6809 = vpop.f32.mrf.mxu0
      %v6810 = vadd.f32 0.0, %v6809
      %v6811 = vpop.f32.mrf.mxu0
      %v6812 = vadd.f32 0.0, %v6811
      %6813 = vmatmul.bf16.gmra.mxu0 %v6529
      %v6814 = vpop.f32.mrf.mxu0
      %v6815 = vadd.f32 0.0, %v6814
      %v6816 = vpop.f32.mrf.mxu0
      %v6817 = vadd.f32 0.0, %v6816
      %6818 = vmatmul.bf16.gmra.mxu0 %v6532
      %v6819 = vpop.f32.mrf.mxu0
      %v6820 = vadd.f32 0.0, %v6819
      %v6821 = vpop.f32.mrf.mxu0
      %v6822 = vadd.f32 0.0, %v6821
      %6823 = vmatmul.bf16.gmra.mxu0 %v6535
      %v6824 = vpop.f32.mrf.mxu0
      %v6825 = vadd.f32 0.0, %v6824
      %v6826 = vpop.f32.mrf.mxu0
      %v6827 = vadd.f32 0.0, %v6826
      %6828 = vmatmul.bf16.gmra.mxu0 %v6538
      %v6829 = vpop.f32.mrf.mxu0
      %v6830 = vadd.f32 0.0, %v6829
      %v6831 = vpop.f32.mrf.mxu0
      %v6832 = vadd.f32 0.0, %v6831
      %6833 = vmatmul.bf16.gmra.mxu0 %v6541
      %v6834 = vpop.f32.mrf.mxu0
      %v6835 = vadd.f32 0.0, %v6834
      %v6836 = vpop.f32.mrf.mxu0
      %v6837 = vadd.f32 0.0, %v6836
      %6838 = vmatmul.bf16.gmra.mxu0 %v6544
      %v6839 = vpop.f32.mrf.mxu0
      %v6840 = vadd.f32 0.0, %v6839
      %v6841 = vpop.f32.mrf.mxu0
      %v6842 = vadd.f32 0.0, %v6841
      %6843 = vmatmul.bf16.gmra.mxu0 %v6547
      %v6844 = vpop.f32.mrf.mxu0
      %v6845 = vadd.f32 0.0, %v6844
      %v6846 = vpop.f32.mrf.mxu0
      %v6847 = vadd.f32 0.0, %v6846
      %6848 = vmatmul.bf16.gmra.mxu0 %v6550
      %v6849 = vpop.f32.mrf.mxu0
      %v6850 = vadd.f32 0.0, %v6849
      %v6851 = vpop.f32.mrf.mxu0
      %v6852 = vadd.f32 0.0, %v6851
      %6853 = vmatmul.bf16.gmra.mxu0 %v6553
      %v6854 = vpop.f32.mrf.mxu0
      %v6855 = vadd.f32 0.0, %v6854
      %v6856 = vpop.f32.mrf.mxu0
      %v6857 = vadd.f32 0.0, %v6856
      %6858 = vmatmul.bf16.gmra.mxu0 %v6556
      %v6859 = vpop.f32.mrf.mxu0
      %v6860 = vadd.f32 0.0, %v6859
      %v6861 = vpop.f32.mrf.mxu0
      %v6862 = vadd.f32 0.0, %v6861
      %6863 = vmatmul.bf16.gmra.mxu0 %v6559
      %v6864 = vpop.f32.mrf.mxu0
      %v6865 = vadd.f32 0.0, %v6864
      %v6866 = vpop.f32.mrf.mxu0
      %v6867 = vadd.f32 0.0, %v6866
      %6868 = vmatmul.bf16.gmra.mxu0 %v6562
      %v6869 = vpop.f32.mrf.mxu0
      %v6870 = vadd.f32 0.0, %v6869
      %v6871 = vpop.f32.mrf.mxu0
      %v6872 = vadd.f32 0.0, %v6871
      %6873 = vmatmul.bf16.gmra.mxu0 %v6565
      %v6874 = vpop.f32.mrf.mxu0
      %v6875 = vadd.f32 0.0, %v6874
      %v6876 = vpop.f32.mrf.mxu0
      %v6877 = vadd.f32 0.0, %v6876
      %6878 = vmatmul.bf16.gmra.mxu0 %v6568
      %v6879 = vpop.f32.mrf.mxu0
      %v6880 = vadd.f32 0.0, %v6879
      %v6881 = vpop.f32.mrf.mxu0
      %v6882 = vadd.f32 0.0, %v6881
      %6883 = vmatmul.bf16.gmra.mxu0 %v6571
      %v6884 = vpop.f32.mrf.mxu0
      %v6885 = vadd.f32 0.0, %v6884
      %v6886 = vpop.f32.mrf.mxu0
      %v6887 = vadd.f32 0.0, %v6886
      %6888 = vmatmul.bf16.gmra.mxu0 %v6574
      %v6889 = vpop.f32.mrf.mxu0
      %v6890 = vadd.f32 0.0, %v6889
      %v6891 = vpop.f32.mrf.mxu0
      %v6892 = vadd.f32 0.0, %v6891
      %6893 = vmatmul.bf16.gmra.mxu0 %v6577
      %v6894 = vpop.f32.mrf.mxu0
      %v6895 = vadd.f32 0.0, %v6894
      %v6896 = vpop.f32.mrf.mxu0
      %v6897 = vadd.f32 0.0, %v6896
      %6898 = vmatmul.bf16.gmra.mxu0 %v6580
      %v6899 = vpop.f32.mrf.mxu0
      %v6900 = vadd.f32 0.0, %v6899
      %v6901 = vpop.f32.mrf.mxu0
      %v6902 = vadd.f32 0.0, %v6901
      %6903 = vmatmul.bf16.gmra.mxu0 %v6583
      %v6904 = vpop.f32.mrf.mxu0
      %v6905 = vadd.f32 0.0, %v6904
      %v6906 = vpop.f32.mrf.mxu0
      %v6907 = vadd.f32 0.0, %v6906
      %6908 = vmatmul.bf16.gmra.mxu0 %v6586
      %v6909 = vpop.f32.mrf.mxu0
      %v6910 = vadd.f32 0.0, %v6909
      %v6911 = vpop.f32.mrf.mxu0
      %v6912 = vadd.f32 0.0, %v6911
      %6913 = vmatmul.bf16.gmra.mxu0 %v6589
      %v6914 = vpop.f32.mrf.mxu0
      %v6915 = vadd.f32 0.0, %v6914
      %v6916 = vpop.f32.mrf.mxu0
      %v6917 = vadd.f32 0.0, %v6916
      %6918 = vmatmul.bf16.gmra.mxu0 %v6592
      %v6919 = vpop.f32.mrf.mxu0
      %v6920 = vadd.f32 0.0, %v6919
      %v6921 = vpop.f32.mrf.mxu0
      %v6922 = vadd.f32 0.0, %v6921
      %6923 = vmatmul.bf16.gmra.mxu0 %v6595
      %v6924 = vpop.f32.mrf.mxu0
      %v6925 = vadd.f32 0.0, %v6924
      %v6926 = vpop.f32.mrf.mxu0
      %v6927 = vadd.f32 0.0, %v6926
      %6928 = vmatmul.bf16.gmra.mxu0 %v6598
      %v6929 = vpop.f32.mrf.mxu0
      %v6930 = vadd.f32 0.0, %v6929
      %v6931 = vpop.f32.mrf.mxu0
      %v6932 = vadd.f32 0.0, %v6931
      %6933 = vmatmul.bf16.gmra.mxu0 %v6601
      %v6934 = vpop.f32.mrf.mxu0
      %v6935 = vadd.f32 0.0, %v6934
      %v6936 = vpop.f32.mrf.mxu0
      %v6937 = vadd.f32 0.0, %v6936
      %6938 = vmatmul.bf16.gmra.mxu0 %v6604
      %v6939 = vpop.f32.mrf.mxu0
      %v6940 = vadd.f32 0.0, %v6939
      %v6941 = vpop.f32.mrf.mxu0
      %v6942 = vadd.f32 0.0, %v6941
      %6943 = vmatmul.bf16.gmra.mxu0 %v6607
      %v6944 = vpop.f32.mrf.mxu0
      %v6945 = vadd.f32 0.0, %v6944
      %v6946 = vpop.f32.mrf.mxu0
      %v6947 = vadd.f32 0.0, %v6946
      %6948 = vmatmul.bf16.gmra.mxu0 %v6610
      %v6949 = vpop.f32.mrf.mxu0
      %v6950 = vadd.f32 0.0, %v6949
      %v6951 = vpop.f32.mrf.mxu0
      %v6952 = vadd.f32 0.0, %v6951
      %6953 = vmatmul.bf16.gmra.mxu0 %v6613
      %v6954 = vpop.f32.mrf.mxu0
      %v6955 = vadd.f32 0.0, %v6954
      %v6956 = vpop.f32.mrf.mxu0
      %v6957 = vadd.f32 0.0, %v6956
      %6958 = vmatmul.bf16.gmra.mxu0 %v6616
      %v6959 = vpop.f32.mrf.mxu0
      %v6960 = vadd.f32 0.0, %v6959
      %v6961 = vpop.f32.mrf.mxu0
      %v6962 = vadd.f32 0.0, %v6961
      %6963 = vmatmul.bf16.gmra.mxu0 %v6619
      %v6964 = vpop.f32.mrf.mxu0
      %v6965 = vadd.f32 0.0, %v6964
      %v6966 = vpop.f32.mrf.mxu0
      %v6967 = vadd.f32 0.0, %v6966
      %6968 = vmatmul.bf16.gmra.mxu0 %v6622
      %v6969 = vpop.f32.mrf.mxu0
      %v6970 = vadd.f32 0.0, %v6969
      %v6971 = vpop.f32.mrf.mxu0
      %v6972 = vadd.f32 0.0, %v6971
      %6973 = vmatmul.bf16.gmra.mxu0 %v6625
      %v6974 = vpop.f32.mrf.mxu0
      %v6975 = vadd.f32 0.0, %v6974
      %v6976 = vpop.f32.mrf.mxu0
      %v6977 = vadd.f32 0.0, %v6976
      %6978 = vdwg.mxu0
      %v6979 = vadd.f32 %v6081, %v6640
      %v6980 = vadd.f32 %v6082, %v6642
      %v6981 = vadd.f32 %v6083, %v6645
      %v6982 = vadd.f32 %v6084, %v6647
      %v6983 = vadd.f32 %v6085, %v6650
      %v6984 = vadd.f32 %v6086, %v6652
      %v6985 = vadd.f32 %v6087, %v6655
      %v6986 = vadd.f32 %v6088, %v6657
      %v6987 = vadd.f32 %v6089, %v6660
      %v6988 = vadd.f32 %v6090, %v6662
      %v6989 = vadd.f32 %v6091, %v6665
      %v6990 = vadd.f32 %v6092, %v6667
      %v6991 = vadd.f32 %v6093, %v6670
      %v6992 = vadd.f32 %v6094, %v6672
      %v6993 = vadd.f32 %v6095, %v6675
      %v6994 = vadd.f32 %v6096, %v6677
      %v6995 = vadd.f32 %v6097, %v6680
      %v6996 = vadd.f32 %v6098, %v6682
      %v6997 = vadd.f32 %v6099, %v6685
      %v6998 = vadd.f32 %v6100, %v6687
      %v6999 = vadd.f32 %v6101, %v6690
      %v7000 = vadd.f32 %v6102, %v6692
      %v7001 = vadd.f32 %v6103, %v6695
      %v7002 = vadd.f32 %v6104, %v6697
      %v7003 = vadd.f32 %v6105, %v6700
      %v7004 = vadd.f32 %v6106, %v6702
      %v7005 = vadd.f32 %v6107, %v6705
      %v7006 = vadd.f32 %v6108, %v6707
      %v7007 = vadd.f32 %v6109, %v6710
      %v7008 = vadd.f32 %v6110, %v6712
      %v7009 = vadd.f32 %v6111, %v6715
      %v7010 = vadd.f32 %v6112, %v6717
      %v7011 = vadd.f32 %v6113, %v6720
      %v7012 = vadd.f32 %v6114, %v6722
      %v7013 = vadd.f32 %v6115, %v6725
      %v7014 = vadd.f32 %v6116, %v6727
      %v7015 = vadd.f32 %v6117, %v6730
      %v7016 = vadd.f32 %v6118, %v6732
      %v7017 = vadd.f32 %v6119, %v6735
      %v7018 = vadd.f32 %v6120, %v6737
      %v7019 = vadd.f32 %v6121, %v6740
      %v7020 = vadd.f32 %v6122, %v6742
      %v7021 = vadd.f32 %v6123, %v6745
      %v7022 = vadd.f32 %v6124, %v6747
      %v7023 = vadd.f32 %v6125, %v6750
      %v7024 = vadd.f32 %v6126, %v6752
      %v7025 = vadd.f32 %v6127, %v6755
      %v7026 = vadd.f32 %v6128, %v6757
      %v7027 = vadd.f32 %v6129, %v6760
      %v7028 = vadd.f32 %v6130, %v6762
      %v7029 = vadd.f32 %v6131, %v6765
      %v7030 = vadd.f32 %v6132, %v6767
      %v7031 = vadd.f32 %v6133, %v6770
      %v7032 = vadd.f32 %v6134, %v6772
      %v7033 = vadd.f32 %v6135, %v6775
      %v7034 = vadd.f32 %v6136, %v6777
      %v7035 = vadd.f32 %v6137, %v6780
      %v7036 = vadd.f32 %v6138, %v6782
      %v7037 = vadd.f32 %v6139, %v6785
      %v7038 = vadd.f32 %v6140, %v6787
      %v7039 = vadd.f32 %v6141, %v6790
      %v7040 = vadd.f32 %v6142, %v6792
      %v7041 = vadd.f32 %v6143, %v6795
      %v7042 = vadd.f32 %v6144, %v6797
      %v7043 = vadd.f32 %v6145, %v6800
      %v7044 = vadd.f32 %v6146, %v6802
      %v7045 = vadd.f32 %v6147, %v6805
      %v7046 = vadd.f32 %v6148, %v6807
      %v7047 = vadd.f32 %v6149, %v6810
      %v7048 = vadd.f32 %v6150, %v6812
      %v7049 = vadd.f32 %v6151, %v6815
      %v7050 = vadd.f32 %v6152, %v6817
      %v7051 = vadd.f32 %v6153, %v6820
      %v7052 = vadd.f32 %v6154, %v6822
      %v7053 = vadd.f32 %v6155, %v6825
      %v7054 = vadd.f32 %v6156, %v6827
      %v7055 = vadd.f32 %v6157, %v6830
      %v7056 = vadd.f32 %v6158, %v6832
      %v7057 = vadd.f32 %v6159, %v6835
      %v7058 = vadd.f32 %v6160, %v6837
      %v7059 = vadd.f32 %v6161, %v6840
      %v7060 = vadd.f32 %v6162, %v6842
      %v7061 = vadd.f32 %v6163, %v6845
      %v7062 = vadd.f32 %v6164, %v6847
      %v7063 = vadd.f32 %v6165, %v6850
      %v7064 = vadd.f32 %v6166, %v6852
      %v7065 = vadd.f32 %v6167, %v6855
      %v7066 = vadd.f32 %v6168, %v6857
      %v7067 = vadd.f32 %v6169, %v6860
      %v7068 = vadd.f32 %v6170, %v6862
      %v7069 = vadd.f32 %v6171, %v6865
      %v7070 = vadd.f32 %v6172, %v6867
      %v7071 = vadd.f32 %v6173, %v6870
      %v7072 = vadd.f32 %v6174, %v6872
      %v7073 = vadd.f32 %v6175, %v6875
      %v7074 = vadd.f32 %v6176, %v6877
      %v7075 = vadd.f32 %v6177, %v6880
      %v7076 = vadd.f32 %v6178, %v6882
      %v7077 = vadd.f32 %v6179, %v6885
      %v7078 = vadd.f32 %v6180, %v6887
      %v7079 = vadd.f32 %v6181, %v6890
      %v7080 = vadd.f32 %v6182, %v6892
      %v7081 = vadd.f32 %v6183, %v6895
      %v7082 = vadd.f32 %v6184, %v6897
      %v7083 = vadd.f32 %v6185, %v6900
      %v7084 = vadd.f32 %v6186, %v6902
      %v7085 = vadd.f32 %v6187, %v6905
      %v7086 = vadd.f32 %v6188, %v6907
      %v7087 = vadd.f32 %v6189, %v6910
      %v7088 = vadd.f32 %v6190, %v6912
      %v7089 = vadd.f32 %v6191, %v6915
      %v7090 = vadd.f32 %v6192, %v6917
      %v7091 = vadd.f32 %v6193, %v6920
      %v7092 = vadd.f32 %v6194, %v6922
      %v7093 = vadd.f32 %v6195, %v6925
      %v7094 = vadd.f32 %v6196, %v6927
      %v7095 = vadd.f32 %v6197, %v6930
      %v7096 = vadd.f32 %v6198, %v6932
      %v7097 = vadd.f32 %v6199, %v6935
      %v7098 = vadd.f32 %v6200, %v6937
      %v7099 = vadd.f32 %v6201, %v6940
      %v7100 = vadd.f32 %v6202, %v6942
      %v7101 = vadd.f32 %v6203, %v6945
      %v7102 = vadd.f32 %v6204, %v6947
      %v7103 = vadd.f32 %v6205, %v6950
      %v7104 = vadd.f32 %v6206, %v6952
      %v7105 = vadd.f32 %v6207, %v6955
      %v7106 = vadd.f32 %v6208, %v6957
      %v7107 = vadd.f32 %v6209, %v6960
      %v7108 = vadd.f32 %v6210, %v6962
      %v7109 = vadd.f32 %v6211, %v6965
      %v7110 = vadd.f32 %v6212, %v6967
      %v7111 = vadd.f32 %v6213, %v6970
      %v7112 = vadd.f32 %v6214, %v6972
      %v7113 = vadd.f32 %v6215, %v6975
      %v7114 = vadd.f32 %v6216, %v6977
      %v7115 = vld [vmem:[%s192 + $0x46] sm:$0xff]
      %v7116 = vld [vmem:[%s192 + $0x4e] sm:$0xff]
      %v7117 = vld [vmem:[%s192 + $0x56] sm:$0xff]
      %v7118 = vld [vmem:[%s192 + $0x5e] sm:$0xff]
      %v7119 = vld [vmem:[%s192 + $0x66] sm:$0xff]
      %v7120 = vld [vmem:[%s192 + $0x6e] sm:$0xff]
      %v7121 = vld [vmem:[%s192 + $0x76] sm:$0xff]
      %v7122 = vld [vmem:[%s192 + $0x7e] sm:$0xff]
      %v7123 = vld [vmem:[%s192 + $0x86] sm:$0xff]
      %v7124 = vld [vmem:[%s192 + $0x8e] sm:$0xff]
      %v7125 = vld [vmem:[%s192 + $0x96] sm:$0xff]
      %v7126 = vld [vmem:[%s192 + $0x9e] sm:$0xff]
      %v7127 = vld [vmem:[%s192 + $0xa6] sm:$0xff]
      %v7128 = vld [vmem:[%s192 + $0xae] sm:$0xff]
      %v7129 = vld [vmem:[%s192 + $0xb6] sm:$0xff]
      %v7130 = vld [vmem:[%s192 + $0xbe] sm:$0xff]
      %v7131 = vld [vmem:[%s192 + $0xc6] sm:$0xff]
      %v7132 = vld [vmem:[%s192 + $0xce] sm:$0xff]
      %v7133 = vld [vmem:[%s192 + $0xd6] sm:$0xff]
      %v7134 = vld [vmem:[%s192 + $0xde] sm:$0xff]
      %v7135 = vld [vmem:[%s192 + $0xe6] sm:$0xff]
      %v7136 = vld [vmem:[%s192 + $0xee] sm:$0xff]
      %v7137 = vld [vmem:[%s192 + $0xf6] sm:$0xff]
      %v7138 = vld [vmem:[%s192 + $0xfe] sm:$0xff]
      %v7139 = vld [vmem:[%s192 + $0x106] sm:$0xff]
      %v7140 = vld [vmem:[%s192 + $0x10e] sm:$0xff]
      %v7141 = vld [vmem:[%s192 + $0x116] sm:$0xff]
      %v7142 = vld [vmem:[%s192 + $0x11e] sm:$0xff]
      %v7143 = vld [vmem:[%s192 + $0x126] sm:$0xff]
      %v7144 = vld [vmem:[%s192 + $0x12e] sm:$0xff]
      %v7145 = vld [vmem:[%s192 + $0x136] sm:$0xff]
      %v7146 = vld [vmem:[%s192 + $0x13e] sm:$0xff]
      %v7147 = vld [vmem:[%s192 + $0x146] sm:$0xff]
      %v7148 = vld [vmem:[%s192 + $0x14e] sm:$0xff]
      %v7149 = vld [vmem:[%s192 + $0x156] sm:$0xff]
      %v7150 = vld [vmem:[%s192 + $0x15e] sm:$0xff]
      %v7151 = vld [vmem:[%s192 + $0x166] sm:$0xff]
      %v7152 = vld [vmem:[%s192 + $0x16e] sm:$0xff]
      %v7153 = vld [vmem:[%s192 + $0x176] sm:$0xff]
      %v7154 = vld [vmem:[%s192 + $0x17e] sm:$0xff]
      %v7155 = vld [vmem:[%s192 + $0x186] sm:$0xff]
      %v7156 = vld [vmem:[%s192 + $0x18e] sm:$0xff]
      %v7157 = vld [vmem:[%s192 + $0x196] sm:$0xff]
      %v7158 = vld [vmem:[%s192 + $0x19e] sm:$0xff]
      %v7159 = vld [vmem:[%s192 + $0x1a6] sm:$0xff]
      %v7160 = vld [vmem:[%s192 + $0x1ae] sm:$0xff]
      %v7161 = vld [vmem:[%s192 + $0x1b6] sm:$0xff]
      %v7162 = vld [vmem:[%s192 + $0x1be] sm:$0xff]
      %v7163 = vld [vmem:[%s192 + $0x1c6] sm:$0xff]
      %v7164 = vld [vmem:[%s192 + $0x1ce] sm:$0xff]
      %v7165 = vld [vmem:[%s192 + $0x1d6] sm:$0xff]
      %v7166 = vld [vmem:[%s192 + $0x1de] sm:$0xff]
      %v7167 = vld [vmem:[%s192 + $0x1e6] sm:$0xff]
      %v7168 = vld [vmem:[%s192 + $0x1ee] sm:$0xff]
      %v7169 = vld [vmem:[%s192 + $0x1f6] sm:$0xff]
      %v7170 = vld [vmem:[%s192 + $0x1fe] sm:$0xff]
      %v7171 = vld [vmem:[%s192 + $0x206] sm:$0xff]
      %v7172 = vld [vmem:[%s192 + $0x20e] sm:$0xff]
      %v7173 = vld [vmem:[%s192 + $0x216] sm:$0xff]
      %v7174 = vld [vmem:[%s192 + $0x21e] sm:$0xff]
      %v7175 = vld [vmem:[%s192 + $0x226] sm:$0xff]
      %v7176 = vld [vmem:[%s192 + $0x22e] sm:$0xff]
      %v7177 = vld [vmem:[%s192 + $0x236] sm:$0xff]
      %v7178 = vld [vmem:[%s192 + $0x23e] sm:$0xff]
      %v7179 = vld [vmem:[%s192 + $0x246] sm:$0xff]
      %v7180 = vld [vmem:[%s192 + $0x24e] sm:$0xff]
      %v7181 = vld [vmem:[%s192 + $0x256] sm:$0xff]
      %v7182 = vld [vmem:[%s192 + $0x25e] sm:$0xff]
      %v7183 = vld [vmem:[%s192 + $0x266] sm:$0xff]
      %v7184 = vld [vmem:[%s192 + $0x26e] sm:$0xff]
      %v7185 = vld [vmem:[%s192 + $0x276] sm:$0xff]
      %v7186 = vld [vmem:[%s192 + $0x27e] sm:$0xff]
      %v7187 = vld [vmem:[%s192 + $0x286] sm:$0xff]
      %v7188 = vld [vmem:[%s192 + $0x28e] sm:$0xff]
      %v7189 = vld [vmem:[%s192 + $0x296] sm:$0xff]
      %v7190 = vld [vmem:[%s192 + $0x29e] sm:$0xff]
      %v7191 = vld [vmem:[%s192 + $0x2a6] sm:$0xff]
      %v7192 = vld [vmem:[%s192 + $0x2ae] sm:$0xff]
      %v7193 = vld [vmem:[%s192 + $0x2b6] sm:$0xff]
      %v7194 = vld [vmem:[%s192 + $0x2be] sm:$0xff]
      %v7195 = vld [vmem:[%s192 + $0x2c6] sm:$0xff]
      %v7196 = vld [vmem:[%s192 + $0x2ce] sm:$0xff]
      %v7197 = vld [vmem:[%s192 + $0x2d6] sm:$0xff]
      %v7198 = vld [vmem:[%s192 + $0x2de] sm:$0xff]
      %v7199 = vld [vmem:[%s192 + $0x2e6] sm:$0xff]
      %v7200 = vld [vmem:[%s192 + $0x2ee] sm:$0xff]
      %v7201 = vld [vmem:[%s192 + $0x2f6] sm:$0xff]
      %v7202 = vld [vmem:[%s192 + $0x2fe] sm:$0xff]
      %v7203 = vld [vmem:[%s192 + $0x306] sm:$0xff]
      %v7204 = vld [vmem:[%s192 + $0x30e] sm:$0xff]
      %v7205 = vld [vmem:[%s192 + $0x316] sm:$0xff]
      %v7206 = vld [vmem:[%s192 + $0x31e] sm:$0xff]
      %v7207 = vld [vmem:[%s192 + $0x326] sm:$0xff]
      %v7208 = vld [vmem:[%s192 + $0x32e] sm:$0xff]
      %v7209 = vld [vmem:[%s192 + $0x336] sm:$0xff]
      %v7210 = vld [vmem:[%s192 + $0x33e] sm:$0xff]
      %v7211 = vld [vmem:[%s192 + $0x346] sm:$0xff]
      %v7212 = vld [vmem:[%s192 + $0x34e] sm:$0xff]
      %v7213 = vld [vmem:[%s192 + $0x356] sm:$0xff]
      %v7214 = vld [vmem:[%s192 + $0x35e] sm:$0xff]
      %v7215 = vld [vmem:[%s192 + $0x366] sm:$0xff]
      %v7216 = vld [vmem:[%s192 + $0x36e] sm:$0xff]
      %v7217 = vld [vmem:[%s192 + $0x376] sm:$0xff]
      %v7218 = vld [vmem:[%s192 + $0x37e] sm:$0xff]
      %v7219 = vld [vmem:[%s192 + $0x386] sm:$0xff]
      %v7220 = vld [vmem:[%s192 + $0x38e] sm:$0xff]
      %v7221 = vld [vmem:[%s192 + $0x396] sm:$0xff]
      %v7222 = vld [vmem:[%s192 + $0x39e] sm:$0xff]
      %v7223 = vld [vmem:[%s192 + $0x3a6] sm:$0xff]
      %v7224 = vld [vmem:[%s192 + $0x3ae] sm:$0xff]
      %v7225 = vld [vmem:[%s192 + $0x3b6] sm:$0xff]
      %v7226 = vld [vmem:[%s192 + $0x3be] sm:$0xff]
      %v7227 = vld [vmem:[%s192 + $0x3c6] sm:$0xff]
      %v7228 = vld [vmem:[%s192 + $0x3ce] sm:$0xff]
      %v7229 = vld [vmem:[%s192 + $0x3d6] sm:$0xff]
      %v7230 = vld [vmem:[%s192 + $0x3de] sm:$0xff]
      %v7231 = vld [vmem:[%s192 + $0x3e6] sm:$0xff]
      %v7232 = vld [vmem:[%s192 + $0x3ee] sm:$0xff]
      %v7233 = vld [vmem:[%s192 + $0x3f6] sm:$0xff]
      %v7234 = vld [vmem:[%s192 + $0x3fe] sm:$0xff]
      %v7235 = vld [vmem:[%s192 + $0x406] sm:$0xff]
      %v7236 = vld [vmem:[%s192 + $0x40e] sm:$0xff]
      %v7237 = vld [vmem:[%s192 + $0x416] sm:$0xff]
      %v7238 = vld [vmem:[%s192 + $0x41e] sm:$0xff]
      %v7239 = vld [vmem:[%s192 + $0x426] sm:$0xff]
      %v7240 = vld [vmem:[%s192 + $0x42e] sm:$0xff]
      %v7241 = vld [vmem:[%s192 + $0x436] sm:$0xff]
      %v7242 = vld [vmem:[%s192 + $0x43e] sm:$0xff]
      %v7243 = vld [vmem:[%s192 + $0x446] sm:$0xff]
      %v7244 = vld [vmem:[%s192 + $0x44e] sm:$0xff]
      %v7245 = vld [vmem:[%s192 + $0x456] sm:$0xff]
      %v7246 = vld [vmem:[%s192 + $0x45e] sm:$0xff]
      %v7247 = vld [vmem:[%s192 + $0x466] sm:$0xff]
      %v7248 = vld [vmem:[%s192 + $0x46e] sm:$0xff]
      %v7249 = vld [vmem:[%s192 + $0x476] sm:$0xff]
      %v7250 = vld [vmem:[%s192 + $0x47e] sm:$0xff]
      %v7251 = vpack.c.bf16 %v7116, %v7115
      %v7252 = vpack.c.bf16 %v7118, %v7117
      %v7253 = vpack.c.bf16 %v7120, %v7119
      %v7254 = vpack.c.bf16 %v7122, %v7121
      %v7255 = vpack.c.bf16 %v7124, %v7123
      %v7256 = vpack.c.bf16 %v7126, %v7125
      %v7257 = vpack.c.bf16 %v7128, %v7127
      %v7258 = vpack.c.bf16 %v7130, %v7129
      %v7259 = vpack.c.bf16 %v7132, %v7131
      %v7260 = vpack.c.bf16 %v7134, %v7133
      %v7261 = vpack.c.bf16 %v7136, %v7135
      %v7262 = vpack.c.bf16 %v7138, %v7137
      %v7263 = vpack.c.bf16 %v7140, %v7139
      %v7264 = vpack.c.bf16 %v7142, %v7141
      %v7265 = vpack.c.bf16 %v7144, %v7143
      %v7266 = vpack.c.bf16 %v7146, %v7145
      %v7267 = vpack.c.bf16 %v7148, %v7147
      %v7268 = vpack.c.bf16 %v7150, %v7149
      %v7269 = vpack.c.bf16 %v7152, %v7151
      %v7270 = vpack.c.bf16 %v7154, %v7153
      %v7271 = vpack.c.bf16 %v7156, %v7155
      %v7272 = vpack.c.bf16 %v7158, %v7157
      %v7273 = vpack.c.bf16 %v7160, %v7159
      %v7274 = vpack.c.bf16 %v7162, %v7161
      %v7275 = vpack.c.bf16 %v7164, %v7163
      %v7276 = vpack.c.bf16 %v7166, %v7165
      %v7277 = vpack.c.bf16 %v7168, %v7167
      %v7278 = vpack.c.bf16 %v7170, %v7169
      %v7279 = vpack.c.bf16 %v7172, %v7171
      %v7280 = vpack.c.bf16 %v7174, %v7173
      %v7281 = vpack.c.bf16 %v7176, %v7175
      %v7282 = vpack.c.bf16 %v7178, %v7177
      %v7283 = vpack.c.bf16 %v7180, %v7179
      %v7284 = vpack.c.bf16 %v7182, %v7181
      %v7285 = vpack.c.bf16 %v7184, %v7183
      %v7286 = vpack.c.bf16 %v7186, %v7185
      %v7287 = vpack.c.bf16 %v7188, %v7187
      %v7288 = vpack.c.bf16 %v7190, %v7189
      %v7289 = vpack.c.bf16 %v7192, %v7191
      %v7290 = vpack.c.bf16 %v7194, %v7193
      %v7291 = vpack.c.bf16 %v7196, %v7195
      %v7292 = vpack.c.bf16 %v7198, %v7197
      %v7293 = vpack.c.bf16 %v7200, %v7199
      %v7294 = vpack.c.bf16 %v7202, %v7201
      %v7295 = vpack.c.bf16 %v7204, %v7203
      %v7296 = vpack.c.bf16 %v7206, %v7205
      %v7297 = vpack.c.bf16 %v7208, %v7207
      %v7298 = vpack.c.bf16 %v7210, %v7209
      %v7299 = vpack.c.bf16 %v7212, %v7211
      %v7300 = vpack.c.bf16 %v7214, %v7213
      %v7301 = vpack.c.bf16 %v7216, %v7215
      %v7302 = vpack.c.bf16 %v7218, %v7217
      %v7303 = vpack.c.bf16 %v7220, %v7219
      %v7304 = vpack.c.bf16 %v7222, %v7221
      %v7305 = vpack.c.bf16 %v7224, %v7223
      %v7306 = vpack.c.bf16 %v7226, %v7225
      %v7307 = vpack.c.bf16 %v7228, %v7227
      %v7308 = vpack.c.bf16 %v7230, %v7229
      %v7309 = vpack.c.bf16 %v7232, %v7231
      %v7310 = vpack.c.bf16 %v7234, %v7233
      %v7311 = vpack.c.bf16 %v7236, %v7235
      %v7312 = vpack.c.bf16 %v7238, %v7237
      %v7313 = vpack.c.bf16 %v7240, %v7239
      %v7314 = vpack.c.bf16 %v7242, %v7241
      %v7315 = vpack.c.bf16 %v7244, %v7243
      %v7316 = vpack.c.bf16 %v7246, %v7245
      %v7317 = vpack.c.bf16 %v7248, %v7247
      %v7318 = vpack.c.bf16 %v7250, %v7249
      %s7319 = scalar_lea.vmem %s1, 16
      %v7320 = vld [vmem:[%s7319] sm:$0x3]
      %v7322 = vsel %vm610, %v7251, 0
      %v7325 = vsel %vm610, %v7252, 0
      %v7328 = vsel %vm610, %v7253, 0
      %v7331 = vsel %vm610, %v7254, 0
      %v7334 = vsel %vm610, %v7255, 0
      %v7337 = vsel %vm610, %v7256, 0
      %v7340 = vsel %vm610, %v7257, 0
      %v7343 = vsel %vm610, %v7258, 0
      %v7346 = vsel %vm610, %v7259, 0
      %v7349 = vsel %vm610, %v7260, 0
      %v7352 = vsel %vm610, %v7261, 0
      %v7355 = vsel %vm610, %v7262, 0
      %v7358 = vsel %vm610, %v7263, 0
      %v7361 = vsel %vm610, %v7264, 0
      %v7364 = vsel %vm610, %v7265, 0
      %v7367 = vsel %vm610, %v7266, 0
      %v7370 = vsel %vm610, %v7267, 0
      %v7373 = vsel %vm610, %v7268, 0
      %v7376 = vsel %vm610, %v7269, 0
      %v7379 = vsel %vm610, %v7270, 0
      %v7382 = vsel %vm610, %v7271, 0
      %v7385 = vsel %vm610, %v7272, 0
      %v7388 = vsel %vm610, %v7273, 0
      %v7391 = vsel %vm610, %v7274, 0
      %v7394 = vsel %vm610, %v7275, 0
      %v7397 = vsel %vm610, %v7276, 0
      %v7400 = vsel %vm610, %v7277, 0
      %v7403 = vsel %vm610, %v7278, 0
      %v7406 = vsel %vm610, %v7279, 0
      %v7409 = vsel %vm610, %v7280, 0
      %v7412 = vsel %vm610, %v7281, 0
      %v7415 = vsel %vm610, %v7282, 0
      %v7418 = vsel %vm610, %v7283, 0
      %v7421 = vsel %vm610, %v7284, 0
      %v7424 = vsel %vm610, %v7285, 0
      %v7427 = vsel %vm610, %v7286, 0
      %v7430 = vsel %vm610, %v7287, 0
      %v7433 = vsel %vm610, %v7288, 0
      %v7436 = vsel %vm610, %v7289, 0
      %v7439 = vsel %vm610, %v7290, 0
      %v7442 = vsel %vm610, %v7291, 0
      %v7445 = vsel %vm610, %v7292, 0
      %v7448 = vsel %vm610, %v7293, 0
      %v7451 = vsel %vm610, %v7294, 0
      %v7454 = vsel %vm610, %v7295, 0
      %v7457 = vsel %vm610, %v7296, 0
      %v7460 = vsel %vm610, %v7297, 0
      %v7463 = vsel %vm610, %v7298, 0
      %v7466 = vsel %vm610, %v7299, 0
      %v7469 = vsel %vm610, %v7300, 0
      %v7472 = vsel %vm610, %v7301, 0
      %v7475 = vsel %vm610, %v7302, 0
      %v7478 = vsel %vm610, %v7303, 0
      %v7481 = vsel %vm610, %v7304, 0
      %v7484 = vsel %vm610, %v7305, 0
      %v7487 = vsel %vm610, %v7306, 0
      %v7490 = vsel %vm610, %v7307, 0
      %v7493 = vsel %vm610, %v7308, 0
      %v7496 = vsel %vm610, %v7309, 0
      %v7499 = vsel %vm610, %v7310, 0
      %v7502 = vsel %vm610, %v7311, 0
      %v7505 = vsel %vm610, %v7312, 0
      %v7508 = vsel %vm610, %v7313, 0
      %v7511 = vsel %vm610, %v7314, 0
      %v7514 = vsel %vm610, %v7315, 0
      %v7517 = vsel %vm610, %v7316, 0
      %v7520 = vsel %vm610, %v7317, 0
      %v7523 = vsel %vm610, %v7318, 0
      %v7526 = vand.u32 %v7320, %v818
      %7528 = vmatpush.bf16.msra.mxu0 0
      %7529 = vmatpush.bf16.msra.mxu0 0
      %7530 = vmatpush.bf16.msra.mxu0 0
      %7531 = vmatpush.bf16.msra.mxu0 0
      %7532 = vmatpush.bf16.msra.mxu0 0
      %7533 = vmatpush.bf16.msra.mxu0 0
      %7534 = vmatpush.bf16.msra.mxu0 0
      %7535 = vmatpush.bf16.msra.mxu0 %v7526
      %7536 = vmatmul.bf16.gmra.mxu0 %v7322
      %v7537 = vpop.f32.mrf.mxu0
      %v7538 = vadd.f32 0.0, %v7537
      %v7539 = vpop.f32.mrf.mxu0
      %v7540 = vadd.f32 0.0, %v7539
      %7541 = vmatmul.bf16.gmra.mxu0 %v7325
      %v7542 = vpop.f32.mrf.mxu0
      %v7543 = vadd.f32 0.0, %v7542
      %v7544 = vpop.f32.mrf.mxu0
      %v7545 = vadd.f32 0.0, %v7544
      %7546 = vmatmul.bf16.gmra.mxu0 %v7328
      %v7547 = vpop.f32.mrf.mxu0
      %v7548 = vadd.f32 0.0, %v7547
      %v7549 = vpop.f32.mrf.mxu0
      %v7550 = vadd.f32 0.0, %v7549
      %7551 = vmatmul.bf16.gmra.mxu0 %v7331
      %v7552 = vpop.f32.mrf.mxu0
      %v7553 = vadd.f32 0.0, %v7552
      %v7554 = vpop.f32.mrf.mxu0
      %v7555 = vadd.f32 0.0, %v7554
      %7556 = vmatmul.bf16.gmra.mxu0 %v7334
      %v7557 = vpop.f32.mrf.mxu0
      %v7558 = vadd.f32 0.0, %v7557
      %v7559 = vpop.f32.mrf.mxu0
      %v7560 = vadd.f32 0.0, %v7559
      %7561 = vmatmul.bf16.gmra.mxu0 %v7337
      %v7562 = vpop.f32.mrf.mxu0
      %v7563 = vadd.f32 0.0, %v7562
      %v7564 = vpop.f32.mrf.mxu0
      %v7565 = vadd.f32 0.0, %v7564
      %7566 = vmatmul.bf16.gmra.mxu0 %v7340
      %v7567 = vpop.f32.mrf.mxu0
      %v7568 = vadd.f32 0.0, %v7567
      %v7569 = vpop.f32.mrf.mxu0
      %v7570 = vadd.f32 0.0, %v7569
      %7571 = vmatmul.bf16.gmra.mxu0 %v7343
      %v7572 = vpop.f32.mrf.mxu0
      %v7573 = vadd.f32 0.0, %v7572
      %v7574 = vpop.f32.mrf.mxu0
      %v7575 = vadd.f32 0.0, %v7574
      %7576 = vmatmul.bf16.gmra.mxu0 %v7346
      %v7577 = vpop.f32.mrf.mxu0
      %v7578 = vadd.f32 0.0, %v7577
      %v7579 = vpop.f32.mrf.mxu0
      %v7580 = vadd.f32 0.0, %v7579
      %7581 = vmatmul.bf16.gmra.mxu0 %v7349
      %v7582 = vpop.f32.mrf.mxu0
      %v7583 = vadd.f32 0.0, %v7582
      %v7584 = vpop.f32.mrf.mxu0
      %v7585 = vadd.f32 0.0, %v7584
      %7586 = vmatmul.bf16.gmra.mxu0 %v7352
      %v7587 = vpop.f32.mrf.mxu0
      %v7588 = vadd.f32 0.0, %v7587
      %v7589 = vpop.f32.mrf.mxu0
      %v7590 = vadd.f32 0.0, %v7589
      %7591 = vmatmul.bf16.gmra.mxu0 %v7355
      %v7592 = vpop.f32.mrf.mxu0
      %v7593 = vadd.f32 0.0, %v7592
      %v7594 = vpop.f32.mrf.mxu0
      %v7595 = vadd.f32 0.0, %v7594
      %7596 = vmatmul.bf16.gmra.mxu0 %v7358
      %v7597 = vpop.f32.mrf.mxu0
      %v7598 = vadd.f32 0.0, %v7597
      %v7599 = vpop.f32.mrf.mxu0
      %v7600 = vadd.f32 0.0, %v7599
      %7601 = vmatmul.bf16.gmra.mxu0 %v7361
      %v7602 = vpop.f32.mrf.mxu0
      %v7603 = vadd.f32 0.0, %v7602
      %v7604 = vpop.f32.mrf.mxu0
      %v7605 = vadd.f32 0.0, %v7604
      %7606 = vmatmul.bf16.gmra.mxu0 %v7364
      %v7607 = vpop.f32.mrf.mxu0
      %v7608 = vadd.f32 0.0, %v7607
      %v7609 = vpop.f32.mrf.mxu0
      %v7610 = vadd.f32 0.0, %v7609
      %7611 = vmatmul.bf16.gmra.mxu0 %v7367
      %v7612 = vpop.f32.mrf.mxu0
      %v7613 = vadd.f32 0.0, %v7612
      %v7614 = vpop.f32.mrf.mxu0
      %v7615 = vadd.f32 0.0, %v7614
      %7616 = vmatmul.bf16.gmra.mxu0 %v7370
      %v7617 = vpop.f32.mrf.mxu0
      %v7618 = vadd.f32 0.0, %v7617
      %v7619 = vpop.f32.mrf.mxu0
      %v7620 = vadd.f32 0.0, %v7619
      %7621 = vmatmul.bf16.gmra.mxu0 %v7373
      %v7622 = vpop.f32.mrf.mxu0
      %v7623 = vadd.f32 0.0, %v7622
      %v7624 = vpop.f32.mrf.mxu0
      %v7625 = vadd.f32 0.0, %v7624
      %7626 = vmatmul.bf16.gmra.mxu0 %v7376
      %v7627 = vpop.f32.mrf.mxu0
      %v7628 = vadd.f32 0.0, %v7627
      %v7629 = vpop.f32.mrf.mxu0
      %v7630 = vadd.f32 0.0, %v7629
      %7631 = vmatmul.bf16.gmra.mxu0 %v7379
      %v7632 = vpop.f32.mrf.mxu0
      %v7633 = vadd.f32 0.0, %v7632
      %v7634 = vpop.f32.mrf.mxu0
      %v7635 = vadd.f32 0.0, %v7634
      %7636 = vmatmul.bf16.gmra.mxu0 %v7382
      %v7637 = vpop.f32.mrf.mxu0
      %v7638 = vadd.f32 0.0, %v7637
      %v7639 = vpop.f32.mrf.mxu0
      %v7640 = vadd.f32 0.0, %v7639
      %7641 = vmatmul.bf16.gmra.mxu0 %v7385
      %v7642 = vpop.f32.mrf.mxu0
      %v7643 = vadd.f32 0.0, %v7642
      %v7644 = vpop.f32.mrf.mxu0
      %v7645 = vadd.f32 0.0, %v7644
      %7646 = vmatmul.bf16.gmra.mxu0 %v7388
      %v7647 = vpop.f32.mrf.mxu0
      %v7648 = vadd.f32 0.0, %v7647
      %v7649 = vpop.f32.mrf.mxu0
      %v7650 = vadd.f32 0.0, %v7649
      %7651 = vmatmul.bf16.gmra.mxu0 %v7391
      %v7652 = vpop.f32.mrf.mxu0
      %v7653 = vadd.f32 0.0, %v7652
      %v7654 = vpop.f32.mrf.mxu0
      %v7655 = vadd.f32 0.0, %v7654
      %7656 = vmatmul.bf16.gmra.mxu0 %v7394
      %v7657 = vpop.f32.mrf.mxu0
      %v7658 = vadd.f32 0.0, %v7657
      %v7659 = vpop.f32.mrf.mxu0
      %v7660 = vadd.f32 0.0, %v7659
      %7661 = vmatmul.bf16.gmra.mxu0 %v7397
      %v7662 = vpop.f32.mrf.mxu0
      %v7663 = vadd.f32 0.0, %v7662
      %v7664 = vpop.f32.mrf.mxu0
      %v7665 = vadd.f32 0.0, %v7664
      %7666 = vmatmul.bf16.gmra.mxu0 %v7400
      %v7667 = vpop.f32.mrf.mxu0
      %v7668 = vadd.f32 0.0, %v7667
      %v7669 = vpop.f32.mrf.mxu0
      %v7670 = vadd.f32 0.0, %v7669
      %7671 = vmatmul.bf16.gmra.mxu0 %v7403
      %v7672 = vpop.f32.mrf.mxu0
      %v7673 = vadd.f32 0.0, %v7672
      %v7674 = vpop.f32.mrf.mxu0
      %v7675 = vadd.f32 0.0, %v7674
      %7676 = vmatmul.bf16.gmra.mxu0 %v7406
      %v7677 = vpop.f32.mrf.mxu0
      %v7678 = vadd.f32 0.0, %v7677
      %v7679 = vpop.f32.mrf.mxu0
      %v7680 = vadd.f32 0.0, %v7679
      %7681 = vmatmul.bf16.gmra.mxu0 %v7409
      %v7682 = vpop.f32.mrf.mxu0
      %v7683 = vadd.f32 0.0, %v7682
      %v7684 = vpop.f32.mrf.mxu0
      %v7685 = vadd.f32 0.0, %v7684
      %7686 = vmatmul.bf16.gmra.mxu0 %v7412
      %v7687 = vpop.f32.mrf.mxu0
      %v7688 = vadd.f32 0.0, %v7687
      %v7689 = vpop.f32.mrf.mxu0
      %v7690 = vadd.f32 0.0, %v7689
      %7691 = vmatmul.bf16.gmra.mxu0 %v7415
      %v7692 = vpop.f32.mrf.mxu0
      %v7693 = vadd.f32 0.0, %v7692
      %v7694 = vpop.f32.mrf.mxu0
      %v7695 = vadd.f32 0.0, %v7694
      %7696 = vmatmul.bf16.gmra.mxu0 %v7418
      %v7697 = vpop.f32.mrf.mxu0
      %v7698 = vadd.f32 0.0, %v7697
      %v7699 = vpop.f32.mrf.mxu0
      %v7700 = vadd.f32 0.0, %v7699
      %7701 = vmatmul.bf16.gmra.mxu0 %v7421
      %v7702 = vpop.f32.mrf.mxu0
      %v7703 = vadd.f32 0.0, %v7702
      %v7704 = vpop.f32.mrf.mxu0
      %v7705 = vadd.f32 0.0, %v7704
      %7706 = vmatmul.bf16.gmra.mxu0 %v7424
      %v7707 = vpop.f32.mrf.mxu0
      %v7708 = vadd.f32 0.0, %v7707
      %v7709 = vpop.f32.mrf.mxu0
      %v7710 = vadd.f32 0.0, %v7709
      %7711 = vmatmul.bf16.gmra.mxu0 %v7427
      %v7712 = vpop.f32.mrf.mxu0
      %v7713 = vadd.f32 0.0, %v7712
      %v7714 = vpop.f32.mrf.mxu0
      %v7715 = vadd.f32 0.0, %v7714
      %7716 = vmatmul.bf16.gmra.mxu0 %v7430
      %v7717 = vpop.f32.mrf.mxu0
      %v7718 = vadd.f32 0.0, %v7717
      %v7719 = vpop.f32.mrf.mxu0
      %v7720 = vadd.f32 0.0, %v7719
      %7721 = vmatmul.bf16.gmra.mxu0 %v7433
      %v7722 = vpop.f32.mrf.mxu0
      %v7723 = vadd.f32 0.0, %v7722
      %v7724 = vpop.f32.mrf.mxu0
      %v7725 = vadd.f32 0.0, %v7724
      %7726 = vmatmul.bf16.gmra.mxu0 %v7436
      %v7727 = vpop.f32.mrf.mxu0
      %v7728 = vadd.f32 0.0, %v7727
      %v7729 = vpop.f32.mrf.mxu0
      %v7730 = vadd.f32 0.0, %v7729
      %7731 = vmatmul.bf16.gmra.mxu0 %v7439
      %v7732 = vpop.f32.mrf.mxu0
      %v7733 = vadd.f32 0.0, %v7732
      %v7734 = vpop.f32.mrf.mxu0
      %v7735 = vadd.f32 0.0, %v7734
      %7736 = vmatmul.bf16.gmra.mxu0 %v7442
      %v7737 = vpop.f32.mrf.mxu0
      %v7738 = vadd.f32 0.0, %v7737
      %v7739 = vpop.f32.mrf.mxu0
      %v7740 = vadd.f32 0.0, %v7739
      %7741 = vmatmul.bf16.gmra.mxu0 %v7445
      %v7742 = vpop.f32.mrf.mxu0
      %v7743 = vadd.f32 0.0, %v7742
      %v7744 = vpop.f32.mrf.mxu0
      %v7745 = vadd.f32 0.0, %v7744
      %7746 = vmatmul.bf16.gmra.mxu0 %v7448
      %v7747 = vpop.f32.mrf.mxu0
      %v7748 = vadd.f32 0.0, %v7747
      %v7749 = vpop.f32.mrf.mxu0
      %v7750 = vadd.f32 0.0, %v7749
      %7751 = vmatmul.bf16.gmra.mxu0 %v7451
      %v7752 = vpop.f32.mrf.mxu0
      %v7753 = vadd.f32 0.0, %v7752
      %v7754 = vpop.f32.mrf.mxu0
      %v7755 = vadd.f32 0.0, %v7754
      %7756 = vmatmul.bf16.gmra.mxu0 %v7454
      %v7757 = vpop.f32.mrf.mxu0
      %v7758 = vadd.f32 0.0, %v7757
      %v7759 = vpop.f32.mrf.mxu0
      %v7760 = vadd.f32 0.0, %v7759
      %7761 = vmatmul.bf16.gmra.mxu0 %v7457
      %v7762 = vpop.f32.mrf.mxu0
      %v7763 = vadd.f32 0.0, %v7762
      %v7764 = vpop.f32.mrf.mxu0
      %v7765 = vadd.f32 0.0, %v7764
      %7766 = vmatmul.bf16.gmra.mxu0 %v7460
      %v7767 = vpop.f32.mrf.mxu0
      %v7768 = vadd.f32 0.0, %v7767
      %v7769 = vpop.f32.mrf.mxu0
      %v7770 = vadd.f32 0.0, %v7769
      %7771 = vmatmul.bf16.gmra.mxu0 %v7463
      %v7772 = vpop.f32.mrf.mxu0
      %v7773 = vadd.f32 0.0, %v7772
      %v7774 = vpop.f32.mrf.mxu0
      %v7775 = vadd.f32 0.0, %v7774
      %7776 = vmatmul.bf16.gmra.mxu0 %v7466
      %v7777 = vpop.f32.mrf.mxu0
      %v7778 = vadd.f32 0.0, %v7777
      %v7779 = vpop.f32.mrf.mxu0
      %v7780 = vadd.f32 0.0, %v7779
      %7781 = vmatmul.bf16.gmra.mxu0 %v7469
      %v7782 = vpop.f32.mrf.mxu0
      %v7783 = vadd.f32 0.0, %v7782
      %v7784 = vpop.f32.mrf.mxu0
      %v7785 = vadd.f32 0.0, %v7784
      %7786 = vmatmul.bf16.gmra.mxu0 %v7472
      %v7787 = vpop.f32.mrf.mxu0
      %v7788 = vadd.f32 0.0, %v7787
      %v7789 = vpop.f32.mrf.mxu0
      %v7790 = vadd.f32 0.0, %v7789
      %7791 = vmatmul.bf16.gmra.mxu0 %v7475
      %v7792 = vpop.f32.mrf.mxu0
      %v7793 = vadd.f32 0.0, %v7792
      %v7794 = vpop.f32.mrf.mxu0
      %v7795 = vadd.f32 0.0, %v7794
      %7796 = vmatmul.bf16.gmra.mxu0 %v7478
      %v7797 = vpop.f32.mrf.mxu0
      %v7798 = vadd.f32 0.0, %v7797
      %v7799 = vpop.f32.mrf.mxu0
      %v7800 = vadd.f32 0.0, %v7799
      %7801 = vmatmul.bf16.gmra.mxu0 %v7481
      %v7802 = vpop.f32.mrf.mxu0
      %v7803 = vadd.f32 0.0, %v7802
      %v7804 = vpop.f32.mrf.mxu0
      %v7805 = vadd.f32 0.0, %v7804
      %7806 = vmatmul.bf16.gmra.mxu0 %v7484
      %v7807 = vpop.f32.mrf.mxu0
      %v7808 = vadd.f32 0.0, %v7807
      %v7809 = vpop.f32.mrf.mxu0
      %v7810 = vadd.f32 0.0, %v7809
      %7811 = vmatmul.bf16.gmra.mxu0 %v7487
      %v7812 = vpop.f32.mrf.mxu0
      %v7813 = vadd.f32 0.0, %v7812
      %v7814 = vpop.f32.mrf.mxu0
      %v7815 = vadd.f32 0.0, %v7814
      %7816 = vmatmul.bf16.gmra.mxu0 %v7490
      %v7817 = vpop.f32.mrf.mxu0
      %v7818 = vadd.f32 0.0, %v7817
      %v7819 = vpop.f32.mrf.mxu0
      %v7820 = vadd.f32 0.0, %v7819
      %7821 = vmatmul.bf16.gmra.mxu0 %v7493
      %v7822 = vpop.f32.mrf.mxu0
      %v7823 = vadd.f32 0.0, %v7822
      %v7824 = vpop.f32.mrf.mxu0
      %v7825 = vadd.f32 0.0, %v7824
      %7826 = vmatmul.bf16.gmra.mxu0 %v7496
      %v7827 = vpop.f32.mrf.mxu0
      %v7828 = vadd.f32 0.0, %v7827
      %v7829 = vpop.f32.mrf.mxu0
      %v7830 = vadd.f32 0.0, %v7829
      %7831 = vmatmul.bf16.gmra.mxu0 %v7499
      %v7832 = vpop.f32.mrf.mxu0
      %v7833 = vadd.f32 0.0, %v7832
      %v7834 = vpop.f32.mrf.mxu0
      %v7835 = vadd.f32 0.0, %v7834
      %7836 = vmatmul.bf16.gmra.mxu0 %v7502
      %v7837 = vpop.f32.mrf.mxu0
      %v7838 = vadd.f32 0.0, %v7837
      %v7839 = vpop.f32.mrf.mxu0
      %v7840 = vadd.f32 0.0, %v7839
      %7841 = vmatmul.bf16.gmra.mxu0 %v7505
      %v7842 = vpop.f32.mrf.mxu0
      %v7843 = vadd.f32 0.0, %v7842
      %v7844 = vpop.f32.mrf.mxu0
      %v7845 = vadd.f32 0.0, %v7844
      %7846 = vmatmul.bf16.gmra.mxu0 %v7508
      %v7847 = vpop.f32.mrf.mxu0
      %v7848 = vadd.f32 0.0, %v7847
      %v7849 = vpop.f32.mrf.mxu0
      %v7850 = vadd.f32 0.0, %v7849
      %7851 = vmatmul.bf16.gmra.mxu0 %v7511
      %v7852 = vpop.f32.mrf.mxu0
      %v7853 = vadd.f32 0.0, %v7852
      %v7854 = vpop.f32.mrf.mxu0
      %v7855 = vadd.f32 0.0, %v7854
      %7856 = vmatmul.bf16.gmra.mxu0 %v7514
      %v7857 = vpop.f32.mrf.mxu0
      %v7858 = vadd.f32 0.0, %v7857
      %v7859 = vpop.f32.mrf.mxu0
      %v7860 = vadd.f32 0.0, %v7859
      %7861 = vmatmul.bf16.gmra.mxu0 %v7517
      %v7862 = vpop.f32.mrf.mxu0
      %v7863 = vadd.f32 0.0, %v7862
      %v7864 = vpop.f32.mrf.mxu0
      %v7865 = vadd.f32 0.0, %v7864
      %7866 = vmatmul.bf16.gmra.mxu0 %v7520
      %v7867 = vpop.f32.mrf.mxu0
      %v7868 = vadd.f32 0.0, %v7867
      %v7869 = vpop.f32.mrf.mxu0
      %v7870 = vadd.f32 0.0, %v7869
      %7871 = vmatmul.bf16.gmra.mxu0 %v7523
      %v7872 = vpop.f32.mrf.mxu0
      %v7873 = vadd.f32 0.0, %v7872
      %v7874 = vpop.f32.mrf.mxu0
      %v7875 = vadd.f32 0.0, %v7874
      %7876 = vdwg.mxu0
      %v7877 = vadd.f32 %v6979, %v7538
      %v7878 = vadd.f32 %v6980, %v7540
      %v7879 = vadd.f32 %v6981, %v7543
      %v7880 = vadd.f32 %v6982, %v7545
      %v7881 = vadd.f32 %v6983, %v7548
      %v7882 = vadd.f32 %v6984, %v7550
      %v7883 = vadd.f32 %v6985, %v7553
      %v7884 = vadd.f32 %v6986, %v7555
      %v7885 = vadd.f32 %v6987, %v7558
      %v7886 = vadd.f32 %v6988, %v7560
      %v7887 = vadd.f32 %v6989, %v7563
      %v7888 = vadd.f32 %v6990, %v7565
      %v7889 = vadd.f32 %v6991, %v7568
      %v7890 = vadd.f32 %v6992, %v7570
      %v7891 = vadd.f32 %v6993, %v7573
      %v7892 = vadd.f32 %v6994, %v7575
      %v7893 = vadd.f32 %v6995, %v7578
      %v7894 = vadd.f32 %v6996, %v7580
      %v7895 = vadd.f32 %v6997, %v7583
      %v7896 = vadd.f32 %v6998, %v7585
      %v7897 = vadd.f32 %v6999, %v7588
      %v7898 = vadd.f32 %v7000, %v7590
      %v7899 = vadd.f32 %v7001, %v7593
      %v7900 = vadd.f32 %v7002, %v7595
      %v7901 = vadd.f32 %v7003, %v7598
      %v7902 = vadd.f32 %v7004, %v7600
      %v7903 = vadd.f32 %v7005, %v7603
      %v7904 = vadd.f32 %v7006, %v7605
      %v7905 = vadd.f32 %v7007, %v7608
      %v7906 = vadd.f32 %v7008, %v7610
      %v7907 = vadd.f32 %v7009, %v7613
      %v7908 = vadd.f32 %v7010, %v7615
      %v7909 = vadd.f32 %v7011, %v7618
      %v7910 = vadd.f32 %v7012, %v7620
      %v7911 = vadd.f32 %v7013, %v7623
      %v7912 = vadd.f32 %v7014, %v7625
      %v7913 = vadd.f32 %v7015, %v7628
      %v7914 = vadd.f32 %v7016, %v7630
      %v7915 = vadd.f32 %v7017, %v7633
      %v7916 = vadd.f32 %v7018, %v7635
      %v7917 = vadd.f32 %v7019, %v7638
      %v7918 = vadd.f32 %v7020, %v7640
      %v7919 = vadd.f32 %v7021, %v7643
      %v7920 = vadd.f32 %v7022, %v7645
      %v7921 = vadd.f32 %v7023, %v7648
      %v7922 = vadd.f32 %v7024, %v7650
      %v7923 = vadd.f32 %v7025, %v7653
      %v7924 = vadd.f32 %v7026, %v7655
      %v7925 = vadd.f32 %v7027, %v7658
      %v7926 = vadd.f32 %v7028, %v7660
      %v7927 = vadd.f32 %v7029, %v7663
      %v7928 = vadd.f32 %v7030, %v7665
      %v7929 = vadd.f32 %v7031, %v7668
      %v7930 = vadd.f32 %v7032, %v7670
      %v7931 = vadd.f32 %v7033, %v7673
      %v7932 = vadd.f32 %v7034, %v7675
      %v7933 = vadd.f32 %v7035, %v7678
      %v7934 = vadd.f32 %v7036, %v7680
      %v7935 = vadd.f32 %v7037, %v7683
      %v7936 = vadd.f32 %v7038, %v7685
      %v7937 = vadd.f32 %v7039, %v7688
      %v7938 = vadd.f32 %v7040, %v7690
      %v7939 = vadd.f32 %v7041, %v7693
      %v7940 = vadd.f32 %v7042, %v7695
      %v7941 = vadd.f32 %v7043, %v7698
      %v7942 = vadd.f32 %v7044, %v7700
      %v7943 = vadd.f32 %v7045, %v7703
      %v7944 = vadd.f32 %v7046, %v7705
      %v7945 = vadd.f32 %v7047, %v7708
      %v7946 = vadd.f32 %v7048, %v7710
      %v7947 = vadd.f32 %v7049, %v7713
      %v7948 = vadd.f32 %v7050, %v7715
      %v7949 = vadd.f32 %v7051, %v7718
      %v7950 = vadd.f32 %v7052, %v7720
      %v7951 = vadd.f32 %v7053, %v7723
      %v7952 = vadd.f32 %v7054, %v7725
      %v7953 = vadd.f32 %v7055, %v7728
      %v7954 = vadd.f32 %v7056, %v7730
      %v7955 = vadd.f32 %v7057, %v7733
      %v7956 = vadd.f32 %v7058, %v7735
      %v7957 = vadd.f32 %v7059, %v7738
      %v7958 = vadd.f32 %v7060, %v7740
      %v7959 = vadd.f32 %v7061, %v7743
      %v7960 = vadd.f32 %v7062, %v7745
      %v7961 = vadd.f32 %v7063, %v7748
      %v7962 = vadd.f32 %v7064, %v7750
      %v7963 = vadd.f32 %v7065, %v7753
      %v7964 = vadd.f32 %v7066, %v7755
      %v7965 = vadd.f32 %v7067, %v7758
      %v7966 = vadd.f32 %v7068, %v7760
      %v7967 = vadd.f32 %v7069, %v7763
      %v7968 = vadd.f32 %v7070, %v7765
      %v7969 = vadd.f32 %v7071, %v7768
      %v7970 = vadd.f32 %v7072, %v7770
      %v7971 = vadd.f32 %v7073, %v7773
      %v7972 = vadd.f32 %v7074, %v7775
      %v7973 = vadd.f32 %v7075, %v7778
      %v7974 = vadd.f32 %v7076, %v7780
      %v7975 = vadd.f32 %v7077, %v7783
      %v7976 = vadd.f32 %v7078, %v7785
      %v7977 = vadd.f32 %v7079, %v7788
      %v7978 = vadd.f32 %v7080, %v7790
      %v7979 = vadd.f32 %v7081, %v7793
      %v7980 = vadd.f32 %v7082, %v7795
      %v7981 = vadd.f32 %v7083, %v7798
      %v7982 = vadd.f32 %v7084, %v7800
      %v7983 = vadd.f32 %v7085, %v7803
      %v7984 = vadd.f32 %v7086, %v7805
      %v7985 = vadd.f32 %v7087, %v7808
      %v7986 = vadd.f32 %v7088, %v7810
      %v7987 = vadd.f32 %v7089, %v7813
      %v7988 = vadd.f32 %v7090, %v7815
      %v7989 = vadd.f32 %v7091, %v7818
      %v7990 = vadd.f32 %v7092, %v7820
      %v7991 = vadd.f32 %v7093, %v7823
      %v7992 = vadd.f32 %v7094, %v7825
      %v7993 = vadd.f32 %v7095, %v7828
      %v7994 = vadd.f32 %v7096, %v7830
      %v7995 = vadd.f32 %v7097, %v7833
      %v7996 = vadd.f32 %v7098, %v7835
      %v7997 = vadd.f32 %v7099, %v7838
      %v7998 = vadd.f32 %v7100, %v7840
      %v7999 = vadd.f32 %v7101, %v7843
      %v8000 = vadd.f32 %v7102, %v7845
      %v8001 = vadd.f32 %v7103, %v7848
      %v8002 = vadd.f32 %v7104, %v7850
      %v8003 = vadd.f32 %v7105, %v7853
      %v8004 = vadd.f32 %v7106, %v7855
      %v8005 = vadd.f32 %v7107, %v7858
      %v8006 = vadd.f32 %v7108, %v7860
      %v8007 = vadd.f32 %v7109, %v7863
      %v8008 = vadd.f32 %v7110, %v7865
      %v8009 = vadd.f32 %v7111, %v7868
      %v8010 = vadd.f32 %v7112, %v7870
      %v8011 = vadd.f32 %v7113, %v7873
      %v8012 = vadd.f32 %v7114, %v7875
      %v8013 = vld [vmem:[%s2] sm:$0x1]
      %v8015 = vperm.slane %v8013, 0
      %v8017 = vmul.f32 %v7877, %v8015
      %v8018 = vmul.f32 %v7878, %v8015
      %v8019 = vmul.f32 %v7879, %v8015
      %v8020 = vmul.f32 %v7880, %v8015
      %v8021 = vmul.f32 %v7881, %v8015
      %v8022 = vmul.f32 %v7882, %v8015
      %v8023 = vmul.f32 %v7883, %v8015
      %v8024 = vmul.f32 %v7884, %v8015
      %v8025 = vmul.f32 %v7885, %v8015
      %v8026 = vmul.f32 %v7886, %v8015
      %v8027 = vmul.f32 %v7887, %v8015
      %v8028 = vmul.f32 %v7888, %v8015
      %v8029 = vmul.f32 %v7889, %v8015
      %v8030 = vmul.f32 %v7890, %v8015
      %v8031 = vmul.f32 %v7891, %v8015
      %v8032 = vmul.f32 %v7892, %v8015
      %v8033 = vmul.f32 %v7893, %v8015
      %v8034 = vmul.f32 %v7894, %v8015
      %v8035 = vmul.f32 %v7895, %v8015
      %v8036 = vmul.f32 %v7896, %v8015
      %v8037 = vmul.f32 %v7897, %v8015
      %v8038 = vmul.f32 %v7898, %v8015
      %v8039 = vmul.f32 %v7899, %v8015
      %v8040 = vmul.f32 %v7900, %v8015
      %v8041 = vmul.f32 %v7901, %v8015
      %v8042 = vmul.f32 %v7902, %v8015
      %v8043 = vmul.f32 %v7903, %v8015
      %v8044 = vmul.f32 %v7904, %v8015
      %v8045 = vmul.f32 %v7905, %v8015
      %v8046 = vmul.f32 %v7906, %v8015
      %v8047 = vmul.f32 %v7907, %v8015
      %v8048 = vmul.f32 %v7908, %v8015
      %v8049 = vmul.f32 %v7909, %v8015
      %v8050 = vmul.f32 %v7910, %v8015
      %v8051 = vmul.f32 %v7911, %v8015
      %v8052 = vmul.f32 %v7912, %v8015
      %v8053 = vmul.f32 %v7913, %v8015
      %v8054 = vmul.f32 %v7914, %v8015
      %v8055 = vmul.f32 %v7915, %v8015
      %v8056 = vmul.f32 %v7916, %v8015
      %v8057 = vmul.f32 %v7917, %v8015
      %v8058 = vmul.f32 %v7918, %v8015
      %v8059 = vmul.f32 %v7919, %v8015
      %v8060 = vmul.f32 %v7920, %v8015
      %v8061 = vmul.f32 %v7921, %v8015
      %v8062 = vmul.f32 %v7922, %v8015
      %v8063 = vmul.f32 %v7923, %v8015
      %v8064 = vmul.f32 %v7924, %v8015
      %v8065 = vmul.f32 %v7925, %v8015
      %v8066 = vmul.f32 %v7926, %v8015
      %v8067 = vmul.f32 %v7927, %v8015
      %v8068 = vmul.f32 %v7928, %v8015
      %v8069 = vmul.f32 %v7929, %v8015
      %v8070 = vmul.f32 %v7930, %v8015
      %v8071 = vmul.f32 %v7931, %v8015
      %v8072 = vmul.f32 %v7932, %v8015
      %v8073 = vmul.f32 %v7933, %v8015
      %v8074 = vmul.f32 %v7934, %v8015
      %v8075 = vmul.f32 %v7935, %v8015
      %v8076 = vmul.f32 %v7936, %v8015
      %v8077 = vmul.f32 %v7937, %v8015
      %v8078 = vmul.f32 %v7938, %v8015
      %v8079 = vmul.f32 %v7939, %v8015
      %v8080 = vmul.f32 %v7940, %v8015
      %v8081 = vmul.f32 %v7941, %v8015
      %v8082 = vmul.f32 %v7942, %v8015
      %v8083 = vmul.f32 %v7943, %v8015
      %v8084 = vmul.f32 %v7944, %v8015
      %v8085 = vmul.f32 %v7945, %v8015
      %v8086 = vmul.f32 %v7946, %v8015
      %v8087 = vmul.f32 %v7947, %v8015
      %v8088 = vmul.f32 %v7948, %v8015
      %v8089 = vmul.f32 %v7949, %v8015
      %v8090 = vmul.f32 %v7950, %v8015
      %v8091 = vmul.f32 %v7951, %v8015
      %v8092 = vmul.f32 %v7952, %v8015
      %v8093 = vmul.f32 %v7953, %v8015
      %v8094 = vmul.f32 %v7954, %v8015
      %v8095 = vmul.f32 %v7955, %v8015
      %v8096 = vmul.f32 %v7956, %v8015
      %v8097 = vmul.f32 %v7957, %v8015
      %v8098 = vmul.f32 %v7958, %v8015
      %v8099 = vmul.f32 %v7959, %v8015
      %v8100 = vmul.f32 %v7960, %v8015
      %v8101 = vmul.f32 %v7961, %v8015
      %v8102 = vmul.f32 %v7962, %v8015
      %v8103 = vmul.f32 %v7963, %v8015
      %v8104 = vmul.f32 %v7964, %v8015
      %v8105 = vmul.f32 %v7965, %v8015
      %v8106 = vmul.f32 %v7966, %v8015
      %v8107 = vmul.f32 %v7967, %v8015
      %v8108 = vmul.f32 %v7968, %v8015
      %v8109 = vmul.f32 %v7969, %v8015
      %v8110 = vmul.f32 %v7970, %v8015
      %v8111 = vmul.f32 %v7971, %v8015
      %v8112 = vmul.f32 %v7972, %v8015
      %v8113 = vmul.f32 %v7973, %v8015
      %v8114 = vmul.f32 %v7974, %v8015
      %v8115 = vmul.f32 %v7975, %v8015
      %v8116 = vmul.f32 %v7976, %v8015
      %v8117 = vmul.f32 %v7977, %v8015
      %v8118 = vmul.f32 %v7978, %v8015
      %v8119 = vmul.f32 %v7979, %v8015
      %v8120 = vmul.f32 %v7980, %v8015
      %v8121 = vmul.f32 %v7981, %v8015
      %v8122 = vmul.f32 %v7982, %v8015
      %v8123 = vmul.f32 %v7983, %v8015
      %v8124 = vmul.f32 %v7984, %v8015
      %v8125 = vmul.f32 %v7985, %v8015
      %v8126 = vmul.f32 %v7986, %v8015
      %v8127 = vmul.f32 %v7987, %v8015
      %v8128 = vmul.f32 %v7988, %v8015
      %v8129 = vmul.f32 %v7989, %v8015
      %v8130 = vmul.f32 %v7990, %v8015
      %v8131 = vmul.f32 %v7991, %v8015
      %v8132 = vmul.f32 %v7992, %v8015
      %v8133 = vmul.f32 %v7993, %v8015
      %v8134 = vmul.f32 %v7994, %v8015
      %v8135 = vmul.f32 %v7995, %v8015
      %v8136 = vmul.f32 %v7996, %v8015
      %v8137 = vmul.f32 %v7997, %v8015
      %v8138 = vmul.f32 %v7998, %v8015
      %v8139 = vmul.f32 %v7999, %v8015
      %v8140 = vmul.f32 %v8000, %v8015
      %v8141 = vmul.f32 %v8001, %v8015
      %v8142 = vmul.f32 %v8002, %v8015
      %v8143 = vmul.f32 %v8003, %v8015
      %v8144 = vmul.f32 %v8004, %v8015
      %v8145 = vmul.f32 %v8005, %v8015
      %v8146 = vmul.f32 %v8006, %v8015
      %v8147 = vmul.f32 %v8007, %v8015
      %v8148 = vmul.f32 %v8008, %v8015
      %v8149 = vmul.f32 %v8009, %v8015
      %v8150 = vmul.f32 %v8010, %v8015
      %v8151 = vmul.f32 %v8011, %v8015
      %v8152 = vmul.f32 %v8012, %v8015
      %v8153 = vld [vmem:[%s3] sm:$0x1]
      %v8155 = vperm.slane %v8153, 0
      %v8157 = vadd.f32 %v8017, %v8155
      %v8158 = vadd.f32 %v8018, %v8155
      %v8159 = vadd.f32 %v8019, %v8155
      %v8160 = vadd.f32 %v8020, %v8155
      %v8161 = vadd.f32 %v8021, %v8155
      %v8162 = vadd.f32 %v8022, %v8155
      %v8163 = vadd.f32 %v8023, %v8155
      %v8164 = vadd.f32 %v8024, %v8155
      %v8165 = vadd.f32 %v8025, %v8155
      %v8166 = vadd.f32 %v8026, %v8155
      %v8167 = vadd.f32 %v8027, %v8155
      %v8168 = vadd.f32 %v8028, %v8155
      %v8169 = vadd.f32 %v8029, %v8155
      %v8170 = vadd.f32 %v8030, %v8155
      %v8171 = vadd.f32 %v8031, %v8155
      %v8172 = vadd.f32 %v8032, %v8155
      %v8173 = vadd.f32 %v8033, %v8155
      %v8174 = vadd.f32 %v8034, %v8155
      %v8175 = vadd.f32 %v8035, %v8155
      %v8176 = vadd.f32 %v8036, %v8155
      %v8177 = vadd.f32 %v8037, %v8155
      %v8178 = vadd.f32 %v8038, %v8155
      %v8179 = vadd.f32 %v8039, %v8155
      %v8180 = vadd.f32 %v8040, %v8155
      %v8181 = vadd.f32 %v8041, %v8155
      %v8182 = vadd.f32 %v8042, %v8155
      %v8183 = vadd.f32 %v8043, %v8155
      %v8184 = vadd.f32 %v8044, %v8155
      %v8185 = vadd.f32 %v8045, %v8155
      %v8186 = vadd.f32 %v8046, %v8155
      %v8187 = vadd.f32 %v8047, %v8155
      %v8188 = vadd.f32 %v8048, %v8155
      %v8189 = vadd.f32 %v8049, %v8155
      %v8190 = vadd.f32 %v8050, %v8155
      %v8191 = vadd.f32 %v8051, %v8155
      %v8192 = vadd.f32 %v8052, %v8155
      %v8193 = vadd.f32 %v8053, %v8155
      %v8194 = vadd.f32 %v8054, %v8155
      %v8195 = vadd.f32 %v8055, %v8155
      %v8196 = vadd.f32 %v8056, %v8155
      %v8197 = vadd.f32 %v8057, %v8155
      %v8198 = vadd.f32 %v8058, %v8155
      %v8199 = vadd.f32 %v8059, %v8155
      %v8200 = vadd.f32 %v8060, %v8155
      %v8201 = vadd.f32 %v8061, %v8155
      %v8202 = vadd.f32 %v8062, %v8155
      %v8203 = vadd.f32 %v8063, %v8155
      %v8204 = vadd.f32 %v8064, %v8155
      %v8205 = vadd.f32 %v8065, %v8155
      %v8206 = vadd.f32 %v8066, %v8155
      %v8207 = vadd.f32 %v8067, %v8155
      %v8208 = vadd.f32 %v8068, %v8155
      %v8209 = vadd.f32 %v8069, %v8155
      %v8210 = vadd.f32 %v8070, %v8155
      %v8211 = vadd.f32 %v8071, %v8155
      %v8212 = vadd.f32 %v8072, %v8155
      %v8213 = vadd.f32 %v8073, %v8155
      %v8214 = vadd.f32 %v8074, %v8155
      %v8215 = vadd.f32 %v8075, %v8155
      %v8216 = vadd.f32 %v8076, %v8155
      %v8217 = vadd.f32 %v8077, %v8155
      %v8218 = vadd.f32 %v8078, %v8155
      %v8219 = vadd.f32 %v8079, %v8155
      %v8220 = vadd.f32 %v8080, %v8155
      %v8221 = vadd.f32 %v8081, %v8155
      %v8222 = vadd.f32 %v8082, %v8155
      %v8223 = vadd.f32 %v8083, %v8155
      %v8224 = vadd.f32 %v8084, %v8155
      %v8225 = vadd.f32 %v8085, %v8155
      %v8226 = vadd.f32 %v8086, %v8155
      %v8227 = vadd.f32 %v8087, %v8155
      %v8228 = vadd.f32 %v8088, %v8155
      %v8229 = vadd.f32 %v8089, %v8155
      %v8230 = vadd.f32 %v8090, %v8155
      %v8231 = vadd.f32 %v8091, %v8155
      %v8232 = vadd.f32 %v8092, %v8155
      %v8233 = vadd.f32 %v8093, %v8155
      %v8234 = vadd.f32 %v8094, %v8155
      %v8235 = vadd.f32 %v8095, %v8155
      %v8236 = vadd.f32 %v8096, %v8155
      %v8237 = vadd.f32 %v8097, %v8155
      %v8238 = vadd.f32 %v8098, %v8155
      %v8239 = vadd.f32 %v8099, %v8155
      %v8240 = vadd.f32 %v8100, %v8155
      %v8241 = vadd.f32 %v8101, %v8155
      %v8242 = vadd.f32 %v8102, %v8155
      %v8243 = vadd.f32 %v8103, %v8155
      %v8244 = vadd.f32 %v8104, %v8155
      %v8245 = vadd.f32 %v8105, %v8155
      %v8246 = vadd.f32 %v8106, %v8155
      %v8247 = vadd.f32 %v8107, %v8155
      %v8248 = vadd.f32 %v8108, %v8155
      %v8249 = vadd.f32 %v8109, %v8155
      %v8250 = vadd.f32 %v8110, %v8155
      %v8251 = vadd.f32 %v8111, %v8155
      %v8252 = vadd.f32 %v8112, %v8155
      %v8253 = vadd.f32 %v8113, %v8155
      %v8254 = vadd.f32 %v8114, %v8155
      %v8255 = vadd.f32 %v8115, %v8155
      %v8256 = vadd.f32 %v8116, %v8155
      %v8257 = vadd.f32 %v8117, %v8155
      %v8258 = vadd.f32 %v8118, %v8155
      %v8259 = vadd.f32 %v8119, %v8155
      %v8260 = vadd.f32 %v8120, %v8155
      %v8261 = vadd.f32 %v8121, %v8155
      %v8262 = vadd.f32 %v8122, %v8155
      %v8263 = vadd.f32 %v8123, %v8155
      %v8264 = vadd.f32 %v8124, %v8155
      %v8265 = vadd.f32 %v8125, %v8155
      %v8266 = vadd.f32 %v8126, %v8155
      %v8267 = vadd.f32 %v8127, %v8155
      %v8268 = vadd.f32 %v8128, %v8155
      %v8269 = vadd.f32 %v8129, %v8155
      %v8270 = vadd.f32 %v8130, %v8155
      %v8271 = vadd.f32 %v8131, %v8155
      %v8272 = vadd.f32 %v8132, %v8155
      %v8273 = vadd.f32 %v8133, %v8155
      %v8274 = vadd.f32 %v8134, %v8155
      %v8275 = vadd.f32 %v8135, %v8155
      %v8276 = vadd.f32 %v8136, %v8155
      %v8277 = vadd.f32 %v8137, %v8155
      %v8278 = vadd.f32 %v8138, %v8155
      %v8279 = vadd.f32 %v8139, %v8155
      %v8280 = vadd.f32 %v8140, %v8155
      %v8281 = vadd.f32 %v8141, %v8155
      %v8282 = vadd.f32 %v8142, %v8155
      %v8283 = vadd.f32 %v8143, %v8155
      %v8284 = vadd.f32 %v8144, %v8155
      %v8285 = vadd.f32 %v8145, %v8155
      %v8286 = vadd.f32 %v8146, %v8155
      %v8287 = vadd.f32 %v8147, %v8155
      %v8288 = vadd.f32 %v8148, %v8155
      %v8289 = vadd.f32 %v8149, %v8155
      %v8290 = vadd.f32 %v8150, %v8155
      %v8291 = vadd.f32 %v8151, %v8155
      %v8292 = vadd.f32 %v8152, %v8155
      %v8293 = vmax.f32 %v8157, 0.0
      %v8294 = vmax.f32 %v8158, 0.0
      %v8295 = vmax.f32 %v8159, 0.0
      %v8296 = vmax.f32 %v8160, 0.0
      %v8297 = vmax.f32 %v8161, 0.0
      %v8298 = vmax.f32 %v8162, 0.0
      %v8299 = vmax.f32 %v8163, 0.0
      %v8300 = vmax.f32 %v8164, 0.0
      %v8301 = vmax.f32 %v8165, 0.0
      %v8302 = vmax.f32 %v8166, 0.0
      %v8303 = vmax.f32 %v8167, 0.0
      %v8304 = vmax.f32 %v8168, 0.0
      %v8305 = vmax.f32 %v8169, 0.0
      %v8306 = vmax.f32 %v8170, 0.0
      %v8307 = vmax.f32 %v8171, 0.0
      %v8308 = vmax.f32 %v8172, 0.0
      %v8309 = vmax.f32 %v8173, 0.0
      %v8310 = vmax.f32 %v8174, 0.0
      %v8311 = vmax.f32 %v8175, 0.0
      %v8312 = vmax.f32 %v8176, 0.0
      %v8313 = vmax.f32 %v8177, 0.0
      %v8314 = vmax.f32 %v8178, 0.0
      %v8315 = vmax.f32 %v8179, 0.0
      %v8316 = vmax.f32 %v8180, 0.0
      %v8317 = vmax.f32 %v8181, 0.0
      %v8318 = vmax.f32 %v8182, 0.0
      %v8319 = vmax.f32 %v8183, 0.0
      %v8320 = vmax.f32 %v8184, 0.0
      %v8321 = vmax.f32 %v8185, 0.0
      %v8322 = vmax.f32 %v8186, 0.0
      %v8323 = vmax.f32 %v8187, 0.0
      %v8324 = vmax.f32 %v8188, 0.0
      %v8325 = vmax.f32 %v8189, 0.0
      %v8326 = vmax.f32 %v8190, 0.0
      %v8327 = vmax.f32 %v8191, 0.0
      %v8328 = vmax.f32 %v8192, 0.0
      %v8329 = vmax.f32 %v8193, 0.0
      %v8330 = vmax.f32 %v8194, 0.0
      %v8331 = vmax.f32 %v8195, 0.0
      %v8332 = vmax.f32 %v8196, 0.0
      %v8333 = vmax.f32 %v8197, 0.0
      %v8334 = vmax.f32 %v8198, 0.0
      %v8335 = vmax.f32 %v8199, 0.0
      %v8336 = vmax.f32 %v8200, 0.0
      %v8337 = vmax.f32 %v8201, 0.0
      %v8338 = vmax.f32 %v8202, 0.0
      %v8339 = vmax.f32 %v8203, 0.0
      %v8340 = vmax.f32 %v8204, 0.0
      %v8341 = vmax.f32 %v8205, 0.0
      %v8342 = vmax.f32 %v8206, 0.0
      %v8343 = vmax.f32 %v8207, 0.0
      %v8344 = vmax.f32 %v8208, 0.0
      %v8345 = vmax.f32 %v8209, 0.0
      %v8346 = vmax.f32 %v8210, 0.0
      %v8347 = vmax.f32 %v8211, 0.0
      %v8348 = vmax.f32 %v8212, 0.0
      %v8349 = vmax.f32 %v8213, 0.0
      %v8350 = vmax.f32 %v8214, 0.0
      %v8351 = vmax.f32 %v8215, 0.0
      %v8352 = vmax.f32 %v8216, 0.0
      %v8353 = vmax.f32 %v8217, 0.0
      %v8354 = vmax.f32 %v8218, 0.0
      %v8355 = vmax.f32 %v8219, 0.0
      %v8356 = vmax.f32 %v8220, 0.0
      %v8357 = vmax.f32 %v8221, 0.0
      %v8358 = vmax.f32 %v8222, 0.0
      %v8359 = vmax.f32 %v8223, 0.0
      %v8360 = vmax.f32 %v8224, 0.0
      %v8361 = vmax.f32 %v8225, 0.0
      %v8362 = vmax.f32 %v8226, 0.0
      %v8363 = vmax.f32 %v8227, 0.0
      %v8364 = vmax.f32 %v8228, 0.0
      %v8365 = vmax.f32 %v8229, 0.0
      %v8366 = vmax.f32 %v8230, 0.0
      %v8367 = vmax.f32 %v8231, 0.0
      %v8368 = vmax.f32 %v8232, 0.0
      %v8369 = vmax.f32 %v8233, 0.0
      %v8370 = vmax.f32 %v8234, 0.0
      %v8371 = vmax.f32 %v8235, 0.0
      %v8372 = vmax.f32 %v8236, 0.0
      %v8373 = vmax.f32 %v8237, 0.0
      %v8374 = vmax.f32 %v8238, 0.0
      %v8375 = vmax.f32 %v8239, 0.0
      %v8376 = vmax.f32 %v8240, 0.0
      %v8377 = vmax.f32 %v8241, 0.0
      %v8378 = vmax.f32 %v8242, 0.0
      %v8379 = vmax.f32 %v8243, 0.0
      %v8380 = vmax.f32 %v8244, 0.0
      %v8381 = vmax.f32 %v8245, 0.0
      %v8382 = vmax.f32 %v8246, 0.0
      %v8383 = vmax.f32 %v8247, 0.0
      %v8384 = vmax.f32 %v8248, 0.0
      %v8385 = vmax.f32 %v8249, 0.0
      %v8386 = vmax.f32 %v8250, 0.0
      %v8387 = vmax.f32 %v8251, 0.0
      %v8388 = vmax.f32 %v8252, 0.0
      %v8389 = vmax.f32 %v8253, 0.0
      %v8390 = vmax.f32 %v8254, 0.0
      %v8391 = vmax.f32 %v8255, 0.0
      %v8392 = vmax.f32 %v8256, 0.0
      %v8393 = vmax.f32 %v8257, 0.0
      %v8394 = vmax.f32 %v8258, 0.0
      %v8395 = vmax.f32 %v8259, 0.0
      %v8396 = vmax.f32 %v8260, 0.0
      %v8397 = vmax.f32 %v8261, 0.0
      %v8398 = vmax.f32 %v8262, 0.0
      %v8399 = vmax.f32 %v8263, 0.0
      %v8400 = vmax.f32 %v8264, 0.0
      %v8401 = vmax.f32 %v8265, 0.0
      %v8402 = vmax.f32 %v8266, 0.0
      %v8403 = vmax.f32 %v8267, 0.0
      %v8404 = vmax.f32 %v8268, 0.0
      %v8405 = vmax.f32 %v8269, 0.0
      %v8406 = vmax.f32 %v8270, 0.0
      %v8407 = vmax.f32 %v8271, 0.0
      %v8408 = vmax.f32 %v8272, 0.0
      %v8409 = vmax.f32 %v8273, 0.0
      %v8410 = vmax.f32 %v8274, 0.0
      %v8411 = vmax.f32 %v8275, 0.0
      %v8412 = vmax.f32 %v8276, 0.0
      %v8413 = vmax.f32 %v8277, 0.0
      %v8414 = vmax.f32 %v8278, 0.0
      %v8415 = vmax.f32 %v8279, 0.0
      %v8416 = vmax.f32 %v8280, 0.0
      %v8417 = vmax.f32 %v8281, 0.0
      %v8418 = vmax.f32 %v8282, 0.0
      %v8419 = vmax.f32 %v8283, 0.0
      %v8420 = vmax.f32 %v8284, 0.0
      %v8421 = vmax.f32 %v8285, 0.0
      %v8422 = vmax.f32 %v8286, 0.0
      %v8423 = vmax.f32 %v8287, 0.0
      %v8424 = vmax.f32 %v8288, 0.0
      %v8425 = vmax.f32 %v8289, 0.0
      %v8426 = vmax.f32 %v8290, 0.0
      %v8427 = vmax.f32 %v8291, 0.0
      %v8428 = vmax.f32 %v8292, 0.0
      %vm8429 = vcmask 130048
      %8430 = vst.msk [vmem:[%s197] sm:$0xff] %vm8429, %v8293
      %8431 = vst.msk [vmem:[%s197 + $0x8] sm:$0xff] %vm8429, %v8294
      %8432 = vst.msk [vmem:[%s197 + $0x10] sm:$0xff] %vm8429, %v8295
      %8433 = vst.msk [vmem:[%s197 + $0x18] sm:$0xff] %vm8429, %v8296
      %8434 = vst.msk [vmem:[%s197 + $0x20] sm:$0xff] %vm8429, %v8297
      %8435 = vst.msk [vmem:[%s197 + $0x28] sm:$0xff] %vm8429, %v8298
      %8436 = vst.msk [vmem:[%s197 + $0x30] sm:$0xff] %vm8429, %v8299
      %8437 = vst.msk [vmem:[%s197 + $0x38] sm:$0xff] %vm8429, %v8300
      %8438 = vst.msk [vmem:[%s197 + $0x40] sm:$0xff] %vm8429, %v8301
      %8439 = vst.msk [vmem:[%s197 + $0x48] sm:$0xff] %vm8429, %v8302
      %8440 = vst.msk [vmem:[%s197 + $0x50] sm:$0xff] %vm8429, %v8303
      %8441 = vst.msk [vmem:[%s197 + $0x58] sm:$0xff] %vm8429, %v8304
      %8442 = vst.msk [vmem:[%s197 + $0x60] sm:$0xff] %vm8429, %v8305
      %8443 = vst.msk [vmem:[%s197 + $0x68] sm:$0xff] %vm8429, %v8306
      %8444 = vst.msk [vmem:[%s197 + $0x70] sm:$0xff] %vm8429, %v8307
      %8445 = vst.msk [vmem:[%s197 + $0x78] sm:$0xff] %vm8429, %v8308
      %8446 = vst.msk [vmem:[%s197 + $0x80] sm:$0xff] %vm8429, %v8309
      %8447 = vst.msk [vmem:[%s197 + $0x88] sm:$0xff] %vm8429, %v8310
      %8448 = vst.msk [vmem:[%s197 + $0x90] sm:$0xff] %vm8429, %v8311
      %8449 = vst.msk [vmem:[%s197 + $0x98] sm:$0xff] %vm8429, %v8312
      %8450 = vst.msk [vmem:[%s197 + $0xa0] sm:$0xff] %vm8429, %v8313
      %8451 = vst.msk [vmem:[%s197 + $0xa8] sm:$0xff] %vm8429, %v8314
      %8452 = vst.msk [vmem:[%s197 + $0xb0] sm:$0xff] %vm8429, %v8315
      %8453 = vst.msk [vmem:[%s197 + $0xb8] sm:$0xff] %vm8429, %v8316
      %8454 = vst.msk [vmem:[%s197 + $0xc0] sm:$0xff] %vm8429, %v8317
      %8455 = vst.msk [vmem:[%s197 + $0xc8] sm:$0xff] %vm8429, %v8318
      %8456 = vst.msk [vmem:[%s197 + $0xd0] sm:$0xff] %vm8429, %v8319
      %8457 = vst.msk [vmem:[%s197 + $0xd8] sm:$0xff] %vm8429, %v8320
      %8458 = vst.msk [vmem:[%s197 + $0xe0] sm:$0xff] %vm8429, %v8321
      %8459 = vst.msk [vmem:[%s197 + $0xe8] sm:$0xff] %vm8429, %v8322
      %8460 = vst.msk [vmem:[%s197 + $0xf0] sm:$0xff] %vm8429, %v8323
      %8461 = vst.msk [vmem:[%s197 + $0xf8] sm:$0xff] %vm8429, %v8324
      %8462 = vst.msk [vmem:[%s197 + $0x100] sm:$0xff] %vm8429, %v8325
      %8463 = vst.msk [vmem:[%s197 + $0x108] sm:$0xff] %vm8429, %v8326
      %8464 = vst.msk [vmem:[%s197 + $0x110] sm:$0xff] %vm8429, %v8327
      %8465 = vst.msk [vmem:[%s197 + $0x118] sm:$0xff] %vm8429, %v8328
      %8466 = vst.msk [vmem:[%s197 + $0x120] sm:$0xff] %vm8429, %v8329
      %8467 = vst.msk [vmem:[%s197 + $0x128] sm:$0xff] %vm8429, %v8330
      %8468 = vst.msk [vmem:[%s197 + $0x130] sm:$0xff] %vm8429, %v8331
      %8469 = vst.msk [vmem:[%s197 + $0x138] sm:$0xff] %vm8429, %v8332
      %8470 = vst.msk [vmem:[%s197 + $0x140] sm:$0xff] %vm8429, %v8333
      %8471 = vst.msk [vmem:[%s197 + $0x148] sm:$0xff] %vm8429, %v8334
      %8472 = vst.msk [vmem:[%s197 + $0x150] sm:$0xff] %vm8429, %v8335
      %8473 = vst.msk [vmem:[%s197 + $0x158] sm:$0xff] %vm8429, %v8336
      %8474 = vst.msk [vmem:[%s197 + $0x160] sm:$0xff] %vm8429, %v8337
      %8475 = vst.msk [vmem:[%s197 + $0x168] sm:$0xff] %vm8429, %v8338
      %8476 = vst.msk [vmem:[%s197 + $0x170] sm:$0xff] %vm8429, %v8339
      %8477 = vst.msk [vmem:[%s197 + $0x178] sm:$0xff] %vm8429, %v8340
      %8478 = vst.msk [vmem:[%s197 + $0x180] sm:$0xff] %vm8429, %v8341
      %8479 = vst.msk [vmem:[%s197 + $0x188] sm:$0xff] %vm8429, %v8342
      %8480 = vst.msk [vmem:[%s197 + $0x190] sm:$0xff] %vm8429, %v8343
      %8481 = vst.msk [vmem:[%s197 + $0x198] sm:$0xff] %vm8429, %v8344
      %8482 = vst.msk [vmem:[%s197 + $0x1a0] sm:$0xff] %vm8429, %v8345
      %8483 = vst.msk [vmem:[%s197 + $0x1a8] sm:$0xff] %vm8429, %v8346
      %8484 = vst.msk [vmem:[%s197 + $0x1b0] sm:$0xff] %vm8429, %v8347
      %8485 = vst.msk [vmem:[%s197 + $0x1b8] sm:$0xff] %vm8429, %v8348
      %8486 = vst.msk [vmem:[%s197 + $0x1c0] sm:$0xff] %vm8429, %v8349
      %8487 = vst.msk [vmem:[%s197 + $0x1c8] sm:$0xff] %vm8429, %v8350
      %8488 = vst.msk [vmem:[%s197 + $0x1d0] sm:$0xff] %vm8429, %v8351
      %8489 = vst.msk [vmem:[%s197 + $0x1d8] sm:$0xff] %vm8429, %v8352
      %8490 = vst.msk [vmem:[%s197 + $0x1e0] sm:$0xff] %vm8429, %v8353
      %8491 = vst.msk [vmem:[%s197 + $0x1e8] sm:$0xff] %vm8429, %v8354
      %8492 = vst.msk [vmem:[%s197 + $0x1f0] sm:$0xff] %vm8429, %v8355
      %8493 = vst.msk [vmem:[%s197 + $0x1f8] sm:$0xff] %vm8429, %v8356
      %8494 = vst.msk [vmem:[%s197 + $0x200] sm:$0xff] %vm8429, %v8357
      %8495 = vst.msk [vmem:[%s197 + $0x208] sm:$0xff] %vm8429, %v8358
      %8496 = vst.msk [vmem:[%s197 + $0x210] sm:$0xff] %vm8429, %v8359
      %8497 = vst.msk [vmem:[%s197 + $0x218] sm:$0xff] %vm8429, %v8360
      %8498 = vst.msk [vmem:[%s197 + $0x220] sm:$0xff] %vm8429, %v8361
      %8499 = vst.msk [vmem:[%s197 + $0x228] sm:$0xff] %vm8429, %v8362
      %8500 = vst.msk [vmem:[%s197 + $0x230] sm:$0xff] %vm8429, %v8363
      %8501 = vst.msk [vmem:[%s197 + $0x238] sm:$0xff] %vm8429, %v8364
      %8502 = vst.msk [vmem:[%s197 + $0x240] sm:$0xff] %vm8429, %v8365
      %8503 = vst.msk [vmem:[%s197 + $0x248] sm:$0xff] %vm8429, %v8366
      %8504 = vst.msk [vmem:[%s197 + $0x250] sm:$0xff] %vm8429, %v8367
      %8505 = vst.msk [vmem:[%s197 + $0x258] sm:$0xff] %vm8429, %v8368
      %8506 = vst.msk [vmem:[%s197 + $0x260] sm:$0xff] %vm8429, %v8369
      %8507 = vst.msk [vmem:[%s197 + $0x268] sm:$0xff] %vm8429, %v8370
      %8508 = vst.msk [vmem:[%s197 + $0x270] sm:$0xff] %vm8429, %v8371
      %8509 = vst.msk [vmem:[%s197 + $0x278] sm:$0xff] %vm8429, %v8372
      %8510 = vst.msk [vmem:[%s197 + $0x280] sm:$0xff] %vm8429, %v8373
      %8511 = vst.msk [vmem:[%s197 + $0x288] sm:$0xff] %vm8429, %v8374
      %8512 = vst.msk [vmem:[%s197 + $0x290] sm:$0xff] %vm8429, %v8375
      %8513 = vst.msk [vmem:[%s197 + $0x298] sm:$0xff] %vm8429, %v8376
      %8514 = vst.msk [vmem:[%s197 + $0x2a0] sm:$0xff] %vm8429, %v8377
      %8515 = vst.msk [vmem:[%s197 + $0x2a8] sm:$0xff] %vm8429, %v8378
      %8516 = vst.msk [vmem:[%s197 + $0x2b0] sm:$0xff] %vm8429, %v8379
      %8517 = vst.msk [vmem:[%s197 + $0x2b8] sm:$0xff] %vm8429, %v8380
      %8518 = vst.msk [vmem:[%s197 + $0x2c0] sm:$0xff] %vm8429, %v8381
      %8519 = vst.msk [vmem:[%s197 + $0x2c8] sm:$0xff] %vm8429, %v8382
      %8520 = vst.msk [vmem:[%s197 + $0x2d0] sm:$0xff] %vm8429, %v8383
      %8521 = vst.msk [vmem:[%s197 + $0x2d8] sm:$0xff] %vm8429, %v8384
      %8522 = vst.msk [vmem:[%s197 + $0x2e0] sm:$0xff] %vm8429, %v8385
      %8523 = vst.msk [vmem:[%s197 + $0x2e8] sm:$0xff] %vm8429, %v8386
      %8524 = vst.msk [vmem:[%s197 + $0x2f0] sm:$0xff] %vm8429, %v8387
      %8525 = vst.msk [vmem:[%s197 + $0x2f8] sm:$0xff] %vm8429, %v8388
      %8526 = vst.msk [vmem:[%s197 + $0x300] sm:$0xff] %vm8429, %v8389
      %8527 = vst.msk [vmem:[%s197 + $0x308] sm:$0xff] %vm8429, %v8390
      %8528 = vst.msk [vmem:[%s197 + $0x310] sm:$0xff] %vm8429, %v8391
      %8529 = vst.msk [vmem:[%s197 + $0x318] sm:$0xff] %vm8429, %v8392
      %8530 = vst.msk [vmem:[%s197 + $0x320] sm:$0xff] %vm8429, %v8393
      %8531 = vst.msk [vmem:[%s197 + $0x328] sm:$0xff] %vm8429, %v8394
      %8532 = vst.msk [vmem:[%s197 + $0x330] sm:$0xff] %vm8429, %v8395
      %8533 = vst.msk [vmem:[%s197 + $0x338] sm:$0xff] %vm8429, %v8396
      %8534 = vst.msk [vmem:[%s197 + $0x340] sm:$0xff] %vm8429, %v8397
      %8535 = vst.msk [vmem:[%s197 + $0x348] sm:$0xff] %vm8429, %v8398
      %8536 = vst.msk [vmem:[%s197 + $0x350] sm:$0xff] %vm8429, %v8399
      %8537 = vst.msk [vmem:[%s197 + $0x358] sm:$0xff] %vm8429, %v8400
      %8538 = vst.msk [vmem:[%s197 + $0x360] sm:$0xff] %vm8429, %v8401
      %8539 = vst.msk [vmem:[%s197 + $0x368] sm:$0xff] %vm8429, %v8402
      %8540 = vst.msk [vmem:[%s197 + $0x370] sm:$0xff] %vm8429, %v8403
      %8541 = vst.msk [vmem:[%s197 + $0x378] sm:$0xff] %vm8429, %v8404
      %8542 = vst.msk [vmem:[%s197 + $0x380] sm:$0xff] %vm8429, %v8405
      %8543 = vst.msk [vmem:[%s197 + $0x388] sm:$0xff] %vm8429, %v8406
      %8544 = vst.msk [vmem:[%s197 + $0x390] sm:$0xff] %vm8429, %v8407
      %8545 = vst.msk [vmem:[%s197 + $0x398] sm:$0xff] %vm8429, %v8408
      %8546 = vst.msk [vmem:[%s197 + $0x3a0] sm:$0xff] %vm8429, %v8409
      %8547 = vst.msk [vmem:[%s197 + $0x3a8] sm:$0xff] %vm8429, %v8410
      %8548 = vst.msk [vmem:[%s197 + $0x3b0] sm:$0xff] %vm8429, %v8411
      %8549 = vst.msk [vmem:[%s197 + $0x3b8] sm:$0xff] %vm8429, %v8412
      %8550 = vst.msk [vmem:[%s197 + $0x3c0] sm:$0xff] %vm8429, %v8413
      %8551 = vst.msk [vmem:[%s197 + $0x3c8] sm:$0xff] %vm8429, %v8414
      %8552 = vst.msk [vmem:[%s197 + $0x3d0] sm:$0xff] %vm8429, %v8415
      %8553 = vst.msk [vmem:[%s197 + $0x3d8] sm:$0xff] %vm8429, %v8416
      %8554 = vst.msk [vmem:[%s197 + $0x3e0] sm:$0xff] %vm8429, %v8417
      %8555 = vst.msk [vmem:[%s197 + $0x3e8] sm:$0xff] %vm8429, %v8418
      %8556 = vst.msk [vmem:[%s197 + $0x3f0] sm:$0xff] %vm8429, %v8419
      %8557 = vst.msk [vmem:[%s197 + $0x3f8] sm:$0xff] %vm8429, %v8420
      %8558 = vst.msk [vmem:[%s197 + $0x400] sm:$0xff] %vm8429, %v8421
      %8559 = vst.msk [vmem:[%s197 + $0x408] sm:$0xff] %vm8429, %v8422
      %8560 = vst.msk [vmem:[%s197 + $0x410] sm:$0xff] %vm8429, %v8423
      %8561 = vst.msk [vmem:[%s197 + $0x418] sm:$0xff] %vm8429, %v8424
      %8562 = vst.msk [vmem:[%s197 + $0x420] sm:$0xff] %vm8429, %v8425
      %8563 = vst.msk [vmem:[%s197 + $0x428] sm:$0xff] %vm8429, %v8426
      %8564 = vst.msk [vmem:[%s197 + $0x430] sm:$0xff] %vm8429, %v8427
      %8565 = vst.msk [vmem:[%s197 + $0x438] sm:$0xff] %vm8429, %v8428
      %p8566 = scmp.lt.s32.totalorder %s15, 1
      %s8567 = scalar_select %p8566, %s15, 1
      %s8568 = smul.addr %s8567, 136
      %s8569 = smul.addr %s8568, 8
      %s8570 = scalar_lea.vmem %s4, %s8569
      // Predicated region
      $region37: #{tpu_custom_call.1} parent=35 // pred_check
        %p8571 = pneg %p122
      $region38: #{tpu_custom_call.1} parent=35 // pred_check_branch
        %8573 = sbr.rel (%p8571) target = $region40
      $region39: #{tpu_custom_call.1} parent=35 // pred_region
        _
      $region40: #{tpu_custom_call.1} parent=35 // pred_fallthru
        _
    $region36: #{tpu_custom_call.1} parent=5 // pred_fallthru
      _
    %p8574 = scmp.le.s32.totalorder 2, %s10
    // Predicated region
    $region41: #{tpu_custom_call.1} parent=5 // pred_check
      %p8575 = pneg %p8574
    $region42: #{tpu_custom_call.1} parent=5 // pred_check_branch
      %8577 = sbr.rel (%p8575) target = $region44
    $region43: #{tpu_custom_call.1} parent=5 // pred_region
      %s8578 = ssub.s32 %s10, 2
      // Predicated region
      $region45: #{tpu_custom_call.1} parent=43 // pred_check
        %p8579 = pneg %p128
      $region46: #{tpu_custom_call.1} parent=43 // pred_check_branch
        %8581 = sbr.rel (%p8579) target = $region48
      $region47: #{tpu_custom_call.1} parent=43 // pred_region
        %p8582 = scmp.lt.s32.totalorder %s16, 1
        %s8583 = scalar_select %p8582, %s16, 1
        %s8584 = smul.addr %s8583, 136
        %s8585 = smul.addr %s8584, 8
        %s8586 = scalar_lea.vmem %s4, %s8585
      $region48: #{tpu_custom_call.1} parent=43 // pred_fallthru
        _
    $region44: #{tpu_custom_call.1} parent=5 // pred_fallthru
      _
  $region6: #{tpu_custom_call.1} parent=0 // loop_footer
    %s14 = sadd.s32 1, %s10
  $region7: #{tpu_custom_call.1} parent=0 // loop_footer_branch
    %9 = sbr.rel target = $region3
  $region8: #{tpu_custom_call.1} parent=0 // loop_exit
    _

</llo_original>
